<compile_context>
chip_gen: v7x
topology: tpu7x:2x2x1
jax: 0.10.0
libtpu: 0.0.40
codegen_flags: <defaults>
</compile_context>

<pallas_src>
import functools
import math

import jax
import jax.numpy as jnp
from jax.experimental import pallas as pl
from jax.experimental.pallas import tpu as pltpu


# ---------------------------------------------------------------------------
# Small helpers
# ---------------------------------------------------------------------------
_SQRT_2_OVER_PI = math.sqrt(2.0 / math.pi)
# Scoped-VMEM budget: above v5e's 16 MiB default, at/below physical on all gens.
_VMEM_LIMIT_BYTES = 64 * 1024 * 1024


def _gelu(x):
    # tanh approximation (VPU + EUP friendly).
    # TODO(synk): PyTorch nn.GELU defaults to the exact erf form; the tanh
    # approximation is used here (and in the in-file reference) for portable lowering.
    return 0.5 * x * (1.0 + jnp.tanh(_SQRT_2_OVER_PI * (x + 0.044715 * x * x * x)))


def _sigmoid(x):
    return 1.0 / (1.0 + jnp.exp(-x))


def _pick_tile_sublane(n, target):
    """Largest tile <= target dividing n with 8-alignment, else the full dim."""
    if n <= target:
        return n
    for t in range(min(target, n), 7, -1):
        if n % t == 0 and t % 8 == 0:
            return t
    # TODO(synk): fallback keeps the whole dim resident; pad awkward dims instead.
    return n


def _pick_tile_lane(n, target):
    """Largest 128-multiple tile <= target dividing n, else the full dim."""
    if n <= target:
        return n
    start = (min(target, n) // 128) * 128
    for t in range(start, 127, -128):
        if n % t == 0:
            return t
    # TODO(synk): fallback keeps the whole dim resident; pad awkward dims instead.
    return n


# ---------------------------------------------------------------------------
# Fused linear kernel: y = act(LN?(x) @ W + b) [+ residual]
# Optional K-reduction grid axis with a VMEM accumulator.
# ---------------------------------------------------------------------------
def _make_linear_kernel(activation, has_res_arr, has_ln, residual_from_input,
                        multi_k):
    def _finalize(acc, b_vals, x_raw, r_ref, o_ref):
        acc = acc + b_vals
        if activation == "gelu":
            acc = _gelu(acc)
        elif activation == "sigmoid":
            acc = _sigmoid(acc)
        if residual_from_input:
            acc = acc + x_raw
        elif has_res_arr:
            acc = acc + r_ref[...]
        o_ref[...] = acc.astype(o_ref.dtype)

    def kernel(*refs):
        if multi_k:
            *rest, acc_ref = refs
        else:
            rest, acc_ref = list(refs), None
        *in_refs, o_ref = rest
        it = iter(in_refs)
        x_ref, w_ref, b_ref = next(it), next(it), next(it)
        g_ref = be_ref = r_ref = None
        if has_ln:
            g_ref, be_ref = next(it), next(it)
        if has_res_arr:
            r_ref = next(it)

        x = x_ref[...].astype(jnp.float32)
        x_raw = x
        if has_ln:
            mean = jnp.mean(x, axis=-1, keepdims=True)
            var = jnp.mean(jnp.square(x - mean), axis=-1, keepdims=True)
            x = (x - mean) * jax.lax.rsqrt(var + 1e-5) * g_ref[...] + be_ref[...]
        part = jnp.dot(x, w_ref[...], preferred_element_type=jnp.float32)

        if multi_k:
            @pl.when(pl.program_id(2) == 0)
            def _init():
                acc_ref[...] = jnp.zeros_like(acc_ref)

            acc_ref[...] += part

            @pl.when(pl.program_id(2) == pl.num_programs(2) - 1)
            def _fin():
                _finalize(acc_ref[...], b_ref[...], x_raw, r_ref, o_ref)
        else:
            _finalize(part, b_ref[...], x_raw, r_ref, o_ref)

    return kernel


def linear(x2, w_t, b, *, activation="none", residual=None, ln=None,
           tile_m=512, tile_n=1024, tile_k=2048):
    """y = act(LN?(x2) @ w_t + b) [+ residual].

    x2: (M, K), w_t: (K, N) pre-transposed, b: (N,).
    residual: (M, N) array, or the string "input" to reuse the un-normalized
    x block as the residual (requires N == K; used for LN+residual fusion).
    """
    M, K = x2.shape
    K2, N = w_t.shape
    assert K2 == K
    residual_from_input = isinstance(residual, str) and residual == "input"
    has_res_arr = (residual is not None) and not residual_from_input
    has_ln = ln is not None
    if residual_from_input:
        assert N == K, "residual='input' requires a square projection"

    TM = _pick_tile_sublane(M, tile_m)
    TN = N if residual_from_input else _pick_tile_lane(N, tile_n)
    # LayerNorm fusion needs the full row -> no K tiling on that path.
    TK = K if has_ln else _pick_tile_lane(K, tile_k)
    kt = K // TK
    multi_k = kt > 1

    if multi_k:
        grid = (M // TM, N // TN, kt)
        sems = ("parallel", "parallel", "arbitrary")
        x_map = lambda i, j, k: (i, k)
        w_map = lambda i, j, k: (k, j)
        n_map = lambda i, j, k: (0, j)
        mn_map = lambda i, j, k: (i, j)
        d_map = lambda i, j, k: (0, 0)
    else:
        grid = (M // TM, N // TN)
        sems = ("parallel", "parallel")
        x_map = lambda i, j: (i, 0)
        w_map = lambda i, j: (0, j)
        n_map = lambda i, j: (0, j)
        mn_map = lambda i, j: (i, j)
        d_map = lambda i, j: (0, 0)

    in_specs = [pl.BlockSpec((TM, TK), x_map),
                pl.BlockSpec((TK, TN), w_map),
                pl.BlockSpec((1, TN), n_map)]
    args = [x2, w_t, b.reshape(1, N)]
    if has_ln:
        g, be = ln
        in_specs += [pl.BlockSpec((1, K), d_map), pl.BlockSpec((1, K), d_map)]
        args += [g.reshape(1, K), be.reshape(1, K)]
    if has_res_arr:
        in_specs.append(pl.BlockSpec((TM, TN), mn_map))
        args.append(residual)

    scratch = [pltpu.VMEM((TM, TN), jnp.float32)] if multi_k else []

    flops = 2 * M * K * N
    transcendentals = M * N if activation in ("gelu", "sigmoid") else 0
    bytes_accessed = 4 * (M * K + K * N + N + M * N
                          + (M * N if has_res_arr else 0))

    return pl.pallas_call(
        _make_linear_kernel(activation, has_res_arr, has_ln,
                            residual_from_input, multi_k),
        out_shape=jax.ShapeDtypeStruct((M, N), x2.dtype),
        grid=grid,
        in_specs=in_specs,
        out_specs=pl.BlockSpec((TM, TN), mn_map),
        scratch_shapes=scratch,
        compiler_params=pltpu.CompilerParams(
            dimension_semantics=sems, vmem_limit_bytes=_VMEM_LIMIT_BYTES),
        cost_estimate=pl.CostEstimate(flops=flops, transcendentals=transcendentals,
                                      bytes_accessed=bytes_accessed),
    )(*args)


# ---------------------------------------------------------------------------
# Fused norm1 + QKV + mechanism-head projection (lane-dense mech output)
# ---------------------------------------------------------------------------
def _qkvm_kernel(x_ref, g_ref, be_ref, w_ref, b_ref, wm2_ref, bm2_ref,
                 q_ref, k_ref, v_ref, mech_ref, *, d_model):
    x = x_ref[...].astype(jnp.float32)
    mean = jnp.mean(x, axis=-1, keepdims=True)
    var = jnp.mean(jnp.square(x - mean), axis=-1, keepdims=True)
    h = (x - mean) * jax.lax.rsqrt(var + 1e-5) * g_ref[...] + be_ref[...]
    acc = jnp.dot(h, w_ref[...], preferred_element_type=jnp.float32) + b_ref[...]
    D = d_model
    q_ref[...] = acc[:, :D].astype(q_ref.dtype)
    k_ref[...] = acc[:, D:2 * D].astype(k_ref.dtype)
    v_ref[...] = acc[:, 2 * D:3 * D].astype(v_ref.dtype)
    m1 = _gelu(acc[:, 3 * D:])                                   # (TM, D/2)
    # (1, D/2) x (TM, D/2)^T -> (1, TM): rows land on the lane axis (dense store).
    mech = jax.lax.dot_general(wm2_ref[...], m1, (((1,), (1,)), ((), ())),
                               preferred_element_type=jnp.float32) + bm2_ref[...]
    mech_ref[...] = _sigmoid(mech).astype(mech_ref.dtype)


def qkvm_projection(x2, norm1, attn_p, d_model, *, tile_m=512):
    """Returns q, k, v: (M, D) and mech: (1, M) from LN(x2) in one matmul."""
    M, D = x2.shape
    assert D == d_model
    Dm = attn_p["qkvm_w_t"].shape[1] - 3 * D
    TM = _pick_tile_sublane(M, tile_m)
    gamma, beta = norm1
    Wtot = 3 * D + Dm
    # TODO(synk): for very large D the resident (D, 3.5D) weight should be
    # N-tiled (or stored bf16); fine for d_model-scale weights here.
    return pl.pallas_call(
        functools.partial(_qkvm_kernel, d_model=D),
        out_shape=(jax.ShapeDtypeStruct((M, D), x2.dtype),
                   jax.ShapeDtypeStruct((M, D), x2.dtype),
                   jax.ShapeDtypeStruct((M, D), x2.dtype),
                   jax.ShapeDtypeStruct((1, M), x2.dtype)),
        grid=(M // TM,),
        in_specs=[pl.BlockSpec((TM, D), lambda i: (i, 0)),
                  pl.BlockSpec((1, D), lambda i: (0, 0)),
                  pl.BlockSpec((1, D), lambda i: (0, 0)),
                  pl.BlockSpec((D, Wtot), lambda i: (0, 0)),
                  pl.BlockSpec((1, Wtot), lambda i: (0, 0)),
                  pl.BlockSpec((1, Dm), lambda i: (0, 0)),
                  pl.BlockSpec((1, 1), lambda i: (0, 0))],
        out_specs=(pl.BlockSpec((TM, D), lambda i: (i, 0)),
                   pl.BlockSpec((TM, D), lambda i: (i, 0)),
                   pl.BlockSpec((TM, D), lambda i: (i, 0)),
                   pl.BlockSpec((1, TM), lambda i: (0, i))),
        compiler_params=pltpu.CompilerParams(
            dimension_semantics=("parallel",), vmem_limit_bytes=_VMEM_LIMIT_BYTES),
        cost_estimate=pl.CostEstimate(
            flops=2 * M * D * Wtot + 2 * M * Dm,
            transcendentals=M * Dm + M,
            bytes_accessed=4 * (M * D + D * Wtot + Wtot + 3 * M * D + M)),
    )(x2, gamma.reshape(1, D), beta.reshape(1, D),
      attn_p["qkvm_w_t"], attn_p["qkvm_b"].reshape(1, Wtot),
      attn_p["mech2_row"], attn_p["mech2_b"].reshape(1, 1))


# ---------------------------------------------------------------------------
# LayerNorm (standalone; only used for the final norm)
# ---------------------------------------------------------------------------
def _layernorm_kernel(x_ref, g_ref, b_ref, o_ref):
    x = x_ref[...].astype(jnp.float32)
    mean = jnp.mean(x, axis=-1, keepdims=True)
    var = jnp.mean(jnp.square(x - mean), axis=-1, keepdims=True)
    inv = jax.lax.rsqrt(var + 1e-5)
    o_ref[...] = ((x - mean) * inv * g_ref[...] + b_ref[...]).astype(o_ref.dtype)


def layernorm(x2, gamma, beta, *, tile_m=512):
    M, D = x2.shape
    TM = _pick_tile_sublane(M, tile_m)
    return pl.pallas_call(
        _layernorm_kernel,
        out_shape=jax.ShapeDtypeStruct((M, D), x2.dtype),
        grid=(M // TM,),
        in_specs=[pl.BlockSpec((TM, D), lambda i: (i, 0)),
                  pl.BlockSpec((1, D), lambda i: (0, 0)),
                  pl.BlockSpec((1, D), lambda i: (0, 0))],
        out_specs=pl.BlockSpec((TM, D), lambda i: (i, 0)),
        compiler_params=pltpu.CompilerParams(
            dimension_semantics=("parallel",), vmem_limit_bytes=_VMEM_LIMIT_BYTES),
    )(x2, gamma.reshape(1, D), beta.reshape(1, D))


# ---------------------------------------------------------------------------
# Position/timing broadcast add (default positions == timings == arange path)
# ---------------------------------------------------------------------------
def _bcast_add_kernel(x_ref, p_ref, o_ref):
    o_ref[...] = x_ref[...] + p_ref[...]


def broadcast_add(x, proj_s, *, tile_s=512):
    """out[b, s, :] = x[b, s, :] + proj_s[s, :]."""
    B, S, D = x.shape
    TS = _pick_tile_sublane(S, tile_s)
    return pl.pallas_call(
        _bcast_add_kernel,
        out_shape=jax.ShapeDtypeStruct((B, S, D), x.dtype),
        grid=(B, S // TS),
        in_specs=[pl.BlockSpec((None, TS, D), lambda b, j: (b, j, 0)),
                  pl.BlockSpec((TS, D), lambda b, j: (j, 0))],
        out_specs=pl.BlockSpec((None, TS, D), lambda b, j: (b, j, 0)),
        compiler_params=pltpu.CompilerParams(
            dimension_semantics=("parallel", "parallel"),
            vmem_limit_bytes=_VMEM_LIMIT_BYTES),
    )(x, proj_s)


# ---------------------------------------------------------------------------
# Mechanism attention core: transpose-free, query-tiled, mech-scaled softmax
# ---------------------------------------------------------------------------
def _attention_kernel(q_ref, k_ref, v_ref, m_ref, o_ref, *, n_heads, scale):
    q = q_ref[...].astype(jnp.float32)          # (Tq, D)
    k = k_ref[...].astype(jnp.float32)          # (S, D)
    v = v_ref[...]                              # (S, D)
    mech = m_ref[...].astype(jnp.float32)       # (1, S)
    D = q.shape[-1]
    dh = D // n_heads
    outs = []
    for h in range(n_heads):                    # static unroll over heads
        lo = h * dh
        qh = q[:, lo:lo + dh]
        kh = k[:, lo:lo + dh]
        vh = v[:, lo:lo + dh]
        s = jax.lax.dot_general(qh, kh, (((1,), (1,)), ((), ())),
                                preferred_element_type=jnp.float32) * scale
        s = s * (1.0 + mech)                    # broadcast over query rows
        s = s - jnp.max(s, axis=-1, keepdims=True)
        p = jnp.exp(s)
        p = p / jnp.sum(p, axis=-1, keepdims=True)
        outs.append(jnp.dot(p.astype(v.dtype), vh,
                            preferred_element_type=jnp.float32))
    o_ref[...] = jnp.concatenate(outs, axis=-1).astype(o_ref.dtype)


def attention_core(q, k, v, mech3, *, n_heads, tile_q=256):
    """q, k, v: (B, S, D); mech3: (B, 1, S). Returns context (B, S, D)."""
    B, S, D = q.shape
    dh = D // n_heads
    Tq = _pick_tile_sublane(S, tile_q)
    scale = 1.0 / math.sqrt(dh)
    qkv_q_spec = pl.BlockSpec((None, Tq, D), lambda b, i: (b, i, 0))
    qkv_s_spec = pl.BlockSpec((None, S, D), lambda b, i: (b, 0, 0))
    return pl.pallas_call(
        functools.partial(_attention_kernel, n_heads=n_heads, scale=scale),
        out_shape=jax.ShapeDtypeStruct((B, S, D), q.dtype),
        grid=(B, S // Tq),
        in_specs=[qkv_q_spec, qkv_s_spec, qkv_s_spec,
                  pl.BlockSpec((None, 1, S), lambda b, i: (b, 0, 0))],
        out_specs=qkv_q_spec,
        compiler_params=pltpu.CompilerParams(
            dimension_semantics=("parallel", "parallel"),
            vmem_limit_bytes=_VMEM_LIMIT_BYTES),
        cost_estimate=pl.CostEstimate(
            flops=4 * B * S * S * D,
            transcendentals=B * n_heads * S * S,
            bytes_accessed=4 * (B * S * D * 4 + B * S)),
    )(q, k, v, mech3)


# ---------------------------------------------------------------------------
# Module forward (composition of kernels)
# ---------------------------------------------------------------------------
def position_timing_layer(p, x, positions=None, timings=None):
    B, S, D = x.shape
    w_t, b = p["integration"]
    if positions is None and timings is None:
        # positions == timings == arange(S): identical across the batch ->
        # project the (S, D) table once and broadcast-add (no (B,S,D) temp).
        e_s = jnp.concatenate([p["pos_emb"][:S], p["time_emb"][:S]], axis=-1)
        proj_s = linear(e_s, w_t, b)                       # (S, D)
        return broadcast_add(x, proj_s)
    # TODO(synk): arbitrary positions/timings use an XLA gather for the embedding.
    if positions is None:
        positions = jnp.broadcast_to(jnp.arange(S, dtype=jnp.int32)[None], (B, S))
    if timings is None:
        timings = positions
    e = jnp.concatenate([p["pos_emb"][positions], p["time_emb"][timings]], axis=-1)
    out2 = linear(e.reshape(B * S, D), w_t, b, residual=x.reshape(B * S, D))
    return out2.reshape(B, S, D)


def transformer_block(p, x, n_heads):
    B, S, D = x.shape
    x = position_timing_layer(p["pos_time"], x)
    x2 = x.reshape(B * S, D)

    # --- Mechanism attention (norm1 fused into the QKV + mech projection) ---
    q, k, v, mech = qkvm_projection(x2, p["norm1"], p["attn"], D)
    mech_bs = mech.reshape(B, S)
    ctx = attention_core(q.reshape(B, S, D), k.reshape(B, S, D),
                         v.reshape(B, S, D), mech_bs.reshape(B, 1, S),
                         n_heads=n_heads)
    x2 = linear(ctx.reshape(B * S, D), *p["attn"]["out"], residual=x2)

    # --- Five elements folded into one matmul; norm2 + residual fused ---
    w = jax.nn.softmax(p["five"]["element_weights"])
    w_t_comb = jnp.einsum("k,kio->io", w, p["five"]["w_t"])
    b_comb = w @ p["five"]["b"]
    x2 = linear(x2, w_t_comb, b_comb, ln=p["norm2"], residual="input")

    # --- Feed-forward: norm3 fused into ff1, residual fused into ff2 ---
    f1 = linear(x2, *p["ff1"], activation="gelu", ln=p["norm3"])
    x2 = linear(f1, *p["ff2"], residual=x2)
    # TODO(synk): dropout layers are identity (inference / model.eval()).
    return x2.reshape(B, S, D), mech_bs, w


def mechanism_transformer_forward(params, x, *, n_heads):
    """Forward pass of MechanismTransformer (mask=None path)."""
    # TODO(synk): the optional attention `mask` argument is not implemented.
    B, S, D = x.shape
    x = linear(x.reshape(B * S, D), *params["embedding"]).reshape(B, S, D)
    all_mech, all_elem = [], []
    for bp in params["blocks"]:
        x, mech, elem_w = transformer_block(bp, x, n_heads)
        all_mech.append(mech)
        all_elem.append(elem_w)
    xf = layernorm(x.reshape(B * S, D), *params["norm"]).reshape(B, S, D)
    return xf, all_mech, all_elem


# ---------------------------------------------------------------------------
# Parameter construction (deterministic; mirrors the PyTorch __init__ structure)
# ---------------------------------------------------------------------------
def make_sinusoidal_embedding(max_seq_len, half_dim, base):
    emb = jnp.zeros((max_seq_len, half_dim), dtype=jnp.float32)
    position = jnp.arange(0, max_seq_len, dtype=jnp.float32)[:, None]
    div_term = jnp.exp(jnp.arange(0, half_dim, 2, dtype=jnp.float32)
                       * -(math.log(base) / half_dim))
    sin_vals = jnp.sin(position * div_term)
    cos_vals = jnp.cos(position * div_term)
    emb = emb.at[:, 0::2].set(sin_vals)
    emb = emb.at[:, 1::2].set(cos_vals[:, : emb[:, 1::2].shape[1]])
    return emb


def _linear_init(key, fan_in, fan_out):
    kw, kb = jax.random.split(key)
    bound = 1.0 / math.sqrt(fan_in)
    w = jax.random.uniform(kw, (fan_out, fan_in), jnp.float32, -bound, bound)
    b = jax.random.uniform(kb, (fan_out,), jnp.float32, -bound, bound)
    return w.T, b   # stored pre-transposed (in, out): no per-call weight.T


def _five_elements_init(key, d):
    k_fire, k_metal, k_bias = jax.random.split(key, 3)
    eye = jnp.eye(d, dtype=jnp.float32)
    wood = 1.2 * eye
    fire = eye + 0.1 * jax.random.normal(k_fire, (d, d), jnp.float32)
    earth = 0.8 * eye
    metal = eye * (jax.random.uniform(k_metal, (d, d)) > 0.7).astype(jnp.float32)
    water = eye + 0.5 * (jnp.eye(d, k=1, dtype=jnp.float32)
                         + jnp.eye(d, k=-1, dtype=jnp.float32))
    ws = jnp.stack([wood, fire, earth, metal, water])          # (5, out, in)
    bound = 1.0 / math.sqrt(d)
    bs = jax.random.uniform(k_bias, (5, d), jnp.float32, -bound, bound)
    return {"w_t": jnp.transpose(ws, (0, 2, 1)),               # (5, in, out)
            "b": bs,
            "element_weights": jnp.ones((5,), jnp.float32) / 5.0}


def _block_init(key, d, d_ff, max_seq_len):
    ks = jax.random.split(key, 10)
    ln = lambda: (jnp.ones((d,), jnp.float32), jnp.zeros((d,), jnp.float32))
    q = _linear_init(ks[1], d, d)
    k = _linear_init(ks[2], d, d)
    v = _linear_init(ks[3], d, d)
    out = _linear_init(ks[4], d, d)
    m1 = _linear_init(ks[5], d, d // 2)
    m2 = _linear_init(ks[6], d // 2, 1)
    attn = {
        "q": q, "k": k, "v": v, "out": out, "mech1": m1, "mech2": m2,
        # Fused projection: one (d, 3d + d/2) matmul produces q|k|v|m1.
        "qkvm_w_t": jnp.concatenate([q[0], k[0], v[0], m1[0]], axis=1),
        "qkvm_b": jnp.concatenate([q[1], k[1], v[1], m1[1]]),
        # mech2 in row-form so the mechanism output is written lane-dense (1, M).
        "mech2_row": m2[0].T,                                  # (1, d//2)
        "mech2_b": m2[1],                                      # (1,)
    }
    return {
        "pos_time": {
            "pos_emb": make_sinusoidal_embedding(max_seq_len, d // 2, 10000.0),
            "time_emb": make_sinusoidal_embedding(max_seq_len, d // 2, 5000.0),
            "integration": _linear_init(ks[0], d, d),
        },
        "attn": attn,
        "five": _five_elements_init(ks[7], d),
        "norm1": ln(), "norm2": ln(), "norm3": ln(),
        "ff1": _linear_init(ks[8], d, d_ff),
        "ff2": _linear_init(ks[9], d_ff, d),
    }


def init_params(key, *, d_model, n_layers, d_ff, max_seq_len):
    keys = jax.random.split(key, n_layers + 1)
    return {
        "embedding": _linear_init(keys[0], d_model, d_model),
        "blocks": [_block_init(keys[i + 1], d_model, d_ff, max_seq_len)
                   for i in range(n_layers)],
        "norm": (jnp.ones((d_model,), jnp.float32),
                 jnp.zeros((d_model,), jnp.float32)),
    }


# ---------------------------------------------------------------------------
# Pure-JAX reference (un-fused, faithful to the PyTorch forward) for validation
# ---------------------------------------------------------------------------
def _ref_layernorm(x, g, b, eps=1e-5):
    m = jnp.mean(x, axis=-1, keepdims=True)
    v = jnp.mean(jnp.square(x - m), axis=-1, keepdims=True)
    return (x - m) / jnp.sqrt(v + eps) * g + b


def _ref_attention(p, h, n_heads):
    B, S, D = h.shape
    dh = D // n_heads
    lin = lambda name, inp: inp @ p[name][0] + p[name][1]
    q = lin("q", h).reshape(B, S, n_heads, dh).transpose(0, 2, 1, 3)
    k = lin("k", h).reshape(B, S, n_heads, dh).transpose(0, 2, 1, 3)
    v = lin("v", h).reshape(B, S, n_heads, dh).transpose(0, 2, 1, 3)
    scores = jnp.einsum("bhqd,bhkd->bhqk", q, k) / math.sqrt(dh)
    mech = jax.nn.sigmoid(lin("mech2", _gelu(lin("mech1", h))))[..., 0]   # (B, S)
    scores = scores * (1.0 + mech[:, None, None, :])
    attn = jax.nn.softmax(scores, axis=-1)
    ctx = jnp.einsum("bhqk,bhkd->bhqd", attn, v).transpose(0, 2, 1, 3).reshape(B, S, D)
    return lin("out", ctx), mech


def _ref_block(p, x, n_heads):
    B, S, D = x.shape
    pos = jnp.arange(S)
    e = jnp.concatenate([p["pos_time"]["pos_emb"][pos],
                         p["pos_time"]["time_emb"][pos]], axis=-1)
    wt, b = p["pos_time"]["integration"]
    x = x + (e @ wt + b)[None]

    h1 = _ref_layernorm(x, *p["norm1"])
    attn_out, mech = _ref_attention(p["attn"], h1, n_heads)
    x = x + attn_out

    h2 = _ref_layernorm(x, *p["norm2"])
    w = jax.nn.softmax(p["five"]["element_weights"])
    five_out = sum(w[i] * (h2 @ p["five"]["w_t"][i] + p["five"]["b"][i])
                   for i in range(5))
    x = x + five_out

    h3 = _ref_layernorm(x, *p["norm3"])
    f1 = _gelu(h3 @ p["ff1"][0] + p["ff1"][1])
    x = x + (f1 @ p["ff2"][0] + p["ff2"][1])
    return x, mech, w


def reference_forward(params, x, *, n_heads):
    x = x @ params["embedding"][0] + params["embedding"][1]
    mechs, elems = [], []
    for bp in params["blocks"]:
        x, m, w = _ref_block(bp, x, n_heads)
        mechs.append(m)
        elems.append(w)
    return _ref_layernorm(x, *params["norm"]), mechs, elems


if __name__ == "__main__":
    # Keep reference matmuls in true f32 so the tolerance check is meaningful.
    jax.config.update("jax_default_matmul_precision", "float32")

    B, S, D = 2, 8, 32                      # small shapes consistent with the module
    N_HEADS, N_LAYERS, D_FF, MAX_SEQ_LEN = 4, 2, 64, 64

    key = jax.random.PRNGKey(0)
    k_params, k_x = jax.random.split(key)
    params = init_params(k_params, d_model=D, n_layers=N_LAYERS, d_ff=D_FF,
                         max_seq_len=MAX_SEQ_LEN)
    x = jax.random.normal(k_x, (B, S, D), jnp.float32)

    fwd = jax.jit(functools.partial(mechanism_transformer_forward, n_heads=N_HEADS))
    out, mech_strengths, elem_weights = fwd(params, x)
    out = jax.block_until_ready(out)

    ref_out, ref_mech, ref_elem = reference_forward(params, x, n_heads=N_HEADS)
    assert out.shape == (B, S, D)
    assert len(mech_strengths) == N_LAYERS and len(elem_weights) == N_LAYERS
    assert jnp.allclose(out, ref_out, atol=2e-4, rtol=2e-4), (
        "output mismatch, max abs err = %e" % float(jnp.max(jnp.abs(out - ref_out))))
    for m, rm in zip(mech_strengths, ref_mech):
        assert m.shape == (B, S)
        assert jnp.allclose(m, rm, atol=2e-4, rtol=2e-4), "mechanism strengths mismatch"
    for w, rw in zip(elem_weights, ref_elem):
        assert jnp.allclose(w, rw, atol=1e-6), "element weights mismatch"

    print("KERNEL_OK")
</pallas_src>

<mosaic_0001>
module attributes {stable_mosaic.version = 11 : i64} {
  func.func @kernel(%arg0: i32, %arg1: i32, %arg2: memref<16x32xf32, #tpu.memory_space<vmem>>, %arg3: memref<32x32xf32, #tpu.memory_space<vmem>>, %arg4: memref<1x32xf32, #tpu.memory_space<vmem>>, %arg5: memref<16x32xf32, #tpu.memory_space<vmem>>) attributes {dimension_semantics = [#tpu.dimension_semantics<parallel>, #tpu.dimension_semantics<parallel>], iteration_bounds = array<i64: 1, 1>, scalar_prefetch = 0 : i64, scratch_operands = 0 : i64, tpu.core_type = #tpu.core_type<tc>, window_params = [{transform_indices = @transform_0, window_bounds = array<i64: 16, 32>}, {transform_indices = @transform_1, window_bounds = array<i64: 32, 32>}, {transform_indices = @transform_2, window_bounds = array<i64: 1, 32>}, {transform_indices = @transform_3, window_bounds = array<i64: 16, 32>}]} {
    %c0 = arith.constant 0 : index
    %c0_0 = arith.constant 0 : index
    %0 = vector.load %arg2[%c0, %c0_0] : memref<16x32xf32, #tpu.memory_space<vmem>>, vector<16x32xf32>
    %c0_1 = arith.constant 0 : index
    %c0_2 = arith.constant 0 : index
    %1 = vector.load %arg3[%c0_1, %c0_2] : memref<32x32xf32, #tpu.memory_space<vmem>>, vector<32x32xf32>
    %cst = arith.constant dense<0.000000e+00> : vector<16x32xf32>
    %2 = tpu.matmul %0, %1, %cst {dimension_numbers = #tpu.dot_dimension_numbers<[1], [0], [0], [1], [0, 0, 1, 1], [], []>, precision = #tpu.contract_precision<fp32>} : vector<16x32xf32>, vector<32x32xf32>, vector<16x32xf32> -> vector<16x32xf32>
    %c0_3 = arith.constant 0 : index
    %c0_4 = arith.constant 0 : index
    %3 = vector.load %arg4[%c0_3, %c0_4] : memref<1x32xf32, #tpu.memory_space<vmem>>, vector<1x32xf32>
    %4 = vector.broadcast %3 : vector<1x32xf32> to vector<16x32xf32>
    %5 = arith.addf %2, %4 : vector<16x32xf32>
    %c0_5 = arith.constant 0 : index
    %c0_6 = arith.constant 0 : index
    %6 = vector.load %arg5[%c0_5, %c0_6] : memref<16x32xf32, #tpu.memory_space<vmem>>, vector<16x32xf32>
    tpu.vector_store %arg5[%c0_5, %c0_6], %5 {strides = array<i32>} : memref<16x32xf32, #tpu.memory_space<vmem>>, vector<16x32xf32>,
    return
  }
  func.func @transform_0(%arg0: i32, %arg1: i32) -> (i32, i32) {
    %c0_i32 = arith.constant 0 : i32
    %c0_i32_0 = arith.constant 0 : i32
    return %arg0, %c0_i32 : i32, i32
  }
  func.func @transform_1(%arg0: i32, %arg1: i32) -> (i32, i32) {
    %c0_i32 = arith.constant 0 : i32
    %c0_i32_0 = arith.constant 0 : i32
    return %c0_i32, %arg1 : i32, i32
  }
  func.func @transform_2(%arg0: i32, %arg1: i32) -> (i32, i32) {
    %c0_i32 = arith.constant 0 : i32
    %c0_i32_0 = arith.constant 0 : i32
    return %c0_i32, %arg1 : i32, i32
  }
  func.func @transform_3(%arg0: i32, %arg1: i32) -> (i32, i32) {
    %c0_i32 = arith.constant 0 : i32
    return %arg0, %arg1 : i32, i32
  }
}

module attributes {stable_mosaic.version = 11 : i64} {
  func.func @kernel(%arg0: i32, %arg1: i32, %arg2: memref<8x32xf32, #tpu.memory_space<vmem>>, %arg3: memref<32x32xf32, #tpu.memory_space<vmem>>, %arg4: memref<1x32xf32, #tpu.memory_space<vmem>>, %arg5: memref<8x32xf32, #tpu.memory_space<vmem>>) attributes {dimension_semantics = [#tpu.dimension_semantics<parallel>, #tpu.dimension_semantics<parallel>], iteration_bounds = array<i64: 1, 1>, scalar_prefetch = 0 : i64, scratch_operands = 0 : i64, tpu.core_type = #tpu.core_type<tc>, window_params = [{transform_indices = @transform_0, window_bounds = array<i64: 8, 32>}, {transform_indices = @transform_1, window_bounds = array<i64: 32, 32>}, {transform_indices = @transform_2, window_bounds = array<i64: 1, 32>}, {transform_indices = @transform_3, window_bounds = array<i64: 8, 32>}]} {
    %c0 = arith.constant 0 : index
    %c0_0 = arith.constant 0 : index
    %0 = vector.load %arg2[%c0, %c0_0] : memref<8x32xf32, #tpu.memory_space<vmem>>, vector<8x32xf32>
    %c0_1 = arith.constant 0 : index
    %c0_2 = arith.constant 0 : index
    %1 = vector.load %arg3[%c0_1, %c0_2] : memref<32x32xf32, #tpu.memory_space<vmem>>, vector<32x32xf32>
    %cst = arith.constant dense<0.000000e+00> : vector<8x32xf32>
    %2 = tpu.matmul %0, %1, %cst {dimension_numbers = #tpu.dot_dimension_numbers<[1], [0], [0], [1], [0, 0, 1, 1], [], []>, precision = #tpu.contract_precision<fp32>} : vector<8x32xf32>, vector<32x32xf32>, vector<8x32xf32> -> vector<8x32xf32>
    %c0_3 = arith.constant 0 : index
    %c0_4 = arith.constant 0 : index
    %3 = vector.load %arg4[%c0_3, %c0_4] : memref<1x32xf32, #tpu.memory_space<vmem>>, vector<1x32xf32>
    %4 = vector.broadcast %3 : vector<1x32xf32> to vector<8x32xf32>
    %5 = arith.addf %2, %4 : vector<8x32xf32>
    %c0_5 = arith.constant 0 : index
    %c0_6 = arith.constant 0 : index
    %6 = vector.load %arg5[%c0_5, %c0_6] : memref<8x32xf32, #tpu.memory_space<vmem>>, vector<8x32xf32>
    tpu.vector_store %arg5[%c0_5, %c0_6], %5 {strides = array<i32>} : memref<8x32xf32, #tpu.memory_space<vmem>>, vector<8x32xf32>,
    return
  }
  func.func @transform_0(%arg0: i32, %arg1: i32) -> (i32, i32) {
    %c0_i32 = arith.constant 0 : i32
    %c0_i32_0 = arith.constant 0 : i32
    return %arg0, %c0_i32 : i32, i32
  }
  func.func @transform_1(%arg0: i32, %arg1: i32) -> (i32, i32) {
    %c0_i32 = arith.constant 0 : i32
    %c0_i32_0 = arith.constant 0 : i32
    return %c0_i32, %arg1 : i32, i32
  }
  func.func @transform_2(%arg0: i32, %arg1: i32) -> (i32, i32) {
    %c0_i32 = arith.constant 0 : i32
    %c0_i32_0 = arith.constant 0 : i32
    return %c0_i32, %arg1 : i32, i32
  }
  func.func @transform_3(%arg0: i32, %arg1: i32) -> (i32, i32) {
    %c0_i32 = arith.constant 0 : i32
    return %arg0, %arg1 : i32, i32
  }
}

module attributes {stable_mosaic.version = 11 : i64} {
  func.func @_bcast_add_kernel(%arg0: i32, %arg1: i32, %arg2: memref<1x8x32xf32, #tpu.memory_space<vmem>>, %arg3: memref<8x32xf32, #tpu.memory_space<vmem>>, %arg4: memref<1x8x32xf32, #tpu.memory_space<vmem>>) attributes {dimension_semantics = [#tpu.dimension_semantics<parallel>, #tpu.dimension_semantics<parallel>], iteration_bounds = array<i64: 2, 1>, scalar_prefetch = 0 : i64, scratch_operands = 0 : i64, tpu.core_type = #tpu.core_type<tc>, window_params = [{transform_indices = @transform_0, window_bounds = array<i64: 1, 8, 32>}, {transform_indices = @transform_1, window_bounds = array<i64: 8, 32>}, {transform_indices = @transform_2, window_bounds = array<i64: 1, 8, 32>}]} {
    %c0 = arith.constant 0 : index
    %c0_0 = arith.constant 0 : index
    %c0_1 = arith.constant 0 : index
    %0 = vector.load %arg2[%c0, %c0_0, %c0_1] : memref<1x8x32xf32, #tpu.memory_space<vmem>>, vector<1x8x32xf32>
    %1 = vector.shape_cast %0 : vector<1x8x32xf32> to vector<8x32xf32>
    %c0_2 = arith.constant 0 : index
    %c0_3 = arith.constant 0 : index
    %2 = vector.load %arg3[%c0_2, %c0_3] : memref<8x32xf32, #tpu.memory_space<vmem>>, vector<8x32xf32>
    %3 = arith.addf %1, %2 : vector<8x32xf32>
    %c0_4 = arith.constant 0 : index
    %c0_5 = arith.constant 0 : index
    %c0_6 = arith.constant 0 : index
    %4 = vector.load %arg4[%c0_4, %c0_5, %c0_6] : memref<1x8x32xf32, #tpu.memory_space<vmem>>, vector<1x8x32xf32>
    %5 = vector.shape_cast %4 : vector<1x8x32xf32> to vector<8x32xf32>
    %6 = vector.shape_cast %3 : vector<8x32xf32> to vector<1x8x32xf32>
    tpu.vector_store %arg4[%c0_4, %c0_5, %c0_6], %6 {strides = array<i32>} : memref<1x8x32xf32, #tpu.memory_space<vmem>>, vector<1x8x32xf32>,
    return
  }
  func.func @transform_0(%arg0: i32, %arg1: i32) -> (i32, i32, i32) {
    %c0_i32 = arith.constant 0 : i32
    %c0_i32_0 = arith.constant 0 : i32
    return %arg0, %arg1, %c0_i32 : i32, i32, i32
  }
  func.func @transform_1(%arg0: i32, %arg1: i32) -> (i32, i32) {
    %c0_i32 = arith.constant 0 : i32
    %c0_i32_0 = arith.constant 0 : i32
    return %arg1, %c0_i32 : i32, i32
  }
  func.func @transform_2(%arg0: i32, %arg1: i32) -> (i32, i32, i32) {
    %c0_i32 = arith.constant 0 : i32
    %c0_i32_0 = arith.constant 0 : i32
    return %arg0, %arg1, %c0_i32 : i32, i32, i32
  }
}

module attributes {stable_mosaic.version = 11 : i64} {
  func.func @_qkvm_kernel(%arg0: i32, %arg1: memref<16x32xf32, #tpu.memory_space<vmem>>, %arg2: memref<1x32xf32, #tpu.memory_space<vmem>>, %arg3: memref<1x32xf32, #tpu.memory_space<vmem>>, %arg4: memref<32x112xf32, #tpu.memory_space<vmem>>, %arg5: memref<1x112xf32, #tpu.memory_space<vmem>>, %arg6: memref<1x16xf32, #tpu.memory_space<vmem>>, %arg7: memref<1x1xf32, #tpu.memory_space<vmem>>, %arg8: memref<16x32xf32, #tpu.memory_space<vmem>>, %arg9: memref<16x32xf32, #tpu.memory_space<vmem>>, %arg10: memref<16x32xf32, #tpu.memory_space<vmem>>, %arg11: memref<1x16xf32, #tpu.memory_space<vmem>>) attributes {dimension_semantics = [#tpu.dimension_semantics<parallel>], iteration_bounds = array<i64: 1>, scalar_prefetch = 0 : i64, scratch_operands = 0 : i64, tpu.core_type = #tpu.core_type<tc>, window_params = [{transform_indices = @transform_0, window_bounds = array<i64: 16, 32>}, {pipeline_mode = #tpu.pipeline_mode<synchronous>, transform_indices = @transform_1, window_bounds = array<i64: 1, 32>}, {pipeline_mode = #tpu.pipeline_mode<synchronous>, transform_indices = @transform_2, window_bounds = array<i64: 1, 32>}, {pipeline_mode = #tpu.pipeline_mode<synchronous>, transform_indices = @transform_3, window_bounds = array<i64: 32, 112>}, {pipeline_mode = #tpu.pipeline_mode<synchronous>, transform_indices = @transform_4, window_bounds = array<i64: 1, 112>}, {pipeline_mode = #tpu.pipeline_mode<synchronous>, transform_indices = @transform_5, window_bounds = array<i64: 1, 16>}, {pipeline_mode = #tpu.pipeline_mode<synchronous>, transform_indices = @transform_6, window_bounds = array<i64: 1, 1>}, {transform_indices = @transform_7, window_bounds = array<i64: 16, 32>}, {transform_indices = @transform_8, window_bounds = array<i64: 16, 32>}, {transform_indices = @transform_9, window_bounds = array<i64: 16, 32>}, {transform_indices = @transform_10, window_bounds = array<i64: 1, 16>}]} {
    %c0 = arith.constant 0 : index
    %c0_0 = arith.constant 0 : index
    %0 = vector.load %arg1[%c0, %c0_0] : memref<16x32xf32, #tpu.memory_space<vmem>>, vector<16x32xf32>
    %cst = arith.constant dense<0.000000e+00> : vector<16xf32>
    %1 = vector.multi_reduction <add>, %0, %cst [1] : vector<16x32xf32> to vector<16xf32>
    %2 = vector.shape_cast %1 : vector<16xf32> to vector<16x1xf32>
    %cst_1 = arith.constant 3.200000e+01 : f32
    %3 = vector.broadcast %cst_1 : f32 to vector<16x1xf32>
    %4 = arith.divf %2, %3 : vector<16x1xf32>
    %5 = vector.broadcast %4 : vector<16x1xf32> to vector<16x32xf32>
    %6 = arith.subf %0, %5 : vector<16x32xf32>
    %7 = arith.mulf %6, %6 : vector<16x32xf32>
    %cst_2 = arith.constant dense<0.000000e+00> : vector<16xf32>
    %8 = vector.multi_reduction <add>, %7, %cst_2 [1] : vector<16x32xf32> to vector<16xf32>
    %9 = vector.shape_cast %8 : vector<16xf32> to vector<16x1xf32>
    %cst_3 = arith.constant 3.200000e+01 : f32
    %10 = vector.broadcast %cst_3 : f32 to vector<16x1xf32>
    %11 = arith.divf %9, %10 : vector<16x1xf32>
    %12 = vector.broadcast %4 : vector<16x1xf32> to vector<16x32xf32>
    %13 = arith.subf %0, %12 : vector<16x32xf32>
    %cst_4 = arith.constant 9.99999974E-6 : f32
    %14 = vector.broadcast %cst_4 : f32 to vector<16x1xf32>
    %15 = arith.addf %11, %14 : vector<16x1xf32>
    %16 = math.rsqrt %15 : vector<16x1xf32>
    %17 = vector.broadcast %16 : vector<16x1xf32> to vector<16x32xf32>
    %18 = arith.mulf %13, %17 : vector<16x32xf32>
    %c0_5 = arith.constant 0 : index
    %c0_6 = arith.constant 0 : index
    %19 = vector.load %arg2[%c0_5, %c0_6] : memref<1x32xf32, #tpu.memory_space<vmem>>, vector<1x32xf32>
    %20 = vector.broadcast %19 : vector<1x32xf32> to vector<16x32xf32>
    %21 = arith.mulf %18, %20 : vector<16x32xf32>
    %c0_7 = arith.constant 0 : index
    %c0_8 = arith.constant 0 : index
    %22 = vector.load %arg3[%c0_7, %c0_8] : memref<1x32xf32, #tpu.memory_space<vmem>>, vector<1x32xf32>
    %23 = vector.broadcast %22 : vector<1x32xf32> to vector<16x32xf32>
    %24 = arith.addf %21, %23 : vector<16x32xf32>
    %c0_9 = arith.constant 0 : index
    %c0_10 = arith.constant 0 : index
    %25 = vector.load %arg4[%c0_9, %c0_10] : memref<32x112xf32, #tpu.memory_space<vmem>>, vector<32x112xf32>
    %cst_11 = arith.constant dense<0.000000e+00> : vector<16x112xf32>
    %26 = tpu.matmul %24, %25, %cst_11 {dimension_numbers = #tpu.dot_dimension_numbers<[1], [0], [0], [1], [0, 0, 1, 1], [], []>, precision = #tpu.contract_precision<fp32>} : vector<16x32xf32>, vector<32x112xf32>, vector<16x112xf32> -> vector<16x112xf32>
    %c0_12 = arith.constant 0 : index
    %c0_13 = arith.constant 0 : index
    %27 = vector.load %arg5[%c0_12, %c0_13] : memref<1x112xf32, #tpu.memory_space<vmem>>, vector<1x112xf32>
    %28 = vector.broadcast %27 : vector<1x112xf32> to vector<16x112xf32>
    %29 = arith.addf %26, %28 : vector<16x112xf32>
    %30 = vector.extract_strided_slice %29 {offsets = [0, 0], sizes = [16, 32], strides = [1, 1]} : vector<16x112xf32> to vector<16x32xf32>
    %c0_14 = arith.constant 0 : index
    %c0_15 = arith.constant 0 : index
    %31 = vector.load %arg8[%c0_14, %c0_15] : memref<16x32xf32, #tpu.memory_space<vmem>>, vector<16x32xf32>
    tpu.vector_store %arg8[%c0_14, %c0_15], %30 {strides = array<i32>} : memref<16x32xf32, #tpu.memory_space<vmem>>, vector<16x32xf32>,
    %32 = vector.extract_strided_slice %29 {offsets = [0, 32], sizes = [16, 32], strides = [1, 1]} : vector<16x112xf32> to vector<16x32xf32>
    %c0_16 = arith.constant 0 : index
    %c0_17 = arith.constant 0 : index
    %33 = vector.load %arg9[%c0_16, %c0_17] : memref<16x32xf32, #tpu.memory_space<vmem>>, vector<16x32xf32>
    tpu.vector_store %arg9[%c0_16, %c0_17], %32 {strides = array<i32>} : memref<16x32xf32, #tpu.memory_space<vmem>>, vector<16x32xf32>,
    %34 = vector.extract_strided_slice %29 {offsets = [0, 64], sizes = [16, 32], strides = [1, 1]} : vector<16x112xf32> to vector<16x32xf32>
    %c0_18 = arith.constant 0 : index
    %c0_19 = arith.constant 0 : index
    %35 = vector.load %arg10[%c0_18, %c0_19] : memref<16x32xf32, #tpu.memory_space<vmem>>, vector<16x32xf32>
    tpu.vector_store %arg10[%c0_18, %c0_19], %34 {strides = array<i32>} : memref<16x32xf32, #tpu.memory_space<vmem>>, vector<16x32xf32>,
    %36 = vector.extract_strided_slice %29 {offsets = [0, 96], sizes = [16, 16], strides = [1, 1]} : vector<16x112xf32> to vector<16x16xf32>
    %cst_20 = arith.constant 5.000000e-01 : f32
    %37 = vector.broadcast %cst_20 : f32 to vector<16x16xf32>
    %38 = arith.mulf %37, %36 : vector<16x16xf32>
    %cst_21 = arith.constant 4.471500e-02 : f32
    %39 = vector.broadcast %cst_21 : f32 to vector<16x16xf32>
    %40 = arith.mulf %39, %36 : vector<16x16xf32>
    %41 = arith.mulf %40, %36 : vector<16x16xf32>
    %42 = arith.mulf %41, %36 : vector<16x16xf32>
    %43 = arith.addf %36, %42 : vector<16x16xf32>
    %cst_22 = arith.constant 0.797884583 : f32
    %44 = vector.broadcast %cst_22 : f32 to vector<16x16xf32>
    %45 = arith.mulf %44, %43 : vector<16x16xf32>
    %46 = math.tanh %45 : vector<16x16xf32>
    %cst_23 = arith.constant 1.000000e+00 : f32
    %47 = vector.broadcast %cst_23 : f32 to vector<16x16xf32>
    %48 = arith.addf %47, %46 : vector<16x16xf32>
    %49 = arith.mulf %38, %48 : vector<16x16xf32>
    %c0_24 = arith.constant 0 : index
    %c0_25 = arith.constant 0 : index
    %50 = vector.load %arg6[%c0_24, %c0_25] : memref<1x16xf32, #tpu.memory_space<vmem>>, vector<1x16xf32>
    %cst_26 = arith.constant dense<0.000000e+00> : vector<1x16xf32>
    %51 = tpu.matmul %50, %49, %cst_26 {dimension_numbers = #tpu.dot_dimension_numbers<[1], [1], [0], [0], [0, 0, 1, 0], [], []>, precision = #tpu.contract_precision<fp32>} : vector<1x16xf32>, vector<16x16xf32>, vector<1x16xf32> -> vector<1x16xf32>
    %c0_27 = arith.constant 0 : index
    %c0_28 = arith.constant 0 : index
    %52 = vector.load %arg7[%c0_27, %c0_28] : memref<1x1xf32, #tpu.memory_space<vmem>>, vector<1x1xf32>
    %53 = vector.broadcast %52 : vector<1x1xf32> to vector<1x16xf32>
    %54 = arith.addf %51, %53 : vector<1x16xf32>
    %cst_29 = arith.constant 0.000000e+00 : f32
    %55 = vector.broadcast %cst_29 : f32 to vector<1x16xf32>
    %56 = arith.subf %55, %54 : vector<1x16xf32>
    %57 = math.exp %56 : vector<1x16xf32>
    %cst_30 = arith.constant 1.000000e+00 : f32
    %58 = vector.broadcast %cst_30 : f32 to vector<1x16xf32>
    %59 = arith.addf %58, %57 : vector<1x16xf32>
    %cst_31 = arith.constant 1.000000e+00 : f32
    %60 = vector.broadcast %cst_31 : f32 to vector<1x16xf32>
    %61 = arith.divf %60, %59 : vector<1x16xf32>
    %c0_32 = arith.constant 0 : index
    %c0_33 = arith.constant 0 : index
    %62 = vector.load %arg11[%c0_32, %c0_33] : memref<1x16xf32, #tpu.memory_space<vmem>>, vector<1x16xf32>
    tpu.vector_store %arg11[%c0_32, %c0_33], %61 {strides = array<i32>} : memref<1x16xf32, #tpu.memory_space<vmem>>, vector<1x16xf32>,
    return
  }
  func.func @transform_0(%arg0: i32) -> (i32, i32) {
    %c0_i32 = arith.constant 0 : i32
    %c0_i32_0 = arith.constant 0 : i32
    return %arg0, %c0_i32 : i32, i32
  }
  func.func @transform_1(%arg0: i32) -> (i32, i32) {
    %c0_i32 = arith.constant 0 : i32
    %c0_i32_0 = arith.constant 0 : i32
    %c0_i32_1 = arith.constant 0 : i32
    return %c0_i32, %c0_i32_0 : i32, i32
  }
  func.func @transform_2(%arg0: i32) -> (i32, i32) {
    %c0_i32 = arith.constant 0 : i32
    %c0_i32_0 = arith.constant 0 : i32
    %c0_i32_1 = arith.constant 0 : i32
    return %c0_i32, %c0_i32_0 : i32, i32
  }
  func.func @transform_3(%arg0: i32) -> (i32, i32) {
    %c0_i32 = arith.constant 0 : i32
    %c0_i32_0 = arith.constant 0 : i32
    %c0_i32_1 = arith.constant 0 : i32
    return %c0_i32, %c0_i32_0 : i32, i32
  }
  func.func @transform_4(%arg0: i32) -> (i32, i32) {
    %c0_i32 = arith.constant 0 : i32
    %c0_i32_0 = arith.constant 0 : i32
    %c0_i32_1 = arith.constant 0 : i32
    return %c0_i32, %c0_i32_0 : i32, i32
  }
  func.func @transform_5(%arg0: i32) -> (i32, i32) {
    %c0_i32 = arith.constant 0 : i32
    %c0_i32_0 = arith.constant 0 : i32
    %c0_i32_1 = arith.constant 0 : i32
    return %c0_i32, %c0_i32_0 : i32, i32
  }
  func.func @transform_6(%arg0: i32) -> (i32, i32) {
    %c0_i32 = arith.constant 0 : i32
    %c0_i32_0 = arith.constant 0 : i32
    %c0_i32_1 = arith.constant 0 : i32
    return %c0_i32, %c0_i32_0 : i32, i32
  }
  func.func @transform_7(%arg0: i32) -> (i32, i32) {
    %c0_i32 = arith.constant 0 : i32
    %c0_i32_0 = arith.constant 0 : i32
    return %arg0, %c0_i32 : i32, i32
  }
  func.func @transform_8(%arg0: i32) -> (i32, i32) {
    %c0_i32 = arith.constant 0 : i32
    %c0_i32_0 = arith.constant 0 : i32
    return %arg0, %c0_i32 : i32, i32
  }
  func.func @transform_9(%arg0: i32) -> (i32, i32) {
    %c0_i32 = arith.constant 0 : i32
    %c0_i32_0 = arith.constant 0 : i32
    return %arg0, %c0_i32 : i32, i32
  }
  func.func @transform_10(%arg0: i32) -> (i32, i32) {
    %c0_i32 = arith.constant 0 : i32
    %c0_i32_0 = arith.constant 0 : i32
    return %c0_i32, %arg0 : i32, i32
  }
}

module attributes {stable_mosaic.version = 11 : i64} {
  func.func @_attention_kernel(%arg0: i32, %arg1: i32, %arg2: memref<1x8x32xf32, #tpu.memory_space<vmem>>, %arg3: memref<1x8x32xf32, #tpu.memory_space<vmem>>, %arg4: memref<1x8x32xf32, #tpu.memory_space<vmem>>, %arg5: memref<1x1x8xf32, #tpu.memory_space<vmem>>, %arg6: memref<1x8x32xf32, #tpu.memory_space<vmem>>) attributes {dimension_semantics = [#tpu.dimension_semantics<parallel>, #tpu.dimension_semantics<parallel>], iteration_bounds = array<i64: 2, 1>, scalar_prefetch = 0 : i64, scratch_operands = 0 : i64, tpu.core_type = #tpu.core_type<tc>, window_params = [{transform_indices = @transform_0, window_bounds = array<i64: 1, 8, 32>}, {transform_indices = @transform_1, window_bounds = array<i64: 1, 8, 32>}, {transform_indices = @transform_2, window_bounds = array<i64: 1, 8, 32>}, {transform_indices = @transform_3, window_bounds = array<i64: 1, 1, 8>}, {transform_indices = @transform_4, window_bounds = array<i64: 1, 8, 32>}]} {
    %c0 = arith.constant 0 : index
    %c0_0 = arith.constant 0 : index
    %c0_1 = arith.constant 0 : index
    %0 = vector.load %arg2[%c0, %c0_0, %c0_1] : memref<1x8x32xf32, #tpu.memory_space<vmem>>, vector<1x8x32xf32>
    %1 = vector.shape_cast %0 : vector<1x8x32xf32> to vector<8x32xf32>
    %c0_2 = arith.constant 0 : index
    %c0_3 = arith.constant 0 : index
    %c0_4 = arith.constant 0 : index
    %2 = vector.load %arg3[%c0_2, %c0_3, %c0_4] : memref<1x8x32xf32, #tpu.memory_space<vmem>>, vector<1x8x32xf32>
    %3 = vector.shape_cast %2 : vector<1x8x32xf32> to vector<8x32xf32>
    %c0_5 = arith.constant 0 : index
    %c0_6 = arith.constant 0 : index
    %c0_7 = arith.constant 0 : index
    %4 = vector.load %arg4[%c0_5, %c0_6, %c0_7] : memref<1x8x32xf32, #tpu.memory_space<vmem>>, vector<1x8x32xf32>
    %5 = vector.shape_cast %4 : vector<1x8x32xf32> to vector<8x32xf32>
    %c0_8 = arith.constant 0 : index
    %c0_9 = arith.constant 0 : index
    %c0_10 = arith.constant 0 : index
    %6 = vector.load %arg5[%c0_8, %c0_9, %c0_10] : memref<1x1x8xf32, #tpu.memory_space<vmem>>, vector<1x1x8xf32>
    %7 = vector.shape_cast %6 : vector<1x1x8xf32> to vector<1x8xf32>
    %8 = vector.extract_strided_slice %1 {offsets = [0, 0], sizes = [8, 8], strides = [1, 1]} : vector<8x32xf32> to vector<8x8xf32>
    %9 = vector.extract_strided_slice %3 {offsets = [0, 0], sizes = [8, 8], strides = [1, 1]} : vector<8x32xf32> to vector<8x8xf32>
    %10 = vector.extract_strided_slice %5 {offsets = [0, 0], sizes = [8, 8], strides = [1, 1]} : vector<8x32xf32> to vector<8x8xf32>
    %cst = arith.constant dense<0.000000e+00> : vector<8x8xf32>
    %11 = tpu.matmul %8, %9, %cst {dimension_numbers = #tpu.dot_dimension_numbers<[1], [1], [0], [0], [0, 0, 1, 0], [], []>, precision = #tpu.contract_precision<fp32>} : vector<8x8xf32>, vector<8x8xf32>, vector<8x8xf32> -> vector<8x8xf32>
    %cst_11 = arith.constant 0.353553385 : f32
    %12 = vector.broadcast %cst_11 : f32 to vector<8x8xf32>
    %13 = arith.mulf %11, %12 : vector<8x8xf32>
    %cst_12 = arith.constant 1.000000e+00 : f32
    %14 = vector.broadcast %cst_12 : f32 to vector<1x8xf32>
    %15 = arith.addf %14, %7 : vector<1x8xf32>
    %16 = vector.broadcast %15 : vector<1x8xf32> to vector<8x8xf32>
    %17 = arith.mulf %13, %16 : vector<8x8xf32>
    %cst_13 = arith.constant dense<0xFF800000> : vector<8xf32>
    %18 = vector.multi_reduction <maximumf>, %17, %cst_13 [1] : vector<8x8xf32> to vector<8xf32>
    %19 = vector.shape_cast %18 : vector<8xf32> to vector<8x1xf32>
    %20 = vector.broadcast %19 : vector<8x1xf32> to vector<8x8xf32>
    %21 = arith.subf %17, %20 : vector<8x8xf32>
    %22 = math.exp %21 : vector<8x8xf32>
    %cst_14 = arith.constant dense<0.000000e+00> : vector<8xf32>
    %23 = vector.multi_reduction <add>, %22, %cst_14 [1] : vector<8x8xf32> to vector<8xf32>
    %24 = vector.shape_cast %23 : vector<8xf32> to vector<8x1xf32>
    %25 = vector.broadcast %24 : vector<8x1xf32> to vector<8x8xf32>
    %26 = arith.divf %22, %25 : vector<8x8xf32>
    %cst_15 = arith.constant dense<0.000000e+00> : vector<8x8xf32>
    %27 = tpu.matmul %26, %10, %cst_15 {dimension_numbers = #tpu.dot_dimension_numbers<[1], [0], [0], [1], [0, 0, 1, 1], [], []>, precision = #tpu.contract_precision<fp32>} : vector<8x8xf32>, vector<8x8xf32>, vector<8x8xf32> -> vector<8x8xf32>
    %28 = vector.extract_strided_slice %1 {offsets = [0, 8], sizes = [8, 8], strides = [1, 1]} : vector<8x32xf32> to vector<8x8xf32>
    %29 = vector.extract_strided_slice %3 {offsets = [0, 8], sizes = [8, 8], strides = [1, 1]} : vector<8x32xf32> to vector<8x8xf32>
    %30 = vector.extract_strided_slice %5 {offsets = [0, 8], sizes = [8, 8], strides = [1, 1]} : vector<8x32xf32> to vector<8x8xf32>
    %cst_16 = arith.constant dense<0.000000e+00> : vector<8x8xf32>
    %31 = tpu.matmul %28, %29, %cst_16 {dimension_numbers = #tpu.dot_dimension_numbers<[1], [1], [0], [0], [0, 0, 1, 0], [], []>, precision = #tpu.contract_precision<fp32>} : vector<8x8xf32>, vector<8x8xf32>, vector<8x8xf32> -> vector<8x8xf32>
    %cst_17 = arith.constant 0.353553385 : f32
    %32 = vector.broadcast %cst_17 : f32 to vector<8x8xf32>
    %33 = arith.mulf %31, %32 : vector<8x8xf32>
    %cst_18 = arith.constant 1.000000e+00 : f32
    %34 = vector.broadcast %cst_18 : f32 to vector<1x8xf32>
    %35 = arith.addf %34, %7 : vector<1x8xf32>
    %36 = vector.broadcast %35 : vector<1x8xf32> to vector<8x8xf32>
    %37 = arith.mulf %33, %36 : vector<8x8xf32>
    %cst_19 = arith.constant dense<0xFF800000> : vector<8xf32>
    %38 = vector.multi_reduction <maximumf>, %37, %cst_19 [1] : vector<8x8xf32> to vector<8xf32>
    %39 = vector.shape_cast %38 : vector<8xf32> to vector<8x1xf32>
    %40 = vector.broadcast %39 : vector<8x1xf32> to vector<8x8xf32>
    %41 = arith.subf %37, %40 : vector<8x8xf32>
    %42 = math.exp %41 : vector<8x8xf32>
    %cst_20 = arith.constant dense<0.000000e+00> : vector<8xf32>
    %43 = vector.multi_reduction <add>, %42, %cst_20 [1] : vector<8x8xf32> to vector<8xf32>
    %44 = vector.shape_cast %43 : vector<8xf32> to vector<8x1xf32>
    %45 = vector.broadcast %44 : vector<8x1xf32> to vector<8x8xf32>
    %46 = arith.divf %42, %45 : vector<8x8xf32>
    %cst_21 = arith.constant dense<0.000000e+00> : vector<8x8xf32>
    %47 = tpu.matmul %46, %30, %cst_21 {dimension_numbers = #tpu.dot_dimension_numbers<[1], [0], [0], [1], [0, 0, 1, 1], [], []>, precision = #tpu.contract_precision<fp32>} : vector<8x8xf32>, vector<8x8xf32>, vector<8x8xf32> -> vector<8x8xf32>
    %48 = vector.extract_strided_slice %1 {offsets = [0, 16], sizes = [8, 8], strides = [1, 1]} : vector<8x32xf32> to vector<8x8xf32>
    %49 = vector.extract_strided_slice %3 {offsets = [0, 16], sizes = [8, 8], strides = [1, 1]} : vector<8x32xf32> to vector<8x8xf32>
    %50 = vector.extract_strided_slice %5 {offsets = [0, 16], sizes = [8, 8], strides = [1, 1]} : vector<8x32xf32> to vector<8x8xf32>
    %cst_22 = arith.constant dense<0.000000e+00> : vector<8x8xf32>
    %51 = tpu.matmul %48, %49, %cst_22 {dimension_numbers = #tpu.dot_dimension_numbers<[1], [1], [0], [0], [0, 0, 1, 0], [], []>, precision = #tpu.contract_precision<fp32>} : vector<8x8xf32>, vector<8x8xf32>, vector<8x8xf32> -> vector<8x8xf32>
    %cst_23 = arith.constant 0.353553385 : f32
    %52 = vector.broadcast %cst_23 : f32 to vector<8x8xf32>
    %53 = arith.mulf %51, %52 : vector<8x8xf32>
    %cst_24 = arith.constant 1.000000e+00 : f32
    %54 = vector.broadcast %cst_24 : f32 to vector<1x8xf32>
    %55 = arith.addf %54, %7 : vector<1x8xf32>
    %56 = vector.broadcast %55 : vector<1x8xf32> to vector<8x8xf32>
    %57 = arith.mulf %53, %56 : vector<8x8xf32>
    %cst_25 = arith.constant dense<0xFF800000> : vector<8xf32>
    %58 = vector.multi_reduction <maximumf>, %57, %cst_25 [1] : vector<8x8xf32> to vector<8xf32>
    %59 = vector.shape_cast %58 : vector<8xf32> to vector<8x1xf32>
    %60 = vector.broadcast %59 : vector<8x1xf32> to vector<8x8xf32>
    %61 = arith.subf %57, %60 : vector<8x8xf32>
    %62 = math.exp %61 : vector<8x8xf32>
    %cst_26 = arith.constant dense<0.000000e+00> : vector<8xf32>
    %63 = vector.multi_reduction <add>, %62, %cst_26 [1] : vector<8x8xf32> to vector<8xf32>
    %64 = vector.shape_cast %63 : vector<8xf32> to vector<8x1xf32>
    %65 = vector.broadcast %64 : vector<8x1xf32> to vector<8x8xf32>
    %66 = arith.divf %62, %65 : vector<8x8xf32>
    %cst_27 = arith.constant dense<0.000000e+00> : vector<8x8xf32>
    %67 = tpu.matmul %66, %50, %cst_27 {dimension_numbers = #tpu.dot_dimension_numbers<[1], [0], [0], [1], [0, 0, 1, 1], [], []>, precision = #tpu.contract_precision<fp32>} : vector<8x8xf32>, vector<8x8xf32>, vector<8x8xf32> -> vector<8x8xf32>
    %68 = vector.extract_strided_slice %1 {offsets = [0, 24], sizes = [8, 8], strides = [1, 1]} : vector<8x32xf32> to vector<8x8xf32>
    %69 = vector.extract_strided_slice %3 {offsets = [0, 24], sizes = [8, 8], strides = [1, 1]} : vector<8x32xf32> to vector<8x8xf32>
    %70 = vector.extract_strided_slice %5 {offsets = [0, 24], sizes = [8, 8], strides = [1, 1]} : vector<8x32xf32> to vector<8x8xf32>
    %cst_28 = arith.constant dense<0.000000e+00> : vector<8x8xf32>
    %71 = tpu.matmul %68, %69, %cst_28 {dimension_numbers = #tpu.dot_dimension_numbers<[1], [1], [0], [0], [0, 0, 1, 0], [], []>, precision = #tpu.contract_precision<fp32>} : vector<8x8xf32>, vector<8x8xf32>, vector<8x8xf32> -> vector<8x8xf32>
    %cst_29 = arith.constant 0.353553385 : f32
    %72 = vector.broadcast %cst_29 : f32 to vector<8x8xf32>
    %73 = arith.mulf %71, %72 : vector<8x8xf32>
    %cst_30 = arith.constant 1.000000e+00 : f32
    %74 = vector.broadcast %cst_30 : f32 to vector<1x8xf32>
    %75 = arith.addf %74, %7 : vector<1x8xf32>
    %76 = vector.broadcast %75 : vector<1x8xf32> to vector<8x8xf32>
    %77 = arith.mulf %73, %76 : vector<8x8xf32>
    %cst_31 = arith.constant dense<0xFF800000> : vector<8xf32>
    %78 = vector.multi_reduction <maximumf>, %77, %cst_31 [1] : vector<8x8xf32> to vector<8xf32>
    %79 = vector.shape_cast %78 : vector<8xf32> to vector<8x1xf32>
    %80 = vector.broadcast %79 : vector<8x1xf32> to vector<8x8xf32>
    %81 = arith.subf %77, %80 : vector<8x8xf32>
    %82 = math.exp %81 : vector<8x8xf32>
    %cst_32 = arith.constant dense<0.000000e+00> : vector<8xf32>
    %83 = vector.multi_reduction <add>, %82, %cst_32 [1] : vector<8x8xf32> to vector<8xf32>
    %84 = vector.shape_cast %83 : vector<8xf32> to vector<8x1xf32>
    %85 = vector.broadcast %84 : vector<8x1xf32> to vector<8x8xf32>
    %86 = arith.divf %82, %85 : vector<8x8xf32>
    %cst_33 = arith.constant dense<0.000000e+00> : vector<8x8xf32>
    %87 = tpu.matmul %86, %70, %cst_33 {dimension_numbers = #tpu.dot_dimension_numbers<[1], [0], [0], [1], [0, 0, 1, 1], [], []>, precision = #tpu.contract_precision<fp32>} : vector<8x8xf32>, vector<8x8xf32>, vector<8x8xf32> -> vector<8x8xf32>
    %88 = tpu.concatenate %27, %47, %67, %87 in 1 : vector<8x8xf32>, vector<8x8xf32>, vector<8x8xf32>, vector<8x8xf32> -> vector<8x32xf32>
    %c0_34 = arith.constant 0 : index
    %c0_35 = arith.constant 0 : index
    %c0_36 = arith.constant 0 : index
    %89 = vector.load %arg6[%c0_34, %c0_35, %c0_36] : memref<1x8x32xf32, #tpu.memory_space<vmem>>, vector<1x8x32xf32>
    %90 = vector.shape_cast %89 : vector<1x8x32xf32> to vector<8x32xf32>
    %91 = vector.shape_cast %88 : vector<8x32xf32> to vector<1x8x32xf32>
    tpu.vector_store %arg6[%c0_34, %c0_35, %c0_36], %91 {strides = array<i32>} : memref<1x8x32xf32, #tpu.memory_space<vmem>>, vector<1x8x32xf32>,
    return
  }
  func.func @transform_0(%arg0: i32, %arg1: i32) -> (i32, i32, i32) {
    %c0_i32 = arith.constant 0 : i32
    %c0_i32_0 = arith.constant 0 : i32
    return %arg0, %arg1, %c0_i32 : i32, i32, i32
  }
  func.func @transform_1(%arg0: i32, %arg1: i32) -> (i32, i32, i32) {
    %c0_i32 = arith.constant 0 : i32
    %c0_i32_0 = arith.constant 0 : i32
    %c0_i32_1 = arith.constant 0 : i32
    return %arg0, %c0_i32, %c0_i32_0 : i32, i32, i32
  }
  func.func @transform_2(%arg0: i32, %arg1: i32) -> (i32, i32, i32) {
    %c0_i32 = arith.constant 0 : i32
    %c0_i32_0 = arith.constant 0 : i32
    %c0_i32_1 = arith.constant 0 : i32
    return %arg0, %c0_i32, %c0_i32_0 : i32, i32, i32
  }
  func.func @transform_3(%arg0: i32, %arg1: i32) -> (i32, i32, i32) {
    %c0_i32 = arith.constant 0 : i32
    %c0_i32_0 = arith.constant 0 : i32
    %c0_i32_1 = arith.constant 0 : i32
    return %arg0, %c0_i32, %c0_i32_0 : i32, i32, i32
  }
  func.func @transform_4(%arg0: i32, %arg1: i32) -> (i32, i32, i32) {
    %c0_i32 = arith.constant 0 : i32
    %c0_i32_0 = arith.constant 0 : i32
    return %arg0, %arg1, %c0_i32 : i32, i32, i32
  }
}

module attributes {stable_mosaic.version = 11 : i64} {
  func.func @kernel(%arg0: i32, %arg1: i32, %arg2: memref<16x32xf32, #tpu.memory_space<vmem>>, %arg3: memref<32x32xf32, #tpu.memory_space<vmem>>, %arg4: memref<1x32xf32, #tpu.memory_space<vmem>>, %arg5: memref<16x32xf32, #tpu.memory_space<vmem>>, %arg6: memref<16x32xf32, #tpu.memory_space<vmem>>) attributes {dimension_semantics = [#tpu.dimension_semantics<parallel>, #tpu.dimension_semantics<parallel>], iteration_bounds = array<i64: 1, 1>, scalar_prefetch = 0 : i64, scratch_operands = 0 : i64, tpu.core_type = #tpu.core_type<tc>, window_params = [{transform_indices = @transform_0, window_bounds = array<i64: 16, 32>}, {transform_indices = @transform_1, window_bounds = array<i64: 32, 32>}, {transform_indices = @transform_2, window_bounds = array<i64: 1, 32>}, {transform_indices = @transform_3, window_bounds = array<i64: 16, 32>}, {transform_indices = @transform_4, window_bounds = array<i64: 16, 32>}]} {
    %c0 = arith.constant 0 : index
    %c0_0 = arith.constant 0 : index
    %0 = vector.load %arg2[%c0, %c0_0] : memref<16x32xf32, #tpu.memory_space<vmem>>, vector<16x32xf32>
    %c0_1 = arith.constant 0 : index
    %c0_2 = arith.constant 0 : index
    %1 = vector.load %arg3[%c0_1, %c0_2] : memref<32x32xf32, #tpu.memory_space<vmem>>, vector<32x32xf32>
    %cst = arith.constant dense<0.000000e+00> : vector<16x32xf32>
    %2 = tpu.matmul %0, %1, %cst {dimension_numbers = #tpu.dot_dimension_numbers<[1], [0], [0], [1], [0, 0, 1, 1], [], []>, precision = #tpu.contract_precision<fp32>} : vector<16x32xf32>, vector<32x32xf32>, vector<16x32xf32> -> vector<16x32xf32>
    %c0_3 = arith.constant 0 : index
    %c0_4 = arith.constant 0 : index
    %3 = vector.load %arg4[%c0_3, %c0_4] : memref<1x32xf32, #tpu.memory_space<vmem>>, vector<1x32xf32>
    %4 = vector.broadcast %3 : vector<1x32xf32> to vector<16x32xf32>
    %5 = arith.addf %2, %4 : vector<16x32xf32>
    %c0_5 = arith.constant 0 : index
    %c0_6 = arith.constant 0 : index
    %6 = vector.load %arg5[%c0_5, %c0_6] : memref<16x32xf32, #tpu.memory_space<vmem>>, vector<16x32xf32>
    %7 = arith.addf %5, %6 : vector<16x32xf32>
    %c0_7 = arith.constant 0 : index
    %c0_8 = arith.constant 0 : index
    %8 = vector.load %arg6[%c0_7, %c0_8] : memref<16x32xf32, #tpu.memory_space<vmem>>, vector<16x32xf32>
    tpu.vector_store %arg6[%c0_7, %c0_8], %7 {strides = array<i32>} : memref<16x32xf32, #tpu.memory_space<vmem>>, vector<16x32xf32>,
    return
  }
  func.func @transform_0(%arg0: i32, %arg1: i32) -> (i32, i32) {
    %c0_i32 = arith.constant 0 : i32
    %c0_i32_0 = arith.constant 0 : i32
    return %arg0, %c0_i32 : i32, i32
  }
  func.func @transform_1(%arg0: i32, %arg1: i32) -> (i32, i32) {
    %c0_i32 = arith.constant 0 : i32
    %c0_i32_0 = arith.constant 0 : i32
    return %c0_i32, %arg1 : i32, i32
  }
  func.func @transform_2(%arg0: i32, %arg1: i32) -> (i32, i32) {
    %c0_i32 = arith.constant 0 : i32
    %c0_i32_0 = arith.constant 0 : i32
    return %c0_i32, %arg1 : i32, i32
  }
  func.func @transform_3(%arg0: i32, %arg1: i32) -> (i32, i32) {
    %c0_i32 = arith.constant 0 : i32
    return %arg0, %arg1 : i32, i32
  }
  func.func @transform_4(%arg0: i32, %arg1: i32) -> (i32, i32) {
    %c0_i32 = arith.constant 0 : i32
    return %arg0, %arg1 : i32, i32
  }
}

module attributes {stable_mosaic.version = 11 : i64} {
  func.func @kernel(%arg0: i32, %arg1: i32, %arg2: memref<16x32xf32, #tpu.memory_space<vmem>>, %arg3: memref<32x64xf32, #tpu.memory_space<vmem>>, %arg4: memref<1x64xf32, #tpu.memory_space<vmem>>, %arg5: memref<1x32xf32, #tpu.memory_space<vmem>>, %arg6: memref<1x32xf32, #tpu.memory_space<vmem>>, %arg7: memref<16x64xf32, #tpu.memory_space<vmem>>) attributes {dimension_semantics = [#tpu.dimension_semantics<parallel>, #tpu.dimension_semantics<parallel>], iteration_bounds = array<i64: 1, 1>, scalar_prefetch = 0 : i64, scratch_operands = 0 : i64, tpu.core_type = #tpu.core_type<tc>, window_params = [{transform_indices = @transform_0, window_bounds = array<i64: 16, 32>}, {transform_indices = @transform_1, window_bounds = array<i64: 32, 64>}, {transform_indices = @transform_2, window_bounds = array<i64: 1, 64>}, {pipeline_mode = #tpu.pipeline_mode<synchronous>, transform_indices = @transform_3, window_bounds = array<i64: 1, 32>}, {pipeline_mode = #tpu.pipeline_mode<synchronous>, transform_indices = @transform_4, window_bounds = array<i64: 1, 32>}, {transform_indices = @transform_5, window_bounds = array<i64: 16, 64>}]} {
    %c0 = arith.constant 0 : index
    %c0_0 = arith.constant 0 : index
    %0 = vector.load %arg2[%c0, %c0_0] : memref<16x32xf32, #tpu.memory_space<vmem>>, vector<16x32xf32>
    %cst = arith.constant dense<0.000000e+00> : vector<16xf32>
    %1 = vector.multi_reduction <add>, %0, %cst [1] : vector<16x32xf32> to vector<16xf32>
    %2 = vector.shape_cast %1 : vector<16xf32> to vector<16x1xf32>
    %cst_1 = arith.constant 3.200000e+01 : f32
    %3 = vector.broadcast %cst_1 : f32 to vector<16x1xf32>
    %4 = arith.divf %2, %3 : vector<16x1xf32>
    %5 = vector.broadcast %4 : vector<16x1xf32> to vector<16x32xf32>
    %6 = arith.subf %0, %5 : vector<16x32xf32>
    %7 = arith.mulf %6, %6 : vector<16x32xf32>
    %cst_2 = arith.constant dense<0.000000e+00> : vector<16xf32>
    %8 = vector.multi_reduction <add>, %7, %cst_2 [1] : vector<16x32xf32> to vector<16xf32>
    %9 = vector.shape_cast %8 : vector<16xf32> to vector<16x1xf32>
    %cst_3 = arith.constant 3.200000e+01 : f32
    %10 = vector.broadcast %cst_3 : f32 to vector<16x1xf32>
    %11 = arith.divf %9, %10 : vector<16x1xf32>
    %12 = vector.broadcast %4 : vector<16x1xf32> to vector<16x32xf32>
    %13 = arith.subf %0, %12 : vector<16x32xf32>
    %cst_4 = arith.constant 9.99999974E-6 : f32
    %14 = vector.broadcast %cst_4 : f32 to vector<16x1xf32>
    %15 = arith.addf %11, %14 : vector<16x1xf32>
    %16 = math.rsqrt %15 : vector<16x1xf32>
    %17 = vector.broadcast %16 : vector<16x1xf32> to vector<16x32xf32>
    %18 = arith.mulf %13, %17 : vector<16x32xf32>
    %c0_5 = arith.constant 0 : index
    %c0_6 = arith.constant 0 : index
    %19 = vector.load %arg5[%c0_5, %c0_6] : memref<1x32xf32, #tpu.memory_space<vmem>>, vector<1x32xf32>
    %20 = vector.broadcast %19 : vector<1x32xf32> to vector<16x32xf32>
    %21 = arith.mulf %18, %20 : vector<16x32xf32>
    %c0_7 = arith.constant 0 : index
    %c0_8 = arith.constant 0 : index
    %22 = vector.load %arg6[%c0_7, %c0_8] : memref<1x32xf32, #tpu.memory_space<vmem>>, vector<1x32xf32>
    %23 = vector.broadcast %22 : vector<1x32xf32> to vector<16x32xf32>
    %24 = arith.addf %21, %23 : vector<16x32xf32>
    %c0_9 = arith.constant 0 : index
    %c0_10 = arith.constant 0 : index
    %25 = vector.load %arg3[%c0_9, %c0_10] : memref<32x64xf32, #tpu.memory_space<vmem>>, vector<32x64xf32>
    %cst_11 = arith.constant dense<0.000000e+00> : vector<16x64xf32>
    %26 = tpu.matmul %24, %25, %cst_11 {dimension_numbers = #tpu.dot_dimension_numbers<[1], [0], [0], [1], [0, 0, 1, 1], [], []>, precision = #tpu.contract_precision<fp32>} : vector<16x32xf32>, vector<32x64xf32>, vector<16x64xf32> -> vector<16x64xf32>
    %c0_12 = arith.constant 0 : index
    %c0_13 = arith.constant 0 : index
    %27 = vector.load %arg4[%c0_12, %c0_13] : memref<1x64xf32, #tpu.memory_space<vmem>>, vector<1x64xf32>
    %28 = vector.broadcast %27 : vector<1x64xf32> to vector<16x64xf32>
    %29 = arith.addf %26, %28 : vector<16x64xf32>
    %cst_14 = arith.constant 5.000000e-01 : f32
    %30 = vector.broadcast %cst_14 : f32 to vector<16x64xf32>
    %31 = arith.mulf %30, %29 : vector<16x64xf32>
    %cst_15 = arith.constant 4.471500e-02 : f32
    %32 = vector.broadcast %cst_15 : f32 to vector<16x64xf32>
    %33 = arith.mulf %32, %29 : vector<16x64xf32>
    %34 = arith.mulf %33, %29 : vector<16x64xf32>
    %35 = arith.mulf %34, %29 : vector<16x64xf32>
    %36 = arith.addf %29, %35 : vector<16x64xf32>
    %cst_16 = arith.constant 0.797884583 : f32
    %37 = vector.broadcast %cst_16 : f32 to vector<16x64xf32>
    %38 = arith.mulf %37, %36 : vector<16x64xf32>
    %39 = math.tanh %38 : vector<16x64xf32>
    %cst_17 = arith.constant 1.000000e+00 : f32
    %40 = vector.broadcast %cst_17 : f32 to vector<16x64xf32>
    %41 = arith.addf %40, %39 : vector<16x64xf32>
    %42 = arith.mulf %31, %41 : vector<16x64xf32>
    %c0_18 = arith.constant 0 : index
    %c0_19 = arith.constant 0 : index
    %43 = vector.load %arg7[%c0_18, %c0_19] : memref<16x64xf32, #tpu.memory_space<vmem>>, vector<16x64xf32>
    tpu.vector_store %arg7[%c0_18, %c0_19], %42 {strides = array<i32>} : memref<16x64xf32, #tpu.memory_space<vmem>>, vector<16x64xf32>,
    return
  }
  func.func @transform_0(%arg0: i32, %arg1: i32) -> (i32, i32) {
    %c0_i32 = arith.constant 0 : i32
    %c0_i32_0 = arith.constant 0 : i32
    return %arg0, %c0_i32 : i32, i32
  }
  func.func @transform_1(%arg0: i32, %arg1: i32) -> (i32, i32) {
    %c0_i32 = arith.constant 0 : i32
    %c0_i32_0 = arith.constant 0 : i32
    return %c0_i32, %arg1 : i32, i32
  }
  func.func @transform_2(%arg0: i32, %arg1: i32) -> (i32, i32) {
    %c0_i32 = arith.constant 0 : i32
    %c0_i32_0 = arith.constant 0 : i32
    return %c0_i32, %arg1 : i32, i32
  }
  func.func @transform_3(%arg0: i32, %arg1: i32) -> (i32, i32) {
    %c0_i32 = arith.constant 0 : i32
    %c0_i32_0 = arith.constant 0 : i32
    %c0_i32_1 = arith.constant 0 : i32
    return %c0_i32, %c0_i32_0 : i32, i32
  }
  func.func @transform_4(%arg0: i32, %arg1: i32) -> (i32, i32) {
    %c0_i32 = arith.constant 0 : i32
    %c0_i32_0 = arith.constant 0 : i32
    %c0_i32_1 = arith.constant 0 : i32
    return %c0_i32, %c0_i32_0 : i32, i32
  }
  func.func @transform_5(%arg0: i32, %arg1: i32) -> (i32, i32) {
    %c0_i32 = arith.constant 0 : i32
    return %arg0, %arg1 : i32, i32
  }
}

module attributes {stable_mosaic.version = 11 : i64} {
  func.func @kernel(%arg0: i32, %arg1: i32, %arg2: memref<16x32xf32, #tpu.memory_space<vmem>>, %arg3: memref<32x32xf32, #tpu.memory_space<vmem>>, %arg4: memref<1x32xf32, #tpu.memory_space<vmem>>, %arg5: memref<1x32xf32, #tpu.memory_space<vmem>>, %arg6: memref<1x32xf32, #tpu.memory_space<vmem>>, %arg7: memref<16x32xf32, #tpu.memory_space<vmem>>) attributes {dimension_semantics = [#tpu.dimension_semantics<parallel>, #tpu.dimension_semantics<parallel>], iteration_bounds = array<i64: 1, 1>, scalar_prefetch = 0 : i64, scratch_operands = 0 : i64, tpu.core_type = #tpu.core_type<tc>, window_params = [{transform_indices = @transform_0, window_bounds = array<i64: 16, 32>}, {transform_indices = @transform_1, window_bounds = array<i64: 32, 32>}, {transform_indices = @transform_2, window_bounds = array<i64: 1, 32>}, {pipeline_mode = #tpu.pipeline_mode<synchronous>, transform_indices = @transform_3, window_bounds = array<i64: 1, 32>}, {pipeline_mode = #tpu.pipeline_mode<synchronous>, transform_indices = @transform_4, window_bounds = array<i64: 1, 32>}, {transform_indices = @transform_5, window_bounds = array<i64: 16, 32>}]} {
    %c0 = arith.constant 0 : index
    %c0_0 = arith.constant 0 : index
    %0 = vector.load %arg2[%c0, %c0_0] : memref<16x32xf32, #tpu.memory_space<vmem>>, vector<16x32xf32>
    %cst = arith.constant dense<0.000000e+00> : vector<16xf32>
    %1 = vector.multi_reduction <add>, %0, %cst [1] : vector<16x32xf32> to vector<16xf32>
    %2 = vector.shape_cast %1 : vector<16xf32> to vector<16x1xf32>
    %cst_1 = arith.constant 3.200000e+01 : f32
    %3 = vector.broadcast %cst_1 : f32 to vector<16x1xf32>
    %4 = arith.divf %2, %3 : vector<16x1xf32>
    %5 = vector.broadcast %4 : vector<16x1xf32> to vector<16x32xf32>
    %6 = arith.subf %0, %5 : vector<16x32xf32>
    %7 = arith.mulf %6, %6 : vector<16x32xf32>
    %cst_2 = arith.constant dense<0.000000e+00> : vector<16xf32>
    %8 = vector.multi_reduction <add>, %7, %cst_2 [1] : vector<16x32xf32> to vector<16xf32>
    %9 = vector.shape_cast %8 : vector<16xf32> to vector<16x1xf32>
    %cst_3 = arith.constant 3.200000e+01 : f32
    %10 = vector.broadcast %cst_3 : f32 to vector<16x1xf32>
    %11 = arith.divf %9, %10 : vector<16x1xf32>
    %12 = vector.broadcast %4 : vector<16x1xf32> to vector<16x32xf32>
    %13 = arith.subf %0, %12 : vector<16x32xf32>
    %cst_4 = arith.constant 9.99999974E-6 : f32
    %14 = vector.broadcast %cst_4 : f32 to vector<16x1xf32>
    %15 = arith.addf %11, %14 : vector<16x1xf32>
    %16 = math.rsqrt %15 : vector<16x1xf32>
    %17 = vector.broadcast %16 : vector<16x1xf32> to vector<16x32xf32>
    %18 = arith.mulf %13, %17 : vector<16x32xf32>
    %c0_5 = arith.constant 0 : index
    %c0_6 = arith.constant 0 : index
    %19 = vector.load %arg5[%c0_5, %c0_6] : memref<1x32xf32, #tpu.memory_space<vmem>>, vector<1x32xf32>
    %20 = vector.broadcast %19 : vector<1x32xf32> to vector<16x32xf32>
    %21 = arith.mulf %18, %20 : vector<16x32xf32>
    %c0_7 = arith.constant 0 : index
    %c0_8 = arith.constant 0 : index
    %22 = vector.load %arg6[%c0_7, %c0_8] : memref<1x32xf32, #tpu.memory_space<vmem>>, vector<1x32xf32>
    %23 = vector.broadcast %22 : vector<1x32xf32> to vector<16x32xf32>
    %24 = arith.addf %21, %23 : vector<16x32xf32>
    %c0_9 = arith.constant 0 : index
    %c0_10 = arith.constant 0 : index
    %25 = vector.load %arg3[%c0_9, %c0_10] : memref<32x32xf32, #tpu.memory_space<vmem>>, vector<32x32xf32>
    %cst_11 = arith.constant dense<0.000000e+00> : vector<16x32xf32>
    %26 = tpu.matmul %24, %25, %cst_11 {dimension_numbers = #tpu.dot_dimension_numbers<[1], [0], [0], [1], [0, 0, 1, 1], [], []>, precision = #tpu.contract_precision<fp32>} : vector<16x32xf32>, vector<32x32xf32>, vector<16x32xf32> -> vector<16x32xf32>
    %c0_12 = arith.constant 0 : index
    %c0_13 = arith.constant 0 : index
    %27 = vector.load %arg4[%c0_12, %c0_13] : memref<1x32xf32, #tpu.memory_space<vmem>>, vector<1x32xf32>
    %28 = vector.broadcast %27 : vector<1x32xf32> to vector<16x32xf32>
    %29 = arith.addf %26, %28 : vector<16x32xf32>
    %30 = arith.addf %29, %0 : vector<16x32xf32>
    %c0_14 = arith.constant 0 : index
    %c0_15 = arith.constant 0 : index
    %31 = vector.load %arg7[%c0_14, %c0_15] : memref<16x32xf32, #tpu.memory_space<vmem>>, vector<16x32xf32>
    tpu.vector_store %arg7[%c0_14, %c0_15], %30 {strides = array<i32>} : memref<16x32xf32, #tpu.memory_space<vmem>>, vector<16x32xf32>,
    return
  }
  func.func @transform_0(%arg0: i32, %arg1: i32) -> (i32, i32) {
    %c0_i32 = arith.constant 0 : i32
    %c0_i32_0 = arith.constant 0 : i32
    return %arg0, %c0_i32 : i32, i32
  }
  func.func @transform_1(%arg0: i32, %arg1: i32) -> (i32, i32) {
    %c0_i32 = arith.constant 0 : i32
    %c0_i32_0 = arith.constant 0 : i32
    return %c0_i32, %arg1 : i32, i32
  }
  func.func @transform_2(%arg0: i32, %arg1: i32) -> (i32, i32) {
    %c0_i32 = arith.constant 0 : i32
    %c0_i32_0 = arith.constant 0 : i32
    return %c0_i32, %arg1 : i32, i32
  }
  func.func @transform_3(%arg0: i32, %arg1: i32) -> (i32, i32) {
    %c0_i32 = arith.constant 0 : i32
    %c0_i32_0 = arith.constant 0 : i32
    %c0_i32_1 = arith.constant 0 : i32
    return %c0_i32, %c0_i32_0 : i32, i32
  }
  func.func @transform_4(%arg0: i32, %arg1: i32) -> (i32, i32) {
    %c0_i32 = arith.constant 0 : i32
    %c0_i32_0 = arith.constant 0 : i32
    %c0_i32_1 = arith.constant 0 : i32
    return %c0_i32, %c0_i32_0 : i32, i32
  }
  func.func @transform_5(%arg0: i32, %arg1: i32) -> (i32, i32) {
    %c0_i32 = arith.constant 0 : i32
    return %arg0, %arg1 : i32, i32
  }
}

module attributes {stable_mosaic.version = 11 : i64} {
  func.func @kernel(%arg0: i32, %arg1: i32, %arg2: memref<16x64xf32, #tpu.memory_space<vmem>>, %arg3: memref<64x32xf32, #tpu.memory_space<vmem>>, %arg4: memref<1x32xf32, #tpu.memory_space<vmem>>, %arg5: memref<16x32xf32, #tpu.memory_space<vmem>>, %arg6: memref<16x32xf32, #tpu.memory_space<vmem>>) attributes {dimension_semantics = [#tpu.dimension_semantics<parallel>, #tpu.dimension_semantics<parallel>], iteration_bounds = array<i64: 1, 1>, scalar_prefetch = 0 : i64, scratch_operands = 0 : i64, tpu.core_type = #tpu.core_type<tc>, window_params = [{transform_indices = @transform_0, window_bounds = array<i64: 16, 64>}, {transform_indices = @transform_1, window_bounds = array<i64: 64, 32>}, {transform_indices = @transform_2, window_bounds = array<i64: 1, 32>}, {transform_indices = @transform_3, window_bounds = array<i64: 16, 32>}, {transform_indices = @transform_4, window_bounds = array<i64: 16, 32>}]} {
    %c0 = arith.constant 0 : index
    %c0_0 = arith.constant 0 : index
    %0 = vector.load %arg2[%c0, %c0_0] : memref<16x64xf32, #tpu.memory_space<vmem>>, vector<16x64xf32>
    %c0_1 = arith.constant 0 : index
    %c0_2 = arith.constant 0 : index
    %1 = vector.load %arg3[%c0_1, %c0_2] : memref<64x32xf32, #tpu.memory_space<vmem>>, vector<64x32xf32>
    %cst = arith.constant dense<0.000000e+00> : vector<16x32xf32>
    %2 = tpu.matmul %0, %1, %cst {dimension_numbers = #tpu.dot_dimension_numbers<[1], [0], [0], [1], [0, 0, 1, 1], [], []>, precision = #tpu.contract_precision<fp32>} : vector<16x64xf32>, vector<64x32xf32>, vector<16x32xf32> -> vector<16x32xf32>
    %c0_3 = arith.constant 0 : index
    %c0_4 = arith.constant 0 : index
    %3 = vector.load %arg4[%c0_3, %c0_4] : memref<1x32xf32, #tpu.memory_space<vmem>>, vector<1x32xf32>
    %4 = vector.broadcast %3 : vector<1x32xf32> to vector<16x32xf32>
    %5 = arith.addf %2, %4 : vector<16x32xf32>
    %c0_5 = arith.constant 0 : index
    %c0_6 = arith.constant 0 : index
    %6 = vector.load %arg5[%c0_5, %c0_6] : memref<16x32xf32, #tpu.memory_space<vmem>>, vector<16x32xf32>
    %7 = arith.addf %5, %6 : vector<16x32xf32>
    %c0_7 = arith.constant 0 : index
    %c0_8 = arith.constant 0 : index
    %8 = vector.load %arg6[%c0_7, %c0_8] : memref<16x32xf32, #tpu.memory_space<vmem>>, vector<16x32xf32>
    tpu.vector_store %arg6[%c0_7, %c0_8], %7 {strides = array<i32>} : memref<16x32xf32, #tpu.memory_space<vmem>>, vector<16x32xf32>,
    return
  }
  func.func @transform_0(%arg0: i32, %arg1: i32) -> (i32, i32) {
    %c0_i32 = arith.constant 0 : i32
    %c0_i32_0 = arith.constant 0 : i32
    return %arg0, %c0_i32 : i32, i32
  }
  func.func @transform_1(%arg0: i32, %arg1: i32) -> (i32, i32) {
    %c0_i32 = arith.constant 0 : i32
    %c0_i32_0 = arith.constant 0 : i32
    return %c0_i32, %arg1 : i32, i32
  }
  func.func @transform_2(%arg0: i32, %arg1: i32) -> (i32, i32) {
    %c0_i32 = arith.constant 0 : i32
    %c0_i32_0 = arith.constant 0 : i32
    return %c0_i32, %arg1 : i32, i32
  }
  func.func @transform_3(%arg0: i32, %arg1: i32) -> (i32, i32) {
    %c0_i32 = arith.constant 0 : i32
    return %arg0, %arg1 : i32, i32
  }
  func.func @transform_4(%arg0: i32, %arg1: i32) -> (i32, i32) {
    %c0_i32 = arith.constant 0 : i32
    return %arg0, %arg1 : i32, i32
  }
}

module attributes {stable_mosaic.version = 11 : i64} {
  func.func @_layernorm_kernel(%arg0: i32, %arg1: memref<16x32xf32, #tpu.memory_space<vmem>>, %arg2: memref<1x32xf32, #tpu.memory_space<vmem>>, %arg3: memref<1x32xf32, #tpu.memory_space<vmem>>, %arg4: memref<16x32xf32, #tpu.memory_space<vmem>>) attributes {dimension_semantics = [#tpu.dimension_semantics<parallel>], iteration_bounds = array<i64: 1>, scalar_prefetch = 0 : i64, scratch_operands = 0 : i64, tpu.core_type = #tpu.core_type<tc>, window_params = [{transform_indices = @transform_0, window_bounds = array<i64: 16, 32>}, {pipeline_mode = #tpu.pipeline_mode<synchronous>, transform_indices = @transform_1, window_bounds = array<i64: 1, 32>}, {pipeline_mode = #tpu.pipeline_mode<synchronous>, transform_indices = @transform_2, window_bounds = array<i64: 1, 32>}, {transform_indices = @transform_3, window_bounds = array<i64: 16, 32>}]} {
    %c0 = arith.constant 0 : index
    %c0_0 = arith.constant 0 : index
    %0 = vector.load %arg1[%c0, %c0_0] : memref<16x32xf32, #tpu.memory_space<vmem>>, vector<16x32xf32>
    %cst = arith.constant dense<0.000000e+00> : vector<16xf32>
    %1 = vector.multi_reduction <add>, %0, %cst [1] : vector<16x32xf32> to vector<16xf32>
    %2 = vector.shape_cast %1 : vector<16xf32> to vector<16x1xf32>
    %cst_1 = arith.constant 3.200000e+01 : f32
    %3 = vector.broadcast %cst_1 : f32 to vector<16x1xf32>
    %4 = arith.divf %2, %3 : vector<16x1xf32>
    %5 = vector.broadcast %4 : vector<16x1xf32> to vector<16x32xf32>
    %6 = arith.subf %0, %5 : vector<16x32xf32>
    %7 = arith.mulf %6, %6 : vector<16x32xf32>
    %cst_2 = arith.constant dense<0.000000e+00> : vector<16xf32>
    %8 = vector.multi_reduction <add>, %7, %cst_2 [1] : vector<16x32xf32> to vector<16xf32>
    %9 = vector.shape_cast %8 : vector<16xf32> to vector<16x1xf32>
    %cst_3 = arith.constant 3.200000e+01 : f32
    %10 = vector.broadcast %cst_3 : f32 to vector<16x1xf32>
    %11 = arith.divf %9, %10 : vector<16x1xf32>
    %cst_4 = arith.constant 9.99999974E-6 : f32
    %12 = vector.broadcast %cst_4 : f32 to vector<16x1xf32>
    %13 = arith.addf %11, %12 : vector<16x1xf32>
    %14 = math.rsqrt %13 : vector<16x1xf32>
    %15 = vector.broadcast %4 : vector<16x1xf32> to vector<16x32xf32>
    %16 = arith.subf %0, %15 : vector<16x32xf32>
    %17 = vector.broadcast %14 : vector<16x1xf32> to vector<16x32xf32>
    %18 = arith.mulf %16, %17 : vector<16x32xf32>
    %c0_5 = arith.constant 0 : index
    %c0_6 = arith.constant 0 : index
    %19 = vector.load %arg2[%c0_5, %c0_6] : memref<1x32xf32, #tpu.memory_space<vmem>>, vector<1x32xf32>
    %20 = vector.broadcast %19 : vector<1x32xf32> to vector<16x32xf32>
    %21 = arith.mulf %18, %20 : vector<16x32xf32>
    %c0_7 = arith.constant 0 : index
    %c0_8 = arith.constant 0 : index
    %22 = vector.load %arg3[%c0_7, %c0_8] : memref<1x32xf32, #tpu.memory_space<vmem>>, vector<1x32xf32>
    %23 = vector.broadcast %22 : vector<1x32xf32> to vector<16x32xf32>
    %24 = arith.addf %21, %23 : vector<16x32xf32>
    %c0_9 = arith.constant 0 : index
    %c0_10 = arith.constant 0 : index
    %25 = vector.load %arg4[%c0_9, %c0_10] : memref<16x32xf32, #tpu.memory_space<vmem>>, vector<16x32xf32>
    tpu.vector_store %arg4[%c0_9, %c0_10], %24 {strides = array<i32>} : memref<16x32xf32, #tpu.memory_space<vmem>>, vector<16x32xf32>,
    return
  }
  func.func @transform_0(%arg0: i32) -> (i32, i32) {
    %c0_i32 = arith.constant 0 : i32
    %c0_i32_0 = arith.constant 0 : i32
    return %arg0, %c0_i32 : i32, i32
  }
  func.func @transform_1(%arg0: i32) -> (i32, i32) {
    %c0_i32 = arith.constant 0 : i32
    %c0_i32_0 = arith.constant 0 : i32
    %c0_i32_1 = arith.constant 0 : i32
    return %c0_i32, %c0_i32_0 : i32, i32
  }
  func.func @transform_2(%arg0: i32) -> (i32, i32) {
    %c0_i32 = arith.constant 0 : i32
    %c0_i32_0 = arith.constant 0 : i32
    %c0_i32_1 = arith.constant 0 : i32
    return %c0_i32, %c0_i32_0 : i32, i32
  }
  func.func @transform_3(%arg0: i32) -> (i32, i32) {
    %c0_i32 = arith.constant 0 : i32
    %c0_i32_0 = arith.constant 0 : i32
    return %arg0, %c0_i32 : i32, i32
  }
}

</mosaic_0001>

<llo_original>
// kernel: mechanism_transformer_forward.18
$region0: #{mechanism_transformer_forward.18}
  #allocation0 [shape = 'u32[]', space=smem, size = 0x4, offset = 0x4, fixed_abs, tag = 'smem constant byte address 0x4 - core index']
  #allocation1 [shape = 'u32[144,128]{1,0:T(1,128)}', space=vmem, size = 0x12000, scoped, tag = 'internal scratch']
  %s0 = inlined_call_operand.hbm [shape: f32[16,32], index: 0, kind: input, shape index: {}]
  %s1 = inlined_call_operand.hbm [shape: f32[32,32], index: 1, kind: input, shape index: {}]
  %s2 = inlined_call_operand.hbm [shape: f32[1,32], index: 2, kind: input, shape index: {}]
  %s3 = inlined_call_operand.hbm [shape: f32[16,32], index: 3, kind: output, shape index: {}]
  %s4 = sld [smem:[#allocation0]]
  $region34: #{mechanism_transformer_forward.18} parent=0
    _
  %s6 = ssub.s32 1, %s4
  %s7 = scalar_select 0, %s6, %s4
  $region1: #{mechanism_transformer_forward.18} parent=0
    #allocation2 [shape = 'u8[8192]{0}', space=vmem, size = 0x2000, scoped, tag = 'input window, operand 0, single buffered']
    #allocation3 [shape = 's32[1]{0}', space=sflag, size = 0x4, scoped, tag = 'scoped memory for mechanism_transformer_forward.18']
    #allocation4 [shape = 's32[1]{0}', space=sflag, size = 0x4, scoped, tag = 'scoped memory for mechanism_transformer_forward.18']
    #allocation5 [shape = 'u8[16384]{0}', space=vmem, size = 0x4000, scoped, tag = 'input window, operand 1, single buffered']
    #allocation6 [shape = 's32[1]{0}', space=sflag, size = 0x4, scoped, tag = 'scoped memory for mechanism_transformer_forward.18']
    #allocation7 [shape = 'u8[512]{0}', space=vmem, size = 0x400, scoped, tag = 'input window, operand 2, single buffered']
    #allocation8 [shape = 'u8[8192]{0}', space=vmem, size = 0x2000, scoped, tag = 'output window, operand 0, single buffered']
    %8 = vsyncpa [#allocation3], 0
    %9 = vsyncpa [#allocation6], 0
    %10 = vsyncpa [#allocation4], 0
    // Predicated region
    $region2: #{mechanism_transformer_forward.18} parent=1 // pred_check
      _
    $region3: #{mechanism_transformer_forward.18} parent=1 // pred_check_branch
      %12 = sbr.rel (0) target = $region5
    $region4: #{mechanism_transformer_forward.18} parent=1 // pred_region
      %s14 = ssub.s32 256, 256
      %15 = vsyncadd [#allocation3], %s14
      %s16 = sshll.u32 [#allocation2], 4
      %s17 = int_to_ptr.vmem [resolvable:$true] %s16
      %22 = dma.hbm_to_vmem [thread:$0]  %s0, 256, %s17, [#allocation3], 128, 128, 8
    $region5: #{mechanism_transformer_forward.18} parent=1 // pred_fallthru
      _
    // Predicated region
    $region6: #{mechanism_transformer_forward.18} parent=1 // pred_check
      _
    $region7: #{mechanism_transformer_forward.18} parent=1 // pred_check_branch
      %24 = sbr.rel (0) target = $region9
    $region8: #{mechanism_transformer_forward.18} parent=1 // pred_region
      %s26 = ssub.s32 512, 512
      %27 = vsyncadd [#allocation6], %s26
      %s28 = sshll.u32 [#allocation5], 4
      %s29 = int_to_ptr.vmem [resolvable:$true] %s28
      %34 = dma.hbm_to_vmem [thread:$0]  %s1, 512, %s29, [#allocation6], 128, 128, 8
    $region9: #{mechanism_transformer_forward.18} parent=1 // pred_fallthru
      _
    // Predicated region
    $region10: #{mechanism_transformer_forward.18} parent=1 // pred_check
      _
    $region11: #{mechanism_transformer_forward.18} parent=1 // pred_check_branch
      %36 = sbr.rel (0) target = $region13
    $region12: #{mechanism_transformer_forward.18} parent=1 // pred_region
      %s38 = ssub.s32 16, 16
      %39 = vsyncadd [#allocation6], %s38
      %s41 = sshll.u32 [#allocation7], 4
      %s42 = int_to_ptr.vmem [resolvable:$true] %s41
      %44 = dma.hbm_to_vmem [thread:$0]  %s2, 16, %s42, [#allocation6]
    $region13: #{mechanism_transformer_forward.18} parent=1 // pred_fallthru
      _
    // Predicated region
    $region14: #{mechanism_transformer_forward.18} parent=1 // pred_check
      _
    $region15: #{mechanism_transformer_forward.18} parent=1 // pred_check_branch
      %46 = sbr.rel (0) target = $region17
    $region16: #{mechanism_transformer_forward.18} parent=1 // pred_region
      %47 = dma.done [#allocation3], 256
    $region17: #{mechanism_transformer_forward.18} parent=1 // pred_fallthru
      _
    // Predicated region
    $region18: #{mechanism_transformer_forward.18} parent=1 // pred_check
      _
    $region19: #{mechanism_transformer_forward.18} parent=1 // pred_check_branch
      %49 = sbr.rel (0) target = $region21
    $region20: #{mechanism_transformer_forward.18} parent=1 // pred_region
      %50 = dma.done [#allocation6], 512
    $region21: #{mechanism_transformer_forward.18} parent=1 // pred_fallthru
      _
    // Predicated region
    $region22: #{mechanism_transformer_forward.18} parent=1 // pred_check
      _
    $region23: #{mechanism_transformer_forward.18} parent=1 // pred_check_branch
      %52 = sbr.rel (0) target = $region25
    $region24: #{mechanism_transformer_forward.18} parent=1 // pred_region
      %53 = dma.done [#allocation6], 16
    $region25: #{mechanism_transformer_forward.18} parent=1 // pred_fallthru
      _
    %v54 = vld [vmem:[#allocation2] sm:$0xff]
    %v55 = vld [vmem:[#allocation2 + $0x8] sm:$0xff]
    %v56 = vld [vmem:[#allocation5] sm:$0xff]
    %v57 = vld [vmem:[#allocation5 + $0x8] sm:$0xff]
    %v58 = vld [vmem:[#allocation5 + $0x10] sm:$0xff]
    %v59 = vld [vmem:[#allocation5 + $0x18] sm:$0xff]
    %v60 = vld [vmem:[#allocation7] sm:$0x1]
    %v62 = vlaneseq
    %v63 = vshrl.u32 %v62, 7
    %v64 = vsub.s32 0, %v63
    %v65 = vrot.slane %v60, %v64
    %vm67 = vcmask 261120
    %v69 = vsel %vm67, %v54, 0
    %v72 = vsel %vm67, %v55, 0
    %74 = vmatprep.subr.mxu0 0.0
    %v75 = vand.u32 %v56, 4294901760
    %76 = vmatpush1.msra.mxu0 %v75
    %77 = vmatprep.subr.mxu0 0.0
    %v78 = vand.u32 %v57, 4294901760
    %79 = vmatpush1.msra.mxu0 %v78
    %80 = vmatprep.subr.mxu0 0.0
    %v81 = vand.u32 %v58, 4294901760
    %82 = vmatpush1.msra.mxu0 %v81
    %83 = vmatprep.subr.mxu0 0.0
    %v84 = vand.u32 %v59, 4294901760
    %85 = vmatpush1.msra.mxu0 %v84
    %86 = vmatprep.subr.mxu0 0.0
    %87 = vmatpush1.msra.mxu0 0.0
    %88 = vmatprep.subr.mxu0 0.0
    %89 = vmatpush1.msra.mxu0 0.0
    %90 = vmatprep.subr.mxu0 0.0
    %91 = vmatpush1.msra.mxu0 0.0
    %92 = vmatprep.subr.mxu0 0.0
    %93 = vmatpush1.msra.mxu0 0.0
    %94 = vmatprep.subr.mxu0 0.0
    %95 = vmatpush1.msra.mxu0 0.0
    %96 = vmatprep.subr.mxu0 0.0
    %97 = vmatpush1.msra.mxu0 0.0
    %98 = vmatprep.subr.mxu0 0.0
    %99 = vmatpush1.msra.mxu0 0.0
    %100 = vmatprep.subr.mxu0 0.0
    %101 = vmatpush1.msra.mxu0 0.0
    %102 = vmatprep.subr.mxu0 0.0
    %103 = vmatpush1.msra.mxu0 0.0
    %104 = vmatprep.subr.mxu0 0.0
    %105 = vmatpush1.msra.mxu0 0.0
    %106 = vmatprep.subr.mxu0 0.0
    %107 = vmatpush1.msra.mxu0 0.0
    %108 = vmatprep.subr.mxu0 0.0
    %109 = vmatpush1.msra.mxu0 0.0
    %110 = vmatprep.subr.mxu0 0.0
    %111 = vmatpush1.msra.mxu0 0.0
    %112 = vmatprep.subr.mxu0 0.0
    %113 = vmatpush1.msra.mxu0 0.0
    %114 = vmatprep.subr.mxu0 0.0
    %115 = vmatpush1.msra.mxu0 0.0
    %116 = vmatprep.subr.mxu0 0.0
    %117 = vmatpush1.msra.mxu0 0.0
    %118 = vmatprep.subr.mxu0 0.0
    %119 = vmatpush1.msra.mxu0 0.0
    %120 = vmatprep.subr.mxu0 0.0
    %121 = vmatpush1.msra.mxu0 0.0
    %122 = vmatprep.subr.mxu0 0.0
    %123 = vmatpush1.msra.mxu0 0.0
    %124 = vmatprep.subr.mxu0 0.0
    %125 = vmatpush1.msra.mxu0 0.0
    %126 = vmatprep.subr.mxu0 0.0
    %127 = vmatpush1.msra.mxu0 0.0
    %128 = vmatprep.subr.mxu0 0.0
    %129 = vmatpush1.msra.mxu0 0.0
    %130 = vmatprep.subr.mxu0 0.0
    %131 = vmatpush1.msra.mxu0 0.0
    %132 = vmatprep.subr.mxu0 0.0
    %133 = vmatpush1.msra.mxu0 0.0
    %134 = vmatprep.subr.mxu0 0.0
    %135 = vmatpush1.msra.mxu0 0.0
    %136 = vmatprep.subr.mxu0 0.0
    %137 = vmatpush1.msra.mxu0 0.0
    %138 = vmatprep.subr.mxu0 0.0
    %139 = vmatpush1.msra.mxu0 0.0
    %140 = vmatprep.subr.mxu0 0.0
    %141 = vmatpush1.msra.mxu0 0.0
    %142 = vmatprep.mubr.f32.mxu0 0.0
    %v143 = vand.u32 %v69, 4294901760
    %v144 = vsub.f32 %v69, %v143
    %v145 = vand.u32 %v144, 4294901760
    %v146 = vsub.f32 %v144, %v145
    %v147 = vand.u32 %v146, 4294901760
    %148 = vmatmul.mubr.f32.gmra.mrb[0].mxu0 %v147
    %v149 = vpop.f32.mrb[0].mxu0
    %v150 = vadd.f32 %v65, %v149
    %v151 = vpop.f32.mrb[0].mxu0
    %152 = vmatprep.mubr.f32.mxu0 0.0
    %v153 = vand.u32 %v72, 4294901760
    %v154 = vsub.f32 %v72, %v153
    %v155 = vand.u32 %v154, 4294901760
    %v156 = vsub.f32 %v154, %v155
    %v157 = vand.u32 %v156, 4294901760
    %158 = vmatmul.mubr.f32.gmra.mrb[0].mxu0 %v157
    %v159 = vpop.f32.mrb[0].mxu0
    %v160 = vadd.f32 %v65, %v159
    %v161 = vpop.f32.mrb[0].mxu0
    %162 = vdwg.mxu0
    %163 = vmatprep.subr.mxu0 0.0
    %v164 = vand.u32 %v56, 4294901760
    %v165 = vsub.f32 %v56, %v164
    %v166 = vand.u32 %v165, 4294901760
    %v167 = vsub.f32 %v165, %v166
    %v168 = vand.u32 %v167, 4294901760
    %169 = vmatpush1.msra.mxu0 %v168
    %170 = vmatprep.subr.mxu0 0.0
    %v171 = vand.u32 %v57, 4294901760
    %v172 = vsub.f32 %v57, %v171
    %v173 = vand.u32 %v172, 4294901760
    %v174 = vsub.f32 %v172, %v173
    %v175 = vand.u32 %v174, 4294901760
    %176 = vmatpush1.msra.mxu0 %v175
    %177 = vmatprep.subr.mxu0 0.0
    %v178 = vand.u32 %v58, 4294901760
    %v179 = vsub.f32 %v58, %v178
    %v180 = vand.u32 %v179, 4294901760
    %v181 = vsub.f32 %v179, %v180
    %v182 = vand.u32 %v181, 4294901760
    %183 = vmatpush1.msra.mxu0 %v182
    %184 = vmatprep.subr.mxu0 0.0
    %v185 = vand.u32 %v59, 4294901760
    %v186 = vsub.f32 %v59, %v185
    %v187 = vand.u32 %v186, 4294901760
    %v188 = vsub.f32 %v186, %v187
    %v189 = vand.u32 %v188, 4294901760
    %190 = vmatpush1.msra.mxu0 %v189
    %191 = vmatprep.subr.mxu0 0.0
    %192 = vmatpush1.msra.mxu0 0.0
    %193 = vmatprep.subr.mxu0 0.0
    %194 = vmatpush1.msra.mxu0 0.0
    %195 = vmatprep.subr.mxu0 0.0
    %196 = vmatpush1.msra.mxu0 0.0
    %197 = vmatprep.subr.mxu0 0.0
    %198 = vmatpush1.msra.mxu0 0.0
    %199 = vmatprep.subr.mxu0 0.0
    %200 = vmatpush1.msra.mxu0 0.0
    %201 = vmatprep.subr.mxu0 0.0
    %202 = vmatpush1.msra.mxu0 0.0
    %203 = vmatprep.subr.mxu0 0.0
    %204 = vmatpush1.msra.mxu0 0.0
    %205 = vmatprep.subr.mxu0 0.0
    %206 = vmatpush1.msra.mxu0 0.0
    %207 = vmatprep.subr.mxu0 0.0
    %208 = vmatpush1.msra.mxu0 0.0
    %209 = vmatprep.subr.mxu0 0.0
    %210 = vmatpush1.msra.mxu0 0.0
    %211 = vmatprep.subr.mxu0 0.0
    %212 = vmatpush1.msra.mxu0 0.0
    %213 = vmatprep.subr.mxu0 0.0
    %214 = vmatpush1.msra.mxu0 0.0
    %215 = vmatprep.subr.mxu0 0.0
    %216 = vmatpush1.msra.mxu0 0.0
    %217 = vmatprep.subr.mxu0 0.0
    %218 = vmatpush1.msra.mxu0 0.0
    %219 = vmatprep.subr.mxu0 0.0
    %220 = vmatpush1.msra.mxu0 0.0
    %221 = vmatprep.subr.mxu0 0.0
    %222 = vmatpush1.msra.mxu0 0.0
    %223 = vmatprep.subr.mxu0 0.0
    %224 = vmatpush1.msra.mxu0 0.0
    %225 = vmatprep.subr.mxu0 0.0
    %226 = vmatpush1.msra.mxu0 0.0
    %227 = vmatprep.subr.mxu0 0.0
    %228 = vmatpush1.msra.mxu0 0.0
    %229 = vmatprep.subr.mxu0 0.0
    %230 = vmatpush1.msra.mxu0 0.0
    %231 = vmatprep.subr.mxu0 0.0
    %232 = vmatpush1.msra.mxu0 0.0
    %233 = vmatprep.subr.mxu0 0.0
    %234 = vmatpush1.msra.mxu0 0.0
    %235 = vmatprep.subr.mxu0 0.0
    %236 = vmatpush1.msra.mxu0 0.0
    %237 = vmatprep.subr.mxu0 0.0
    %238 = vmatpush1.msra.mxu0 0.0
    %239 = vmatprep.subr.mxu0 0.0
    %240 = vmatpush1.msra.mxu0 0.0
    %241 = vmatprep.subr.mxu0 0.0
    %242 = vmatpush1.msra.mxu0 0.0
    %243 = vmatprep.subr.mxu0 0.0
    %244 = vmatpush1.msra.mxu0 0.0
    %245 = vmatprep.subr.mxu0 0.0
    %246 = vmatpush1.msra.mxu0 0.0
    %247 = vmatprep.mubr.f32.mxu0 0.0
    %v248 = vand.u32 %v69, 4294901760
    %249 = vmatmul.mubr.f32.gmra.mrb[0].mxu0 %v248
    %v250 = vpop.f32.mrb[0].mxu0
    %v251 = vadd.f32 %v150, %v250
    %v252 = vpop.f32.mrb[0].mxu0
    %253 = vmatprep.mubr.f32.mxu0 0.0
    %v254 = vand.u32 %v72, 4294901760
    %255 = vmatmul.mubr.f32.gmra.mrb[0].mxu0 %v254
    %v256 = vpop.f32.mrb[0].mxu0
    %v257 = vadd.f32 %v160, %v256
    %v258 = vpop.f32.mrb[0].mxu0
    %259 = vdwg.mxu0
    %260 = vmatprep.subr.mxu0 0.0
    %v261 = vand.u32 %v56, 4294901760
    %v262 = vsub.f32 %v56, %v261
    %263 = vmatpush1.msra.mxu0 %v262
    %264 = vmatprep.subr.mxu0 0.0
    %v265 = vand.u32 %v57, 4294901760
    %v266 = vsub.f32 %v57, %v265
    %267 = vmatpush1.msra.mxu0 %v266
    %268 = vmatprep.subr.mxu0 0.0
    %v269 = vand.u32 %v58, 4294901760
    %v270 = vsub.f32 %v58, %v269
    %271 = vmatpush1.msra.mxu0 %v270
    %272 = vmatprep.subr.mxu0 0.0
    %v273 = vand.u32 %v59, 4294901760
    %v274 = vsub.f32 %v59, %v273
    %275 = vmatpush1.msra.mxu0 %v274
    %276 = vmatprep.subr.mxu0 0.0
    %277 = vmatpush1.msra.mxu0 0.0
    %278 = vmatprep.subr.mxu0 0.0
    %279 = vmatpush1.msra.mxu0 0.0
    %280 = vmatprep.subr.mxu0 0.0
    %281 = vmatpush1.msra.mxu0 0.0
    %282 = vmatprep.subr.mxu0 0.0
    %283 = vmatpush1.msra.mxu0 0.0
    %284 = vmatprep.subr.mxu0 0.0
    %285 = vmatpush1.msra.mxu0 0.0
    %286 = vmatprep.subr.mxu0 0.0
    %287 = vmatpush1.msra.mxu0 0.0
    %288 = vmatprep.subr.mxu0 0.0
    %289 = vmatpush1.msra.mxu0 0.0
    %290 = vmatprep.subr.mxu0 0.0
    %291 = vmatpush1.msra.mxu0 0.0
    %292 = vmatprep.subr.mxu0 0.0
    %293 = vmatpush1.msra.mxu0 0.0
    %294 = vmatprep.subr.mxu0 0.0
    %295 = vmatpush1.msra.mxu0 0.0
    %296 = vmatprep.subr.mxu0 0.0
    %297 = vmatpush1.msra.mxu0 0.0
    %298 = vmatprep.subr.mxu0 0.0
    %299 = vmatpush1.msra.mxu0 0.0
    %300 = vmatprep.subr.mxu0 0.0
    %301 = vmatpush1.msra.mxu0 0.0
    %302 = vmatprep.subr.mxu0 0.0
    %303 = vmatpush1.msra.mxu0 0.0
    %304 = vmatprep.subr.mxu0 0.0
    %305 = vmatpush1.msra.mxu0 0.0
    %306 = vmatprep.subr.mxu0 0.0
    %307 = vmatpush1.msra.mxu0 0.0
    %308 = vmatprep.subr.mxu0 0.0
    %309 = vmatpush1.msra.mxu0 0.0
    %310 = vmatprep.subr.mxu0 0.0
    %311 = vmatpush1.msra.mxu0 0.0
    %312 = vmatprep.subr.mxu0 0.0
    %313 = vmatpush1.msra.mxu0 0.0
    %314 = vmatprep.subr.mxu0 0.0
    %315 = vmatpush1.msra.mxu0 0.0
    %316 = vmatprep.subr.mxu0 0.0
    %317 = vmatpush1.msra.mxu0 0.0
    %318 = vmatprep.subr.mxu0 0.0
    %319 = vmatpush1.msra.mxu0 0.0
    %320 = vmatprep.subr.mxu0 0.0
    %321 = vmatpush1.msra.mxu0 0.0
    %322 = vmatprep.subr.mxu0 0.0
    %323 = vmatpush1.msra.mxu0 0.0
    %324 = vmatprep.subr.mxu0 0.0
    %325 = vmatpush1.msra.mxu0 0.0
    %326 = vmatprep.subr.mxu0 0.0
    %327 = vmatpush1.msra.mxu0 0.0
    %328 = vmatprep.subr.mxu0 0.0
    %329 = vmatpush1.msra.mxu0 0.0
    %330 = vmatprep.subr.mxu0 0.0
    %331 = vmatpush1.msra.mxu0 0.0
    %332 = vmatprep.mubr.f32.mxu0 0.0
    %v333 = vand.u32 %v69, 4294901760
    %v334 = vsub.f32 %v69, %v333
    %335 = vmatmul.mubr.f32.gmra.mrb[0].mxu0 %v334
    %v336 = vpop.f32.mrb[0].mxu0
    %v337 = vadd.f32 %v251, %v336
    %v338 = vpop.f32.mrb[0].mxu0
    %339 = vmatprep.mubr.f32.mxu0 0.0
    %v340 = vand.u32 %v72, 4294901760
    %v341 = vsub.f32 %v72, %v340
    %342 = vmatmul.mubr.f32.gmra.mrb[0].mxu0 %v341
    %v343 = vpop.f32.mrb[0].mxu0
    %v344 = vadd.f32 %v257, %v343
    %v345 = vpop.f32.mrb[0].mxu0
    %346 = vdwg.mxu0
    %347 = vmatprep.subr.mxu0 0.0
    %v348 = vand.u32 %v56, 4294901760
    %349 = vmatpush1.msra.mxu0 %v348
    %350 = vmatprep.subr.mxu0 0.0
    %v351 = vand.u32 %v57, 4294901760
    %352 = vmatpush1.msra.mxu0 %v351
    %353 = vmatprep.subr.mxu0 0.0
    %v354 = vand.u32 %v58, 4294901760
    %355 = vmatpush1.msra.mxu0 %v354
    %356 = vmatprep.subr.mxu0 0.0
    %v357 = vand.u32 %v59, 4294901760
    %358 = vmatpush1.msra.mxu0 %v357
    %359 = vmatprep.subr.mxu0 0.0
    %360 = vmatpush1.msra.mxu0 0.0
    %361 = vmatprep.subr.mxu0 0.0
    %362 = vmatpush1.msra.mxu0 0.0
    %363 = vmatprep.subr.mxu0 0.0
    %364 = vmatpush1.msra.mxu0 0.0
    %365 = vmatprep.subr.mxu0 0.0
    %366 = vmatpush1.msra.mxu0 0.0
    %367 = vmatprep.subr.mxu0 0.0
    %368 = vmatpush1.msra.mxu0 0.0
    %369 = vmatprep.subr.mxu0 0.0
    %370 = vmatpush1.msra.mxu0 0.0
    %371 = vmatprep.subr.mxu0 0.0
    %372 = vmatpush1.msra.mxu0 0.0
    %373 = vmatprep.subr.mxu0 0.0
    %374 = vmatpush1.msra.mxu0 0.0
    %375 = vmatprep.subr.mxu0 0.0
    %376 = vmatpush1.msra.mxu0 0.0
    %377 = vmatprep.subr.mxu0 0.0
    %378 = vmatpush1.msra.mxu0 0.0
    %379 = vmatprep.subr.mxu0 0.0
    %380 = vmatpush1.msra.mxu0 0.0
    %381 = vmatprep.subr.mxu0 0.0
    %382 = vmatpush1.msra.mxu0 0.0
    %383 = vmatprep.subr.mxu0 0.0
    %384 = vmatpush1.msra.mxu0 0.0
    %385 = vmatprep.subr.mxu0 0.0
    %386 = vmatpush1.msra.mxu0 0.0
    %387 = vmatprep.subr.mxu0 0.0
    %388 = vmatpush1.msra.mxu0 0.0
    %389 = vmatprep.subr.mxu0 0.0
    %390 = vmatpush1.msra.mxu0 0.0
    %391 = vmatprep.subr.mxu0 0.0
    %392 = vmatpush1.msra.mxu0 0.0
    %393 = vmatprep.subr.mxu0 0.0
    %394 = vmatpush1.msra.mxu0 0.0
    %395 = vmatprep.subr.mxu0 0.0
    %396 = vmatpush1.msra.mxu0 0.0
    %397 = vmatprep.subr.mxu0 0.0
    %398 = vmatpush1.msra.mxu0 0.0
    %399 = vmatprep.subr.mxu0 0.0
    %400 = vmatpush1.msra.mxu0 0.0
    %401 = vmatprep.subr.mxu0 0.0
    %402 = vmatpush1.msra.mxu0 0.0
    %403 = vmatprep.subr.mxu0 0.0
    %404 = vmatpush1.msra.mxu0 0.0
    %405 = vmatprep.subr.mxu0 0.0
    %406 = vmatpush1.msra.mxu0 0.0
    %407 = vmatprep.subr.mxu0 0.0
    %408 = vmatpush1.msra.mxu0 0.0
    %409 = vmatprep.subr.mxu0 0.0
    %410 = vmatpush1.msra.mxu0 0.0
    %411 = vmatprep.subr.mxu0 0.0
    %412 = vmatpush1.msra.mxu0 0.0
    %413 = vmatprep.subr.mxu0 0.0
    %414 = vmatpush1.msra.mxu0 0.0
    %415 = vmatprep.mubr.f32.mxu0 0.0
    %v416 = vand.u32 %v69, 4294901760
    %v417 = vsub.f32 %v69, %v416
    %v418 = vand.u32 %v417, 4294901760
    %419 = vmatmul.mubr.f32.gmra.mrb[0].mxu0 %v418
    %v420 = vpop.f32.mrb[0].mxu0
    %v421 = vadd.f32 %v337, %v420
    %v422 = vpop.f32.mrb[0].mxu0
    %423 = vmatprep.mubr.f32.mxu0 0.0
    %v424 = vand.u32 %v72, 4294901760
    %v425 = vsub.f32 %v72, %v424
    %v426 = vand.u32 %v425, 4294901760
    %427 = vmatmul.mubr.f32.gmra.mrb[0].mxu0 %v426
    %v428 = vpop.f32.mrb[0].mxu0
    %v429 = vadd.f32 %v344, %v428
    %v430 = vpop.f32.mrb[0].mxu0
    %431 = vdwg.mxu0
    %432 = vmatprep.subr.mxu0 0.0
    %v433 = vand.u32 %v56, 4294901760
    %v434 = vsub.f32 %v56, %v433
    %v435 = vand.u32 %v434, 4294901760
    %436 = vmatpush1.msra.mxu0 %v435
    %437 = vmatprep.subr.mxu0 0.0
    %v438 = vand.u32 %v57, 4294901760
    %v439 = vsub.f32 %v57, %v438
    %v440 = vand.u32 %v439, 4294901760
    %441 = vmatpush1.msra.mxu0 %v440
    %442 = vmatprep.subr.mxu0 0.0
    %v443 = vand.u32 %v58, 4294901760
    %v444 = vsub.f32 %v58, %v443
    %v445 = vand.u32 %v444, 4294901760
    %446 = vmatpush1.msra.mxu0 %v445
    %447 = vmatprep.subr.mxu0 0.0
    %v448 = vand.u32 %v59, 4294901760
    %v449 = vsub.f32 %v59, %v448
    %v450 = vand.u32 %v449, 4294901760
    %451 = vmatpush1.msra.mxu0 %v450
    %452 = vmatprep.subr.mxu0 0.0
    %453 = vmatpush1.msra.mxu0 0.0
    %454 = vmatprep.subr.mxu0 0.0
    %455 = vmatpush1.msra.mxu0 0.0
    %456 = vmatprep.subr.mxu0 0.0
    %457 = vmatpush1.msra.mxu0 0.0
    %458 = vmatprep.subr.mxu0 0.0
    %459 = vmatpush1.msra.mxu0 0.0
    %460 = vmatprep.subr.mxu0 0.0
    %461 = vmatpush1.msra.mxu0 0.0
    %462 = vmatprep.subr.mxu0 0.0
    %463 = vmatpush1.msra.mxu0 0.0
    %464 = vmatprep.subr.mxu0 0.0
    %465 = vmatpush1.msra.mxu0 0.0
    %466 = vmatprep.subr.mxu0 0.0
    %467 = vmatpush1.msra.mxu0 0.0
    %468 = vmatprep.subr.mxu0 0.0
    %469 = vmatpush1.msra.mxu0 0.0
    %470 = vmatprep.subr.mxu0 0.0
    %471 = vmatpush1.msra.mxu0 0.0
    %472 = vmatprep.subr.mxu0 0.0
    %473 = vmatpush1.msra.mxu0 0.0
    %474 = vmatprep.subr.mxu0 0.0
    %475 = vmatpush1.msra.mxu0 0.0
    %476 = vmatprep.subr.mxu0 0.0
    %477 = vmatpush1.msra.mxu0 0.0
    %478 = vmatprep.subr.mxu0 0.0
    %479 = vmatpush1.msra.mxu0 0.0
    %480 = vmatprep.subr.mxu0 0.0
    %481 = vmatpush1.msra.mxu0 0.0
    %482 = vmatprep.subr.mxu0 0.0
    %483 = vmatpush1.msra.mxu0 0.0
    %484 = vmatprep.subr.mxu0 0.0
    %485 = vmatpush1.msra.mxu0 0.0
    %486 = vmatprep.subr.mxu0 0.0
    %487 = vmatpush1.msra.mxu0 0.0
    %488 = vmatprep.subr.mxu0 0.0
    %489 = vmatpush1.msra.mxu0 0.0
    %490 = vmatprep.subr.mxu0 0.0
    %491 = vmatpush1.msra.mxu0 0.0
    %492 = vmatprep.subr.mxu0 0.0
    %493 = vmatpush1.msra.mxu0 0.0
    %494 = vmatprep.subr.mxu0 0.0
    %495 = vmatpush1.msra.mxu0 0.0
    %496 = vmatprep.subr.mxu0 0.0
    %497 = vmatpush1.msra.mxu0 0.0
    %498 = vmatprep.subr.mxu0 0.0
    %499 = vmatpush1.msra.mxu0 0.0
    %500 = vmatprep.subr.mxu0 0.0
    %501 = vmatpush1.msra.mxu0 0.0
    %502 = vmatprep.subr.mxu0 0.0
    %503 = vmatpush1.msra.mxu0 0.0
    %504 = vmatprep.subr.mxu0 0.0
    %505 = vmatpush1.msra.mxu0 0.0
    %506 = vmatprep.subr.mxu0 0.0
    %507 = vmatpush1.msra.mxu0 0.0
    %508 = vmatprep.mubr.f32.mxu0 0.0
    %v509 = vand.u32 %v69, 4294901760
    %510 = vmatmul.mubr.f32.gmra.mrb[0].mxu0 %v509
    %v511 = vpop.f32.mrb[0].mxu0
    %v512 = vadd.f32 %v421, %v511
    %v513 = vpop.f32.mrb[0].mxu0
    %514 = vmatprep.mubr.f32.mxu0 0.0
    %v515 = vand.u32 %v72, 4294901760
    %516 = vmatmul.mubr.f32.gmra.mrb[0].mxu0 %v515
    %v517 = vpop.f32.mrb[0].mxu0
    %v518 = vadd.f32 %v429, %v517
    %v519 = vpop.f32.mrb[0].mxu0
    %520 = vdwg.mxu0
    %521 = vmatprep.subr.mxu0 0.0
    %v522 = vand.u32 %v56, 4294901760
    %523 = vmatpush1.msra.mxu0 %v522
    %524 = vmatprep.subr.mxu0 0.0
    %v525 = vand.u32 %v57, 4294901760
    %526 = vmatpush1.msra.mxu0 %v525
    %527 = vmatprep.subr.mxu0 0.0
    %v528 = vand.u32 %v58, 4294901760
    %529 = vmatpush1.msra.mxu0 %v528
    %530 = vmatprep.subr.mxu0 0.0
    %v531 = vand.u32 %v59, 4294901760
    %532 = vmatpush1.msra.mxu0 %v531
    %533 = vmatprep.subr.mxu0 0.0
    %534 = vmatpush1.msra.mxu0 0.0
    %535 = vmatprep.subr.mxu0 0.0
    %536 = vmatpush1.msra.mxu0 0.0
    %537 = vmatprep.subr.mxu0 0.0
    %538 = vmatpush1.msra.mxu0 0.0
    %539 = vmatprep.subr.mxu0 0.0
    %540 = vmatpush1.msra.mxu0 0.0
    %541 = vmatprep.subr.mxu0 0.0
    %542 = vmatpush1.msra.mxu0 0.0
    %543 = vmatprep.subr.mxu0 0.0
    %544 = vmatpush1.msra.mxu0 0.0
    %545 = vmatprep.subr.mxu0 0.0
    %546 = vmatpush1.msra.mxu0 0.0
    %547 = vmatprep.subr.mxu0 0.0
    %548 = vmatpush1.msra.mxu0 0.0
    %549 = vmatprep.subr.mxu0 0.0
    %550 = vmatpush1.msra.mxu0 0.0
    %551 = vmatprep.subr.mxu0 0.0
    %552 = vmatpush1.msra.mxu0 0.0
    %553 = vmatprep.subr.mxu0 0.0
    %554 = vmatpush1.msra.mxu0 0.0
    %555 = vmatprep.subr.mxu0 0.0
    %556 = vmatpush1.msra.mxu0 0.0
    %557 = vmatprep.subr.mxu0 0.0
    %558 = vmatpush1.msra.mxu0 0.0
    %559 = vmatprep.subr.mxu0 0.0
    %560 = vmatpush1.msra.mxu0 0.0
    %561 = vmatprep.subr.mxu0 0.0
    %562 = vmatpush1.msra.mxu0 0.0
    %563 = vmatprep.subr.mxu0 0.0
    %564 = vmatpush1.msra.mxu0 0.0
    %565 = vmatprep.subr.mxu0 0.0
    %566 = vmatpush1.msra.mxu0 0.0
    %567 = vmatprep.subr.mxu0 0.0
    %568 = vmatpush1.msra.mxu0 0.0
    %569 = vmatprep.subr.mxu0 0.0
    %570 = vmatpush1.msra.mxu0 0.0
    %571 = vmatprep.subr.mxu0 0.0
    %572 = vmatpush1.msra.mxu0 0.0
    %573 = vmatprep.subr.mxu0 0.0
    %574 = vmatpush1.msra.mxu0 0.0
    %575 = vmatprep.subr.mxu0 0.0
    %576 = vmatpush1.msra.mxu0 0.0
    %577 = vmatprep.subr.mxu0 0.0
    %578 = vmatpush1.msra.mxu0 0.0
    %579 = vmatprep.subr.mxu0 0.0
    %580 = vmatpush1.msra.mxu0 0.0
    %581 = vmatprep.subr.mxu0 0.0
    %582 = vmatpush1.msra.mxu0 0.0
    %583 = vmatprep.subr.mxu0 0.0
    %584 = vmatpush1.msra.mxu0 0.0
    %585 = vmatprep.subr.mxu0 0.0
    %586 = vmatpush1.msra.mxu0 0.0
    %587 = vmatprep.subr.mxu0 0.0
    %588 = vmatpush1.msra.mxu0 0.0
    %589 = vmatprep.mubr.f32.mxu0 0.0
    %v590 = vand.u32 %v69, 4294901760
    %591 = vmatmul.mubr.f32.gmra.mrb[0].mxu0 %v590
    %v592 = vpop.f32.mrb[0].mxu0
    %v593 = vadd.f32 %v512, %v592
    %v594 = vpop.f32.mrb[0].mxu0
    %595 = vmatprep.mubr.f32.mxu0 0.0
    %v596 = vand.u32 %v72, 4294901760
    %597 = vmatmul.mubr.f32.gmra.mrb[0].mxu0 %v596
    %v598 = vpop.f32.mrb[0].mxu0
    %v599 = vadd.f32 %v518, %v598
    %v600 = vpop.f32.mrb[0].mxu0
    %601 = vdwg.mxu0
    %602 = vst.msk [vmem:[#allocation8] sm:$0xff] %vm67, %v593
    %603 = vst.msk [vmem:[#allocation8 + $0x8] sm:$0xff] %vm67, %v599
    // Predicated region
    $region26: #{mechanism_transformer_forward.18} parent=1 // pred_check
      _
    $region27: #{mechanism_transformer_forward.18} parent=1 // pred_check_branch
      %605 = sbr.rel (0) target = $region29
    $region28: #{mechanism_transformer_forward.18} parent=1 // pred_region
      %s607 = ssub.s32 256, 256
      %608 = vsyncadd [#allocation4], %s607
      %s609 = sshll.u32 [#allocation8], 4
      %s610 = int_to_ptr.vmem [resolvable:$true] %s609
      %615 = dma.vmem_to_hbm [thread:$0]  %s610, 256, %s3, [#allocation4], 128, 128, 8
    $region29: #{mechanism_transformer_forward.18} parent=1 // pred_fallthru
      _
    // Predicated region
    $region30: #{mechanism_transformer_forward.18} parent=1 // pred_check
      _
    $region31: #{mechanism_transformer_forward.18} parent=1 // pred_check_branch
      %617 = sbr.rel (0) target = $region33
    $region32: #{mechanism_transformer_forward.18} parent=1 // pred_region
      %618 = dma.done [#allocation4], 256
    $region33: #{mechanism_transformer_forward.18} parent=1 // pred_fallthru
      _
    %619 = vsyncpa [#allocation3], 1
    %620 = vsyncpa [#allocation6], 1
    %621 = vsyncpa [#allocation4], 1

// kernel: mechanism_transformer_forward.20
$region0: #{mechanism_transformer_forward.20}
  #allocation0 [shape = 'u32[]', space=smem, size = 0x4, offset = 0x4, fixed_abs, tag = 'smem constant byte address 0x4 - core index']
  #allocation1 [shape = 'u32[144,128]{1,0:T(1,128)}', space=vmem, size = 0x12000, scoped, tag = 'internal scratch']
  %s0 = inlined_call_operand.hbm [shape: f32[2,8,32], index: 0, kind: input, shape index: {}]
  %s1 = inlined_call_operand.hbm [shape: f32[8,32], index: 1, kind: input, shape index: {}]
  %s2 = inlined_call_operand.hbm [shape: f32[2,8,32], index: 2, kind: output, shape index: {}]
  %s3 = sld [smem:[#allocation0]]
  $region49: #{mechanism_transformer_forward.20} parent=0
    _
  %s5 = ssub.s32 1, %s3
  %s6 = scalar_select 0, %s5, %s3
  $region1: #{mechanism_transformer_forward.20} parent=0
    #allocation2 [shape = 'u8[8192]{0}', space=vmem, size = 0x2000, scoped, tag = 'input window, operand 0']
    #allocation3 [shape = 's32[2]{0}', space=sflag, size = 0x8, scoped, tag = 'scoped memory for mechanism_transformer_forward.20']
    #allocation4 [shape = 's32[2]{0}', space=sflag, size = 0x8, scoped, tag = 'scoped memory for mechanism_transformer_forward.20']
    #allocation5 [shape = 'u8[4096]{0}', space=vmem, size = 0x1000, scoped, tag = 'input window, operand 1, single buffered']
    #allocation6 [shape = 's32[1]{0}', space=sflag, size = 0x4, scoped, tag = 'scoped memory for mechanism_transformer_forward.20']
    #allocation7 [shape = 'u8[8192]{0}', space=vmem, size = 0x2000, scoped, tag = 'output window, operand 0']
    %7 = vsyncpa [#allocation3], 0
    %s8 = scalar_lea.sflag [#allocation3], 1
    %9 = vsyncpa %s8, 0
    %10 = vsyncpa [#allocation6], 0
    %11 = vsyncpa [#allocation4], 0
    %s12 = scalar_lea.sflag [#allocation4], 1
    %13 = vsyncpa %s12, 0
    loop: start=0, step=1, limit=4
    $region2: #{mechanism_transformer_forward.20} parent=1 // loop_pre_header
      _
    $region3: #{mechanism_transformer_forward.20} parent=1 // loop_header
      %s15 = sphi 0, %s19
      %p16 = scmp.ge.s32.totalorder %s15, 4
      %s22 = sphi 0, %s34
      %s23 = sphi 0, %s30
      %s24 = sphi 0, %s22
      %s25 = sphi 0, %s23
      %s26 = sphi 0, %s24
      %s27 = sphi 0, %s25
      %s39 = sphi 0, %s41
      %s42 = sphi 0, %s39
      %s43 = sphi 0, %s42
      %s59 = sphi 0, %s43
      %s65 = sphi 0, %s67
      %s68 = sphi 0, %s65
      %s69 = sphi 0, %s68
      %s85 = sphi 0, %s69
      %s93 = sphi 0, %s95
      %s96 = sphi 0, %s93
      %s97 = sphi 0, %s96
      %s113 = sphi 0, %s97
    $region4: #{mechanism_transformer_forward.20} parent=1 // loop_header_branch
      %18 = sbr.rel (%p16) target = $region8
    $region5: #{mechanism_transformer_forward.20} parent=1 // loop_body
      %s20 = ssub.s32 %s15, 1
      %s21 = ssub.s32 %s15, 2
      %s28 = sadd.s32 1, %s23
      %p29 = scmp.ge.s32.totalorder %s28, 1
      %s30 = scalar_select %p29, 0, %s28
      %s31 = sadd.s32 1, %s22
      %s32 = scalar_select %p29, %s31, %s22
      %p33 = scmp.ge.s32.totalorder %s32, 2
      %s34 = scalar_select %p33, 0, %s32
      %s35 = ssub.s32 %s22, %s34
      %s36 = ssub.s32 %s23, %s30
      %s37 = sor.u32 %s35, %s36
      %p38 = scmp.eq.s32.totalorder %s37, 0
      %s40 = sadd.s32 %s39, 1
      %s41 = scalar_select %p38, %s39, %s40
      %p44 = pneg %p38
      %p45 = scmp.eq.s32.totalorder %s15, 1
      %p46 = por %p44, %p45
      %p47 = scmp.ne.s32.totalorder %s39, %s42
      %p48 = scmp.eq.s32.totalorder %s15, 0
      %p49 = por %p47, %p48
      %p50 = scmp.ne.s32.totalorder %s39, %s42
      %p51 = scmp.eq.s32.totalorder %s20, 1
      %p52 = por %p50, %p51
      %p53 = scmp.ne.s32.totalorder %s42, %s43
      %p54 = scmp.eq.s32.totalorder %s20, 0
      %p55 = por %p53, %p54
      %p56 = scmp.ne.s32.totalorder %s42, %s43
      %p57 = scmp.eq.s32.totalorder %s21, 1
      %p58 = por %p56, %p57
      %p60 = scmp.ne.s32.totalorder %s43, %s59
      %p61 = scmp.eq.s32.totalorder %s21, 0
      %p62 = por %p60, %p61
      %s63 = ssub.s32 %s23, %s30
      %p64 = scmp.eq.s32.totalorder %s63, 0
      %s66 = sadd.s32 %s65, 1
      %s67 = scalar_select %p64, %s65, %s66
      %p70 = pneg %p64
      %p71 = scmp.eq.s32.totalorder %s15, 1
      %p72 = por %p70, %p71
      %p73 = scmp.ne.s32.totalorder %s65, %s68
      %p74 = scmp.eq.s32.totalorder %s15, 0
      %p75 = por %p73, %p74
      %p76 = scmp.ne.s32.totalorder %s65, %s68
      %p77 = scmp.eq.s32.totalorder %s20, 1
      %p78 = por %p76, %p77
      %p79 = scmp.ne.s32.totalorder %s68, %s69
      %p80 = scmp.eq.s32.totalorder %s20, 0
      %p81 = por %p79, %p80
      %p82 = scmp.ne.s32.totalorder %s68, %s69
      %p83 = scmp.eq.s32.totalorder %s21, 1
      %p84 = por %p82, %p83
      %p86 = scmp.ne.s32.totalorder %s69, %s85
      %p87 = scmp.eq.s32.totalorder %s21, 0
      %p88 = por %p86, %p87
      %s89 = ssub.s32 %s22, %s34
      %s90 = ssub.s32 %s23, %s30
      %s91 = sor.u32 %s89, %s90
      %p92 = scmp.eq.s32.totalorder %s91, 0
      %s94 = sadd.s32 %s93, 1
      %s95 = scalar_select %p92, %s93, %s94
      %p98 = pneg %p92
      %p99 = scmp.eq.s32.totalorder %s15, 1
      %p100 = por %p98, %p99
      %p101 = scmp.ne.s32.totalorder %s93, %s96
      %p102 = scmp.eq.s32.totalorder %s15, 0
      %p103 = por %p101, %p102
      %p104 = scmp.ne.s32.totalorder %s93, %s96
      %p105 = scmp.eq.s32.totalorder %s20, 1
      %p106 = por %p104, %p105
      %p107 = scmp.ne.s32.totalorder %s96, %s97
      %p108 = scmp.eq.s32.totalorder %s20, 0
      %p109 = por %p107, %p108
      %p110 = scmp.ne.s32.totalorder %s96, %s97
      %p111 = scmp.eq.s32.totalorder %s21, 1
      %p112 = por %p110, %p111
      %p114 = scmp.ne.s32.totalorder %s97, %s113
      %p115 = scmp.eq.s32.totalorder %s21, 0
      %p116 = por %p114, %p115
      %p117 = scmp.le.s32.totalorder 1, %s15
      %p118 = scmp.lt.s32.totalorder %s15, 3
      %p119 = pnand %p117, %p118
      %p120 = pneg %p119
      // Predicated region
      $region9: #{mechanism_transformer_forward.20} parent=5 // pred_check
        _
      $region10: #{mechanism_transformer_forward.20} parent=5 // pred_check_branch
        %122 = sbr.rel (%p119) target = $region12
      $region11: #{mechanism_transformer_forward.20} parent=5 // pred_region
        %s123 = ssub.s32 %s15, 1
        // Predicated region
        $region13: #{mechanism_transformer_forward.20} parent=11 // pred_check
          %p124 = pneg %p81
        $region14: #{mechanism_transformer_forward.20} parent=11 // pred_check_branch
          %126 = sbr.rel (%p124) target = $region16
        $region15: #{mechanism_transformer_forward.20} parent=11 // pred_region
          %s128 = ssub.s32 128, 128
          %129 = vsyncadd [#allocation6], %s128
          %s130 = smul.addr %s25, 128
          %s131 = scalar_lea.hbm %s1, %s130
          %s133 = sshll.u32 [#allocation5], 4
          %s134 = int_to_ptr.vmem [resolvable:$true] %s133
          %136 = dma.hbm_to_vmem [thread:$0]  %s131, 128, %s134, [#allocation6]
        $region16: #{mechanism_transformer_forward.20} parent=11 // pred_fallthru
          _
      $region12: #{mechanism_transformer_forward.20} parent=5 // pred_fallthru
        _
      %p137 = scmp.lt.s32.totalorder %s15, 2
      // Predicated region
      $region17: #{mechanism_transformer_forward.20} parent=5 // pred_check
        %p138 = pneg %p137
      $region18: #{mechanism_transformer_forward.20} parent=5 // pred_check_branch
        %140 = sbr.rel (%p138) target = $region20
      $region19: #{mechanism_transformer_forward.20} parent=5 // pred_region
        // Predicated region
        $region21: #{mechanism_transformer_forward.20} parent=19 // pred_check
          %p141 = pneg %p49
        $region22: #{mechanism_transformer_forward.20} parent=19 // pred_check_branch
          %143 = sbr.rel (%p141) target = $region24
        $region23: #{mechanism_transformer_forward.20} parent=19 // pred_region
          %s144 = sand.u32 %s39, 1
          %s145 = scalar_lea.sflag [#allocation3], %s144
          %s146 = sand.u32 %s39, 1
          %s147 = smul.addr %s146, 8
          %s148 = scalar_lea.vmem [#allocation2], %s147
          %s150 = ssub.s32 128, 128
          %151 = vsyncadd %s145, %s150
          %s152 = sadd.s32 %s23, %s22
          %s153 = smul.addr %s152, 128
          %s154 = scalar_lea.hbm %s0, %s153
          %s156 = sshll.u32 %s148, 4
          %s157 = int_to_ptr.vmem [resolvable:$true] %s156
          %159 = dma.hbm_to_vmem [thread:$0]  %s154, 128, %s157, %s145
        $region24: #{mechanism_transformer_forward.20} parent=19 // pred_fallthru
          _
      $region20: #{mechanism_transformer_forward.20} parent=5 // pred_fallthru
        _
      %p160 = scmp.le.s32.totalorder 1, %s15
      %p161 = scmp.lt.s32.totalorder %s15, 3
      %p162 = pnand %p160, %p161
      %p163 = pneg %p162
      // Predicated region
      $region25: #{mechanism_transformer_forward.20} parent=5 // pred_check
        _
      $region26: #{mechanism_transformer_forward.20} parent=5 // pred_check_branch
        %165 = sbr.rel (%p162) target = $region28
      $region27: #{mechanism_transformer_forward.20} parent=5 // pred_region
        %s166 = ssub.s32 %s15, 1
        %s167 = sand.u32 %s42, 1
        %s168 = scalar_lea.sflag [#allocation3], %s167
        %s169 = sand.u32 %s42, 1
        %s170 = smul.addr %s169, 8
        %s171 = scalar_lea.vmem [#allocation2], %s170
        // Predicated region
        $region29: #{mechanism_transformer_forward.20} parent=27 // pred_check
          %p172 = pneg %p55
        $region30: #{mechanism_transformer_forward.20} parent=27 // pred_check_branch
          %174 = sbr.rel (%p172) target = $region32
        $region31: #{mechanism_transformer_forward.20} parent=27 // pred_region
          %175 = dma.done %s168, 128
        $region32: #{mechanism_transformer_forward.20} parent=27 // pred_fallthru
          _
        // Predicated region
        $region33: #{mechanism_transformer_forward.20} parent=27 // pred_check
          %p176 = pneg %p81
        $region34: #{mechanism_transformer_forward.20} parent=27 // pred_check_branch
          %178 = sbr.rel (%p176) target = $region36
        $region35: #{mechanism_transformer_forward.20} parent=27 // pred_region
          %179 = dma.done [#allocation6], 128
        $region36: #{mechanism_transformer_forward.20} parent=27 // pred_fallthru
          _
        %s180 = sand.u32 %s42, 1
        %s181 = scalar_lea.sflag [#allocation3], %s180
        %s182 = sand.u32 %s42, 1
        %s183 = smul.addr %s182, 8
        %s184 = scalar_lea.vmem [#allocation2], %s183
        %p185 = pneg %p55
        %p186 = pneg %p52
        %p187 = pneg %p81
        %p188 = pneg %p78
        %p189 = pneg %p109
        %p190 = pneg %p106
        %s191 = sand.u32 %s96, 1
        %s192 = scalar_lea.sflag [#allocation4], %s191
        %s193 = sand.u32 %s96, 1
        %s194 = smul.addr %s193, 8
        %s195 = scalar_lea.vmem [#allocation7], %s194
        %v196 = vld [vmem:[%s171] sm:$0xff]
        %v197 = vld [vmem:[#allocation5] sm:$0xff]
        %v198 = vadd.f32 %v196, %v197
        %vm199 = vcmask 261120
        %200 = vst.msk [vmem:[%s195] sm:$0xff] %vm199, %v198
        %s201 = sand.u32 %s96, 1
        %s202 = scalar_lea.sflag [#allocation4], %s201
        %s203 = sand.u32 %s96, 1
        %s204 = smul.addr %s203, 8
        %s205 = scalar_lea.vmem [#allocation7], %s204
        // Predicated region
        $region37: #{mechanism_transformer_forward.20} parent=27 // pred_check
          %p206 = pneg %p106
        $region38: #{mechanism_transformer_forward.20} parent=27 // pred_check_branch
          %208 = sbr.rel (%p206) target = $region40
        $region39: #{mechanism_transformer_forward.20} parent=27 // pred_region
          %s210 = ssub.s32 128, 128
          %211 = vsyncadd %s202, %s210
          %s212 = sadd.s32 %s25, %s24
          %s213 = smul.addr %s212, 128
          %s214 = scalar_lea.hbm %s2, %s213
          %s216 = sshll.u32 %s205, 4
          %s217 = int_to_ptr.vmem [resolvable:$true] %s216
          %219 = dma.vmem_to_hbm [thread:$0]  %s217, 128, %s214, %s202
        $region40: #{mechanism_transformer_forward.20} parent=27 // pred_fallthru
          _
      $region28: #{mechanism_transformer_forward.20} parent=5 // pred_fallthru
        _
      %p220 = scmp.le.s32.totalorder 2, %s15
      // Predicated region
      $region41: #{mechanism_transformer_forward.20} parent=5 // pred_check
        %p221 = pneg %p220
      $region42: #{mechanism_transformer_forward.20} parent=5 // pred_check_branch
        %223 = sbr.rel (%p221) target = $region44
      $region43: #{mechanism_transformer_forward.20} parent=5 // pred_region
        %s224 = ssub.s32 %s15, 2
        // Predicated region
        $region45: #{mechanism_transformer_forward.20} parent=43 // pred_check
          %p225 = pneg %p112
        $region46: #{mechanism_transformer_forward.20} parent=43 // pred_check_branch
          %227 = sbr.rel (%p225) target = $region48
        $region47: #{mechanism_transformer_forward.20} parent=43 // pred_region
          %s228 = sand.u32 %s97, 1
          %s229 = scalar_lea.sflag [#allocation4], %s228
          %s230 = sand.u32 %s97, 1
          %s231 = smul.addr %s230, 8
          %s232 = scalar_lea.vmem [#allocation7], %s231
          %233 = dma.done %s229, 128
        $region48: #{mechanism_transformer_forward.20} parent=43 // pred_fallthru
          _
      $region44: #{mechanism_transformer_forward.20} parent=5 // pred_fallthru
        _
    $region6: #{mechanism_transformer_forward.20} parent=1 // loop_footer
      %s19 = sadd.s32 1, %s15
    $region7: #{mechanism_transformer_forward.20} parent=1 // loop_footer_branch
      %14 = sbr.rel target = $region3
    $region8: #{mechanism_transformer_forward.20} parent=1 // loop_exit
      _
    %234 = vsyncpa [#allocation3], 1
    %s235 = scalar_lea.sflag [#allocation3], 1
    %236 = vsyncpa %s235, 1
    %237 = vsyncpa [#allocation6], 1
    %238 = vsyncpa [#allocation4], 1
    %s239 = scalar_lea.sflag [#allocation4], 1
    %240 = vsyncpa %s239, 1

// kernel: mechanism_transformer_forward.19
$region0: #{mechanism_transformer_forward.19}
  #allocation0 [shape = 'u32[]', space=smem, size = 0x4, offset = 0x4, fixed_abs, tag = 'smem constant byte address 0x4 - core index']
  #allocation1 [shape = 'u32[144,128]{1,0:T(1,128)}', space=vmem, size = 0x12000, scoped, tag = 'internal scratch']
  %s0 = inlined_call_operand.hbm [shape: f32[8,32], index: 0, kind: input, shape index: {}]
  %s1 = inlined_call_operand.hbm [shape: f32[32,32], index: 1, kind: input, shape index: {}]
  %s2 = inlined_call_operand.hbm [shape: f32[1,32], index: 2, kind: input, shape index: {}]
  %s3 = inlined_call_operand.hbm [shape: f32[8,32], index: 3, kind: output, shape index: {}]
  %s4 = sld [smem:[#allocation0]]
  $region34: #{mechanism_transformer_forward.19} parent=0
    _
  %s6 = ssub.s32 1, %s4
  %s7 = scalar_select 0, %s6, %s4
  $region1: #{mechanism_transformer_forward.19} parent=0
    #allocation2 [shape = 'u8[4096]{0}', space=vmem, size = 0x1000, scoped, tag = 'input window, operand 0, single buffered']
    #allocation3 [shape = 's32[1]{0}', space=sflag, size = 0x4, scoped, tag = 'scoped memory for mechanism_transformer_forward.19']
    #allocation4 [shape = 's32[1]{0}', space=sflag, size = 0x4, scoped, tag = 'scoped memory for mechanism_transformer_forward.19']
    #allocation5 [shape = 'u8[16384]{0}', space=vmem, size = 0x4000, scoped, tag = 'input window, operand 1, single buffered']
    #allocation6 [shape = 's32[1]{0}', space=sflag, size = 0x4, scoped, tag = 'scoped memory for mechanism_transformer_forward.19']
    #allocation7 [shape = 'u8[512]{0}', space=vmem, size = 0x400, scoped, tag = 'input window, operand 2, single buffered']
    #allocation8 [shape = 'u8[4096]{0}', space=vmem, size = 0x1000, scoped, tag = 'output window, operand 0, single buffered']
    %8 = vsyncpa [#allocation3], 0
    %9 = vsyncpa [#allocation6], 0
    %10 = vsyncpa [#allocation4], 0
    // Predicated region
    $region2: #{mechanism_transformer_forward.19} parent=1 // pred_check
      _
    $region3: #{mechanism_transformer_forward.19} parent=1 // pred_check_branch
      %12 = sbr.rel (0) target = $region5
    $region4: #{mechanism_transformer_forward.19} parent=1 // pred_region
      %s14 = ssub.s32 128, 128
      %15 = vsyncadd [#allocation3], %s14
      %s17 = sshll.u32 [#allocation2], 4
      %s18 = int_to_ptr.vmem [resolvable:$true] %s17
      %20 = dma.hbm_to_vmem [thread:$0]  %s0, 128, %s18, [#allocation3]
    $region5: #{mechanism_transformer_forward.19} parent=1 // pred_fallthru
      _
    // Predicated region
    $region6: #{mechanism_transformer_forward.19} parent=1 // pred_check
      _
    $region7: #{mechanism_transformer_forward.19} parent=1 // pred_check_branch
      %22 = sbr.rel (0) target = $region9
    $region8: #{mechanism_transformer_forward.19} parent=1 // pred_region
      %s24 = ssub.s32 512, 512
      %25 = vsyncadd [#allocation6], %s24
      %s26 = sshll.u32 [#allocation5], 4
      %s27 = int_to_ptr.vmem [resolvable:$true] %s26
      %32 = dma.hbm_to_vmem [thread:$0]  %s1, 512, %s27, [#allocation6], 128, 128, 8
    $region9: #{mechanism_transformer_forward.19} parent=1 // pred_fallthru
      _
    // Predicated region
    $region10: #{mechanism_transformer_forward.19} parent=1 // pred_check
      _
    $region11: #{mechanism_transformer_forward.19} parent=1 // pred_check_branch
      %34 = sbr.rel (0) target = $region13
    $region12: #{mechanism_transformer_forward.19} parent=1 // pred_region
      %s36 = ssub.s32 16, 16
      %37 = vsyncadd [#allocation6], %s36
      %s39 = sshll.u32 [#allocation7], 4
      %s40 = int_to_ptr.vmem [resolvable:$true] %s39
      %42 = dma.hbm_to_vmem [thread:$0]  %s2, 16, %s40, [#allocation6]
    $region13: #{mechanism_transformer_forward.19} parent=1 // pred_fallthru
      _
    // Predicated region
    $region14: #{mechanism_transformer_forward.19} parent=1 // pred_check
      _
    $region15: #{mechanism_transformer_forward.19} parent=1 // pred_check_branch
      %44 = sbr.rel (0) target = $region17
    $region16: #{mechanism_transformer_forward.19} parent=1 // pred_region
      %45 = dma.done [#allocation3], 128
    $region17: #{mechanism_transformer_forward.19} parent=1 // pred_fallthru
      _
    // Predicated region
    $region18: #{mechanism_transformer_forward.19} parent=1 // pred_check
      _
    $region19: #{mechanism_transformer_forward.19} parent=1 // pred_check_branch
      %47 = sbr.rel (0) target = $region21
    $region20: #{mechanism_transformer_forward.19} parent=1 // pred_region
      %48 = dma.done [#allocation6], 512
    $region21: #{mechanism_transformer_forward.19} parent=1 // pred_fallthru
      _
    // Predicated region
    $region22: #{mechanism_transformer_forward.19} parent=1 // pred_check
      _
    $region23: #{mechanism_transformer_forward.19} parent=1 // pred_check_branch
      %50 = sbr.rel (0) target = $region25
    $region24: #{mechanism_transformer_forward.19} parent=1 // pred_region
      %51 = dma.done [#allocation6], 16
    $region25: #{mechanism_transformer_forward.19} parent=1 // pred_fallthru
      _
    %v52 = vld [vmem:[#allocation2] sm:$0xff]
    %v53 = vld [vmem:[#allocation5] sm:$0xff]
    %v54 = vld [vmem:[#allocation5 + $0x8] sm:$0xff]
    %v55 = vld [vmem:[#allocation5 + $0x10] sm:$0xff]
    %v56 = vld [vmem:[#allocation5 + $0x18] sm:$0xff]
    %v57 = vld [vmem:[#allocation7] sm:$0x1]
    %v59 = vlaneseq
    %v60 = vshrl.u32 %v59, 7
    %v61 = vsub.s32 0, %v60
    %v62 = vrot.slane %v57, %v61
    %vm64 = vcmask 261120
    %v66 = vsel %vm64, %v52, 0
    %68 = vmatprep.subr.mxu0 0.0
    %v69 = vand.u32 %v53, 4294901760
    %70 = vmatpush1.msra.mxu0 %v69
    %71 = vmatprep.subr.mxu0 0.0
    %v72 = vand.u32 %v54, 4294901760
    %73 = vmatpush1.msra.mxu0 %v72
    %74 = vmatprep.subr.mxu0 0.0
    %v75 = vand.u32 %v55, 4294901760
    %76 = vmatpush1.msra.mxu0 %v75
    %77 = vmatprep.subr.mxu0 0.0
    %v78 = vand.u32 %v56, 4294901760
    %79 = vmatpush1.msra.mxu0 %v78
    %80 = vmatprep.subr.mxu0 0.0
    %81 = vmatpush1.msra.mxu0 0.0
    %82 = vmatprep.subr.mxu0 0.0
    %83 = vmatpush1.msra.mxu0 0.0
    %84 = vmatprep.subr.mxu0 0.0
    %85 = vmatpush1.msra.mxu0 0.0
    %86 = vmatprep.subr.mxu0 0.0
    %87 = vmatpush1.msra.mxu0 0.0
    %88 = vmatprep.subr.mxu0 0.0
    %89 = vmatpush1.msra.mxu0 0.0
    %90 = vmatprep.subr.mxu0 0.0
    %91 = vmatpush1.msra.mxu0 0.0
    %92 = vmatprep.subr.mxu0 0.0
    %93 = vmatpush1.msra.mxu0 0.0
    %94 = vmatprep.subr.mxu0 0.0
    %95 = vmatpush1.msra.mxu0 0.0
    %96 = vmatprep.subr.mxu0 0.0
    %97 = vmatpush1.msra.mxu0 0.0
    %98 = vmatprep.subr.mxu0 0.0
    %99 = vmatpush1.msra.mxu0 0.0
    %100 = vmatprep.subr.mxu0 0.0
    %101 = vmatpush1.msra.mxu0 0.0
    %102 = vmatprep.subr.mxu0 0.0
    %103 = vmatpush1.msra.mxu0 0.0
    %104 = vmatprep.subr.mxu0 0.0
    %105 = vmatpush1.msra.mxu0 0.0
    %106 = vmatprep.subr.mxu0 0.0
    %107 = vmatpush1.msra.mxu0 0.0
    %108 = vmatprep.subr.mxu0 0.0
    %109 = vmatpush1.msra.mxu0 0.0
    %110 = vmatprep.subr.mxu0 0.0
    %111 = vmatpush1.msra.mxu0 0.0
    %112 = vmatprep.subr.mxu0 0.0
    %113 = vmatpush1.msra.mxu0 0.0
    %114 = vmatprep.subr.mxu0 0.0
    %115 = vmatpush1.msra.mxu0 0.0
    %116 = vmatprep.subr.mxu0 0.0
    %117 = vmatpush1.msra.mxu0 0.0
    %118 = vmatprep.subr.mxu0 0.0
    %119 = vmatpush1.msra.mxu0 0.0
    %120 = vmatprep.subr.mxu0 0.0
    %121 = vmatpush1.msra.mxu0 0.0
    %122 = vmatprep.subr.mxu0 0.0
    %123 = vmatpush1.msra.mxu0 0.0
    %124 = vmatprep.subr.mxu0 0.0
    %125 = vmatpush1.msra.mxu0 0.0
    %126 = vmatprep.subr.mxu0 0.0
    %127 = vmatpush1.msra.mxu0 0.0
    %128 = vmatprep.subr.mxu0 0.0
    %129 = vmatpush1.msra.mxu0 0.0
    %130 = vmatprep.subr.mxu0 0.0
    %131 = vmatpush1.msra.mxu0 0.0
    %132 = vmatprep.subr.mxu0 0.0
    %133 = vmatpush1.msra.mxu0 0.0
    %134 = vmatprep.subr.mxu0 0.0
    %135 = vmatpush1.msra.mxu0 0.0
    %136 = vmatprep.mubr.f32.mxu0 0.0
    %v137 = vand.u32 %v66, 4294901760
    %v138 = vsub.f32 %v66, %v137
    %v139 = vand.u32 %v138, 4294901760
    %v140 = vsub.f32 %v138, %v139
    %v141 = vand.u32 %v140, 4294901760
    %142 = vmatmul.mubr.f32.gmra.mrb[0].mxu0 %v141
    %v143 = vpop.f32.mrb[0].mxu0
    %v144 = vadd.f32 %v62, %v143
    %v145 = vpop.f32.mrb[0].mxu0
    %146 = vdwg.mxu0
    %147 = vmatprep.subr.mxu0 0.0
    %v148 = vand.u32 %v53, 4294901760
    %v149 = vsub.f32 %v53, %v148
    %v150 = vand.u32 %v149, 4294901760
    %v151 = vsub.f32 %v149, %v150
    %v152 = vand.u32 %v151, 4294901760
    %153 = vmatpush1.msra.mxu0 %v152
    %154 = vmatprep.subr.mxu0 0.0
    %v155 = vand.u32 %v54, 4294901760
    %v156 = vsub.f32 %v54, %v155
    %v157 = vand.u32 %v156, 4294901760
    %v158 = vsub.f32 %v156, %v157
    %v159 = vand.u32 %v158, 4294901760
    %160 = vmatpush1.msra.mxu0 %v159
    %161 = vmatprep.subr.mxu0 0.0
    %v162 = vand.u32 %v55, 4294901760
    %v163 = vsub.f32 %v55, %v162
    %v164 = vand.u32 %v163, 4294901760
    %v165 = vsub.f32 %v163, %v164
    %v166 = vand.u32 %v165, 4294901760
    %167 = vmatpush1.msra.mxu0 %v166
    %168 = vmatprep.subr.mxu0 0.0
    %v169 = vand.u32 %v56, 4294901760
    %v170 = vsub.f32 %v56, %v169
    %v171 = vand.u32 %v170, 4294901760
    %v172 = vsub.f32 %v170, %v171
    %v173 = vand.u32 %v172, 4294901760
    %174 = vmatpush1.msra.mxu0 %v173
    %175 = vmatprep.subr.mxu0 0.0
    %176 = vmatpush1.msra.mxu0 0.0
    %177 = vmatprep.subr.mxu0 0.0
    %178 = vmatpush1.msra.mxu0 0.0
    %179 = vmatprep.subr.mxu0 0.0
    %180 = vmatpush1.msra.mxu0 0.0
    %181 = vmatprep.subr.mxu0 0.0
    %182 = vmatpush1.msra.mxu0 0.0
    %183 = vmatprep.subr.mxu0 0.0
    %184 = vmatpush1.msra.mxu0 0.0
    %185 = vmatprep.subr.mxu0 0.0
    %186 = vmatpush1.msra.mxu0 0.0
    %187 = vmatprep.subr.mxu0 0.0
    %188 = vmatpush1.msra.mxu0 0.0
    %189 = vmatprep.subr.mxu0 0.0
    %190 = vmatpush1.msra.mxu0 0.0
    %191 = vmatprep.subr.mxu0 0.0
    %192 = vmatpush1.msra.mxu0 0.0
    %193 = vmatprep.subr.mxu0 0.0
    %194 = vmatpush1.msra.mxu0 0.0
    %195 = vmatprep.subr.mxu0 0.0
    %196 = vmatpush1.msra.mxu0 0.0
    %197 = vmatprep.subr.mxu0 0.0
    %198 = vmatpush1.msra.mxu0 0.0
    %199 = vmatprep.subr.mxu0 0.0
    %200 = vmatpush1.msra.mxu0 0.0
    %201 = vmatprep.subr.mxu0 0.0
    %202 = vmatpush1.msra.mxu0 0.0
    %203 = vmatprep.subr.mxu0 0.0
    %204 = vmatpush1.msra.mxu0 0.0
    %205 = vmatprep.subr.mxu0 0.0
    %206 = vmatpush1.msra.mxu0 0.0
    %207 = vmatprep.subr.mxu0 0.0
    %208 = vmatpush1.msra.mxu0 0.0
    %209 = vmatprep.subr.mxu0 0.0
    %210 = vmatpush1.msra.mxu0 0.0
    %211 = vmatprep.subr.mxu0 0.0
    %212 = vmatpush1.msra.mxu0 0.0
    %213 = vmatprep.subr.mxu0 0.0
    %214 = vmatpush1.msra.mxu0 0.0
    %215 = vmatprep.subr.mxu0 0.0
    %216 = vmatpush1.msra.mxu0 0.0
    %217 = vmatprep.subr.mxu0 0.0
    %218 = vmatpush1.msra.mxu0 0.0
    %219 = vmatprep.subr.mxu0 0.0
    %220 = vmatpush1.msra.mxu0 0.0
    %221 = vmatprep.subr.mxu0 0.0
    %222 = vmatpush1.msra.mxu0 0.0
    %223 = vmatprep.subr.mxu0 0.0
    %224 = vmatpush1.msra.mxu0 0.0
    %225 = vmatprep.subr.mxu0 0.0
    %226 = vmatpush1.msra.mxu0 0.0
    %227 = vmatprep.subr.mxu0 0.0
    %228 = vmatpush1.msra.mxu0 0.0
    %229 = vmatprep.subr.mxu0 0.0
    %230 = vmatpush1.msra.mxu0 0.0
    %231 = vmatprep.mubr.f32.mxu0 0.0
    %v232 = vand.u32 %v66, 4294901760
    %233 = vmatmul.mubr.f32.gmra.mrb[0].mxu0 %v232
    %v234 = vpop.f32.mrb[0].mxu0
    %v235 = vadd.f32 %v144, %v234
    %v236 = vpop.f32.mrb[0].mxu0
    %237 = vdwg.mxu0
    %238 = vmatprep.subr.mxu0 0.0
    %v239 = vand.u32 %v53, 4294901760
    %v240 = vsub.f32 %v53, %v239
    %241 = vmatpush1.msra.mxu0 %v240
    %242 = vmatprep.subr.mxu0 0.0
    %v243 = vand.u32 %v54, 4294901760
    %v244 = vsub.f32 %v54, %v243
    %245 = vmatpush1.msra.mxu0 %v244
    %246 = vmatprep.subr.mxu0 0.0
    %v247 = vand.u32 %v55, 4294901760
    %v248 = vsub.f32 %v55, %v247
    %249 = vmatpush1.msra.mxu0 %v248
    %250 = vmatprep.subr.mxu0 0.0
    %v251 = vand.u32 %v56, 4294901760
    %v252 = vsub.f32 %v56, %v251
    %253 = vmatpush1.msra.mxu0 %v252
    %254 = vmatprep.subr.mxu0 0.0
    %255 = vmatpush1.msra.mxu0 0.0
    %256 = vmatprep.subr.mxu0 0.0
    %257 = vmatpush1.msra.mxu0 0.0
    %258 = vmatprep.subr.mxu0 0.0
    %259 = vmatpush1.msra.mxu0 0.0
    %260 = vmatprep.subr.mxu0 0.0
    %261 = vmatpush1.msra.mxu0 0.0
    %262 = vmatprep.subr.mxu0 0.0
    %263 = vmatpush1.msra.mxu0 0.0
    %264 = vmatprep.subr.mxu0 0.0
    %265 = vmatpush1.msra.mxu0 0.0
    %266 = vmatprep.subr.mxu0 0.0
    %267 = vmatpush1.msra.mxu0 0.0
    %268 = vmatprep.subr.mxu0 0.0
    %269 = vmatpush1.msra.mxu0 0.0
    %270 = vmatprep.subr.mxu0 0.0
    %271 = vmatpush1.msra.mxu0 0.0
    %272 = vmatprep.subr.mxu0 0.0
    %273 = vmatpush1.msra.mxu0 0.0
    %274 = vmatprep.subr.mxu0 0.0
    %275 = vmatpush1.msra.mxu0 0.0
    %276 = vmatprep.subr.mxu0 0.0
    %277 = vmatpush1.msra.mxu0 0.0
    %278 = vmatprep.subr.mxu0 0.0
    %279 = vmatpush1.msra.mxu0 0.0
    %280 = vmatprep.subr.mxu0 0.0
    %281 = vmatpush1.msra.mxu0 0.0
    %282 = vmatprep.subr.mxu0 0.0
    %283 = vmatpush1.msra.mxu0 0.0
    %284 = vmatprep.subr.mxu0 0.0
    %285 = vmatpush1.msra.mxu0 0.0
    %286 = vmatprep.subr.mxu0 0.0
    %287 = vmatpush1.msra.mxu0 0.0
    %288 = vmatprep.subr.mxu0 0.0
    %289 = vmatpush1.msra.mxu0 0.0
    %290 = vmatprep.subr.mxu0 0.0
    %291 = vmatpush1.msra.mxu0 0.0
    %292 = vmatprep.subr.mxu0 0.0
    %293 = vmatpush1.msra.mxu0 0.0
    %294 = vmatprep.subr.mxu0 0.0
    %295 = vmatpush1.msra.mxu0 0.0
    %296 = vmatprep.subr.mxu0 0.0
    %297 = vmatpush1.msra.mxu0 0.0
    %298 = vmatprep.subr.mxu0 0.0
    %299 = vmatpush1.msra.mxu0 0.0
    %300 = vmatprep.subr.mxu0 0.0
    %301 = vmatpush1.msra.mxu0 0.0
    %302 = vmatprep.subr.mxu0 0.0
    %303 = vmatpush1.msra.mxu0 0.0
    %304 = vmatprep.subr.mxu0 0.0
    %305 = vmatpush1.msra.mxu0 0.0
    %306 = vmatprep.subr.mxu0 0.0
    %307 = vmatpush1.msra.mxu0 0.0
    %308 = vmatprep.subr.mxu0 0.0
    %309 = vmatpush1.msra.mxu0 0.0
    %310 = vmatprep.mubr.f32.mxu0 0.0
    %v311 = vand.u32 %v66, 4294901760
    %v312 = vsub.f32 %v66, %v311
    %313 = vmatmul.mubr.f32.gmra.mrb[0].mxu0 %v312
    %v314 = vpop.f32.mrb[0].mxu0
    %v315 = vadd.f32 %v235, %v314
    %v316 = vpop.f32.mrb[0].mxu0
    %317 = vdwg.mxu0
    %318 = vmatprep.subr.mxu0 0.0
    %v319 = vand.u32 %v53, 4294901760
    %320 = vmatpush1.msra.mxu0 %v319
    %321 = vmatprep.subr.mxu0 0.0
    %v322 = vand.u32 %v54, 4294901760
    %323 = vmatpush1.msra.mxu0 %v322
    %324 = vmatprep.subr.mxu0 0.0
    %v325 = vand.u32 %v55, 4294901760
    %326 = vmatpush1.msra.mxu0 %v325
    %327 = vmatprep.subr.mxu0 0.0
    %v328 = vand.u32 %v56, 4294901760
    %329 = vmatpush1.msra.mxu0 %v328
    %330 = vmatprep.subr.mxu0 0.0
    %331 = vmatpush1.msra.mxu0 0.0
    %332 = vmatprep.subr.mxu0 0.0
    %333 = vmatpush1.msra.mxu0 0.0
    %334 = vmatprep.subr.mxu0 0.0
    %335 = vmatpush1.msra.mxu0 0.0
    %336 = vmatprep.subr.mxu0 0.0
    %337 = vmatpush1.msra.mxu0 0.0
    %338 = vmatprep.subr.mxu0 0.0
    %339 = vmatpush1.msra.mxu0 0.0
    %340 = vmatprep.subr.mxu0 0.0
    %341 = vmatpush1.msra.mxu0 0.0
    %342 = vmatprep.subr.mxu0 0.0
    %343 = vmatpush1.msra.mxu0 0.0
    %344 = vmatprep.subr.mxu0 0.0
    %345 = vmatpush1.msra.mxu0 0.0
    %346 = vmatprep.subr.mxu0 0.0
    %347 = vmatpush1.msra.mxu0 0.0
    %348 = vmatprep.subr.mxu0 0.0
    %349 = vmatpush1.msra.mxu0 0.0
    %350 = vmatprep.subr.mxu0 0.0
    %351 = vmatpush1.msra.mxu0 0.0
    %352 = vmatprep.subr.mxu0 0.0
    %353 = vmatpush1.msra.mxu0 0.0
    %354 = vmatprep.subr.mxu0 0.0
    %355 = vmatpush1.msra.mxu0 0.0
    %356 = vmatprep.subr.mxu0 0.0
    %357 = vmatpush1.msra.mxu0 0.0
    %358 = vmatprep.subr.mxu0 0.0
    %359 = vmatpush1.msra.mxu0 0.0
    %360 = vmatprep.subr.mxu0 0.0
    %361 = vmatpush1.msra.mxu0 0.0
    %362 = vmatprep.subr.mxu0 0.0
    %363 = vmatpush1.msra.mxu0 0.0
    %364 = vmatprep.subr.mxu0 0.0
    %365 = vmatpush1.msra.mxu0 0.0
    %366 = vmatprep.subr.mxu0 0.0
    %367 = vmatpush1.msra.mxu0 0.0
    %368 = vmatprep.subr.mxu0 0.0
    %369 = vmatpush1.msra.mxu0 0.0
    %370 = vmatprep.subr.mxu0 0.0
    %371 = vmatpush1.msra.mxu0 0.0
    %372 = vmatprep.subr.mxu0 0.0
    %373 = vmatpush1.msra.mxu0 0.0
    %374 = vmatprep.subr.mxu0 0.0
    %375 = vmatpush1.msra.mxu0 0.0
    %376 = vmatprep.subr.mxu0 0.0
    %377 = vmatpush1.msra.mxu0 0.0
    %378 = vmatprep.subr.mxu0 0.0
    %379 = vmatpush1.msra.mxu0 0.0
    %380 = vmatprep.subr.mxu0 0.0
    %381 = vmatpush1.msra.mxu0 0.0
    %382 = vmatprep.subr.mxu0 0.0
    %383 = vmatpush1.msra.mxu0 0.0
    %384 = vmatprep.subr.mxu0 0.0
    %385 = vmatpush1.msra.mxu0 0.0
    %386 = vmatprep.mubr.f32.mxu0 0.0
    %v387 = vand.u32 %v66, 4294901760
    %v388 = vsub.f32 %v66, %v387
    %v389 = vand.u32 %v388, 4294901760
    %390 = vmatmul.mubr.f32.gmra.mrb[0].mxu0 %v389
    %v391 = vpop.f32.mrb[0].mxu0
    %v392 = vadd.f32 %v315, %v391
    %v393 = vpop.f32.mrb[0].mxu0
    %394 = vdwg.mxu0
    %395 = vmatprep.subr.mxu0 0.0
    %v396 = vand.u32 %v53, 4294901760
    %v397 = vsub.f32 %v53, %v396
    %v398 = vand.u32 %v397, 4294901760
    %399 = vmatpush1.msra.mxu0 %v398
    %400 = vmatprep.subr.mxu0 0.0
    %v401 = vand.u32 %v54, 4294901760
    %v402 = vsub.f32 %v54, %v401
    %v403 = vand.u32 %v402, 4294901760
    %404 = vmatpush1.msra.mxu0 %v403
    %405 = vmatprep.subr.mxu0 0.0
    %v406 = vand.u32 %v55, 4294901760
    %v407 = vsub.f32 %v55, %v406
    %v408 = vand.u32 %v407, 4294901760
    %409 = vmatpush1.msra.mxu0 %v408
    %410 = vmatprep.subr.mxu0 0.0
    %v411 = vand.u32 %v56, 4294901760
    %v412 = vsub.f32 %v56, %v411
    %v413 = vand.u32 %v412, 4294901760
    %414 = vmatpush1.msra.mxu0 %v413
    %415 = vmatprep.subr.mxu0 0.0
    %416 = vmatpush1.msra.mxu0 0.0
    %417 = vmatprep.subr.mxu0 0.0
    %418 = vmatpush1.msra.mxu0 0.0
    %419 = vmatprep.subr.mxu0 0.0
    %420 = vmatpush1.msra.mxu0 0.0
    %421 = vmatprep.subr.mxu0 0.0
    %422 = vmatpush1.msra.mxu0 0.0
    %423 = vmatprep.subr.mxu0 0.0
    %424 = vmatpush1.msra.mxu0 0.0
    %425 = vmatprep.subr.mxu0 0.0
    %426 = vmatpush1.msra.mxu0 0.0
    %427 = vmatprep.subr.mxu0 0.0
    %428 = vmatpush1.msra.mxu0 0.0
    %429 = vmatprep.subr.mxu0 0.0
    %430 = vmatpush1.msra.mxu0 0.0
    %431 = vmatprep.subr.mxu0 0.0
    %432 = vmatpush1.msra.mxu0 0.0
    %433 = vmatprep.subr.mxu0 0.0
    %434 = vmatpush1.msra.mxu0 0.0
    %435 = vmatprep.subr.mxu0 0.0
    %436 = vmatpush1.msra.mxu0 0.0
    %437 = vmatprep.subr.mxu0 0.0
    %438 = vmatpush1.msra.mxu0 0.0
    %439 = vmatprep.subr.mxu0 0.0
    %440 = vmatpush1.msra.mxu0 0.0
    %441 = vmatprep.subr.mxu0 0.0
    %442 = vmatpush1.msra.mxu0 0.0
    %443 = vmatprep.subr.mxu0 0.0
    %444 = vmatpush1.msra.mxu0 0.0
    %445 = vmatprep.subr.mxu0 0.0
    %446 = vmatpush1.msra.mxu0 0.0
    %447 = vmatprep.subr.mxu0 0.0
    %448 = vmatpush1.msra.mxu0 0.0
    %449 = vmatprep.subr.mxu0 0.0
    %450 = vmatpush1.msra.mxu0 0.0
    %451 = vmatprep.subr.mxu0 0.0
    %452 = vmatpush1.msra.mxu0 0.0
    %453 = vmatprep.subr.mxu0 0.0
    %454 = vmatpush1.msra.mxu0 0.0
    %455 = vmatprep.subr.mxu0 0.0
    %456 = vmatpush1.msra.mxu0 0.0
    %457 = vmatprep.subr.mxu0 0.0
    %458 = vmatpush1.msra.mxu0 0.0
    %459 = vmatprep.subr.mxu0 0.0
    %460 = vmatpush1.msra.mxu0 0.0
    %461 = vmatprep.subr.mxu0 0.0
    %462 = vmatpush1.msra.mxu0 0.0
    %463 = vmatprep.subr.mxu0 0.0
    %464 = vmatpush1.msra.mxu0 0.0
    %465 = vmatprep.subr.mxu0 0.0
    %466 = vmatpush1.msra.mxu0 0.0
    %467 = vmatprep.subr.mxu0 0.0
    %468 = vmatpush1.msra.mxu0 0.0
    %469 = vmatprep.subr.mxu0 0.0
    %470 = vmatpush1.msra.mxu0 0.0
    %471 = vmatprep.mubr.f32.mxu0 0.0
    %v472 = vand.u32 %v66, 4294901760
    %473 = vmatmul.mubr.f32.gmra.mrb[0].mxu0 %v472
    %v474 = vpop.f32.mrb[0].mxu0
    %v475 = vadd.f32 %v392, %v474
    %v476 = vpop.f32.mrb[0].mxu0
    %477 = vdwg.mxu0
    %478 = vmatprep.subr.mxu0 0.0
    %v479 = vand.u32 %v53, 4294901760
    %480 = vmatpush1.msra.mxu0 %v479
    %481 = vmatprep.subr.mxu0 0.0
    %v482 = vand.u32 %v54, 4294901760
    %483 = vmatpush1.msra.mxu0 %v482
    %484 = vmatprep.subr.mxu0 0.0
    %v485 = vand.u32 %v55, 4294901760
    %486 = vmatpush1.msra.mxu0 %v485
    %487 = vmatprep.subr.mxu0 0.0
    %v488 = vand.u32 %v56, 4294901760
    %489 = vmatpush1.msra.mxu0 %v488
    %490 = vmatprep.subr.mxu0 0.0
    %491 = vmatpush1.msra.mxu0 0.0
    %492 = vmatprep.subr.mxu0 0.0
    %493 = vmatpush1.msra.mxu0 0.0
    %494 = vmatprep.subr.mxu0 0.0
    %495 = vmatpush1.msra.mxu0 0.0
    %496 = vmatprep.subr.mxu0 0.0
    %497 = vmatpush1.msra.mxu0 0.0
    %498 = vmatprep.subr.mxu0 0.0
    %499 = vmatpush1.msra.mxu0 0.0
    %500 = vmatprep.subr.mxu0 0.0
    %501 = vmatpush1.msra.mxu0 0.0
    %502 = vmatprep.subr.mxu0 0.0
    %503 = vmatpush1.msra.mxu0 0.0
    %504 = vmatprep.subr.mxu0 0.0
    %505 = vmatpush1.msra.mxu0 0.0
    %506 = vmatprep.subr.mxu0 0.0
    %507 = vmatpush1.msra.mxu0 0.0
    %508 = vmatprep.subr.mxu0 0.0
    %509 = vmatpush1.msra.mxu0 0.0
    %510 = vmatprep.subr.mxu0 0.0
    %511 = vmatpush1.msra.mxu0 0.0
    %512 = vmatprep.subr.mxu0 0.0
    %513 = vmatpush1.msra.mxu0 0.0
    %514 = vmatprep.subr.mxu0 0.0
    %515 = vmatpush1.msra.mxu0 0.0
    %516 = vmatprep.subr.mxu0 0.0
    %517 = vmatpush1.msra.mxu0 0.0
    %518 = vmatprep.subr.mxu0 0.0
    %519 = vmatpush1.msra.mxu0 0.0
    %520 = vmatprep.subr.mxu0 0.0
    %521 = vmatpush1.msra.mxu0 0.0
    %522 = vmatprep.subr.mxu0 0.0
    %523 = vmatpush1.msra.mxu0 0.0
    %524 = vmatprep.subr.mxu0 0.0
    %525 = vmatpush1.msra.mxu0 0.0
    %526 = vmatprep.subr.mxu0 0.0
    %527 = vmatpush1.msra.mxu0 0.0
    %528 = vmatprep.subr.mxu0 0.0
    %529 = vmatpush1.msra.mxu0 0.0
    %530 = vmatprep.subr.mxu0 0.0
    %531 = vmatpush1.msra.mxu0 0.0
    %532 = vmatprep.subr.mxu0 0.0
    %533 = vmatpush1.msra.mxu0 0.0
    %534 = vmatprep.subr.mxu0 0.0
    %535 = vmatpush1.msra.mxu0 0.0
    %536 = vmatprep.subr.mxu0 0.0
    %537 = vmatpush1.msra.mxu0 0.0
    %538 = vmatprep.subr.mxu0 0.0
    %539 = vmatpush1.msra.mxu0 0.0
    %540 = vmatprep.subr.mxu0 0.0
    %541 = vmatpush1.msra.mxu0 0.0
    %542 = vmatprep.subr.mxu0 0.0
    %543 = vmatpush1.msra.mxu0 0.0
    %544 = vmatprep.subr.mxu0 0.0
    %545 = vmatpush1.msra.mxu0 0.0
    %546 = vmatprep.mubr.f32.mxu0 0.0
    %v547 = vand.u32 %v66, 4294901760
    %548 = vmatmul.mubr.f32.gmra.mrb[0].mxu0 %v547
    %v549 = vpop.f32.mrb[0].mxu0
    %v550 = vadd.f32 %v475, %v549
    %v551 = vpop.f32.mrb[0].mxu0
    %552 = vdwg.mxu0
    %553 = vst.msk [vmem:[#allocation8] sm:$0xff] %vm64, %v550
    // Predicated region
    $region26: #{mechanism_transformer_forward.19} parent=1 // pred_check
      _
    $region27: #{mechanism_transformer_forward.19} parent=1 // pred_check_branch
      %555 = sbr.rel (0) target = $region29
    $region28: #{mechanism_transformer_forward.19} parent=1 // pred_region
      %s557 = ssub.s32 128, 128
      %558 = vsyncadd [#allocation4], %s557
      %s560 = sshll.u32 [#allocation8], 4
      %s561 = int_to_ptr.vmem [resolvable:$true] %s560
      %563 = dma.vmem_to_hbm [thread:$0]  %s561, 128, %s3, [#allocation4]
    $region29: #{mechanism_transformer_forward.19} parent=1 // pred_fallthru
      _
    // Predicated region
    $region30: #{mechanism_transformer_forward.19} parent=1 // pred_check
      _
    $region31: #{mechanism_transformer_forward.19} parent=1 // pred_check_branch
      %565 = sbr.rel (0) target = $region33
    $region32: #{mechanism_transformer_forward.19} parent=1 // pred_region
      %566 = dma.done [#allocation4], 128
    $region33: #{mechanism_transformer_forward.19} parent=1 // pred_fallthru
      _
    %567 = vsyncpa [#allocation3], 1
    %568 = vsyncpa [#allocation6], 1
    %569 = vsyncpa [#allocation4], 1

// kernel: mechanism_transformer_forward.21
$region0: #{mechanism_transformer_forward.21}
  #allocation0 [shape = 'u32[]', space=smem, size = 0x4, offset = 0x4, fixed_abs, tag = 'smem constant byte address 0x4 - core index']
  #allocation1 [shape = 'u32[144,128]{1,0:T(1,128)}', space=vmem, size = 0x12000, scoped, tag = 'internal scratch']
  #allocation2 [shape = 'f32[1,1]{1,0:T(1,128)S(1)}', space=vmem, size = 0x200, scoped, tag = 'scoped memory for mechanism_transformer_forward.21']
  %s0 = inlined_call_operand.hbm [shape: f32[16,32], index: 0, kind: input, shape index: {}]
  %s1 = inlined_call_operand.hbm [shape: f32[1,32], index: 1, kind: input, shape index: {}]
  %s2 = inlined_call_operand.hbm [shape: f32[1,32], index: 2, kind: input, shape index: {}]
  %s3 = inlined_call_operand.hbm [shape: f32[32,112], index: 3, kind: input, shape index: {}]
  %s4 = inlined_call_operand.hbm [shape: f32[1,112], index: 4, kind: input, shape index: {}]
  %s5 = inlined_call_operand.hbm [shape: f32[1,16], index: 5, kind: input, shape index: {}]
  %s6 = inlined_call_operand.<no memory space> [shape: f32[1,1], index: 6, kind: input, shape index: {}]
  %s7 = inlined_call_operand.hbm [shape: f32[16,32], index: 7, kind: output, shape index: {0}]
  %s8 = inlined_call_operand.hbm [shape: f32[16,32], index: 8, kind: output, shape index: {1}]
  %s9 = inlined_call_operand.hbm [shape: f32[16,32], index: 9, kind: output, shape index: {2}]
  %s10 = inlined_call_operand.hbm [shape: f32[1,16], index: 10, kind: output, shape index: {3}]
  %11 = xla_tuple %s7, %s8, %s9, %s10
  %s12 = sld [smem:[#allocation0]]
  $region86: #{mechanism_transformer_forward.21} parent=0
    _
  %s14 = ssub.s32 1, %s12
  %s15 = scalar_select 0, %s14, %s12
  %v16 = vstv %s6
  %17 = vst [vmem:[#allocation2] sm:$0x1] %v16
  $region1: #{mechanism_transformer_forward.21} parent=0
    #allocation3 [shape = 'u8[8192]{0}', space=vmem, size = 0x2000, scoped, tag = 'input window, operand 0, single buffered']
    #allocation4 [shape = 's32[1]{0}', space=sflag, size = 0x4, scoped, tag = 'scoped memory for mechanism_transformer_forward.21']
    #allocation5 [shape = 's32[1]{0}', space=sflag, size = 0x4, scoped, tag = 'scoped memory for mechanism_transformer_forward.21']
    #allocation6 [shape = 'u8[512]{0}', space=vmem, size = 0x400, scoped, tag = 'input window, operand 1, single buffered']
    #allocation7 [shape = 's32[1]{0}', space=sflag, size = 0x4, scoped, tag = 'scoped memory for mechanism_transformer_forward.21']
    #allocation8 [shape = 'u8[512]{0}', space=vmem, size = 0x400, scoped, tag = 'input window, operand 2, single buffered']
    #allocation9 [shape = 'u8[16384]{0}', space=vmem, size = 0x4000, scoped, tag = 'input window, operand 3, single buffered']
    #allocation10 [shape = 's32[1]{0}', space=sflag, size = 0x4, scoped, tag = 'scoped memory for mechanism_transformer_forward.21']
    #allocation11 [shape = 'u8[512]{0}', space=vmem, size = 0x400, scoped, tag = 'input window, operand 4, single buffered']
    #allocation12 [shape = 'u8[512]{0}', space=vmem, size = 0x400, scoped, tag = 'input window, operand 5, single buffered']
    #allocation13 [shape = 's32[1]{0}', space=sflag, size = 0x4, scoped, tag = 'scoped memory for mechanism_transformer_forward.21']
    #allocation14 [shape = 'u8[8192]{0}', space=vmem, size = 0x2000, scoped, tag = 'output window, operand 0, single buffered']
    #allocation15 [shape = 'u8[8192]{0}', space=vmem, size = 0x2000, scoped, tag = 'output window, operand 1, single buffered']
    #allocation16 [shape = 's32[1]{0}', space=sflag, size = 0x4, scoped, tag = 'scoped memory for mechanism_transformer_forward.21']
    #allocation17 [shape = 'u8[8192]{0}', space=vmem, size = 0x2000, scoped, tag = 'output window, operand 2, single buffered']
    #allocation18 [shape = 'u8[512]{0}', space=vmem, size = 0x400, scoped, tag = 'output window, operand 3, single buffered']
    #allocation19 [shape = 's32[1]{0}', space=sflag, size = 0x4, scoped, tag = 'scoped memory for mechanism_transformer_forward.21']
    %18 = vsyncpa [#allocation4], 0
    %19 = vsyncpa [#allocation7], 0
    %20 = vsyncpa [#allocation10], 0
    %21 = vsyncpa [#allocation13], 0
    %22 = vsyncpa [#allocation5], 0
    %23 = vsyncpa [#allocation16], 0
    %24 = vsyncpa [#allocation19], 0
    // Predicated region
    $region2: #{mechanism_transformer_forward.21} parent=1 // pred_check
      _
    $region3: #{mechanism_transformer_forward.21} parent=1 // pred_check_branch
      %26 = sbr.rel (0) target = $region5
    $region4: #{mechanism_transformer_forward.21} parent=1 // pred_region
      %s28 = ssub.s32 256, 256
      %29 = vsyncadd [#allocation4], %s28
      %s30 = sshll.u32 [#allocation3], 4
      %s31 = int_to_ptr.vmem [resolvable:$true] %s30
      %36 = dma.hbm_to_vmem [thread:$0]  %s0, 256, %s31, [#allocation4], 128, 128, 8
    $region5: #{mechanism_transformer_forward.21} parent=1 // pred_fallthru
      _
    // Predicated region
    $region6: #{mechanism_transformer_forward.21} parent=1 // pred_check
      _
    $region7: #{mechanism_transformer_forward.21} parent=1 // pred_check_branch
      %38 = sbr.rel (0) target = $region9
    $region8: #{mechanism_transformer_forward.21} parent=1 // pred_region
      %s40 = ssub.s32 16, 16
      %41 = vsyncadd [#allocation7], %s40
      %s43 = sshll.u32 [#allocation6], 4
      %s44 = int_to_ptr.vmem [resolvable:$true] %s43
      %46 = dma.hbm_to_vmem [thread:$0]  %s1, 16, %s44, [#allocation7]
    $region9: #{mechanism_transformer_forward.21} parent=1 // pred_fallthru
      _
    // Predicated region
    $region10: #{mechanism_transformer_forward.21} parent=1 // pred_check
      _
    $region11: #{mechanism_transformer_forward.21} parent=1 // pred_check_branch
      %48 = sbr.rel (0) target = $region13
    $region12: #{mechanism_transformer_forward.21} parent=1 // pred_region
      %s50 = ssub.s32 16, 16
      %51 = vsyncadd [#allocation7], %s50
      %s53 = sshll.u32 [#allocation8], 4
      %s54 = int_to_ptr.vmem [resolvable:$true] %s53
      %56 = dma.hbm_to_vmem [thread:$0]  %s2, 16, %s54, [#allocation7]
    $region13: #{mechanism_transformer_forward.21} parent=1 // pred_fallthru
      _
    // Predicated region
    $region14: #{mechanism_transformer_forward.21} parent=1 // pred_check
      _
    $region15: #{mechanism_transformer_forward.21} parent=1 // pred_check_branch
      %58 = sbr.rel (0) target = $region17
    $region16: #{mechanism_transformer_forward.21} parent=1 // pred_region
      %s60 = ssub.s32 512, 512
      %61 = vsyncadd [#allocation10], %s60
      %s62 = sshll.u32 [#allocation9], 4
      %s63 = int_to_ptr.vmem [resolvable:$true] %s62
      %68 = dma.hbm_to_vmem [thread:$0]  %s3, 512, %s63, [#allocation10], 128, 128, 8
    $region17: #{mechanism_transformer_forward.21} parent=1 // pred_fallthru
      _
    // Predicated region
    $region18: #{mechanism_transformer_forward.21} parent=1 // pred_check
      _
    $region19: #{mechanism_transformer_forward.21} parent=1 // pred_check_branch
      %70 = sbr.rel (0) target = $region21
    $region20: #{mechanism_transformer_forward.21} parent=1 // pred_region
      %s72 = ssub.s32 16, 16
      %73 = vsyncadd [#allocation10], %s72
      %s75 = sshll.u32 [#allocation11], 4
      %s76 = int_to_ptr.vmem [resolvable:$true] %s75
      %78 = dma.hbm_to_vmem [thread:$0]  %s4, 16, %s76, [#allocation10]
    $region21: #{mechanism_transformer_forward.21} parent=1 // pred_fallthru
      _
    // Predicated region
    $region22: #{mechanism_transformer_forward.21} parent=1 // pred_check
      _
    $region23: #{mechanism_transformer_forward.21} parent=1 // pred_check_branch
      %80 = sbr.rel (0) target = $region25
    $region24: #{mechanism_transformer_forward.21} parent=1 // pred_region
      %s82 = ssub.s32 16, 16
      %83 = vsyncadd [#allocation13], %s82
      %s85 = sshll.u32 [#allocation12], 4
      %s86 = int_to_ptr.vmem [resolvable:$true] %s85
      %88 = dma.hbm_to_vmem [thread:$0]  %s5, 16, %s86, [#allocation13]
    $region25: #{mechanism_transformer_forward.21} parent=1 // pred_fallthru
      _
    // Predicated region
    $region26: #{mechanism_transformer_forward.21} parent=1 // pred_check
      _
    $region27: #{mechanism_transformer_forward.21} parent=1 // pred_check_branch
      %90 = sbr.rel (0) target = $region29
    $region28: #{mechanism_transformer_forward.21} parent=1 // pred_region
      _
    $region29: #{mechanism_transformer_forward.21} parent=1 // pred_fallthru
      _
    // Predicated region
    $region30: #{mechanism_transformer_forward.21} parent=1 // pred_check
      _
    $region31: #{mechanism_transformer_forward.21} parent=1 // pred_check_branch
      %92 = sbr.rel (0) target = $region33
    $region32: #{mechanism_transformer_forward.21} parent=1 // pred_region
      %93 = dma.done [#allocation4], 256
    $region33: #{mechanism_transformer_forward.21} parent=1 // pred_fallthru
      _
    // Predicated region
    $region34: #{mechanism_transformer_forward.21} parent=1 // pred_check
      _
    $region35: #{mechanism_transformer_forward.21} parent=1 // pred_check_branch
      %95 = sbr.rel (0) target = $region37
    $region36: #{mechanism_transformer_forward.21} parent=1 // pred_region
      %96 = dma.done [#allocation7], 16
    $region37: #{mechanism_transformer_forward.21} parent=1 // pred_fallthru
      _
    // Predicated region
    $region38: #{mechanism_transformer_forward.21} parent=1 // pred_check
      _
    $region39: #{mechanism_transformer_forward.21} parent=1 // pred_check_branch
      %98 = sbr.rel (0) target = $region41
    $region40: #{mechanism_transformer_forward.21} parent=1 // pred_region
      %99 = dma.done [#allocation7], 16
    $region41: #{mechanism_transformer_forward.21} parent=1 // pred_fallthru
      _
    // Predicated region
    $region42: #{mechanism_transformer_forward.21} parent=1 // pred_check
      _
    $region43: #{mechanism_transformer_forward.21} parent=1 // pred_check_branch
      %101 = sbr.rel (0) target = $region45
    $region44: #{mechanism_transformer_forward.21} parent=1 // pred_region
      %102 = dma.done [#allocation10], 512
    $region45: #{mechanism_transformer_forward.21} parent=1 // pred_fallthru
      _
    // Predicated region
    $region46: #{mechanism_transformer_forward.21} parent=1 // pred_check
      _
    $region47: #{mechanism_transformer_forward.21} parent=1 // pred_check_branch
      %104 = sbr.rel (0) target = $region49
    $region48: #{mechanism_transformer_forward.21} parent=1 // pred_region
      %105 = dma.done [#allocation10], 16
    $region49: #{mechanism_transformer_forward.21} parent=1 // pred_fallthru
      _
    // Predicated region
    $region50: #{mechanism_transformer_forward.21} parent=1 // pred_check
      _
    $region51: #{mechanism_transformer_forward.21} parent=1 // pred_check_branch
      %107 = sbr.rel (0) target = $region53
    $region52: #{mechanism_transformer_forward.21} parent=1 // pred_region
      %108 = dma.done [#allocation13], 16
    $region53: #{mechanism_transformer_forward.21} parent=1 // pred_fallthru
      _
    %v109 = vld [vmem:[#allocation3] sm:$0xff]
    %v110 = vld [vmem:[#allocation3 + $0x8] sm:$0xff]
    %vm111 = vcmask 261120
    %v112 = vsel %vm111, %v109, 0.0
    %113 = vadd.xlane.f32.xlu0 %v112
    %v114 = vpop.xlane.xlu0 %113
    %v115 = vsel %vm111, %v110, 0.0
    %116 = vadd.xlane.f32.xlu0 %v115
    %v117 = vpop.xlane.xlu0 %116
    %v118 = vrcp.pop 32.0
    %v119 = vmul.f32 %v114, %v118
    %v120 = vmul.f32 %v117, %v118
    %v121 = vsub.f32 %v109, %v119
    %v122 = vsub.f32 %v110, %v120
    %v123 = vmul.f32 %v121, %v121
    %v124 = vmul.f32 %v122, %v122
    %v125 = vsel %vm111, %v123, 0.0
    %126 = vadd.xlane.f32.xlu0 %v125
    %v127 = vpop.xlane.xlu0 %126
    %v128 = vsel %vm111, %v124, 0.0
    %129 = vadd.xlane.f32.xlu0 %v128
    %v130 = vpop.xlane.xlu0 %129
    %v131 = vmul.f32 %v127, %v118
    %v132 = vmul.f32 %v130, %v118
    %v133 = vadd.f32 %v131, 1e-05
    %v134 = vadd.f32 %v132, 1e-05
    %v135 = vrsqrt.pop %v133
    %v136 = vrsqrt.pop %v134
    %v137 = vmul.f32 %v121, %v135
    %v138 = vmul.f32 %v122, %v136
    %v139 = vld [vmem:[#allocation6] sm:$0x1]
    %v141 = vlaneseq
    %v142 = vshrl.u32 %v141, 7
    %v143 = vsub.s32 0, %v142
    %v144 = vrot.slane %v139, %v143
    %v146 = vmul.f32 %v137, %v144
    %v147 = vmul.f32 %v138, %v144
    %v148 = vld [vmem:[#allocation8] sm:$0x1]
    %v150 = vlaneseq
    %v151 = vshrl.u32 %v150, 7
    %v152 = vsub.s32 0, %v151
    %v153 = vrot.slane %v148, %v152
    %v155 = vadd.f32 %v146, %v153
    %v156 = vadd.f32 %v147, %v153
    %v157 = vld [vmem:[#allocation9] sm:$0xff]
    %v158 = vld [vmem:[#allocation9 + $0x8] sm:$0xff]
    %v159 = vld [vmem:[#allocation9 + $0x10] sm:$0xff]
    %v160 = vld [vmem:[#allocation9 + $0x18] sm:$0xff]
    %v161 = vld [vmem:[#allocation11] sm:$0x1]
    %v163 = vlaneseq
    %v164 = vshrl.u32 %v163, 7
    %v165 = vsub.s32 0, %v164
    %v166 = vrot.slane %v161, %v165
    %v169 = vsel %vm111, %v155, 0
    %v172 = vsel %vm111, %v156, 0
    %174 = vmatprep.subr.mxu0 0.0
    %v175 = vand.u32 %v157, 4294901760
    %176 = vmatpush1.msra.mxu0 %v175
    %177 = vmatprep.subr.mxu0 0.0
    %v178 = vand.u32 %v158, 4294901760
    %179 = vmatpush1.msra.mxu0 %v178
    %180 = vmatprep.subr.mxu0 0.0
    %v181 = vand.u32 %v159, 4294901760
    %182 = vmatpush1.msra.mxu0 %v181
    %183 = vmatprep.subr.mxu0 0.0
    %v184 = vand.u32 %v160, 4294901760
    %185 = vmatpush1.msra.mxu0 %v184
    %186 = vmatprep.subr.mxu0 0.0
    %187 = vmatpush1.msra.mxu0 0.0
    %188 = vmatprep.subr.mxu0 0.0
    %189 = vmatpush1.msra.mxu0 0.0
    %190 = vmatprep.subr.mxu0 0.0
    %191 = vmatpush1.msra.mxu0 0.0
    %192 = vmatprep.subr.mxu0 0.0
    %193 = vmatpush1.msra.mxu0 0.0
    %194 = vmatprep.subr.mxu0 0.0
    %195 = vmatpush1.msra.mxu0 0.0
    %196 = vmatprep.subr.mxu0 0.0
    %197 = vmatpush1.msra.mxu0 0.0
    %198 = vmatprep.subr.mxu0 0.0
    %199 = vmatpush1.msra.mxu0 0.0
    %200 = vmatprep.subr.mxu0 0.0
    %201 = vmatpush1.msra.mxu0 0.0
    %202 = vmatprep.subr.mxu0 0.0
    %203 = vmatpush1.msra.mxu0 0.0
    %204 = vmatprep.subr.mxu0 0.0
    %205 = vmatpush1.msra.mxu0 0.0
    %206 = vmatprep.subr.mxu0 0.0
    %207 = vmatpush1.msra.mxu0 0.0
    %208 = vmatprep.subr.mxu0 0.0
    %209 = vmatpush1.msra.mxu0 0.0
    %210 = vmatprep.subr.mxu0 0.0
    %211 = vmatpush1.msra.mxu0 0.0
    %212 = vmatprep.subr.mxu0 0.0
    %213 = vmatpush1.msra.mxu0 0.0
    %214 = vmatprep.subr.mxu0 0.0
    %215 = vmatpush1.msra.mxu0 0.0
    %216 = vmatprep.subr.mxu0 0.0
    %217 = vmatpush1.msra.mxu0 0.0
    %218 = vmatprep.subr.mxu0 0.0
    %219 = vmatpush1.msra.mxu0 0.0
    %220 = vmatprep.subr.mxu0 0.0
    %221 = vmatpush1.msra.mxu0 0.0
    %222 = vmatprep.subr.mxu0 0.0
    %223 = vmatpush1.msra.mxu0 0.0
    %224 = vmatprep.subr.mxu0 0.0
    %225 = vmatpush1.msra.mxu0 0.0
    %226 = vmatprep.subr.mxu0 0.0
    %227 = vmatpush1.msra.mxu0 0.0
    %228 = vmatprep.subr.mxu0 0.0
    %229 = vmatpush1.msra.mxu0 0.0
    %230 = vmatprep.subr.mxu0 0.0
    %231 = vmatpush1.msra.mxu0 0.0
    %232 = vmatprep.subr.mxu0 0.0
    %233 = vmatpush1.msra.mxu0 0.0
    %234 = vmatprep.subr.mxu0 0.0
    %235 = vmatpush1.msra.mxu0 0.0
    %236 = vmatprep.subr.mxu0 0.0
    %237 = vmatpush1.msra.mxu0 0.0
    %238 = vmatprep.subr.mxu0 0.0
    %239 = vmatpush1.msra.mxu0 0.0
    %240 = vmatprep.subr.mxu0 0.0
    %241 = vmatpush1.msra.mxu0 0.0
    %242 = vmatprep.mubr.f32.mxu0 0.0
    %v243 = vand.u32 %v169, 4294901760
    %v244 = vsub.f32 %v169, %v243
    %v245 = vand.u32 %v244, 4294901760
    %v246 = vsub.f32 %v244, %v245
    %v247 = vand.u32 %v246, 4294901760
    %248 = vmatmul.mubr.f32.gmra.mrb[0].mxu0 %v247
    %v249 = vpop.f32.mrb[0].mxu0
    %v250 = vadd.f32 %v166, %v249
    %v251 = vpop.f32.mrb[0].mxu0
    %252 = vmatprep.mubr.f32.mxu0 0.0
    %v253 = vand.u32 %v172, 4294901760
    %v254 = vsub.f32 %v172, %v253
    %v255 = vand.u32 %v254, 4294901760
    %v256 = vsub.f32 %v254, %v255
    %v257 = vand.u32 %v256, 4294901760
    %258 = vmatmul.mubr.f32.gmra.mrb[0].mxu0 %v257
    %v259 = vpop.f32.mrb[0].mxu0
    %v260 = vadd.f32 %v166, %v259
    %v261 = vpop.f32.mrb[0].mxu0
    %262 = vdwg.mxu0
    %263 = vmatprep.subr.mxu0 0.0
    %v264 = vand.u32 %v157, 4294901760
    %v265 = vsub.f32 %v157, %v264
    %v266 = vand.u32 %v265, 4294901760
    %v267 = vsub.f32 %v265, %v266
    %v268 = vand.u32 %v267, 4294901760
    %269 = vmatpush1.msra.mxu0 %v268
    %270 = vmatprep.subr.mxu0 0.0
    %v271 = vand.u32 %v158, 4294901760
    %v272 = vsub.f32 %v158, %v271
    %v273 = vand.u32 %v272, 4294901760
    %v274 = vsub.f32 %v272, %v273
    %v275 = vand.u32 %v274, 4294901760
    %276 = vmatpush1.msra.mxu0 %v275
    %277 = vmatprep.subr.mxu0 0.0
    %v278 = vand.u32 %v159, 4294901760
    %v279 = vsub.f32 %v159, %v278
    %v280 = vand.u32 %v279, 4294901760
    %v281 = vsub.f32 %v279, %v280
    %v282 = vand.u32 %v281, 4294901760
    %283 = vmatpush1.msra.mxu0 %v282
    %284 = vmatprep.subr.mxu0 0.0
    %v285 = vand.u32 %v160, 4294901760
    %v286 = vsub.f32 %v160, %v285
    %v287 = vand.u32 %v286, 4294901760
    %v288 = vsub.f32 %v286, %v287
    %v289 = vand.u32 %v288, 4294901760
    %290 = vmatpush1.msra.mxu0 %v289
    %291 = vmatprep.subr.mxu0 0.0
    %292 = vmatpush1.msra.mxu0 0.0
    %293 = vmatprep.subr.mxu0 0.0
    %294 = vmatpush1.msra.mxu0 0.0
    %295 = vmatprep.subr.mxu0 0.0
    %296 = vmatpush1.msra.mxu0 0.0
    %297 = vmatprep.subr.mxu0 0.0
    %298 = vmatpush1.msra.mxu0 0.0
    %299 = vmatprep.subr.mxu0 0.0
    %300 = vmatpush1.msra.mxu0 0.0
    %301 = vmatprep.subr.mxu0 0.0
    %302 = vmatpush1.msra.mxu0 0.0
    %303 = vmatprep.subr.mxu0 0.0
    %304 = vmatpush1.msra.mxu0 0.0
    %305 = vmatprep.subr.mxu0 0.0
    %306 = vmatpush1.msra.mxu0 0.0
    %307 = vmatprep.subr.mxu0 0.0
    %308 = vmatpush1.msra.mxu0 0.0
    %309 = vmatprep.subr.mxu0 0.0
    %310 = vmatpush1.msra.mxu0 0.0
    %311 = vmatprep.subr.mxu0 0.0
    %312 = vmatpush1.msra.mxu0 0.0
    %313 = vmatprep.subr.mxu0 0.0
    %314 = vmatpush1.msra.mxu0 0.0
    %315 = vmatprep.subr.mxu0 0.0
    %316 = vmatpush1.msra.mxu0 0.0
    %317 = vmatprep.subr.mxu0 0.0
    %318 = vmatpush1.msra.mxu0 0.0
    %319 = vmatprep.subr.mxu0 0.0
    %320 = vmatpush1.msra.mxu0 0.0
    %321 = vmatprep.subr.mxu0 0.0
    %322 = vmatpush1.msra.mxu0 0.0
    %323 = vmatprep.subr.mxu0 0.0
    %324 = vmatpush1.msra.mxu0 0.0
    %325 = vmatprep.subr.mxu0 0.0
    %326 = vmatpush1.msra.mxu0 0.0
    %327 = vmatprep.subr.mxu0 0.0
    %328 = vmatpush1.msra.mxu0 0.0
    %329 = vmatprep.subr.mxu0 0.0
    %330 = vmatpush1.msra.mxu0 0.0
    %331 = vmatprep.subr.mxu0 0.0
    %332 = vmatpush1.msra.mxu0 0.0
    %333 = vmatprep.subr.mxu0 0.0
    %334 = vmatpush1.msra.mxu0 0.0
    %335 = vmatprep.subr.mxu0 0.0
    %336 = vmatpush1.msra.mxu0 0.0
    %337 = vmatprep.subr.mxu0 0.0
    %338 = vmatpush1.msra.mxu0 0.0
    %339 = vmatprep.subr.mxu0 0.0
    %340 = vmatpush1.msra.mxu0 0.0
    %341 = vmatprep.subr.mxu0 0.0
    %342 = vmatpush1.msra.mxu0 0.0
    %343 = vmatprep.subr.mxu0 0.0
    %344 = vmatpush1.msra.mxu0 0.0
    %345 = vmatprep.subr.mxu0 0.0
    %346 = vmatpush1.msra.mxu0 0.0
    %347 = vmatprep.mubr.f32.mxu0 0.0
    %v348 = vand.u32 %v169, 4294901760
    %349 = vmatmul.mubr.f32.gmra.mrb[0].mxu0 %v348
    %v350 = vpop.f32.mrb[0].mxu0
    %v351 = vadd.f32 %v250, %v350
    %v352 = vpop.f32.mrb[0].mxu0
    %353 = vmatprep.mubr.f32.mxu0 0.0
    %v354 = vand.u32 %v172, 4294901760
    %355 = vmatmul.mubr.f32.gmra.mrb[0].mxu0 %v354
    %v356 = vpop.f32.mrb[0].mxu0
    %v357 = vadd.f32 %v260, %v356
    %v358 = vpop.f32.mrb[0].mxu0
    %359 = vdwg.mxu0
    %360 = vmatprep.subr.mxu0 0.0
    %v361 = vand.u32 %v157, 4294901760
    %v362 = vsub.f32 %v157, %v361
    %363 = vmatpush1.msra.mxu0 %v362
    %364 = vmatprep.subr.mxu0 0.0
    %v365 = vand.u32 %v158, 4294901760
    %v366 = vsub.f32 %v158, %v365
    %367 = vmatpush1.msra.mxu0 %v366
    %368 = vmatprep.subr.mxu0 0.0
    %v369 = vand.u32 %v159, 4294901760
    %v370 = vsub.f32 %v159, %v369
    %371 = vmatpush1.msra.mxu0 %v370
    %372 = vmatprep.subr.mxu0 0.0
    %v373 = vand.u32 %v160, 4294901760
    %v374 = vsub.f32 %v160, %v373
    %375 = vmatpush1.msra.mxu0 %v374
    %376 = vmatprep.subr.mxu0 0.0
    %377 = vmatpush1.msra.mxu0 0.0
    %378 = vmatprep.subr.mxu0 0.0
    %379 = vmatpush1.msra.mxu0 0.0
    %380 = vmatprep.subr.mxu0 0.0
    %381 = vmatpush1.msra.mxu0 0.0
    %382 = vmatprep.subr.mxu0 0.0
    %383 = vmatpush1.msra.mxu0 0.0
    %384 = vmatprep.subr.mxu0 0.0
    %385 = vmatpush1.msra.mxu0 0.0
    %386 = vmatprep.subr.mxu0 0.0
    %387 = vmatpush1.msra.mxu0 0.0
    %388 = vmatprep.subr.mxu0 0.0
    %389 = vmatpush1.msra.mxu0 0.0
    %390 = vmatprep.subr.mxu0 0.0
    %391 = vmatpush1.msra.mxu0 0.0
    %392 = vmatprep.subr.mxu0 0.0
    %393 = vmatpush1.msra.mxu0 0.0
    %394 = vmatprep.subr.mxu0 0.0
    %395 = vmatpush1.msra.mxu0 0.0
    %396 = vmatprep.subr.mxu0 0.0
    %397 = vmatpush1.msra.mxu0 0.0
    %398 = vmatprep.subr.mxu0 0.0
    %399 = vmatpush1.msra.mxu0 0.0
    %400 = vmatprep.subr.mxu0 0.0
    %401 = vmatpush1.msra.mxu0 0.0
    %402 = vmatprep.subr.mxu0 0.0
    %403 = vmatpush1.msra.mxu0 0.0
    %404 = vmatprep.subr.mxu0 0.0
    %405 = vmatpush1.msra.mxu0 0.0
    %406 = vmatprep.subr.mxu0 0.0
    %407 = vmatpush1.msra.mxu0 0.0
    %408 = vmatprep.subr.mxu0 0.0
    %409 = vmatpush1.msra.mxu0 0.0
    %410 = vmatprep.subr.mxu0 0.0
    %411 = vmatpush1.msra.mxu0 0.0
    %412 = vmatprep.subr.mxu0 0.0
    %413 = vmatpush1.msra.mxu0 0.0
    %414 = vmatprep.subr.mxu0 0.0
    %415 = vmatpush1.msra.mxu0 0.0
    %416 = vmatprep.subr.mxu0 0.0
    %417 = vmatpush1.msra.mxu0 0.0
    %418 = vmatprep.subr.mxu0 0.0
    %419 = vmatpush1.msra.mxu0 0.0
    %420 = vmatprep.subr.mxu0 0.0
    %421 = vmatpush1.msra.mxu0 0.0
    %422 = vmatprep.subr.mxu0 0.0
    %423 = vmatpush1.msra.mxu0 0.0
    %424 = vmatprep.subr.mxu0 0.0
    %425 = vmatpush1.msra.mxu0 0.0
    %426 = vmatprep.subr.mxu0 0.0
    %427 = vmatpush1.msra.mxu0 0.0
    %428 = vmatprep.subr.mxu0 0.0
    %429 = vmatpush1.msra.mxu0 0.0
    %430 = vmatprep.subr.mxu0 0.0
    %431 = vmatpush1.msra.mxu0 0.0
    %432 = vmatprep.mubr.f32.mxu0 0.0
    %v433 = vand.u32 %v169, 4294901760
    %v434 = vsub.f32 %v169, %v433
    %435 = vmatmul.mubr.f32.gmra.mrb[0].mxu0 %v434
    %v436 = vpop.f32.mrb[0].mxu0
    %v437 = vadd.f32 %v351, %v436
    %v438 = vpop.f32.mrb[0].mxu0
    %439 = vmatprep.mubr.f32.mxu0 0.0
    %v440 = vand.u32 %v172, 4294901760
    %v441 = vsub.f32 %v172, %v440
    %442 = vmatmul.mubr.f32.gmra.mrb[0].mxu0 %v441
    %v443 = vpop.f32.mrb[0].mxu0
    %v444 = vadd.f32 %v357, %v443
    %v445 = vpop.f32.mrb[0].mxu0
    %446 = vdwg.mxu0
    %447 = vmatprep.subr.mxu0 0.0
    %v448 = vand.u32 %v157, 4294901760
    %449 = vmatpush1.msra.mxu0 %v448
    %450 = vmatprep.subr.mxu0 0.0
    %v451 = vand.u32 %v158, 4294901760
    %452 = vmatpush1.msra.mxu0 %v451
    %453 = vmatprep.subr.mxu0 0.0
    %v454 = vand.u32 %v159, 4294901760
    %455 = vmatpush1.msra.mxu0 %v454
    %456 = vmatprep.subr.mxu0 0.0
    %v457 = vand.u32 %v160, 4294901760
    %458 = vmatpush1.msra.mxu0 %v457
    %459 = vmatprep.subr.mxu0 0.0
    %460 = vmatpush1.msra.mxu0 0.0
    %461 = vmatprep.subr.mxu0 0.0
    %462 = vmatpush1.msra.mxu0 0.0
    %463 = vmatprep.subr.mxu0 0.0
    %464 = vmatpush1.msra.mxu0 0.0
    %465 = vmatprep.subr.mxu0 0.0
    %466 = vmatpush1.msra.mxu0 0.0
    %467 = vmatprep.subr.mxu0 0.0
    %468 = vmatpush1.msra.mxu0 0.0
    %469 = vmatprep.subr.mxu0 0.0
    %470 = vmatpush1.msra.mxu0 0.0
    %471 = vmatprep.subr.mxu0 0.0
    %472 = vmatpush1.msra.mxu0 0.0
    %473 = vmatprep.subr.mxu0 0.0
    %474 = vmatpush1.msra.mxu0 0.0
    %475 = vmatprep.subr.mxu0 0.0
    %476 = vmatpush1.msra.mxu0 0.0
    %477 = vmatprep.subr.mxu0 0.0
    %478 = vmatpush1.msra.mxu0 0.0
    %479 = vmatprep.subr.mxu0 0.0
    %480 = vmatpush1.msra.mxu0 0.0
    %481 = vmatprep.subr.mxu0 0.0
    %482 = vmatpush1.msra.mxu0 0.0
    %483 = vmatprep.subr.mxu0 0.0
    %484 = vmatpush1.msra.mxu0 0.0
    %485 = vmatprep.subr.mxu0 0.0
    %486 = vmatpush1.msra.mxu0 0.0
    %487 = vmatprep.subr.mxu0 0.0
    %488 = vmatpush1.msra.mxu0 0.0
    %489 = vmatprep.subr.mxu0 0.0
    %490 = vmatpush1.msra.mxu0 0.0
    %491 = vmatprep.subr.mxu0 0.0
    %492 = vmatpush1.msra.mxu0 0.0
    %493 = vmatprep.subr.mxu0 0.0
    %494 = vmatpush1.msra.mxu0 0.0
    %495 = vmatprep.subr.mxu0 0.0
    %496 = vmatpush1.msra.mxu0 0.0
    %497 = vmatprep.subr.mxu0 0.0
    %498 = vmatpush1.msra.mxu0 0.0
    %499 = vmatprep.subr.mxu0 0.0
    %500 = vmatpush1.msra.mxu0 0.0
    %501 = vmatprep.subr.mxu0 0.0
    %502 = vmatpush1.msra.mxu0 0.0
    %503 = vmatprep.subr.mxu0 0.0
    %504 = vmatpush1.msra.mxu0 0.0
    %505 = vmatprep.subr.mxu0 0.0
    %506 = vmatpush1.msra.mxu0 0.0
    %507 = vmatprep.subr.mxu0 0.0
    %508 = vmatpush1.msra.mxu0 0.0
    %509 = vmatprep.subr.mxu0 0.0
    %510 = vmatpush1.msra.mxu0 0.0
    %511 = vmatprep.subr.mxu0 0.0
    %512 = vmatpush1.msra.mxu0 0.0
    %513 = vmatprep.subr.mxu0 0.0
    %514 = vmatpush1.msra.mxu0 0.0
    %515 = vmatprep.mubr.f32.mxu0 0.0
    %v516 = vand.u32 %v169, 4294901760
    %v517 = vsub.f32 %v169, %v516
    %v518 = vand.u32 %v517, 4294901760
    %519 = vmatmul.mubr.f32.gmra.mrb[0].mxu0 %v518
    %v520 = vpop.f32.mrb[0].mxu0
    %v521 = vadd.f32 %v437, %v520
    %v522 = vpop.f32.mrb[0].mxu0
    %523 = vmatprep.mubr.f32.mxu0 0.0
    %v524 = vand.u32 %v172, 4294901760
    %v525 = vsub.f32 %v172, %v524
    %v526 = vand.u32 %v525, 4294901760
    %527 = vmatmul.mubr.f32.gmra.mrb[0].mxu0 %v526
    %v528 = vpop.f32.mrb[0].mxu0
    %v529 = vadd.f32 %v444, %v528
    %v530 = vpop.f32.mrb[0].mxu0
    %531 = vdwg.mxu0
    %532 = vmatprep.subr.mxu0 0.0
    %v533 = vand.u32 %v157, 4294901760
    %v534 = vsub.f32 %v157, %v533
    %v535 = vand.u32 %v534, 4294901760
    %536 = vmatpush1.msra.mxu0 %v535
    %537 = vmatprep.subr.mxu0 0.0
    %v538 = vand.u32 %v158, 4294901760
    %v539 = vsub.f32 %v158, %v538
    %v540 = vand.u32 %v539, 4294901760
    %541 = vmatpush1.msra.mxu0 %v540
    %542 = vmatprep.subr.mxu0 0.0
    %v543 = vand.u32 %v159, 4294901760
    %v544 = vsub.f32 %v159, %v543
    %v545 = vand.u32 %v544, 4294901760
    %546 = vmatpush1.msra.mxu0 %v545
    %547 = vmatprep.subr.mxu0 0.0
    %v548 = vand.u32 %v160, 4294901760
    %v549 = vsub.f32 %v160, %v548
    %v550 = vand.u32 %v549, 4294901760
    %551 = vmatpush1.msra.mxu0 %v550
    %552 = vmatprep.subr.mxu0 0.0
    %553 = vmatpush1.msra.mxu0 0.0
    %554 = vmatprep.subr.mxu0 0.0
    %555 = vmatpush1.msra.mxu0 0.0
    %556 = vmatprep.subr.mxu0 0.0
    %557 = vmatpush1.msra.mxu0 0.0
    %558 = vmatprep.subr.mxu0 0.0
    %559 = vmatpush1.msra.mxu0 0.0
    %560 = vmatprep.subr.mxu0 0.0
    %561 = vmatpush1.msra.mxu0 0.0
    %562 = vmatprep.subr.mxu0 0.0
    %563 = vmatpush1.msra.mxu0 0.0
    %564 = vmatprep.subr.mxu0 0.0
    %565 = vmatpush1.msra.mxu0 0.0
    %566 = vmatprep.subr.mxu0 0.0
    %567 = vmatpush1.msra.mxu0 0.0
    %568 = vmatprep.subr.mxu0 0.0
    %569 = vmatpush1.msra.mxu0 0.0
    %570 = vmatprep.subr.mxu0 0.0
    %571 = vmatpush1.msra.mxu0 0.0
    %572 = vmatprep.subr.mxu0 0.0
    %573 = vmatpush1.msra.mxu0 0.0
    %574 = vmatprep.subr.mxu0 0.0
    %575 = vmatpush1.msra.mxu0 0.0
    %576 = vmatprep.subr.mxu0 0.0
    %577 = vmatpush1.msra.mxu0 0.0
    %578 = vmatprep.subr.mxu0 0.0
    %579 = vmatpush1.msra.mxu0 0.0
    %580 = vmatprep.subr.mxu0 0.0
    %581 = vmatpush1.msra.mxu0 0.0
    %582 = vmatprep.subr.mxu0 0.0
    %583 = vmatpush1.msra.mxu0 0.0
    %584 = vmatprep.subr.mxu0 0.0
    %585 = vmatpush1.msra.mxu0 0.0
    %586 = vmatprep.subr.mxu0 0.0
    %587 = vmatpush1.msra.mxu0 0.0
    %588 = vmatprep.subr.mxu0 0.0
    %589 = vmatpush1.msra.mxu0 0.0
    %590 = vmatprep.subr.mxu0 0.0
    %591 = vmatpush1.msra.mxu0 0.0
    %592 = vmatprep.subr.mxu0 0.0
    %593 = vmatpush1.msra.mxu0 0.0
    %594 = vmatprep.subr.mxu0 0.0
    %595 = vmatpush1.msra.mxu0 0.0
    %596 = vmatprep.subr.mxu0 0.0
    %597 = vmatpush1.msra.mxu0 0.0
    %598 = vmatprep.subr.mxu0 0.0
    %599 = vmatpush1.msra.mxu0 0.0
    %600 = vmatprep.subr.mxu0 0.0
    %601 = vmatpush1.msra.mxu0 0.0
    %602 = vmatprep.subr.mxu0 0.0
    %603 = vmatpush1.msra.mxu0 0.0
    %604 = vmatprep.subr.mxu0 0.0
    %605 = vmatpush1.msra.mxu0 0.0
    %606 = vmatprep.subr.mxu0 0.0
    %607 = vmatpush1.msra.mxu0 0.0
    %608 = vmatprep.mubr.f32.mxu0 0.0
    %v609 = vand.u32 %v169, 4294901760
    %610 = vmatmul.mubr.f32.gmra.mrb[0].mxu0 %v609
    %v611 = vpop.f32.mrb[0].mxu0
    %v612 = vadd.f32 %v521, %v611
    %v613 = vpop.f32.mrb[0].mxu0
    %614 = vmatprep.mubr.f32.mxu0 0.0
    %v615 = vand.u32 %v172, 4294901760
    %616 = vmatmul.mubr.f32.gmra.mrb[0].mxu0 %v615
    %v617 = vpop.f32.mrb[0].mxu0
    %v618 = vadd.f32 %v529, %v617
    %v619 = vpop.f32.mrb[0].mxu0
    %620 = vdwg.mxu0
    %621 = vmatprep.subr.mxu0 0.0
    %v622 = vand.u32 %v157, 4294901760
    %623 = vmatpush1.msra.mxu0 %v622
    %624 = vmatprep.subr.mxu0 0.0
    %v625 = vand.u32 %v158, 4294901760
    %626 = vmatpush1.msra.mxu0 %v625
    %627 = vmatprep.subr.mxu0 0.0
    %v628 = vand.u32 %v159, 4294901760
    %629 = vmatpush1.msra.mxu0 %v628
    %630 = vmatprep.subr.mxu0 0.0
    %v631 = vand.u32 %v160, 4294901760
    %632 = vmatpush1.msra.mxu0 %v631
    %633 = vmatprep.subr.mxu0 0.0
    %634 = vmatpush1.msra.mxu0 0.0
    %635 = vmatprep.subr.mxu0 0.0
    %636 = vmatpush1.msra.mxu0 0.0
    %637 = vmatprep.subr.mxu0 0.0
    %638 = vmatpush1.msra.mxu0 0.0
    %639 = vmatprep.subr.mxu0 0.0
    %640 = vmatpush1.msra.mxu0 0.0
    %641 = vmatprep.subr.mxu0 0.0
    %642 = vmatpush1.msra.mxu0 0.0
    %643 = vmatprep.subr.mxu0 0.0
    %644 = vmatpush1.msra.mxu0 0.0
    %645 = vmatprep.subr.mxu0 0.0
    %646 = vmatpush1.msra.mxu0 0.0
    %647 = vmatprep.subr.mxu0 0.0
    %648 = vmatpush1.msra.mxu0 0.0
    %649 = vmatprep.subr.mxu0 0.0
    %650 = vmatpush1.msra.mxu0 0.0
    %651 = vmatprep.subr.mxu0 0.0
    %652 = vmatpush1.msra.mxu0 0.0
    %653 = vmatprep.subr.mxu0 0.0
    %654 = vmatpush1.msra.mxu0 0.0
    %655 = vmatprep.subr.mxu0 0.0
    %656 = vmatpush1.msra.mxu0 0.0
    %657 = vmatprep.subr.mxu0 0.0
    %658 = vmatpush1.msra.mxu0 0.0
    %659 = vmatprep.subr.mxu0 0.0
    %660 = vmatpush1.msra.mxu0 0.0
    %661 = vmatprep.subr.mxu0 0.0
    %662 = vmatpush1.msra.mxu0 0.0
    %663 = vmatprep.subr.mxu0 0.0
    %664 = vmatpush1.msra.mxu0 0.0
    %665 = vmatprep.subr.mxu0 0.0
    %666 = vmatpush1.msra.mxu0 0.0
    %667 = vmatprep.subr.mxu0 0.0
    %668 = vmatpush1.msra.mxu0 0.0
    %669 = vmatprep.subr.mxu0 0.0
    %670 = vmatpush1.msra.mxu0 0.0
    %671 = vmatprep.subr.mxu0 0.0
    %672 = vmatpush1.msra.mxu0 0.0
    %673 = vmatprep.subr.mxu0 0.0
    %674 = vmatpush1.msra.mxu0 0.0
    %675 = vmatprep.subr.mxu0 0.0
    %676 = vmatpush1.msra.mxu0 0.0
    %677 = vmatprep.subr.mxu0 0.0
    %678 = vmatpush1.msra.mxu0 0.0
    %679 = vmatprep.subr.mxu0 0.0
    %680 = vmatpush1.msra.mxu0 0.0
    %681 = vmatprep.subr.mxu0 0.0
    %682 = vmatpush1.msra.mxu0 0.0
    %683 = vmatprep.subr.mxu0 0.0
    %684 = vmatpush1.msra.mxu0 0.0
    %685 = vmatprep.subr.mxu0 0.0
    %686 = vmatpush1.msra.mxu0 0.0
    %687 = vmatprep.subr.mxu0 0.0
    %688 = vmatpush1.msra.mxu0 0.0
    %689 = vmatprep.mubr.f32.mxu0 0.0
    %v690 = vand.u32 %v169, 4294901760
    %691 = vmatmul.mubr.f32.gmra.mrb[0].mxu0 %v690
    %v692 = vpop.f32.mrb[0].mxu0
    %v693 = vadd.f32 %v612, %v692
    %v694 = vpop.f32.mrb[0].mxu0
    %695 = vmatprep.mubr.f32.mxu0 0.0
    %v696 = vand.u32 %v172, 4294901760
    %697 = vmatmul.mubr.f32.gmra.mrb[0].mxu0 %v696
    %v698 = vpop.f32.mrb[0].mxu0
    %v699 = vadd.f32 %v618, %v698
    %v700 = vpop.f32.mrb[0].mxu0
    %701 = vdwg.mxu0
    %702 = vst.msk [vmem:[#allocation14] sm:$0xff] %vm111, %v693
    %703 = vst.msk [vmem:[#allocation14 + $0x8] sm:$0xff] %vm111, %v699
    %706 = vrot.lane.b32.xlu0 %v693, 96
    %v707 = vpop.permute.xlu0 %706
    %708 = vrot.lane.b32.xlu0 %v699, 96
    %v709 = vpop.permute.xlu0 %708
    %712 = vst.msk [vmem:[#allocation15] sm:$0xff] %vm111, %v707
    %713 = vst.msk [vmem:[#allocation15 + $0x8] sm:$0xff] %vm111, %v709
    %714 = vrot.lane.b32.xlu0 %v693, 64
    %v715 = vpop.permute.xlu0 %714
    %716 = vrot.lane.b32.xlu0 %v699, 64
    %v717 = vpop.permute.xlu0 %716
    %720 = vst.msk [vmem:[#allocation17] sm:$0xff] %vm111, %v715
    %721 = vst.msk [vmem:[#allocation17 + $0x8] sm:$0xff] %vm111, %v717
    %v722 = vmul.f32 %v693, 0.5
    %v723 = vmul.f32 %v699, 0.5
    %v724 = vmul.f32 %v693, 0.044715
    %v725 = vmul.f32 %v699, 0.044715
    %v726 = vmul.f32 %v724, %v693
    %v727 = vmul.f32 %v725, %v699
    %v728 = vmul.f32 %v726, %v693
    %v729 = vmul.f32 %v727, %v699
    %v730 = vadd.f32 %v693, %v728
    %v731 = vadd.f32 %v699, %v729
    %v732 = vmul.f32 %v730, 0.7978846
    %v733 = vmul.f32 %v731, 0.7978846
    %v734 = vtanh.pop %v732
    %v735 = vtanh.pop %v733
    %v736 = vadd.f32 %v734, 1.0
    %v737 = vadd.f32 %v735, 1.0
    %v738 = vmul.f32 %v722, %v736
    %v739 = vmul.f32 %v723, %v737
    %v740 = vld [vmem:[#allocation12] sm:$0x1]
    %v741 = vld [vmem:[#allocation2] sm:$0x1]
    %743 = vset.pattern.permute.xlu0 0
    %744 = vperm.xlu0 %743, %v741
    %v745 = vpop.permute.xlu0 %744
    %v747 = vlaneseq
    %v748 = vshrl.u32 %v747, 7
    %v749 = vsub.s32 0, %v748
    %v750 = vrot.slane %v745, %v749
    %753 = vrot.lane.b32.xlu0 %v738, 32
    %v754 = vpop.permute.xlu0 %753
    %755 = vrot.lane.b32.xlu0 %v739, 32
    %v756 = vpop.permute.xlu0 %755
    %vm757 = vcmask 130048
    %v759 = vsel %vm757, %v740, 0
    %v761 = vsel %vm757, %v754, 0
    %v763 = vsel %vm757, %v756, 0
    %765 = vmatprep.subr.mxu0 0.0
    %v766 = vand.u32 %v761, 4294901760
    %767 = vmatpush1.xpose.msra.mxu0 %v766
    %768 = vmatprep.subr.mxu0 0.0
    %v769 = vand.u32 %v763, 4294901760
    %770 = vmatpush1.xpose.msra.mxu0 %v769
    %771 = vmatprep.subr.mxu0 0.0
    %772 = vmatpush1.xpose.msra.mxu0 0.0
    %773 = vmatprep.subr.mxu0 0.0
    %774 = vmatpush1.xpose.msra.mxu0 0.0
    %775 = vmatprep.subr.mxu0 0.0
    %776 = vmatpush1.xpose.msra.mxu0 0.0
    %777 = vmatprep.subr.mxu0 0.0
    %778 = vmatpush1.xpose.msra.mxu0 0.0
    %779 = vmatprep.subr.mxu0 0.0
    %780 = vmatpush1.xpose.msra.mxu0 0.0
    %781 = vmatprep.subr.mxu0 0.0
    %782 = vmatpush1.xpose.msra.mxu0 0.0
    %783 = vmatprep.subr.mxu0 0.0
    %784 = vmatpush1.xpose.msra.mxu0 0.0
    %785 = vmatprep.subr.mxu0 0.0
    %786 = vmatpush1.xpose.msra.mxu0 0.0
    %787 = vmatprep.subr.mxu0 0.0
    %788 = vmatpush1.xpose.msra.mxu0 0.0
    %789 = vmatprep.subr.mxu0 0.0
    %790 = vmatpush1.xpose.msra.mxu0 0.0
    %791 = vmatprep.subr.mxu0 0.0
    %792 = vmatpush1.xpose.msra.mxu0 0.0
    %793 = vmatprep.subr.mxu0 0.0
    %794 = vmatpush1.xpose.msra.mxu0 0.0
    %795 = vmatprep.subr.mxu0 0.0
    %796 = vmatpush1.xpose.msra.mxu0 0.0
    %797 = vmatprep.subr.mxu0 0.0
    %798 = vmatpush1.xpose.msra.mxu0 0.0
    %799 = vmatprep.subr.mxu0 0.0
    %800 = vmatpush1.xpose.msra.mxu0 0.0
    %801 = vmatprep.subr.mxu0 0.0
    %802 = vmatpush1.xpose.msra.mxu0 0.0
    %803 = vmatprep.subr.mxu0 0.0
    %804 = vmatpush1.xpose.msra.mxu0 0.0
    %805 = vmatprep.subr.mxu0 0.0
    %806 = vmatpush1.xpose.msra.mxu0 0.0
    %807 = vmatprep.subr.mxu0 0.0
    %808 = vmatpush1.xpose.msra.mxu0 0.0
    %809 = vmatprep.subr.mxu0 0.0
    %810 = vmatpush1.xpose.msra.mxu0 0.0
    %811 = vmatprep.subr.mxu0 0.0
    %812 = vmatpush1.xpose.msra.mxu0 0.0
    %813 = vmatprep.subr.mxu0 0.0
    %814 = vmatpush1.xpose.msra.mxu0 0.0
    %815 = vmatprep.subr.mxu0 0.0
    %816 = vmatpush1.xpose.msra.mxu0 0.0
    %817 = vmatprep.subr.mxu0 0.0
    %818 = vmatpush1.xpose.msra.mxu0 0.0
    %819 = vmatprep.subr.mxu0 0.0
    %820 = vmatpush1.xpose.msra.mxu0 0.0
    %821 = vmatprep.subr.mxu0 0.0
    %822 = vmatpush1.xpose.msra.mxu0 0.0
    %823 = vmatprep.subr.mxu0 0.0
    %824 = vmatpush1.xpose.msra.mxu0 0.0
    %825 = vmatprep.subr.mxu0 0.0
    %826 = vmatpush1.xpose.msra.mxu0 0.0
    %827 = vmatprep.subr.mxu0 0.0
    %828 = vmatpush1.xpose.msra.mxu0 0.0
    %829 = vmatprep.subr.mxu0 0.0
    %830 = vmatpush1.xpose.msra.mxu0 0.0
    %831 = vmatprep.mubr.f32.mxu0 0.0
    %v832 = vand.u32 %v759, 4294901760
    %v833 = vsub.f32 %v759, %v832
    %v834 = vand.u32 %v833, 4294901760
    %v835 = vsub.f32 %v833, %v834
    %v836 = vand.u32 %v835, 4294901760
    %837 = vmatmul.mubr.f32.gmra.mrb[0].mxu0 %v836
    %v838 = vpop.f32.mrb[0].mxu0
    %v839 = vadd.f32 %v750, %v838
    %v840 = vpop.f32.mrb[0].mxu0
    %841 = vdwg.mxu0
    %842 = vmatprep.subr.mxu0 0.0
    %v843 = vand.u32 %v761, 4294901760
    %v844 = vsub.f32 %v761, %v843
    %v845 = vand.u32 %v844, 4294901760
    %v846 = vsub.f32 %v844, %v845
    %v847 = vand.u32 %v846, 4294901760
    %848 = vmatpush1.xpose.msra.mxu0 %v847
    %849 = vmatprep.subr.mxu0 0.0
    %v850 = vand.u32 %v763, 4294901760
    %v851 = vsub.f32 %v763, %v850
    %v852 = vand.u32 %v851, 4294901760
    %v853 = vsub.f32 %v851, %v852
    %v854 = vand.u32 %v853, 4294901760
    %855 = vmatpush1.xpose.msra.mxu0 %v854
    %856 = vmatprep.subr.mxu0 0.0
    %857 = vmatpush1.xpose.msra.mxu0 0.0
    %858 = vmatprep.subr.mxu0 0.0
    %859 = vmatpush1.xpose.msra.mxu0 0.0
    %860 = vmatprep.subr.mxu0 0.0
    %861 = vmatpush1.xpose.msra.mxu0 0.0
    %862 = vmatprep.subr.mxu0 0.0
    %863 = vmatpush1.xpose.msra.mxu0 0.0
    %864 = vmatprep.subr.mxu0 0.0
    %865 = vmatpush1.xpose.msra.mxu0 0.0
    %866 = vmatprep.subr.mxu0 0.0
    %867 = vmatpush1.xpose.msra.mxu0 0.0
    %868 = vmatprep.subr.mxu0 0.0
    %869 = vmatpush1.xpose.msra.mxu0 0.0
    %870 = vmatprep.subr.mxu0 0.0
    %871 = vmatpush1.xpose.msra.mxu0 0.0
    %872 = vmatprep.subr.mxu0 0.0
    %873 = vmatpush1.xpose.msra.mxu0 0.0
    %874 = vmatprep.subr.mxu0 0.0
    %875 = vmatpush1.xpose.msra.mxu0 0.0
    %876 = vmatprep.subr.mxu0 0.0
    %877 = vmatpush1.xpose.msra.mxu0 0.0
    %878 = vmatprep.subr.mxu0 0.0
    %879 = vmatpush1.xpose.msra.mxu0 0.0
    %880 = vmatprep.subr.mxu0 0.0
    %881 = vmatpush1.xpose.msra.mxu0 0.0
    %882 = vmatprep.subr.mxu0 0.0
    %883 = vmatpush1.xpose.msra.mxu0 0.0
    %884 = vmatprep.subr.mxu0 0.0
    %885 = vmatpush1.xpose.msra.mxu0 0.0
    %886 = vmatprep.subr.mxu0 0.0
    %887 = vmatpush1.xpose.msra.mxu0 0.0
    %888 = vmatprep.subr.mxu0 0.0
    %889 = vmatpush1.xpose.msra.mxu0 0.0
    %890 = vmatprep.subr.mxu0 0.0
    %891 = vmatpush1.xpose.msra.mxu0 0.0
    %892 = vmatprep.subr.mxu0 0.0
    %893 = vmatpush1.xpose.msra.mxu0 0.0
    %894 = vmatprep.subr.mxu0 0.0
    %895 = vmatpush1.xpose.msra.mxu0 0.0
    %896 = vmatprep.subr.mxu0 0.0
    %897 = vmatpush1.xpose.msra.mxu0 0.0
    %898 = vmatprep.subr.mxu0 0.0
    %899 = vmatpush1.xpose.msra.mxu0 0.0
    %900 = vmatprep.subr.mxu0 0.0
    %901 = vmatpush1.xpose.msra.mxu0 0.0
    %902 = vmatprep.subr.mxu0 0.0
    %903 = vmatpush1.xpose.msra.mxu0 0.0
    %904 = vmatprep.subr.mxu0 0.0
    %905 = vmatpush1.xpose.msra.mxu0 0.0
    %906 = vmatprep.subr.mxu0 0.0
    %907 = vmatpush1.xpose.msra.mxu0 0.0
    %908 = vmatprep.subr.mxu0 0.0
    %909 = vmatpush1.xpose.msra.mxu0 0.0
    %910 = vmatprep.subr.mxu0 0.0
    %911 = vmatpush1.xpose.msra.mxu0 0.0
    %912 = vmatprep.subr.mxu0 0.0
    %913 = vmatpush1.xpose.msra.mxu0 0.0
    %914 = vmatprep.subr.mxu0 0.0
    %915 = vmatpush1.xpose.msra.mxu0 0.0
    %916 = vmatprep.mubr.f32.mxu0 0.0
    %v917 = vand.u32 %v759, 4294901760
    %918 = vmatmul.mubr.f32.gmra.mrb[0].mxu0 %v917
    %v919 = vpop.f32.mrb[0].mxu0
    %v920 = vadd.f32 %v839, %v919
    %v921 = vpop.f32.mrb[0].mxu0
    %922 = vdwg.mxu0
    %923 = vmatprep.subr.mxu0 0.0
    %v924 = vand.u32 %v761, 4294901760
    %v925 = vsub.f32 %v761, %v924
    %926 = vmatpush1.xpose.msra.mxu0 %v925
    %927 = vmatprep.subr.mxu0 0.0
    %v928 = vand.u32 %v763, 4294901760
    %v929 = vsub.f32 %v763, %v928
    %930 = vmatpush1.xpose.msra.mxu0 %v929
    %931 = vmatprep.subr.mxu0 0.0
    %932 = vmatpush1.xpose.msra.mxu0 0.0
    %933 = vmatprep.subr.mxu0 0.0
    %934 = vmatpush1.xpose.msra.mxu0 0.0
    %935 = vmatprep.subr.mxu0 0.0
    %936 = vmatpush1.xpose.msra.mxu0 0.0
    %937 = vmatprep.subr.mxu0 0.0
    %938 = vmatpush1.xpose.msra.mxu0 0.0
    %939 = vmatprep.subr.mxu0 0.0
    %940 = vmatpush1.xpose.msra.mxu0 0.0
    %941 = vmatprep.subr.mxu0 0.0
    %942 = vmatpush1.xpose.msra.mxu0 0.0
    %943 = vmatprep.subr.mxu0 0.0
    %944 = vmatpush1.xpose.msra.mxu0 0.0
    %945 = vmatprep.subr.mxu0 0.0
    %946 = vmatpush1.xpose.msra.mxu0 0.0
    %947 = vmatprep.subr.mxu0 0.0
    %948 = vmatpush1.xpose.msra.mxu0 0.0
    %949 = vmatprep.subr.mxu0 0.0
    %950 = vmatpush1.xpose.msra.mxu0 0.0
    %951 = vmatprep.subr.mxu0 0.0
    %952 = vmatpush1.xpose.msra.mxu0 0.0
    %953 = vmatprep.subr.mxu0 0.0
    %954 = vmatpush1.xpose.msra.mxu0 0.0
    %955 = vmatprep.subr.mxu0 0.0
    %956 = vmatpush1.xpose.msra.mxu0 0.0
    %957 = vmatprep.subr.mxu0 0.0
    %958 = vmatpush1.xpose.msra.mxu0 0.0
    %959 = vmatprep.subr.mxu0 0.0
    %960 = vmatpush1.xpose.msra.mxu0 0.0
    %961 = vmatprep.subr.mxu0 0.0
    %962 = vmatpush1.xpose.msra.mxu0 0.0
    %963 = vmatprep.subr.mxu0 0.0
    %964 = vmatpush1.xpose.msra.mxu0 0.0
    %965 = vmatprep.subr.mxu0 0.0
    %966 = vmatpush1.xpose.msra.mxu0 0.0
    %967 = vmatprep.subr.mxu0 0.0
    %968 = vmatpush1.xpose.msra.mxu0 0.0
    %969 = vmatprep.subr.mxu0 0.0
    %970 = vmatpush1.xpose.msra.mxu0 0.0
    %971 = vmatprep.subr.mxu0 0.0
    %972 = vmatpush1.xpose.msra.mxu0 0.0
    %973 = vmatprep.subr.mxu0 0.0
    %974 = vmatpush1.xpose.msra.mxu0 0.0
    %975 = vmatprep.subr.mxu0 0.0
    %976 = vmatpush1.xpose.msra.mxu0 0.0
    %977 = vmatprep.subr.mxu0 0.0
    %978 = vmatpush1.xpose.msra.mxu0 0.0
    %979 = vmatprep.subr.mxu0 0.0
    %980 = vmatpush1.xpose.msra.mxu0 0.0
    %981 = vmatprep.subr.mxu0 0.0
    %982 = vmatpush1.xpose.msra.mxu0 0.0
    %983 = vmatprep.subr.mxu0 0.0
    %984 = vmatpush1.xpose.msra.mxu0 0.0
    %985 = vmatprep.subr.mxu0 0.0
    %986 = vmatpush1.xpose.msra.mxu0 0.0
    %987 = vmatprep.subr.mxu0 0.0
    %988 = vmatpush1.xpose.msra.mxu0 0.0
    %989 = vmatprep.subr.mxu0 0.0
    %990 = vmatpush1.xpose.msra.mxu0 0.0
    %991 = vmatprep.mubr.f32.mxu0 0.0
    %v992 = vand.u32 %v759, 4294901760
    %v993 = vsub.f32 %v759, %v992
    %994 = vmatmul.mubr.f32.gmra.mrb[0].mxu0 %v993
    %v995 = vpop.f32.mrb[0].mxu0
    %v996 = vadd.f32 %v920, %v995
    %v997 = vpop.f32.mrb[0].mxu0
    %998 = vdwg.mxu0
    %999 = vmatprep.subr.mxu0 0.0
    %v1000 = vand.u32 %v761, 4294901760
    %1001 = vmatpush1.xpose.msra.mxu0 %v1000
    %1002 = vmatprep.subr.mxu0 0.0
    %v1003 = vand.u32 %v763, 4294901760
    %1004 = vmatpush1.xpose.msra.mxu0 %v1003
    %1005 = vmatprep.subr.mxu0 0.0
    %1006 = vmatpush1.xpose.msra.mxu0 0.0
    %1007 = vmatprep.subr.mxu0 0.0
    %1008 = vmatpush1.xpose.msra.mxu0 0.0
    %1009 = vmatprep.subr.mxu0 0.0
    %1010 = vmatpush1.xpose.msra.mxu0 0.0
    %1011 = vmatprep.subr.mxu0 0.0
    %1012 = vmatpush1.xpose.msra.mxu0 0.0
    %1013 = vmatprep.subr.mxu0 0.0
    %1014 = vmatpush1.xpose.msra.mxu0 0.0
    %1015 = vmatprep.subr.mxu0 0.0
    %1016 = vmatpush1.xpose.msra.mxu0 0.0
    %1017 = vmatprep.subr.mxu0 0.0
    %1018 = vmatpush1.xpose.msra.mxu0 0.0
    %1019 = vmatprep.subr.mxu0 0.0
    %1020 = vmatpush1.xpose.msra.mxu0 0.0
    %1021 = vmatprep.subr.mxu0 0.0
    %1022 = vmatpush1.xpose.msra.mxu0 0.0
    %1023 = vmatprep.subr.mxu0 0.0
    %1024 = vmatpush1.xpose.msra.mxu0 0.0
    %1025 = vmatprep.subr.mxu0 0.0
    %1026 = vmatpush1.xpose.msra.mxu0 0.0
    %1027 = vmatprep.subr.mxu0 0.0
    %1028 = vmatpush1.xpose.msra.mxu0 0.0
    %1029 = vmatprep.subr.mxu0 0.0
    %1030 = vmatpush1.xpose.msra.mxu0 0.0
    %1031 = vmatprep.subr.mxu0 0.0
    %1032 = vmatpush1.xpose.msra.mxu0 0.0
    %1033 = vmatprep.subr.mxu0 0.0
    %1034 = vmatpush1.xpose.msra.mxu0 0.0
    %1035 = vmatprep.subr.mxu0 0.0
    %1036 = vmatpush1.xpose.msra.mxu0 0.0
    %1037 = vmatprep.subr.mxu0 0.0
    %1038 = vmatpush1.xpose.msra.mxu0 0.0
    %1039 = vmatprep.subr.mxu0 0.0
    %1040 = vmatpush1.xpose.msra.mxu0 0.0
    %1041 = vmatprep.subr.mxu0 0.0
    %1042 = vmatpush1.xpose.msra.mxu0 0.0
    %1043 = vmatprep.subr.mxu0 0.0
    %1044 = vmatpush1.xpose.msra.mxu0 0.0
    %1045 = vmatprep.subr.mxu0 0.0
    %1046 = vmatpush1.xpose.msra.mxu0 0.0
    %1047 = vmatprep.subr.mxu0 0.0
    %1048 = vmatpush1.xpose.msra.mxu0 0.0
    %1049 = vmatprep.subr.mxu0 0.0
    %1050 = vmatpush1.xpose.msra.mxu0 0.0
    %1051 = vmatprep.subr.mxu0 0.0
    %1052 = vmatpush1.xpose.msra.mxu0 0.0
    %1053 = vmatprep.subr.mxu0 0.0
    %1054 = vmatpush1.xpose.msra.mxu0 0.0
    %1055 = vmatprep.subr.mxu0 0.0
    %1056 = vmatpush1.xpose.msra.mxu0 0.0
    %1057 = vmatprep.subr.mxu0 0.0
    %1058 = vmatpush1.xpose.msra.mxu0 0.0
    %1059 = vmatprep.subr.mxu0 0.0
    %1060 = vmatpush1.xpose.msra.mxu0 0.0
    %1061 = vmatprep.subr.mxu0 0.0
    %1062 = vmatpush1.xpose.msra.mxu0 0.0
    %1063 = vmatprep.subr.mxu0 0.0
    %1064 = vmatpush1.xpose.msra.mxu0 0.0
    %1065 = vmatprep.mubr.f32.mxu0 0.0
    %v1066 = vand.u32 %v759, 4294901760
    %v1067 = vsub.f32 %v759, %v1066
    %v1068 = vand.u32 %v1067, 4294901760
    %1069 = vmatmul.mubr.f32.gmra.mrb[0].mxu0 %v1068
    %v1070 = vpop.f32.mrb[0].mxu0
    %v1071 = vadd.f32 %v996, %v1070
    %v1072 = vpop.f32.mrb[0].mxu0
    %1073 = vdwg.mxu0
    %1074 = vmatprep.subr.mxu0 0.0
    %v1075 = vand.u32 %v761, 4294901760
    %v1076 = vsub.f32 %v761, %v1075
    %v1077 = vand.u32 %v1076, 4294901760
    %1078 = vmatpush1.xpose.msra.mxu0 %v1077
    %1079 = vmatprep.subr.mxu0 0.0
    %v1080 = vand.u32 %v763, 4294901760
    %v1081 = vsub.f32 %v763, %v1080
    %v1082 = vand.u32 %v1081, 4294901760
    %1083 = vmatpush1.xpose.msra.mxu0 %v1082
    %1084 = vmatprep.subr.mxu0 0.0
    %1085 = vmatpush1.xpose.msra.mxu0 0.0
    %1086 = vmatprep.subr.mxu0 0.0
    %1087 = vmatpush1.xpose.msra.mxu0 0.0
    %1088 = vmatprep.subr.mxu0 0.0
    %1089 = vmatpush1.xpose.msra.mxu0 0.0
    %1090 = vmatprep.subr.mxu0 0.0
    %1091 = vmatpush1.xpose.msra.mxu0 0.0
    %1092 = vmatprep.subr.mxu0 0.0
    %1093 = vmatpush1.xpose.msra.mxu0 0.0
    %1094 = vmatprep.subr.mxu0 0.0
    %1095 = vmatpush1.xpose.msra.mxu0 0.0
    %1096 = vmatprep.subr.mxu0 0.0
    %1097 = vmatpush1.xpose.msra.mxu0 0.0
    %1098 = vmatprep.subr.mxu0 0.0
    %1099 = vmatpush1.xpose.msra.mxu0 0.0
    %1100 = vmatprep.subr.mxu0 0.0
    %1101 = vmatpush1.xpose.msra.mxu0 0.0
    %1102 = vmatprep.subr.mxu0 0.0
    %1103 = vmatpush1.xpose.msra.mxu0 0.0
    %1104 = vmatprep.subr.mxu0 0.0
    %1105 = vmatpush1.xpose.msra.mxu0 0.0
    %1106 = vmatprep.subr.mxu0 0.0
    %1107 = vmatpush1.xpose.msra.mxu0 0.0
    %1108 = vmatprep.subr.mxu0 0.0
    %1109 = vmatpush1.xpose.msra.mxu0 0.0
    %1110 = vmatprep.subr.mxu0 0.0
    %1111 = vmatpush1.xpose.msra.mxu0 0.0
    %1112 = vmatprep.subr.mxu0 0.0
    %1113 = vmatpush1.xpose.msra.mxu0 0.0
    %1114 = vmatprep.subr.mxu0 0.0
    %1115 = vmatpush1.xpose.msra.mxu0 0.0
    %1116 = vmatprep.subr.mxu0 0.0
    %1117 = vmatpush1.xpose.msra.mxu0 0.0
    %1118 = vmatprep.subr.mxu0 0.0
    %1119 = vmatpush1.xpose.msra.mxu0 0.0
    %1120 = vmatprep.subr.mxu0 0.0
    %1121 = vmatpush1.xpose.msra.mxu0 0.0
    %1122 = vmatprep.subr.mxu0 0.0
    %1123 = vmatpush1.xpose.msra.mxu0 0.0
    %1124 = vmatprep.subr.mxu0 0.0
    %1125 = vmatpush1.xpose.msra.mxu0 0.0
    %1126 = vmatprep.subr.mxu0 0.0
    %1127 = vmatpush1.xpose.msra.mxu0 0.0
    %1128 = vmatprep.subr.mxu0 0.0
    %1129 = vmatpush1.xpose.msra.mxu0 0.0
    %1130 = vmatprep.subr.mxu0 0.0
    %1131 = vmatpush1.xpose.msra.mxu0 0.0
    %1132 = vmatprep.subr.mxu0 0.0
    %1133 = vmatpush1.xpose.msra.mxu0 0.0
    %1134 = vmatprep.subr.mxu0 0.0
    %1135 = vmatpush1.xpose.msra.mxu0 0.0
    %1136 = vmatprep.subr.mxu0 0.0
    %1137 = vmatpush1.xpose.msra.mxu0 0.0
    %1138 = vmatprep.subr.mxu0 0.0
    %1139 = vmatpush1.xpose.msra.mxu0 0.0
    %1140 = vmatprep.subr.mxu0 0.0
    %1141 = vmatpush1.xpose.msra.mxu0 0.0
    %1142 = vmatprep.subr.mxu0 0.0
    %1143 = vmatpush1.xpose.msra.mxu0 0.0
    %1144 = vmatprep.mubr.f32.mxu0 0.0
    %v1145 = vand.u32 %v759, 4294901760
    %1146 = vmatmul.mubr.f32.gmra.mrb[0].mxu0 %v1145
    %v1147 = vpop.f32.mrb[0].mxu0
    %v1148 = vadd.f32 %v1071, %v1147
    %v1149 = vpop.f32.mrb[0].mxu0
    %1150 = vdwg.mxu0
    %1151 = vmatprep.subr.mxu0 0.0
    %v1152 = vand.u32 %v761, 4294901760
    %1153 = vmatpush1.xpose.msra.mxu0 %v1152
    %1154 = vmatprep.subr.mxu0 0.0
    %v1155 = vand.u32 %v763, 4294901760
    %1156 = vmatpush1.xpose.msra.mxu0 %v1155
    %1157 = vmatprep.subr.mxu0 0.0
    %1158 = vmatpush1.xpose.msra.mxu0 0.0
    %1159 = vmatprep.subr.mxu0 0.0
    %1160 = vmatpush1.xpose.msra.mxu0 0.0
    %1161 = vmatprep.subr.mxu0 0.0
    %1162 = vmatpush1.xpose.msra.mxu0 0.0
    %1163 = vmatprep.subr.mxu0 0.0
    %1164 = vmatpush1.xpose.msra.mxu0 0.0
    %1165 = vmatprep.subr.mxu0 0.0
    %1166 = vmatpush1.xpose.msra.mxu0 0.0
    %1167 = vmatprep.subr.mxu0 0.0
    %1168 = vmatpush1.xpose.msra.mxu0 0.0
    %1169 = vmatprep.subr.mxu0 0.0
    %1170 = vmatpush1.xpose.msra.mxu0 0.0
    %1171 = vmatprep.subr.mxu0 0.0
    %1172 = vmatpush1.xpose.msra.mxu0 0.0
    %1173 = vmatprep.subr.mxu0 0.0
    %1174 = vmatpush1.xpose.msra.mxu0 0.0
    %1175 = vmatprep.subr.mxu0 0.0
    %1176 = vmatpush1.xpose.msra.mxu0 0.0
    %1177 = vmatprep.subr.mxu0 0.0
    %1178 = vmatpush1.xpose.msra.mxu0 0.0
    %1179 = vmatprep.subr.mxu0 0.0
    %1180 = vmatpush1.xpose.msra.mxu0 0.0
    %1181 = vmatprep.subr.mxu0 0.0
    %1182 = vmatpush1.xpose.msra.mxu0 0.0
    %1183 = vmatprep.subr.mxu0 0.0
    %1184 = vmatpush1.xpose.msra.mxu0 0.0
    %1185 = vmatprep.subr.mxu0 0.0
    %1186 = vmatpush1.xpose.msra.mxu0 0.0
    %1187 = vmatprep.subr.mxu0 0.0
    %1188 = vmatpush1.xpose.msra.mxu0 0.0
    %1189 = vmatprep.subr.mxu0 0.0
    %1190 = vmatpush1.xpose.msra.mxu0 0.0
    %1191 = vmatprep.subr.mxu0 0.0
    %1192 = vmatpush1.xpose.msra.mxu0 0.0
    %1193 = vmatprep.subr.mxu0 0.0
    %1194 = vmatpush1.xpose.msra.mxu0 0.0
    %1195 = vmatprep.subr.mxu0 0.0
    %1196 = vmatpush1.xpose.msra.mxu0 0.0
    %1197 = vmatprep.subr.mxu0 0.0
    %1198 = vmatpush1.xpose.msra.mxu0 0.0
    %1199 = vmatprep.subr.mxu0 0.0
    %1200 = vmatpush1.xpose.msra.mxu0 0.0
    %1201 = vmatprep.subr.mxu0 0.0
    %1202 = vmatpush1.xpose.msra.mxu0 0.0
    %1203 = vmatprep.subr.mxu0 0.0
    %1204 = vmatpush1.xpose.msra.mxu0 0.0
    %1205 = vmatprep.subr.mxu0 0.0
    %1206 = vmatpush1.xpose.msra.mxu0 0.0
    %1207 = vmatprep.subr.mxu0 0.0
    %1208 = vmatpush1.xpose.msra.mxu0 0.0
    %1209 = vmatprep.subr.mxu0 0.0
    %1210 = vmatpush1.xpose.msra.mxu0 0.0
    %1211 = vmatprep.subr.mxu0 0.0
    %1212 = vmatpush1.xpose.msra.mxu0 0.0
    %1213 = vmatprep.subr.mxu0 0.0
    %1214 = vmatpush1.xpose.msra.mxu0 0.0
    %1215 = vmatprep.subr.mxu0 0.0
    %1216 = vmatpush1.xpose.msra.mxu0 0.0
    %1217 = vmatprep.mubr.f32.mxu0 0.0
    %v1218 = vand.u32 %v759, 4294901760
    %1219 = vmatmul.mubr.f32.gmra.mrb[0].mxu0 %v1218
    %v1220 = vpop.f32.mrb[0].mxu0
    %v1221 = vadd.f32 %v1148, %v1220
    %v1222 = vpop.f32.mrb[0].mxu0
    %1223 = vdwg.mxu0
    %v1224 = vsub.f32 0.0, %v1221
    %v1225 = vmul.f32 %v1224, 1.442695
    %v1226 = vpow.pop %v1225
    %v1227 = vadd.f32 %v1226, 1.0
    %v1228 = vrcp.pop %v1227
    %v1229 = vmul.f32 1.0, %v1228
    %vm1230 = vcmask 122880
    %1231 = vst.msk [vmem:[#allocation18] sm:$0x1] %vm1230, %v1229
    // Predicated region
    $region54: #{mechanism_transformer_forward.21} parent=1 // pred_check
      _
    $region55: #{mechanism_transformer_forward.21} parent=1 // pred_check_branch
      %1233 = sbr.rel (0) target = $region57
    $region56: #{mechanism_transformer_forward.21} parent=1 // pred_region
      %s1235 = ssub.s32 256, 256
      %1236 = vsyncadd [#allocation5], %s1235
      %s1237 = sshll.u32 [#allocation14], 4
      %s1238 = int_to_ptr.vmem [resolvable:$true] %s1237
      %1243 = dma.vmem_to_hbm [thread:$0]  %s1238, 256, %s7, [#allocation5], 128, 128, 8
    $region57: #{mechanism_transformer_forward.21} parent=1 // pred_fallthru
      _
    // Predicated region
    $region58: #{mechanism_transformer_forward.21} parent=1 // pred_check
      _
    $region59: #{mechanism_transformer_forward.21} parent=1 // pred_check_branch
      %1245 = sbr.rel (0) target = $region61
    $region60: #{mechanism_transformer_forward.21} parent=1 // pred_region
      %s1247 = ssub.s32 256, 256
      %1248 = vsyncadd [#allocation16], %s1247
      %s1249 = sshll.u32 [#allocation15], 4
      %s1250 = int_to_ptr.vmem [resolvable:$true] %s1249
      %1255 = dma.vmem_to_hbm [thread:$0]  %s1250, 256, %s8, [#allocation16], 128, 128, 8
    $region61: #{mechanism_transformer_forward.21} parent=1 // pred_fallthru
      _
    // Predicated region
    $region62: #{mechanism_transformer_forward.21} parent=1 // pred_check
      _
    $region63: #{mechanism_transformer_forward.21} parent=1 // pred_check_branch
      %1257 = sbr.rel (0) target = $region65
    $region64: #{mechanism_transformer_forward.21} parent=1 // pred_region
      %s1259 = ssub.s32 256, 256
      %1260 = vsyncadd [#allocation16], %s1259
      %s1261 = sshll.u32 [#allocation17], 4
      %s1262 = int_to_ptr.vmem [resolvable:$true] %s1261
      %1267 = dma.vmem_to_hbm [thread:$0]  %s1262, 256, %s9, [#allocation16], 128, 128, 8
    $region65: #{mechanism_transformer_forward.21} parent=1 // pred_fallthru
      _
    // Predicated region
    $region66: #{mechanism_transformer_forward.21} parent=1 // pred_check
      _
    $region67: #{mechanism_transformer_forward.21} parent=1 // pred_check_branch
      %1269 = sbr.rel (0) target = $region69
    $region68: #{mechanism_transformer_forward.21} parent=1 // pred_region
      %s1271 = ssub.s32 16, 16
      %1272 = vsyncadd [#allocation19], %s1271
      %s1274 = sshll.u32 [#allocation18], 4
      %s1275 = int_to_ptr.vmem [resolvable:$true] %s1274
      %1277 = dma.vmem_to_hbm [thread:$0]  %s1275, 16, %s10, [#allocation19]
    $region69: #{mechanism_transformer_forward.21} parent=1 // pred_fallthru
      _
    // Predicated region
    $region70: #{mechanism_transformer_forward.21} parent=1 // pred_check
      _
    $region71: #{mechanism_transformer_forward.21} parent=1 // pred_check_branch
      %1279 = sbr.rel (0) target = $region73
    $region72: #{mechanism_transformer_forward.21} parent=1 // pred_region
      %1280 = dma.done [#allocation5], 256
    $region73: #{mechanism_transformer_forward.21} parent=1 // pred_fallthru
      _
    // Predicated region
    $region74: #{mechanism_transformer_forward.21} parent=1 // pred_check
      _
    $region75: #{mechanism_transformer_forward.21} parent=1 // pred_check_branch
      %1282 = sbr.rel (0) target = $region77
    $region76: #{mechanism_transformer_forward.21} parent=1 // pred_region
      %1283 = dma.done [#allocation16], 256
    $region77: #{mechanism_transformer_forward.21} parent=1 // pred_fallthru
      _
    // Predicated region
    $region78: #{mechanism_transformer_forward.21} parent=1 // pred_check
      _
    $region79: #{mechanism_transformer_forward.21} parent=1 // pred_check_branch
      %1285 = sbr.rel (0) target = $region81
    $region80: #{mechanism_transformer_forward.21} parent=1 // pred_region
      %1286 = dma.done [#allocation16], 256
    $region81: #{mechanism_transformer_forward.21} parent=1 // pred_fallthru
      _
    // Predicated region
    $region82: #{mechanism_transformer_forward.21} parent=1 // pred_check
      _
    $region83: #{mechanism_transformer_forward.21} parent=1 // pred_check_branch
      %1288 = sbr.rel (0) target = $region85
    $region84: #{mechanism_transformer_forward.21} parent=1 // pred_region
      %1289 = dma.done [#allocation19], 16
    $region85: #{mechanism_transformer_forward.21} parent=1 // pred_fallthru
      _
    %1290 = vsyncpa [#allocation4], 1
    %1291 = vsyncpa [#allocation7], 1
    %1292 = vsyncpa [#allocation10], 1
    %1293 = vsyncpa [#allocation13], 1
    %1294 = vsyncpa [#allocation5], 1
    %1295 = vsyncpa [#allocation16], 1
    %1296 = vsyncpa [#allocation19], 1

// kernel: mechanism_transformer_forward.23
$region0: #{mechanism_transformer_forward.23}
  #allocation0 [shape = 'u32[]', space=smem, size = 0x4, offset = 0x4, fixed_abs, tag = 'smem constant byte address 0x4 - core index']
  #allocation1 [shape = 'u32[144,128]{1,0:T(1,128)}', space=vmem, size = 0x12000, scoped, tag = 'internal scratch']
  %s0 = inlined_call_operand.hbm [shape: f32[16,32], index: 0, kind: input, shape index: {}]
  %s1 = inlined_call_operand.hbm [shape: f32[32,32], index: 1, kind: input, shape index: {}]
  %s2 = inlined_call_operand.hbm [shape: f32[1,32], index: 2, kind: input, shape index: {}]
  %s3 = inlined_call_operand.hbm [shape: f32[16,32], index: 3, kind: input, shape index: {}]
  %s4 = inlined_call_operand.hbm [shape: f32[16,32], index: 4, kind: output, shape index: {}]
  %s5 = sld [smem:[#allocation0]]
  $region42: #{mechanism_transformer_forward.23} parent=0
    _
  %s7 = ssub.s32 1, %s5
  %s8 = scalar_select 0, %s7, %s5
  $region1: #{mechanism_transformer_forward.23} parent=0
    #allocation2 [shape = 'u8[8192]{0}', space=vmem, size = 0x2000, scoped, tag = 'input window, operand 0, single buffered']
    #allocation3 [shape = 's32[1]{0}', space=sflag, size = 0x4, scoped, tag = 'scoped memory for mechanism_transformer_forward.23']
    #allocation4 [shape = 's32[1]{0}', space=sflag, size = 0x4, scoped, tag = 'scoped memory for mechanism_transformer_forward.23']
    #allocation5 [shape = 'u8[16384]{0}', space=vmem, size = 0x4000, scoped, tag = 'input window, operand 1, single buffered']
    #allocation6 [shape = 's32[1]{0}', space=sflag, size = 0x4, scoped, tag = 'scoped memory for mechanism_transformer_forward.23']
    #allocation7 [shape = 'u8[512]{0}', space=vmem, size = 0x400, scoped, tag = 'input window, operand 2, single buffered']
    #allocation8 [shape = 'u8[8192]{0}', space=vmem, size = 0x2000, scoped, tag = 'input window, operand 3, single buffered']
    #allocation9 [shape = 's32[1]{0}', space=sflag, size = 0x4, scoped, tag = 'scoped memory for mechanism_transformer_forward.23']
    #allocation10 [shape = 'u8[8192]{0}', space=vmem, size = 0x2000, scoped, tag = 'output window, operand 0, single buffered']
    %9 = vsyncpa [#allocation3], 0
    %10 = vsyncpa [#allocation6], 0
    %11 = vsyncpa [#allocation9], 0
    %12 = vsyncpa [#allocation4], 0
    // Predicated region
    $region2: #{mechanism_transformer_forward.23} parent=1 // pred_check
      _
    $region3: #{mechanism_transformer_forward.23} parent=1 // pred_check_branch
      %14 = sbr.rel (0) target = $region5
    $region4: #{mechanism_transformer_forward.23} parent=1 // pred_region
      %s16 = ssub.s32 256, 256
      %17 = vsyncadd [#allocation3], %s16
      %s18 = sshll.u32 [#allocation2], 4
      %s19 = int_to_ptr.vmem [resolvable:$true] %s18
      %24 = dma.hbm_to_vmem [thread:$0]  %s0, 256, %s19, [#allocation3], 128, 128, 8
    $region5: #{mechanism_transformer_forward.23} parent=1 // pred_fallthru
      _
    // Predicated region
    $region6: #{mechanism_transformer_forward.23} parent=1 // pred_check
      _
    $region7: #{mechanism_transformer_forward.23} parent=1 // pred_check_branch
      %26 = sbr.rel (0) target = $region9
    $region8: #{mechanism_transformer_forward.23} parent=1 // pred_region
      %s28 = ssub.s32 512, 512
      %29 = vsyncadd [#allocation6], %s28
      %s30 = sshll.u32 [#allocation5], 4
      %s31 = int_to_ptr.vmem [resolvable:$true] %s30
      %36 = dma.hbm_to_vmem [thread:$0]  %s1, 512, %s31, [#allocation6], 128, 128, 8
    $region9: #{mechanism_transformer_forward.23} parent=1 // pred_fallthru
      _
    // Predicated region
    $region10: #{mechanism_transformer_forward.23} parent=1 // pred_check
      _
    $region11: #{mechanism_transformer_forward.23} parent=1 // pred_check_branch
      %38 = sbr.rel (0) target = $region13
    $region12: #{mechanism_transformer_forward.23} parent=1 // pred_region
      %s40 = ssub.s32 16, 16
      %41 = vsyncadd [#allocation6], %s40
      %s43 = sshll.u32 [#allocation7], 4
      %s44 = int_to_ptr.vmem [resolvable:$true] %s43
      %46 = dma.hbm_to_vmem [thread:$0]  %s2, 16, %s44, [#allocation6]
    $region13: #{mechanism_transformer_forward.23} parent=1 // pred_fallthru
      _
    // Predicated region
    $region14: #{mechanism_transformer_forward.23} parent=1 // pred_check
      _
    $region15: #{mechanism_transformer_forward.23} parent=1 // pred_check_branch
      %48 = sbr.rel (0) target = $region17
    $region16: #{mechanism_transformer_forward.23} parent=1 // pred_region
      %s50 = ssub.s32 256, 256
      %51 = vsyncadd [#allocation9], %s50
      %s52 = sshll.u32 [#allocation8], 4
      %s53 = int_to_ptr.vmem [resolvable:$true] %s52
      %58 = dma.hbm_to_vmem [thread:$0]  %s3, 256, %s53, [#allocation9], 128, 128, 8
    $region17: #{mechanism_transformer_forward.23} parent=1 // pred_fallthru
      _
    // Predicated region
    $region18: #{mechanism_transformer_forward.23} parent=1 // pred_check
      _
    $region19: #{mechanism_transformer_forward.23} parent=1 // pred_check_branch
      %60 = sbr.rel (0) target = $region21
    $region20: #{mechanism_transformer_forward.23} parent=1 // pred_region
      %61 = dma.done [#allocation3], 256
    $region21: #{mechanism_transformer_forward.23} parent=1 // pred_fallthru
      _
    // Predicated region
    $region22: #{mechanism_transformer_forward.23} parent=1 // pred_check
      _
    $region23: #{mechanism_transformer_forward.23} parent=1 // pred_check_branch
      %63 = sbr.rel (0) target = $region25
    $region24: #{mechanism_transformer_forward.23} parent=1 // pred_region
      %64 = dma.done [#allocation6], 512
    $region25: #{mechanism_transformer_forward.23} parent=1 // pred_fallthru
      _
    // Predicated region
    $region26: #{mechanism_transformer_forward.23} parent=1 // pred_check
      _
    $region27: #{mechanism_transformer_forward.23} parent=1 // pred_check_branch
      %66 = sbr.rel (0) target = $region29
    $region28: #{mechanism_transformer_forward.23} parent=1 // pred_region
      %67 = dma.done [#allocation6], 16
    $region29: #{mechanism_transformer_forward.23} parent=1 // pred_fallthru
      _
    // Predicated region
    $region30: #{mechanism_transformer_forward.23} parent=1 // pred_check
      _
    $region31: #{mechanism_transformer_forward.23} parent=1 // pred_check_branch
      %69 = sbr.rel (0) target = $region33
    $region32: #{mechanism_transformer_forward.23} parent=1 // pred_region
      %70 = dma.done [#allocation9], 256
    $region33: #{mechanism_transformer_forward.23} parent=1 // pred_fallthru
      _
    %v71 = vld [vmem:[#allocation2] sm:$0xff]
    %v72 = vld [vmem:[#allocation2 + $0x8] sm:$0xff]
    %v73 = vld [vmem:[#allocation5] sm:$0xff]
    %v74 = vld [vmem:[#allocation5 + $0x8] sm:$0xff]
    %v75 = vld [vmem:[#allocation5 + $0x10] sm:$0xff]
    %v76 = vld [vmem:[#allocation5 + $0x18] sm:$0xff]
    %v77 = vld [vmem:[#allocation7] sm:$0x1]
    %v79 = vlaneseq
    %v80 = vshrl.u32 %v79, 7
    %v81 = vsub.s32 0, %v80
    %v82 = vrot.slane %v77, %v81
    %vm84 = vcmask 261120
    %v86 = vsel %vm84, %v71, 0
    %v89 = vsel %vm84, %v72, 0
    %91 = vmatprep.subr.mxu0 0.0
    %v92 = vand.u32 %v73, 4294901760
    %93 = vmatpush1.msra.mxu0 %v92
    %94 = vmatprep.subr.mxu0 0.0
    %v95 = vand.u32 %v74, 4294901760
    %96 = vmatpush1.msra.mxu0 %v95
    %97 = vmatprep.subr.mxu0 0.0
    %v98 = vand.u32 %v75, 4294901760
    %99 = vmatpush1.msra.mxu0 %v98
    %100 = vmatprep.subr.mxu0 0.0
    %v101 = vand.u32 %v76, 4294901760
    %102 = vmatpush1.msra.mxu0 %v101
    %103 = vmatprep.subr.mxu0 0.0
    %104 = vmatpush1.msra.mxu0 0.0
    %105 = vmatprep.subr.mxu0 0.0
    %106 = vmatpush1.msra.mxu0 0.0
    %107 = vmatprep.subr.mxu0 0.0
    %108 = vmatpush1.msra.mxu0 0.0
    %109 = vmatprep.subr.mxu0 0.0
    %110 = vmatpush1.msra.mxu0 0.0
    %111 = vmatprep.subr.mxu0 0.0
    %112 = vmatpush1.msra.mxu0 0.0
    %113 = vmatprep.subr.mxu0 0.0
    %114 = vmatpush1.msra.mxu0 0.0
    %115 = vmatprep.subr.mxu0 0.0
    %116 = vmatpush1.msra.mxu0 0.0
    %117 = vmatprep.subr.mxu0 0.0
    %118 = vmatpush1.msra.mxu0 0.0
    %119 = vmatprep.subr.mxu0 0.0
    %120 = vmatpush1.msra.mxu0 0.0
    %121 = vmatprep.subr.mxu0 0.0
    %122 = vmatpush1.msra.mxu0 0.0
    %123 = vmatprep.subr.mxu0 0.0
    %124 = vmatpush1.msra.mxu0 0.0
    %125 = vmatprep.subr.mxu0 0.0
    %126 = vmatpush1.msra.mxu0 0.0
    %127 = vmatprep.subr.mxu0 0.0
    %128 = vmatpush1.msra.mxu0 0.0
    %129 = vmatprep.subr.mxu0 0.0
    %130 = vmatpush1.msra.mxu0 0.0
    %131 = vmatprep.subr.mxu0 0.0
    %132 = vmatpush1.msra.mxu0 0.0
    %133 = vmatprep.subr.mxu0 0.0
    %134 = vmatpush1.msra.mxu0 0.0
    %135 = vmatprep.subr.mxu0 0.0
    %136 = vmatpush1.msra.mxu0 0.0
    %137 = vmatprep.subr.mxu0 0.0
    %138 = vmatpush1.msra.mxu0 0.0
    %139 = vmatprep.subr.mxu0 0.0
    %140 = vmatpush1.msra.mxu0 0.0
    %141 = vmatprep.subr.mxu0 0.0
    %142 = vmatpush1.msra.mxu0 0.0
    %143 = vmatprep.subr.mxu0 0.0
    %144 = vmatpush1.msra.mxu0 0.0
    %145 = vmatprep.subr.mxu0 0.0
    %146 = vmatpush1.msra.mxu0 0.0
    %147 = vmatprep.subr.mxu0 0.0
    %148 = vmatpush1.msra.mxu0 0.0
    %149 = vmatprep.subr.mxu0 0.0
    %150 = vmatpush1.msra.mxu0 0.0
    %151 = vmatprep.subr.mxu0 0.0
    %152 = vmatpush1.msra.mxu0 0.0
    %153 = vmatprep.subr.mxu0 0.0
    %154 = vmatpush1.msra.mxu0 0.0
    %155 = vmatprep.subr.mxu0 0.0
    %156 = vmatpush1.msra.mxu0 0.0
    %157 = vmatprep.subr.mxu0 0.0
    %158 = vmatpush1.msra.mxu0 0.0
    %159 = vmatprep.mubr.f32.mxu0 0.0
    %v160 = vand.u32 %v86, 4294901760
    %v161 = vsub.f32 %v86, %v160
    %v162 = vand.u32 %v161, 4294901760
    %v163 = vsub.f32 %v161, %v162
    %v164 = vand.u32 %v163, 4294901760
    %165 = vmatmul.mubr.f32.gmra.mrb[0].mxu0 %v164
    %v166 = vpop.f32.mrb[0].mxu0
    %v167 = vadd.f32 %v82, %v166
    %v168 = vpop.f32.mrb[0].mxu0
    %169 = vmatprep.mubr.f32.mxu0 0.0
    %v170 = vand.u32 %v89, 4294901760
    %v171 = vsub.f32 %v89, %v170
    %v172 = vand.u32 %v171, 4294901760
    %v173 = vsub.f32 %v171, %v172
    %v174 = vand.u32 %v173, 4294901760
    %175 = vmatmul.mubr.f32.gmra.mrb[0].mxu0 %v174
    %v176 = vpop.f32.mrb[0].mxu0
    %v177 = vadd.f32 %v82, %v176
    %v178 = vpop.f32.mrb[0].mxu0
    %179 = vdwg.mxu0
    %180 = vmatprep.subr.mxu0 0.0
    %v181 = vand.u32 %v73, 4294901760
    %v182 = vsub.f32 %v73, %v181
    %v183 = vand.u32 %v182, 4294901760
    %v184 = vsub.f32 %v182, %v183
    %v185 = vand.u32 %v184, 4294901760
    %186 = vmatpush1.msra.mxu0 %v185
    %187 = vmatprep.subr.mxu0 0.0
    %v188 = vand.u32 %v74, 4294901760
    %v189 = vsub.f32 %v74, %v188
    %v190 = vand.u32 %v189, 4294901760
    %v191 = vsub.f32 %v189, %v190
    %v192 = vand.u32 %v191, 4294901760
    %193 = vmatpush1.msra.mxu0 %v192
    %194 = vmatprep.subr.mxu0 0.0
    %v195 = vand.u32 %v75, 4294901760
    %v196 = vsub.f32 %v75, %v195
    %v197 = vand.u32 %v196, 4294901760
    %v198 = vsub.f32 %v196, %v197
    %v199 = vand.u32 %v198, 4294901760
    %200 = vmatpush1.msra.mxu0 %v199
    %201 = vmatprep.subr.mxu0 0.0
    %v202 = vand.u32 %v76, 4294901760
    %v203 = vsub.f32 %v76, %v202
    %v204 = vand.u32 %v203, 4294901760
    %v205 = vsub.f32 %v203, %v204
    %v206 = vand.u32 %v205, 4294901760
    %207 = vmatpush1.msra.mxu0 %v206
    %208 = vmatprep.subr.mxu0 0.0
    %209 = vmatpush1.msra.mxu0 0.0
    %210 = vmatprep.subr.mxu0 0.0
    %211 = vmatpush1.msra.mxu0 0.0
    %212 = vmatprep.subr.mxu0 0.0
    %213 = vmatpush1.msra.mxu0 0.0
    %214 = vmatprep.subr.mxu0 0.0
    %215 = vmatpush1.msra.mxu0 0.0
    %216 = vmatprep.subr.mxu0 0.0
    %217 = vmatpush1.msra.mxu0 0.0
    %218 = vmatprep.subr.mxu0 0.0
    %219 = vmatpush1.msra.mxu0 0.0
    %220 = vmatprep.subr.mxu0 0.0
    %221 = vmatpush1.msra.mxu0 0.0
    %222 = vmatprep.subr.mxu0 0.0
    %223 = vmatpush1.msra.mxu0 0.0
    %224 = vmatprep.subr.mxu0 0.0
    %225 = vmatpush1.msra.mxu0 0.0
    %226 = vmatprep.subr.mxu0 0.0
    %227 = vmatpush1.msra.mxu0 0.0
    %228 = vmatprep.subr.mxu0 0.0
    %229 = vmatpush1.msra.mxu0 0.0
    %230 = vmatprep.subr.mxu0 0.0
    %231 = vmatpush1.msra.mxu0 0.0
    %232 = vmatprep.subr.mxu0 0.0
    %233 = vmatpush1.msra.mxu0 0.0
    %234 = vmatprep.subr.mxu0 0.0
    %235 = vmatpush1.msra.mxu0 0.0
    %236 = vmatprep.subr.mxu0 0.0
    %237 = vmatpush1.msra.mxu0 0.0
    %238 = vmatprep.subr.mxu0 0.0
    %239 = vmatpush1.msra.mxu0 0.0
    %240 = vmatprep.subr.mxu0 0.0
    %241 = vmatpush1.msra.mxu0 0.0
    %242 = vmatprep.subr.mxu0 0.0
    %243 = vmatpush1.msra.mxu0 0.0
    %244 = vmatprep.subr.mxu0 0.0
    %245 = vmatpush1.msra.mxu0 0.0
    %246 = vmatprep.subr.mxu0 0.0
    %247 = vmatpush1.msra.mxu0 0.0
    %248 = vmatprep.subr.mxu0 0.0
    %249 = vmatpush1.msra.mxu0 0.0
    %250 = vmatprep.subr.mxu0 0.0
    %251 = vmatpush1.msra.mxu0 0.0
    %252 = vmatprep.subr.mxu0 0.0
    %253 = vmatpush1.msra.mxu0 0.0
    %254 = vmatprep.subr.mxu0 0.0
    %255 = vmatpush1.msra.mxu0 0.0
    %256 = vmatprep.subr.mxu0 0.0
    %257 = vmatpush1.msra.mxu0 0.0
    %258 = vmatprep.subr.mxu0 0.0
    %259 = vmatpush1.msra.mxu0 0.0
    %260 = vmatprep.subr.mxu0 0.0
    %261 = vmatpush1.msra.mxu0 0.0
    %262 = vmatprep.subr.mxu0 0.0
    %263 = vmatpush1.msra.mxu0 0.0
    %264 = vmatprep.mubr.f32.mxu0 0.0
    %v265 = vand.u32 %v86, 4294901760
    %266 = vmatmul.mubr.f32.gmra.mrb[0].mxu0 %v265
    %v267 = vpop.f32.mrb[0].mxu0
    %v268 = vadd.f32 %v167, %v267
    %v269 = vpop.f32.mrb[0].mxu0
    %270 = vmatprep.mubr.f32.mxu0 0.0
    %v271 = vand.u32 %v89, 4294901760
    %272 = vmatmul.mubr.f32.gmra.mrb[0].mxu0 %v271
    %v273 = vpop.f32.mrb[0].mxu0
    %v274 = vadd.f32 %v177, %v273
    %v275 = vpop.f32.mrb[0].mxu0
    %276 = vdwg.mxu0
    %277 = vmatprep.subr.mxu0 0.0
    %v278 = vand.u32 %v73, 4294901760
    %v279 = vsub.f32 %v73, %v278
    %280 = vmatpush1.msra.mxu0 %v279
    %281 = vmatprep.subr.mxu0 0.0
    %v282 = vand.u32 %v74, 4294901760
    %v283 = vsub.f32 %v74, %v282
    %284 = vmatpush1.msra.mxu0 %v283
    %285 = vmatprep.subr.mxu0 0.0
    %v286 = vand.u32 %v75, 4294901760
    %v287 = vsub.f32 %v75, %v286
    %288 = vmatpush1.msra.mxu0 %v287
    %289 = vmatprep.subr.mxu0 0.0
    %v290 = vand.u32 %v76, 4294901760
    %v291 = vsub.f32 %v76, %v290
    %292 = vmatpush1.msra.mxu0 %v291
    %293 = vmatprep.subr.mxu0 0.0
    %294 = vmatpush1.msra.mxu0 0.0
    %295 = vmatprep.subr.mxu0 0.0
    %296 = vmatpush1.msra.mxu0 0.0
    %297 = vmatprep.subr.mxu0 0.0
    %298 = vmatpush1.msra.mxu0 0.0
    %299 = vmatprep.subr.mxu0 0.0
    %300 = vmatpush1.msra.mxu0 0.0
    %301 = vmatprep.subr.mxu0 0.0
    %302 = vmatpush1.msra.mxu0 0.0
    %303 = vmatprep.subr.mxu0 0.0
    %304 = vmatpush1.msra.mxu0 0.0
    %305 = vmatprep.subr.mxu0 0.0
    %306 = vmatpush1.msra.mxu0 0.0
    %307 = vmatprep.subr.mxu0 0.0
    %308 = vmatpush1.msra.mxu0 0.0
    %309 = vmatprep.subr.mxu0 0.0
    %310 = vmatpush1.msra.mxu0 0.0
    %311 = vmatprep.subr.mxu0 0.0
    %312 = vmatpush1.msra.mxu0 0.0
    %313 = vmatprep.subr.mxu0 0.0
    %314 = vmatpush1.msra.mxu0 0.0
    %315 = vmatprep.subr.mxu0 0.0
    %316 = vmatpush1.msra.mxu0 0.0
    %317 = vmatprep.subr.mxu0 0.0
    %318 = vmatpush1.msra.mxu0 0.0
    %319 = vmatprep.subr.mxu0 0.0
    %320 = vmatpush1.msra.mxu0 0.0
    %321 = vmatprep.subr.mxu0 0.0
    %322 = vmatpush1.msra.mxu0 0.0
    %323 = vmatprep.subr.mxu0 0.0
    %324 = vmatpush1.msra.mxu0 0.0
    %325 = vmatprep.subr.mxu0 0.0
    %326 = vmatpush1.msra.mxu0 0.0
    %327 = vmatprep.subr.mxu0 0.0
    %328 = vmatpush1.msra.mxu0 0.0
    %329 = vmatprep.subr.mxu0 0.0
    %330 = vmatpush1.msra.mxu0 0.0
    %331 = vmatprep.subr.mxu0 0.0
    %332 = vmatpush1.msra.mxu0 0.0
    %333 = vmatprep.subr.mxu0 0.0
    %334 = vmatpush1.msra.mxu0 0.0
    %335 = vmatprep.subr.mxu0 0.0
    %336 = vmatpush1.msra.mxu0 0.0
    %337 = vmatprep.subr.mxu0 0.0
    %338 = vmatpush1.msra.mxu0 0.0
    %339 = vmatprep.subr.mxu0 0.0
    %340 = vmatpush1.msra.mxu0 0.0
    %341 = vmatprep.subr.mxu0 0.0
    %342 = vmatpush1.msra.mxu0 0.0
    %343 = vmatprep.subr.mxu0 0.0
    %344 = vmatpush1.msra.mxu0 0.0
    %345 = vmatprep.subr.mxu0 0.0
    %346 = vmatpush1.msra.mxu0 0.0
    %347 = vmatprep.subr.mxu0 0.0
    %348 = vmatpush1.msra.mxu0 0.0
    %349 = vmatprep.mubr.f32.mxu0 0.0
    %v350 = vand.u32 %v86, 4294901760
    %v351 = vsub.f32 %v86, %v350
    %352 = vmatmul.mubr.f32.gmra.mrb[0].mxu0 %v351
    %v353 = vpop.f32.mrb[0].mxu0
    %v354 = vadd.f32 %v268, %v353
    %v355 = vpop.f32.mrb[0].mxu0
    %356 = vmatprep.mubr.f32.mxu0 0.0
    %v357 = vand.u32 %v89, 4294901760
    %v358 = vsub.f32 %v89, %v357
    %359 = vmatmul.mubr.f32.gmra.mrb[0].mxu0 %v358
    %v360 = vpop.f32.mrb[0].mxu0
    %v361 = vadd.f32 %v274, %v360
    %v362 = vpop.f32.mrb[0].mxu0
    %363 = vdwg.mxu0
    %364 = vmatprep.subr.mxu0 0.0
    %v365 = vand.u32 %v73, 4294901760
    %366 = vmatpush1.msra.mxu0 %v365
    %367 = vmatprep.subr.mxu0 0.0
    %v368 = vand.u32 %v74, 4294901760
    %369 = vmatpush1.msra.mxu0 %v368
    %370 = vmatprep.subr.mxu0 0.0
    %v371 = vand.u32 %v75, 4294901760
    %372 = vmatpush1.msra.mxu0 %v371
    %373 = vmatprep.subr.mxu0 0.0
    %v374 = vand.u32 %v76, 4294901760
    %375 = vmatpush1.msra.mxu0 %v374
    %376 = vmatprep.subr.mxu0 0.0
    %377 = vmatpush1.msra.mxu0 0.0
    %378 = vmatprep.subr.mxu0 0.0
    %379 = vmatpush1.msra.mxu0 0.0
    %380 = vmatprep.subr.mxu0 0.0
    %381 = vmatpush1.msra.mxu0 0.0
    %382 = vmatprep.subr.mxu0 0.0
    %383 = vmatpush1.msra.mxu0 0.0
    %384 = vmatprep.subr.mxu0 0.0
    %385 = vmatpush1.msra.mxu0 0.0
    %386 = vmatprep.subr.mxu0 0.0
    %387 = vmatpush1.msra.mxu0 0.0
    %388 = vmatprep.subr.mxu0 0.0
    %389 = vmatpush1.msra.mxu0 0.0
    %390 = vmatprep.subr.mxu0 0.0
    %391 = vmatpush1.msra.mxu0 0.0
    %392 = vmatprep.subr.mxu0 0.0
    %393 = vmatpush1.msra.mxu0 0.0
    %394 = vmatprep.subr.mxu0 0.0
    %395 = vmatpush1.msra.mxu0 0.0
    %396 = vmatprep.subr.mxu0 0.0
    %397 = vmatpush1.msra.mxu0 0.0
    %398 = vmatprep.subr.mxu0 0.0
    %399 = vmatpush1.msra.mxu0 0.0
    %400 = vmatprep.subr.mxu0 0.0
    %401 = vmatpush1.msra.mxu0 0.0
    %402 = vmatprep.subr.mxu0 0.0
    %403 = vmatpush1.msra.mxu0 0.0
    %404 = vmatprep.subr.mxu0 0.0
    %405 = vmatpush1.msra.mxu0 0.0
    %406 = vmatprep.subr.mxu0 0.0
    %407 = vmatpush1.msra.mxu0 0.0
    %408 = vmatprep.subr.mxu0 0.0
    %409 = vmatpush1.msra.mxu0 0.0
    %410 = vmatprep.subr.mxu0 0.0
    %411 = vmatpush1.msra.mxu0 0.0
    %412 = vmatprep.subr.mxu0 0.0
    %413 = vmatpush1.msra.mxu0 0.0
    %414 = vmatprep.subr.mxu0 0.0
    %415 = vmatpush1.msra.mxu0 0.0
    %416 = vmatprep.subr.mxu0 0.0
    %417 = vmatpush1.msra.mxu0 0.0
    %418 = vmatprep.subr.mxu0 0.0
    %419 = vmatpush1.msra.mxu0 0.0
    %420 = vmatprep.subr.mxu0 0.0
    %421 = vmatpush1.msra.mxu0 0.0
    %422 = vmatprep.subr.mxu0 0.0
    %423 = vmatpush1.msra.mxu0 0.0
    %424 = vmatprep.subr.mxu0 0.0
    %425 = vmatpush1.msra.mxu0 0.0
    %426 = vmatprep.subr.mxu0 0.0
    %427 = vmatpush1.msra.mxu0 0.0
    %428 = vmatprep.subr.mxu0 0.0
    %429 = vmatpush1.msra.mxu0 0.0
    %430 = vmatprep.subr.mxu0 0.0
    %431 = vmatpush1.msra.mxu0 0.0
    %432 = vmatprep.mubr.f32.mxu0 0.0
    %v433 = vand.u32 %v86, 4294901760
    %v434 = vsub.f32 %v86, %v433
    %v435 = vand.u32 %v434, 4294901760
    %436 = vmatmul.mubr.f32.gmra.mrb[0].mxu0 %v435
    %v437 = vpop.f32.mrb[0].mxu0
    %v438 = vadd.f32 %v354, %v437
    %v439 = vpop.f32.mrb[0].mxu0
    %440 = vmatprep.mubr.f32.mxu0 0.0
    %v441 = vand.u32 %v89, 4294901760
    %v442 = vsub.f32 %v89, %v441
    %v443 = vand.u32 %v442, 4294901760
    %444 = vmatmul.mubr.f32.gmra.mrb[0].mxu0 %v443
    %v445 = vpop.f32.mrb[0].mxu0
    %v446 = vadd.f32 %v361, %v445
    %v447 = vpop.f32.mrb[0].mxu0
    %448 = vdwg.mxu0
    %449 = vmatprep.subr.mxu0 0.0
    %v450 = vand.u32 %v73, 4294901760
    %v451 = vsub.f32 %v73, %v450
    %v452 = vand.u32 %v451, 4294901760
    %453 = vmatpush1.msra.mxu0 %v452
    %454 = vmatprep.subr.mxu0 0.0
    %v455 = vand.u32 %v74, 4294901760
    %v456 = vsub.f32 %v74, %v455
    %v457 = vand.u32 %v456, 4294901760
    %458 = vmatpush1.msra.mxu0 %v457
    %459 = vmatprep.subr.mxu0 0.0
    %v460 = vand.u32 %v75, 4294901760
    %v461 = vsub.f32 %v75, %v460
    %v462 = vand.u32 %v461, 4294901760
    %463 = vmatpush1.msra.mxu0 %v462
    %464 = vmatprep.subr.mxu0 0.0
    %v465 = vand.u32 %v76, 4294901760
    %v466 = vsub.f32 %v76, %v465
    %v467 = vand.u32 %v466, 4294901760
    %468 = vmatpush1.msra.mxu0 %v467
    %469 = vmatprep.subr.mxu0 0.0
    %470 = vmatpush1.msra.mxu0 0.0
    %471 = vmatprep.subr.mxu0 0.0
    %472 = vmatpush1.msra.mxu0 0.0
    %473 = vmatprep.subr.mxu0 0.0
    %474 = vmatpush1.msra.mxu0 0.0
    %475 = vmatprep.subr.mxu0 0.0
    %476 = vmatpush1.msra.mxu0 0.0
    %477 = vmatprep.subr.mxu0 0.0
    %478 = vmatpush1.msra.mxu0 0.0
    %479 = vmatprep.subr.mxu0 0.0
    %480 = vmatpush1.msra.mxu0 0.0
    %481 = vmatprep.subr.mxu0 0.0
    %482 = vmatpush1.msra.mxu0 0.0
    %483 = vmatprep.subr.mxu0 0.0
    %484 = vmatpush1.msra.mxu0 0.0
    %485 = vmatprep.subr.mxu0 0.0
    %486 = vmatpush1.msra.mxu0 0.0
    %487 = vmatprep.subr.mxu0 0.0
    %488 = vmatpush1.msra.mxu0 0.0
    %489 = vmatprep.subr.mxu0 0.0
    %490 = vmatpush1.msra.mxu0 0.0
    %491 = vmatprep.subr.mxu0 0.0
    %492 = vmatpush1.msra.mxu0 0.0
    %493 = vmatprep.subr.mxu0 0.0
    %494 = vmatpush1.msra.mxu0 0.0
    %495 = vmatprep.subr.mxu0 0.0
    %496 = vmatpush1.msra.mxu0 0.0
    %497 = vmatprep.subr.mxu0 0.0
    %498 = vmatpush1.msra.mxu0 0.0
    %499 = vmatprep.subr.mxu0 0.0
    %500 = vmatpush1.msra.mxu0 0.0
    %501 = vmatprep.subr.mxu0 0.0
    %502 = vmatpush1.msra.mxu0 0.0
    %503 = vmatprep.subr.mxu0 0.0
    %504 = vmatpush1.msra.mxu0 0.0
    %505 = vmatprep.subr.mxu0 0.0
    %506 = vmatpush1.msra.mxu0 0.0
    %507 = vmatprep.subr.mxu0 0.0
    %508 = vmatpush1.msra.mxu0 0.0
    %509 = vmatprep.subr.mxu0 0.0
    %510 = vmatpush1.msra.mxu0 0.0
    %511 = vmatprep.subr.mxu0 0.0
    %512 = vmatpush1.msra.mxu0 0.0
    %513 = vmatprep.subr.mxu0 0.0
    %514 = vmatpush1.msra.mxu0 0.0
    %515 = vmatprep.subr.mxu0 0.0
    %516 = vmatpush1.msra.mxu0 0.0
    %517 = vmatprep.subr.mxu0 0.0
    %518 = vmatpush1.msra.mxu0 0.0
    %519 = vmatprep.subr.mxu0 0.0
    %520 = vmatpush1.msra.mxu0 0.0
    %521 = vmatprep.subr.mxu0 0.0
    %522 = vmatpush1.msra.mxu0 0.0
    %523 = vmatprep.subr.mxu0 0.0
    %524 = vmatpush1.msra.mxu0 0.0
    %525 = vmatprep.mubr.f32.mxu0 0.0
    %v526 = vand.u32 %v86, 4294901760
    %527 = vmatmul.mubr.f32.gmra.mrb[0].mxu0 %v526
    %v528 = vpop.f32.mrb[0].mxu0
    %v529 = vadd.f32 %v438, %v528
    %v530 = vpop.f32.mrb[0].mxu0
    %531 = vmatprep.mubr.f32.mxu0 0.0
    %v532 = vand.u32 %v89, 4294901760
    %533 = vmatmul.mubr.f32.gmra.mrb[0].mxu0 %v532
    %v534 = vpop.f32.mrb[0].mxu0
    %v535 = vadd.f32 %v446, %v534
    %v536 = vpop.f32.mrb[0].mxu0
    %537 = vdwg.mxu0
    %538 = vmatprep.subr.mxu0 0.0
    %v539 = vand.u32 %v73, 4294901760
    %540 = vmatpush1.msra.mxu0 %v539
    %541 = vmatprep.subr.mxu0 0.0
    %v542 = vand.u32 %v74, 4294901760
    %543 = vmatpush1.msra.mxu0 %v542
    %544 = vmatprep.subr.mxu0 0.0
    %v545 = vand.u32 %v75, 4294901760
    %546 = vmatpush1.msra.mxu0 %v545
    %547 = vmatprep.subr.mxu0 0.0
    %v548 = vand.u32 %v76, 4294901760
    %549 = vmatpush1.msra.mxu0 %v548
    %550 = vmatprep.subr.mxu0 0.0
    %551 = vmatpush1.msra.mxu0 0.0
    %552 = vmatprep.subr.mxu0 0.0
    %553 = vmatpush1.msra.mxu0 0.0
    %554 = vmatprep.subr.mxu0 0.0
    %555 = vmatpush1.msra.mxu0 0.0
    %556 = vmatprep.subr.mxu0 0.0
    %557 = vmatpush1.msra.mxu0 0.0
    %558 = vmatprep.subr.mxu0 0.0
    %559 = vmatpush1.msra.mxu0 0.0
    %560 = vmatprep.subr.mxu0 0.0
    %561 = vmatpush1.msra.mxu0 0.0
    %562 = vmatprep.subr.mxu0 0.0
    %563 = vmatpush1.msra.mxu0 0.0
    %564 = vmatprep.subr.mxu0 0.0
    %565 = vmatpush1.msra.mxu0 0.0
    %566 = vmatprep.subr.mxu0 0.0
    %567 = vmatpush1.msra.mxu0 0.0
    %568 = vmatprep.subr.mxu0 0.0
    %569 = vmatpush1.msra.mxu0 0.0
    %570 = vmatprep.subr.mxu0 0.0
    %571 = vmatpush1.msra.mxu0 0.0
    %572 = vmatprep.subr.mxu0 0.0
    %573 = vmatpush1.msra.mxu0 0.0
    %574 = vmatprep.subr.mxu0 0.0
    %575 = vmatpush1.msra.mxu0 0.0
    %576 = vmatprep.subr.mxu0 0.0
    %577 = vmatpush1.msra.mxu0 0.0
    %578 = vmatprep.subr.mxu0 0.0
    %579 = vmatpush1.msra.mxu0 0.0
    %580 = vmatprep.subr.mxu0 0.0
    %581 = vmatpush1.msra.mxu0 0.0
    %582 = vmatprep.subr.mxu0 0.0
    %583 = vmatpush1.msra.mxu0 0.0
    %584 = vmatprep.subr.mxu0 0.0
    %585 = vmatpush1.msra.mxu0 0.0
    %586 = vmatprep.subr.mxu0 0.0
    %587 = vmatpush1.msra.mxu0 0.0
    %588 = vmatprep.subr.mxu0 0.0
    %589 = vmatpush1.msra.mxu0 0.0
    %590 = vmatprep.subr.mxu0 0.0
    %591 = vmatpush1.msra.mxu0 0.0
    %592 = vmatprep.subr.mxu0 0.0
    %593 = vmatpush1.msra.mxu0 0.0
    %594 = vmatprep.subr.mxu0 0.0
    %595 = vmatpush1.msra.mxu0 0.0
    %596 = vmatprep.subr.mxu0 0.0
    %597 = vmatpush1.msra.mxu0 0.0
    %598 = vmatprep.subr.mxu0 0.0
    %599 = vmatpush1.msra.mxu0 0.0
    %600 = vmatprep.subr.mxu0 0.0
    %601 = vmatpush1.msra.mxu0 0.0
    %602 = vmatprep.subr.mxu0 0.0
    %603 = vmatpush1.msra.mxu0 0.0
    %604 = vmatprep.subr.mxu0 0.0
    %605 = vmatpush1.msra.mxu0 0.0
    %606 = vmatprep.mubr.f32.mxu0 0.0
    %v607 = vand.u32 %v86, 4294901760
    %608 = vmatmul.mubr.f32.gmra.mrb[0].mxu0 %v607
    %v609 = vpop.f32.mrb[0].mxu0
    %v610 = vadd.f32 %v529, %v609
    %v611 = vpop.f32.mrb[0].mxu0
    %612 = vmatprep.mubr.f32.mxu0 0.0
    %v613 = vand.u32 %v89, 4294901760
    %614 = vmatmul.mubr.f32.gmra.mrb[0].mxu0 %v613
    %v615 = vpop.f32.mrb[0].mxu0
    %v616 = vadd.f32 %v535, %v615
    %v617 = vpop.f32.mrb[0].mxu0
    %618 = vdwg.mxu0
    %v619 = vld [vmem:[#allocation8] sm:$0xff]
    %v620 = vld [vmem:[#allocation8 + $0x8] sm:$0xff]
    %v621 = vadd.f32 %v610, %v619
    %v622 = vadd.f32 %v616, %v620
    %623 = vst.msk [vmem:[#allocation10] sm:$0xff] %vm84, %v621
    %624 = vst.msk [vmem:[#allocation10 + $0x8] sm:$0xff] %vm84, %v622
    // Predicated region
    $region34: #{mechanism_transformer_forward.23} parent=1 // pred_check
      _
    $region35: #{mechanism_transformer_forward.23} parent=1 // pred_check_branch
      %626 = sbr.rel (0) target = $region37
    $region36: #{mechanism_transformer_forward.23} parent=1 // pred_region
      %s628 = ssub.s32 256, 256
      %629 = vsyncadd [#allocation4], %s628
      %s630 = sshll.u32 [#allocation10], 4
      %s631 = int_to_ptr.vmem [resolvable:$true] %s630
      %636 = dma.vmem_to_hbm [thread:$0]  %s631, 256, %s4, [#allocation4], 128, 128, 8
    $region37: #{mechanism_transformer_forward.23} parent=1 // pred_fallthru
      _
    // Predicated region
    $region38: #{mechanism_transformer_forward.23} parent=1 // pred_check
      _
    $region39: #{mechanism_transformer_forward.23} parent=1 // pred_check_branch
      %638 = sbr.rel (0) target = $region41
    $region40: #{mechanism_transformer_forward.23} parent=1 // pred_region
      %639 = dma.done [#allocation4], 256
    $region41: #{mechanism_transformer_forward.23} parent=1 // pred_fallthru
      _
    %640 = vsyncpa [#allocation3], 1
    %641 = vsyncpa [#allocation6], 1
    %642 = vsyncpa [#allocation9], 1
    %643 = vsyncpa [#allocation4], 1

// kernel: mechanism_transformer_forward.25
$region0: #{mechanism_transformer_forward.25}
  #allocation0 [shape = 'u32[]', space=smem, size = 0x4, offset = 0x4, fixed_abs, tag = 'smem constant byte address 0x4 - core index']
  #allocation1 [shape = 'u32[144,128]{1,0:T(1,128)}', space=vmem, size = 0x12000, scoped, tag = 'internal scratch']
  %s0 = inlined_call_operand.hbm [shape: f32[16,32], index: 0, kind: input, shape index: {}]
  %s1 = inlined_call_operand.hbm [shape: f32[32,64], index: 1, kind: input, shape index: {}]
  %s2 = inlined_call_operand.hbm [shape: f32[1,64], index: 2, kind: input, shape index: {}]
  %s3 = inlined_call_operand.hbm [shape: f32[1,32], index: 3, kind: input, shape index: {}]
  %s4 = inlined_call_operand.hbm [shape: f32[1,32], index: 4, kind: input, shape index: {}]
  %s5 = inlined_call_operand.hbm [shape: f32[16,64], index: 5, kind: output, shape index: {}]
  %s6 = sld [smem:[#allocation0]]
  $region50: #{mechanism_transformer_forward.25} parent=0
    _
  %s8 = ssub.s32 1, %s6
  %s9 = scalar_select 0, %s8, %s6
  $region1: #{mechanism_transformer_forward.25} parent=0
    #allocation2 [shape = 'u8[8192]{0}', space=vmem, size = 0x2000, scoped, tag = 'input window, operand 0, single buffered']
    #allocation3 [shape = 's32[1]{0}', space=sflag, size = 0x4, scoped, tag = 'scoped memory for mechanism_transformer_forward.25']
    #allocation4 [shape = 's32[1]{0}', space=sflag, size = 0x4, scoped, tag = 'scoped memory for mechanism_transformer_forward.25']
    #allocation5 [shape = 'u8[16384]{0}', space=vmem, size = 0x4000, scoped, tag = 'input window, operand 1, single buffered']
    #allocation6 [shape = 's32[1]{0}', space=sflag, size = 0x4, scoped, tag = 'scoped memory for mechanism_transformer_forward.25']
    #allocation7 [shape = 'u8[512]{0}', space=vmem, size = 0x400, scoped, tag = 'input window, operand 2, single buffered']
    #allocation8 [shape = 'u8[512]{0}', space=vmem, size = 0x400, scoped, tag = 'input window, operand 3, single buffered']
    #allocation9 [shape = 's32[1]{0}', space=sflag, size = 0x4, scoped, tag = 'scoped memory for mechanism_transformer_forward.25']
    #allocation10 [shape = 'u8[512]{0}', space=vmem, size = 0x400, scoped, tag = 'input window, operand 4, single buffered']
    #allocation11 [shape = 'u8[8192]{0}', space=vmem, size = 0x2000, scoped, tag = 'output window, operand 0, single buffered']
    %10 = vsyncpa [#allocation3], 0
    %11 = vsyncpa [#allocation6], 0
    %12 = vsyncpa [#allocation9], 0
    %13 = vsyncpa [#allocation4], 0
    // Predicated region
    $region2: #{mechanism_transformer_forward.25} parent=1 // pred_check
      _
    $region3: #{mechanism_transformer_forward.25} parent=1 // pred_check_branch
      %15 = sbr.rel (0) target = $region5
    $region4: #{mechanism_transformer_forward.25} parent=1 // pred_region
      %s17 = ssub.s32 256, 256
      %18 = vsyncadd [#allocation3], %s17
      %s19 = sshll.u32 [#allocation2], 4
      %s20 = int_to_ptr.vmem [resolvable:$true] %s19
      %25 = dma.hbm_to_vmem [thread:$0]  %s0, 256, %s20, [#allocation3], 128, 128, 8
    $region5: #{mechanism_transformer_forward.25} parent=1 // pred_fallthru
      _
    // Predicated region
    $region6: #{mechanism_transformer_forward.25} parent=1 // pred_check
      _
    $region7: #{mechanism_transformer_forward.25} parent=1 // pred_check_branch
      %27 = sbr.rel (0) target = $region9
    $region8: #{mechanism_transformer_forward.25} parent=1 // pred_region
      %s29 = ssub.s32 512, 512
      %30 = vsyncadd [#allocation6], %s29
      %s31 = sshll.u32 [#allocation5], 4
      %s32 = int_to_ptr.vmem [resolvable:$true] %s31
      %37 = dma.hbm_to_vmem [thread:$0]  %s1, 512, %s32, [#allocation6], 128, 128, 8
    $region9: #{mechanism_transformer_forward.25} parent=1 // pred_fallthru
      _
    // Predicated region
    $region10: #{mechanism_transformer_forward.25} parent=1 // pred_check
      _
    $region11: #{mechanism_transformer_forward.25} parent=1 // pred_check_branch
      %39 = sbr.rel (0) target = $region13
    $region12: #{mechanism_transformer_forward.25} parent=1 // pred_region
      %s41 = ssub.s32 16, 16
      %42 = vsyncadd [#allocation6], %s41
      %s44 = sshll.u32 [#allocation7], 4
      %s45 = int_to_ptr.vmem [resolvable:$true] %s44
      %47 = dma.hbm_to_vmem [thread:$0]  %s2, 16, %s45, [#allocation6]
    $region13: #{mechanism_transformer_forward.25} parent=1 // pred_fallthru
      _
    // Predicated region
    $region14: #{mechanism_transformer_forward.25} parent=1 // pred_check
      _
    $region15: #{mechanism_transformer_forward.25} parent=1 // pred_check_branch
      %49 = sbr.rel (0) target = $region17
    $region16: #{mechanism_transformer_forward.25} parent=1 // pred_region
      %s51 = ssub.s32 16, 16
      %52 = vsyncadd [#allocation9], %s51
      %s54 = sshll.u32 [#allocation8], 4
      %s55 = int_to_ptr.vmem [resolvable:$true] %s54
      %57 = dma.hbm_to_vmem [thread:$0]  %s3, 16, %s55, [#allocation9]
    $region17: #{mechanism_transformer_forward.25} parent=1 // pred_fallthru
      _
    // Predicated region
    $region18: #{mechanism_transformer_forward.25} parent=1 // pred_check
      _
    $region19: #{mechanism_transformer_forward.25} parent=1 // pred_check_branch
      %59 = sbr.rel (0) target = $region21
    $region20: #{mechanism_transformer_forward.25} parent=1 // pred_region
      %s61 = ssub.s32 16, 16
      %62 = vsyncadd [#allocation9], %s61
      %s64 = sshll.u32 [#allocation10], 4
      %s65 = int_to_ptr.vmem [resolvable:$true] %s64
      %67 = dma.hbm_to_vmem [thread:$0]  %s4, 16, %s65, [#allocation9]
    $region21: #{mechanism_transformer_forward.25} parent=1 // pred_fallthru
      _
    // Predicated region
    $region22: #{mechanism_transformer_forward.25} parent=1 // pred_check
      _
    $region23: #{mechanism_transformer_forward.25} parent=1 // pred_check_branch
      %69 = sbr.rel (0) target = $region25
    $region24: #{mechanism_transformer_forward.25} parent=1 // pred_region
      %70 = dma.done [#allocation3], 256
    $region25: #{mechanism_transformer_forward.25} parent=1 // pred_fallthru
      _
    // Predicated region
    $region26: #{mechanism_transformer_forward.25} parent=1 // pred_check
      _
    $region27: #{mechanism_transformer_forward.25} parent=1 // pred_check_branch
      %72 = sbr.rel (0) target = $region29
    $region28: #{mechanism_transformer_forward.25} parent=1 // pred_region
      %73 = dma.done [#allocation6], 512
    $region29: #{mechanism_transformer_forward.25} parent=1 // pred_fallthru
      _
    // Predicated region
    $region30: #{mechanism_transformer_forward.25} parent=1 // pred_check
      _
    $region31: #{mechanism_transformer_forward.25} parent=1 // pred_check_branch
      %75 = sbr.rel (0) target = $region33
    $region32: #{mechanism_transformer_forward.25} parent=1 // pred_region
      %76 = dma.done [#allocation6], 16
    $region33: #{mechanism_transformer_forward.25} parent=1 // pred_fallthru
      _
    // Predicated region
    $region34: #{mechanism_transformer_forward.25} parent=1 // pred_check
      _
    $region35: #{mechanism_transformer_forward.25} parent=1 // pred_check_branch
      %78 = sbr.rel (0) target = $region37
    $region36: #{mechanism_transformer_forward.25} parent=1 // pred_region
      %79 = dma.done [#allocation9], 16
    $region37: #{mechanism_transformer_forward.25} parent=1 // pred_fallthru
      _
    // Predicated region
    $region38: #{mechanism_transformer_forward.25} parent=1 // pred_check
      _
    $region39: #{mechanism_transformer_forward.25} parent=1 // pred_check_branch
      %81 = sbr.rel (0) target = $region41
    $region40: #{mechanism_transformer_forward.25} parent=1 // pred_region
      %82 = dma.done [#allocation9], 16
    $region41: #{mechanism_transformer_forward.25} parent=1 // pred_fallthru
      _
    %v83 = vld [vmem:[#allocation2] sm:$0xff]
    %v84 = vld [vmem:[#allocation2 + $0x8] sm:$0xff]
    %vm85 = vcmask 261120
    %v86 = vsel %vm85, %v83, 0.0
    %87 = vadd.xlane.f32.xlu0 %v86
    %v88 = vpop.xlane.xlu0 %87
    %v89 = vsel %vm85, %v84, 0.0
    %90 = vadd.xlane.f32.xlu0 %v89
    %v91 = vpop.xlane.xlu0 %90
    %v92 = vrcp.pop 32.0
    %v93 = vmul.f32 %v88, %v92
    %v94 = vmul.f32 %v91, %v92
    %v95 = vsub.f32 %v83, %v93
    %v96 = vsub.f32 %v84, %v94
    %v97 = vmul.f32 %v95, %v95
    %v98 = vmul.f32 %v96, %v96
    %v99 = vsel %vm85, %v97, 0.0
    %100 = vadd.xlane.f32.xlu0 %v99
    %v101 = vpop.xlane.xlu0 %100
    %v102 = vsel %vm85, %v98, 0.0
    %103 = vadd.xlane.f32.xlu0 %v102
    %v104 = vpop.xlane.xlu0 %103
    %v105 = vmul.f32 %v101, %v92
    %v106 = vmul.f32 %v104, %v92
    %v107 = vadd.f32 %v105, 1e-05
    %v108 = vadd.f32 %v106, 1e-05
    %v109 = vrsqrt.pop %v107
    %v110 = vrsqrt.pop %v108
    %v111 = vmul.f32 %v95, %v109
    %v112 = vmul.f32 %v96, %v110
    %v113 = vld [vmem:[#allocation8] sm:$0x1]
    %v115 = vlaneseq
    %v116 = vshrl.u32 %v115, 7
    %v117 = vsub.s32 0, %v116
    %v118 = vrot.slane %v113, %v117
    %v120 = vmul.f32 %v111, %v118
    %v121 = vmul.f32 %v112, %v118
    %v122 = vld [vmem:[#allocation10] sm:$0x1]
    %v124 = vlaneseq
    %v125 = vshrl.u32 %v124, 7
    %v126 = vsub.s32 0, %v125
    %v127 = vrot.slane %v122, %v126
    %v129 = vadd.f32 %v120, %v127
    %v130 = vadd.f32 %v121, %v127
    %v131 = vld [vmem:[#allocation5] sm:$0xff]
    %v132 = vld [vmem:[#allocation5 + $0x8] sm:$0xff]
    %v133 = vld [vmem:[#allocation5 + $0x10] sm:$0xff]
    %v134 = vld [vmem:[#allocation5 + $0x18] sm:$0xff]
    %v135 = vld [vmem:[#allocation7] sm:$0x1]
    %v137 = vlaneseq
    %v138 = vshrl.u32 %v137, 7
    %v139 = vsub.s32 0, %v138
    %v140 = vrot.slane %v135, %v139
    %v143 = vsel %vm85, %v129, 0
    %v146 = vsel %vm85, %v130, 0
    %148 = vmatprep.subr.mxu0 0.0
    %v149 = vand.u32 %v131, 4294901760
    %150 = vmatpush1.msra.mxu0 %v149
    %151 = vmatprep.subr.mxu0 0.0
    %v152 = vand.u32 %v132, 4294901760
    %153 = vmatpush1.msra.mxu0 %v152
    %154 = vmatprep.subr.mxu0 0.0
    %v155 = vand.u32 %v133, 4294901760
    %156 = vmatpush1.msra.mxu0 %v155
    %157 = vmatprep.subr.mxu0 0.0
    %v158 = vand.u32 %v134, 4294901760
    %159 = vmatpush1.msra.mxu0 %v158
    %160 = vmatprep.subr.mxu0 0.0
    %161 = vmatpush1.msra.mxu0 0.0
    %162 = vmatprep.subr.mxu0 0.0
    %163 = vmatpush1.msra.mxu0 0.0
    %164 = vmatprep.subr.mxu0 0.0
    %165 = vmatpush1.msra.mxu0 0.0
    %166 = vmatprep.subr.mxu0 0.0
    %167 = vmatpush1.msra.mxu0 0.0
    %168 = vmatprep.subr.mxu0 0.0
    %169 = vmatpush1.msra.mxu0 0.0
    %170 = vmatprep.subr.mxu0 0.0
    %171 = vmatpush1.msra.mxu0 0.0
    %172 = vmatprep.subr.mxu0 0.0
    %173 = vmatpush1.msra.mxu0 0.0
    %174 = vmatprep.subr.mxu0 0.0
    %175 = vmatpush1.msra.mxu0 0.0
    %176 = vmatprep.subr.mxu0 0.0
    %177 = vmatpush1.msra.mxu0 0.0
    %178 = vmatprep.subr.mxu0 0.0
    %179 = vmatpush1.msra.mxu0 0.0
    %180 = vmatprep.subr.mxu0 0.0
    %181 = vmatpush1.msra.mxu0 0.0
    %182 = vmatprep.subr.mxu0 0.0
    %183 = vmatpush1.msra.mxu0 0.0
    %184 = vmatprep.subr.mxu0 0.0
    %185 = vmatpush1.msra.mxu0 0.0
    %186 = vmatprep.subr.mxu0 0.0
    %187 = vmatpush1.msra.mxu0 0.0
    %188 = vmatprep.subr.mxu0 0.0
    %189 = vmatpush1.msra.mxu0 0.0
    %190 = vmatprep.subr.mxu0 0.0
    %191 = vmatpush1.msra.mxu0 0.0
    %192 = vmatprep.subr.mxu0 0.0
    %193 = vmatpush1.msra.mxu0 0.0
    %194 = vmatprep.subr.mxu0 0.0
    %195 = vmatpush1.msra.mxu0 0.0
    %196 = vmatprep.subr.mxu0 0.0
    %197 = vmatpush1.msra.mxu0 0.0
    %198 = vmatprep.subr.mxu0 0.0
    %199 = vmatpush1.msra.mxu0 0.0
    %200 = vmatprep.subr.mxu0 0.0
    %201 = vmatpush1.msra.mxu0 0.0
    %202 = vmatprep.subr.mxu0 0.0
    %203 = vmatpush1.msra.mxu0 0.0
    %204 = vmatprep.subr.mxu0 0.0
    %205 = vmatpush1.msra.mxu0 0.0
    %206 = vmatprep.subr.mxu0 0.0
    %207 = vmatpush1.msra.mxu0 0.0
    %208 = vmatprep.subr.mxu0 0.0
    %209 = vmatpush1.msra.mxu0 0.0
    %210 = vmatprep.subr.mxu0 0.0
    %211 = vmatpush1.msra.mxu0 0.0
    %212 = vmatprep.subr.mxu0 0.0
    %213 = vmatpush1.msra.mxu0 0.0
    %214 = vmatprep.subr.mxu0 0.0
    %215 = vmatpush1.msra.mxu0 0.0
    %216 = vmatprep.mubr.f32.mxu0 0.0
    %v217 = vand.u32 %v143, 4294901760
    %v218 = vsub.f32 %v143, %v217
    %v219 = vand.u32 %v218, 4294901760
    %v220 = vsub.f32 %v218, %v219
    %v221 = vand.u32 %v220, 4294901760
    %222 = vmatmul.mubr.f32.gmra.mrb[0].mxu0 %v221
    %v223 = vpop.f32.mrb[0].mxu0
    %v224 = vadd.f32 %v140, %v223
    %v225 = vpop.f32.mrb[0].mxu0
    %226 = vmatprep.mubr.f32.mxu0 0.0
    %v227 = vand.u32 %v146, 4294901760
    %v228 = vsub.f32 %v146, %v227
    %v229 = vand.u32 %v228, 4294901760
    %v230 = vsub.f32 %v228, %v229
    %v231 = vand.u32 %v230, 4294901760
    %232 = vmatmul.mubr.f32.gmra.mrb[0].mxu0 %v231
    %v233 = vpop.f32.mrb[0].mxu0
    %v234 = vadd.f32 %v140, %v233
    %v235 = vpop.f32.mrb[0].mxu0
    %236 = vdwg.mxu0
    %237 = vmatprep.subr.mxu0 0.0
    %v238 = vand.u32 %v131, 4294901760
    %v239 = vsub.f32 %v131, %v238
    %v240 = vand.u32 %v239, 4294901760
    %v241 = vsub.f32 %v239, %v240
    %v242 = vand.u32 %v241, 4294901760
    %243 = vmatpush1.msra.mxu0 %v242
    %244 = vmatprep.subr.mxu0 0.0
    %v245 = vand.u32 %v132, 4294901760
    %v246 = vsub.f32 %v132, %v245
    %v247 = vand.u32 %v246, 4294901760
    %v248 = vsub.f32 %v246, %v247
    %v249 = vand.u32 %v248, 4294901760
    %250 = vmatpush1.msra.mxu0 %v249
    %251 = vmatprep.subr.mxu0 0.0
    %v252 = vand.u32 %v133, 4294901760
    %v253 = vsub.f32 %v133, %v252
    %v254 = vand.u32 %v253, 4294901760
    %v255 = vsub.f32 %v253, %v254
    %v256 = vand.u32 %v255, 4294901760
    %257 = vmatpush1.msra.mxu0 %v256
    %258 = vmatprep.subr.mxu0 0.0
    %v259 = vand.u32 %v134, 4294901760
    %v260 = vsub.f32 %v134, %v259
    %v261 = vand.u32 %v260, 4294901760
    %v262 = vsub.f32 %v260, %v261
    %v263 = vand.u32 %v262, 4294901760
    %264 = vmatpush1.msra.mxu0 %v263
    %265 = vmatprep.subr.mxu0 0.0
    %266 = vmatpush1.msra.mxu0 0.0
    %267 = vmatprep.subr.mxu0 0.0
    %268 = vmatpush1.msra.mxu0 0.0
    %269 = vmatprep.subr.mxu0 0.0
    %270 = vmatpush1.msra.mxu0 0.0
    %271 = vmatprep.subr.mxu0 0.0
    %272 = vmatpush1.msra.mxu0 0.0
    %273 = vmatprep.subr.mxu0 0.0
    %274 = vmatpush1.msra.mxu0 0.0
    %275 = vmatprep.subr.mxu0 0.0
    %276 = vmatpush1.msra.mxu0 0.0
    %277 = vmatprep.subr.mxu0 0.0
    %278 = vmatpush1.msra.mxu0 0.0
    %279 = vmatprep.subr.mxu0 0.0
    %280 = vmatpush1.msra.mxu0 0.0
    %281 = vmatprep.subr.mxu0 0.0
    %282 = vmatpush1.msra.mxu0 0.0
    %283 = vmatprep.subr.mxu0 0.0
    %284 = vmatpush1.msra.mxu0 0.0
    %285 = vmatprep.subr.mxu0 0.0
    %286 = vmatpush1.msra.mxu0 0.0
    %287 = vmatprep.subr.mxu0 0.0
    %288 = vmatpush1.msra.mxu0 0.0
    %289 = vmatprep.subr.mxu0 0.0
    %290 = vmatpush1.msra.mxu0 0.0
    %291 = vmatprep.subr.mxu0 0.0
    %292 = vmatpush1.msra.mxu0 0.0
    %293 = vmatprep.subr.mxu0 0.0
    %294 = vmatpush1.msra.mxu0 0.0
    %295 = vmatprep.subr.mxu0 0.0
    %296 = vmatpush1.msra.mxu0 0.0
    %297 = vmatprep.subr.mxu0 0.0
    %298 = vmatpush1.msra.mxu0 0.0
    %299 = vmatprep.subr.mxu0 0.0
    %300 = vmatpush1.msra.mxu0 0.0
    %301 = vmatprep.subr.mxu0 0.0
    %302 = vmatpush1.msra.mxu0 0.0
    %303 = vmatprep.subr.mxu0 0.0
    %304 = vmatpush1.msra.mxu0 0.0
    %305 = vmatprep.subr.mxu0 0.0
    %306 = vmatpush1.msra.mxu0 0.0
    %307 = vmatprep.subr.mxu0 0.0
    %308 = vmatpush1.msra.mxu0 0.0
    %309 = vmatprep.subr.mxu0 0.0
    %310 = vmatpush1.msra.mxu0 0.0
    %311 = vmatprep.subr.mxu0 0.0
    %312 = vmatpush1.msra.mxu0 0.0
    %313 = vmatprep.subr.mxu0 0.0
    %314 = vmatpush1.msra.mxu0 0.0
    %315 = vmatprep.subr.mxu0 0.0
    %316 = vmatpush1.msra.mxu0 0.0
    %317 = vmatprep.subr.mxu0 0.0
    %318 = vmatpush1.msra.mxu0 0.0
    %319 = vmatprep.subr.mxu0 0.0
    %320 = vmatpush1.msra.mxu0 0.0
    %321 = vmatprep.mubr.f32.mxu0 0.0
    %v322 = vand.u32 %v143, 4294901760
    %323 = vmatmul.mubr.f32.gmra.mrb[0].mxu0 %v322
    %v324 = vpop.f32.mrb[0].mxu0
    %v325 = vadd.f32 %v224, %v324
    %v326 = vpop.f32.mrb[0].mxu0
    %327 = vmatprep.mubr.f32.mxu0 0.0
    %v328 = vand.u32 %v146, 4294901760
    %329 = vmatmul.mubr.f32.gmra.mrb[0].mxu0 %v328
    %v330 = vpop.f32.mrb[0].mxu0
    %v331 = vadd.f32 %v234, %v330
    %v332 = vpop.f32.mrb[0].mxu0
    %333 = vdwg.mxu0
    %334 = vmatprep.subr.mxu0 0.0
    %v335 = vand.u32 %v131, 4294901760
    %v336 = vsub.f32 %v131, %v335
    %337 = vmatpush1.msra.mxu0 %v336
    %338 = vmatprep.subr.mxu0 0.0
    %v339 = vand.u32 %v132, 4294901760
    %v340 = vsub.f32 %v132, %v339
    %341 = vmatpush1.msra.mxu0 %v340
    %342 = vmatprep.subr.mxu0 0.0
    %v343 = vand.u32 %v133, 4294901760
    %v344 = vsub.f32 %v133, %v343
    %345 = vmatpush1.msra.mxu0 %v344
    %346 = vmatprep.subr.mxu0 0.0
    %v347 = vand.u32 %v134, 4294901760
    %v348 = vsub.f32 %v134, %v347
    %349 = vmatpush1.msra.mxu0 %v348
    %350 = vmatprep.subr.mxu0 0.0
    %351 = vmatpush1.msra.mxu0 0.0
    %352 = vmatprep.subr.mxu0 0.0
    %353 = vmatpush1.msra.mxu0 0.0
    %354 = vmatprep.subr.mxu0 0.0
    %355 = vmatpush1.msra.mxu0 0.0
    %356 = vmatprep.subr.mxu0 0.0
    %357 = vmatpush1.msra.mxu0 0.0
    %358 = vmatprep.subr.mxu0 0.0
    %359 = vmatpush1.msra.mxu0 0.0
    %360 = vmatprep.subr.mxu0 0.0
    %361 = vmatpush1.msra.mxu0 0.0
    %362 = vmatprep.subr.mxu0 0.0
    %363 = vmatpush1.msra.mxu0 0.0
    %364 = vmatprep.subr.mxu0 0.0
    %365 = vmatpush1.msra.mxu0 0.0
    %366 = vmatprep.subr.mxu0 0.0
    %367 = vmatpush1.msra.mxu0 0.0
    %368 = vmatprep.subr.mxu0 0.0
    %369 = vmatpush1.msra.mxu0 0.0
    %370 = vmatprep.subr.mxu0 0.0
    %371 = vmatpush1.msra.mxu0 0.0
    %372 = vmatprep.subr.mxu0 0.0
    %373 = vmatpush1.msra.mxu0 0.0
    %374 = vmatprep.subr.mxu0 0.0
    %375 = vmatpush1.msra.mxu0 0.0
    %376 = vmatprep.subr.mxu0 0.0
    %377 = vmatpush1.msra.mxu0 0.0
    %378 = vmatprep.subr.mxu0 0.0
    %379 = vmatpush1.msra.mxu0 0.0
    %380 = vmatprep.subr.mxu0 0.0
    %381 = vmatpush1.msra.mxu0 0.0
    %382 = vmatprep.subr.mxu0 0.0
    %383 = vmatpush1.msra.mxu0 0.0
    %384 = vmatprep.subr.mxu0 0.0
    %385 = vmatpush1.msra.mxu0 0.0
    %386 = vmatprep.subr.mxu0 0.0
    %387 = vmatpush1.msra.mxu0 0.0
    %388 = vmatprep.subr.mxu0 0.0
    %389 = vmatpush1.msra.mxu0 0.0
    %390 = vmatprep.subr.mxu0 0.0
    %391 = vmatpush1.msra.mxu0 0.0
    %392 = vmatprep.subr.mxu0 0.0
    %393 = vmatpush1.msra.mxu0 0.0
    %394 = vmatprep.subr.mxu0 0.0
    %395 = vmatpush1.msra.mxu0 0.0
    %396 = vmatprep.subr.mxu0 0.0
    %397 = vmatpush1.msra.mxu0 0.0
    %398 = vmatprep.subr.mxu0 0.0
    %399 = vmatpush1.msra.mxu0 0.0
    %400 = vmatprep.subr.mxu0 0.0
    %401 = vmatpush1.msra.mxu0 0.0
    %402 = vmatprep.subr.mxu0 0.0
    %403 = vmatpush1.msra.mxu0 0.0
    %404 = vmatprep.subr.mxu0 0.0
    %405 = vmatpush1.msra.mxu0 0.0
    %406 = vmatprep.mubr.f32.mxu0 0.0
    %v407 = vand.u32 %v143, 4294901760
    %v408 = vsub.f32 %v143, %v407
    %409 = vmatmul.mubr.f32.gmra.mrb[0].mxu0 %v408
    %v410 = vpop.f32.mrb[0].mxu0
    %v411 = vadd.f32 %v325, %v410
    %v412 = vpop.f32.mrb[0].mxu0
    %413 = vmatprep.mubr.f32.mxu0 0.0
    %v414 = vand.u32 %v146, 4294901760
    %v415 = vsub.f32 %v146, %v414
    %416 = vmatmul.mubr.f32.gmra.mrb[0].mxu0 %v415
    %v417 = vpop.f32.mrb[0].mxu0
    %v418 = vadd.f32 %v331, %v417
    %v419 = vpop.f32.mrb[0].mxu0
    %420 = vdwg.mxu0
    %421 = vmatprep.subr.mxu0 0.0
    %v422 = vand.u32 %v131, 4294901760
    %423 = vmatpush1.msra.mxu0 %v422
    %424 = vmatprep.subr.mxu0 0.0
    %v425 = vand.u32 %v132, 4294901760
    %426 = vmatpush1.msra.mxu0 %v425
    %427 = vmatprep.subr.mxu0 0.0
    %v428 = vand.u32 %v133, 4294901760
    %429 = vmatpush1.msra.mxu0 %v428
    %430 = vmatprep.subr.mxu0 0.0
    %v431 = vand.u32 %v134, 4294901760
    %432 = vmatpush1.msra.mxu0 %v431
    %433 = vmatprep.subr.mxu0 0.0
    %434 = vmatpush1.msra.mxu0 0.0
    %435 = vmatprep.subr.mxu0 0.0
    %436 = vmatpush1.msra.mxu0 0.0
    %437 = vmatprep.subr.mxu0 0.0
    %438 = vmatpush1.msra.mxu0 0.0
    %439 = vmatprep.subr.mxu0 0.0
    %440 = vmatpush1.msra.mxu0 0.0
    %441 = vmatprep.subr.mxu0 0.0
    %442 = vmatpush1.msra.mxu0 0.0
    %443 = vmatprep.subr.mxu0 0.0
    %444 = vmatpush1.msra.mxu0 0.0
    %445 = vmatprep.subr.mxu0 0.0
    %446 = vmatpush1.msra.mxu0 0.0
    %447 = vmatprep.subr.mxu0 0.0
    %448 = vmatpush1.msra.mxu0 0.0
    %449 = vmatprep.subr.mxu0 0.0
    %450 = vmatpush1.msra.mxu0 0.0
    %451 = vmatprep.subr.mxu0 0.0
    %452 = vmatpush1.msra.mxu0 0.0
    %453 = vmatprep.subr.mxu0 0.0
    %454 = vmatpush1.msra.mxu0 0.0
    %455 = vmatprep.subr.mxu0 0.0
    %456 = vmatpush1.msra.mxu0 0.0
    %457 = vmatprep.subr.mxu0 0.0
    %458 = vmatpush1.msra.mxu0 0.0
    %459 = vmatprep.subr.mxu0 0.0
    %460 = vmatpush1.msra.mxu0 0.0
    %461 = vmatprep.subr.mxu0 0.0
    %462 = vmatpush1.msra.mxu0 0.0
    %463 = vmatprep.subr.mxu0 0.0
    %464 = vmatpush1.msra.mxu0 0.0
    %465 = vmatprep.subr.mxu0 0.0
    %466 = vmatpush1.msra.mxu0 0.0
    %467 = vmatprep.subr.mxu0 0.0
    %468 = vmatpush1.msra.mxu0 0.0
    %469 = vmatprep.subr.mxu0 0.0
    %470 = vmatpush1.msra.mxu0 0.0
    %471 = vmatprep.subr.mxu0 0.0
    %472 = vmatpush1.msra.mxu0 0.0
    %473 = vmatprep.subr.mxu0 0.0
    %474 = vmatpush1.msra.mxu0 0.0
    %475 = vmatprep.subr.mxu0 0.0
    %476 = vmatpush1.msra.mxu0 0.0
    %477 = vmatprep.subr.mxu0 0.0
    %478 = vmatpush1.msra.mxu0 0.0
    %479 = vmatprep.subr.mxu0 0.0
    %480 = vmatpush1.msra.mxu0 0.0
    %481 = vmatprep.subr.mxu0 0.0
    %482 = vmatpush1.msra.mxu0 0.0
    %483 = vmatprep.subr.mxu0 0.0
    %484 = vmatpush1.msra.mxu0 0.0
    %485 = vmatprep.subr.mxu0 0.0
    %486 = vmatpush1.msra.mxu0 0.0
    %487 = vmatprep.subr.mxu0 0.0
    %488 = vmatpush1.msra.mxu0 0.0
    %489 = vmatprep.mubr.f32.mxu0 0.0
    %v490 = vand.u32 %v143, 4294901760
    %v491 = vsub.f32 %v143, %v490
    %v492 = vand.u32 %v491, 4294901760
    %493 = vmatmul.mubr.f32.gmra.mrb[0].mxu0 %v492
    %v494 = vpop.f32.mrb[0].mxu0
    %v495 = vadd.f32 %v411, %v494
    %v496 = vpop.f32.mrb[0].mxu0
    %497 = vmatprep.mubr.f32.mxu0 0.0
    %v498 = vand.u32 %v146, 4294901760
    %v499 = vsub.f32 %v146, %v498
    %v500 = vand.u32 %v499, 4294901760
    %501 = vmatmul.mubr.f32.gmra.mrb[0].mxu0 %v500
    %v502 = vpop.f32.mrb[0].mxu0
    %v503 = vadd.f32 %v418, %v502
    %v504 = vpop.f32.mrb[0].mxu0
    %505 = vdwg.mxu0
    %506 = vmatprep.subr.mxu0 0.0
    %v507 = vand.u32 %v131, 4294901760
    %v508 = vsub.f32 %v131, %v507
    %v509 = vand.u32 %v508, 4294901760
    %510 = vmatpush1.msra.mxu0 %v509
    %511 = vmatprep.subr.mxu0 0.0
    %v512 = vand.u32 %v132, 4294901760
    %v513 = vsub.f32 %v132, %v512
    %v514 = vand.u32 %v513, 4294901760
    %515 = vmatpush1.msra.mxu0 %v514
    %516 = vmatprep.subr.mxu0 0.0
    %v517 = vand.u32 %v133, 4294901760
    %v518 = vsub.f32 %v133, %v517
    %v519 = vand.u32 %v518, 4294901760
    %520 = vmatpush1.msra.mxu0 %v519
    %521 = vmatprep.subr.mxu0 0.0
    %v522 = vand.u32 %v134, 4294901760
    %v523 = vsub.f32 %v134, %v522
    %v524 = vand.u32 %v523, 4294901760
    %525 = vmatpush1.msra.mxu0 %v524
    %526 = vmatprep.subr.mxu0 0.0
    %527 = vmatpush1.msra.mxu0 0.0
    %528 = vmatprep.subr.mxu0 0.0
    %529 = vmatpush1.msra.mxu0 0.0
    %530 = vmatprep.subr.mxu0 0.0
    %531 = vmatpush1.msra.mxu0 0.0
    %532 = vmatprep.subr.mxu0 0.0
    %533 = vmatpush1.msra.mxu0 0.0
    %534 = vmatprep.subr.mxu0 0.0
    %535 = vmatpush1.msra.mxu0 0.0
    %536 = vmatprep.subr.mxu0 0.0
    %537 = vmatpush1.msra.mxu0 0.0
    %538 = vmatprep.subr.mxu0 0.0
    %539 = vmatpush1.msra.mxu0 0.0
    %540 = vmatprep.subr.mxu0 0.0
    %541 = vmatpush1.msra.mxu0 0.0
    %542 = vmatprep.subr.mxu0 0.0
    %543 = vmatpush1.msra.mxu0 0.0
    %544 = vmatprep.subr.mxu0 0.0
    %545 = vmatpush1.msra.mxu0 0.0
    %546 = vmatprep.subr.mxu0 0.0
    %547 = vmatpush1.msra.mxu0 0.0
    %548 = vmatprep.subr.mxu0 0.0
    %549 = vmatpush1.msra.mxu0 0.0
    %550 = vmatprep.subr.mxu0 0.0
    %551 = vmatpush1.msra.mxu0 0.0
    %552 = vmatprep.subr.mxu0 0.0
    %553 = vmatpush1.msra.mxu0 0.0
    %554 = vmatprep.subr.mxu0 0.0
    %555 = vmatpush1.msra.mxu0 0.0
    %556 = vmatprep.subr.mxu0 0.0
    %557 = vmatpush1.msra.mxu0 0.0
    %558 = vmatprep.subr.mxu0 0.0
    %559 = vmatpush1.msra.mxu0 0.0
    %560 = vmatprep.subr.mxu0 0.0
    %561 = vmatpush1.msra.mxu0 0.0
    %562 = vmatprep.subr.mxu0 0.0
    %563 = vmatpush1.msra.mxu0 0.0
    %564 = vmatprep.subr.mxu0 0.0
    %565 = vmatpush1.msra.mxu0 0.0
    %566 = vmatprep.subr.mxu0 0.0
    %567 = vmatpush1.msra.mxu0 0.0
    %568 = vmatprep.subr.mxu0 0.0
    %569 = vmatpush1.msra.mxu0 0.0
    %570 = vmatprep.subr.mxu0 0.0
    %571 = vmatpush1.msra.mxu0 0.0
    %572 = vmatprep.subr.mxu0 0.0
    %573 = vmatpush1.msra.mxu0 0.0
    %574 = vmatprep.subr.mxu0 0.0
    %575 = vmatpush1.msra.mxu0 0.0
    %576 = vmatprep.subr.mxu0 0.0
    %577 = vmatpush1.msra.mxu0 0.0
    %578 = vmatprep.subr.mxu0 0.0
    %579 = vmatpush1.msra.mxu0 0.0
    %580 = vmatprep.subr.mxu0 0.0
    %581 = vmatpush1.msra.mxu0 0.0
    %582 = vmatprep.mubr.f32.mxu0 0.0
    %v583 = vand.u32 %v143, 4294901760
    %584 = vmatmul.mubr.f32.gmra.mrb[0].mxu0 %v583
    %v585 = vpop.f32.mrb[0].mxu0
    %v586 = vadd.f32 %v495, %v585
    %v587 = vpop.f32.mrb[0].mxu0
    %588 = vmatprep.mubr.f32.mxu0 0.0
    %v589 = vand.u32 %v146, 4294901760
    %590 = vmatmul.mubr.f32.gmra.mrb[0].mxu0 %v589
    %v591 = vpop.f32.mrb[0].mxu0
    %v592 = vadd.f32 %v503, %v591
    %v593 = vpop.f32.mrb[0].mxu0
    %594 = vdwg.mxu0
    %595 = vmatprep.subr.mxu0 0.0
    %v596 = vand.u32 %v131, 4294901760
    %597 = vmatpush1.msra.mxu0 %v596
    %598 = vmatprep.subr.mxu0 0.0
    %v599 = vand.u32 %v132, 4294901760
    %600 = vmatpush1.msra.mxu0 %v599
    %601 = vmatprep.subr.mxu0 0.0
    %v602 = vand.u32 %v133, 4294901760
    %603 = vmatpush1.msra.mxu0 %v602
    %604 = vmatprep.subr.mxu0 0.0
    %v605 = vand.u32 %v134, 4294901760
    %606 = vmatpush1.msra.mxu0 %v605
    %607 = vmatprep.subr.mxu0 0.0
    %608 = vmatpush1.msra.mxu0 0.0
    %609 = vmatprep.subr.mxu0 0.0
    %610 = vmatpush1.msra.mxu0 0.0
    %611 = vmatprep.subr.mxu0 0.0
    %612 = vmatpush1.msra.mxu0 0.0
    %613 = vmatprep.subr.mxu0 0.0
    %614 = vmatpush1.msra.mxu0 0.0
    %615 = vmatprep.subr.mxu0 0.0
    %616 = vmatpush1.msra.mxu0 0.0
    %617 = vmatprep.subr.mxu0 0.0
    %618 = vmatpush1.msra.mxu0 0.0
    %619 = vmatprep.subr.mxu0 0.0
    %620 = vmatpush1.msra.mxu0 0.0
    %621 = vmatprep.subr.mxu0 0.0
    %622 = vmatpush1.msra.mxu0 0.0
    %623 = vmatprep.subr.mxu0 0.0
    %624 = vmatpush1.msra.mxu0 0.0
    %625 = vmatprep.subr.mxu0 0.0
    %626 = vmatpush1.msra.mxu0 0.0
    %627 = vmatprep.subr.mxu0 0.0
    %628 = vmatpush1.msra.mxu0 0.0
    %629 = vmatprep.subr.mxu0 0.0
    %630 = vmatpush1.msra.mxu0 0.0
    %631 = vmatprep.subr.mxu0 0.0
    %632 = vmatpush1.msra.mxu0 0.0
    %633 = vmatprep.subr.mxu0 0.0
    %634 = vmatpush1.msra.mxu0 0.0
    %635 = vmatprep.subr.mxu0 0.0
    %636 = vmatpush1.msra.mxu0 0.0
    %637 = vmatprep.subr.mxu0 0.0
    %638 = vmatpush1.msra.mxu0 0.0
    %639 = vmatprep.subr.mxu0 0.0
    %640 = vmatpush1.msra.mxu0 0.0
    %641 = vmatprep.subr.mxu0 0.0
    %642 = vmatpush1.msra.mxu0 0.0
    %643 = vmatprep.subr.mxu0 0.0
    %644 = vmatpush1.msra.mxu0 0.0
    %645 = vmatprep.subr.mxu0 0.0
    %646 = vmatpush1.msra.mxu0 0.0
    %647 = vmatprep.subr.mxu0 0.0
    %648 = vmatpush1.msra.mxu0 0.0
    %649 = vmatprep.subr.mxu0 0.0
    %650 = vmatpush1.msra.mxu0 0.0
    %651 = vmatprep.subr.mxu0 0.0
    %652 = vmatpush1.msra.mxu0 0.0
    %653 = vmatprep.subr.mxu0 0.0
    %654 = vmatpush1.msra.mxu0 0.0
    %655 = vmatprep.subr.mxu0 0.0
    %656 = vmatpush1.msra.mxu0 0.0
    %657 = vmatprep.subr.mxu0 0.0
    %658 = vmatpush1.msra.mxu0 0.0
    %659 = vmatprep.subr.mxu0 0.0
    %660 = vmatpush1.msra.mxu0 0.0
    %661 = vmatprep.subr.mxu0 0.0
    %662 = vmatpush1.msra.mxu0 0.0
    %663 = vmatprep.mubr.f32.mxu0 0.0
    %v664 = vand.u32 %v143, 4294901760
    %665 = vmatmul.mubr.f32.gmra.mrb[0].mxu0 %v664
    %v666 = vpop.f32.mrb[0].mxu0
    %v667 = vadd.f32 %v586, %v666
    %v668 = vpop.f32.mrb[0].mxu0
    %669 = vmatprep.mubr.f32.mxu0 0.0
    %v670 = vand.u32 %v146, 4294901760
    %671 = vmatmul.mubr.f32.gmra.mrb[0].mxu0 %v670
    %v672 = vpop.f32.mrb[0].mxu0
    %v673 = vadd.f32 %v592, %v672
    %v674 = vpop.f32.mrb[0].mxu0
    %675 = vdwg.mxu0
    %v676 = vmul.f32 %v667, 0.5
    %v677 = vmul.f32 %v673, 0.5
    %v678 = vmul.f32 %v667, 0.044715
    %v679 = vmul.f32 %v673, 0.044715
    %v680 = vmul.f32 %v678, %v667
    %v681 = vmul.f32 %v679, %v673
    %v682 = vmul.f32 %v680, %v667
    %v683 = vmul.f32 %v681, %v673
    %v684 = vadd.f32 %v667, %v682
    %v685 = vadd.f32 %v673, %v683
    %v686 = vmul.f32 %v684, 0.7978846
    %v687 = vmul.f32 %v685, 0.7978846
    %v688 = vtanh.pop %v686
    %v689 = vtanh.pop %v687
    %v690 = vadd.f32 %v688, 1.0
    %v691 = vadd.f32 %v689, 1.0
    %v692 = vmul.f32 %v676, %v690
    %v693 = vmul.f32 %v677, %v691
    %vm694 = vcmask 523264
    %695 = vst.msk [vmem:[#allocation11] sm:$0xff] %vm694, %v692
    %696 = vst.msk [vmem:[#allocation11 + $0x8] sm:$0xff] %vm694, %v693
    // Predicated region
    $region42: #{mechanism_transformer_forward.25} parent=1 // pred_check
      _
    $region43: #{mechanism_transformer_forward.25} parent=1 // pred_check_branch
      %698 = sbr.rel (0) target = $region45
    $region44: #{mechanism_transformer_forward.25} parent=1 // pred_region
      %s700 = ssub.s32 256, 256
      %701 = vsyncadd [#allocation4], %s700
      %s702 = sshll.u32 [#allocation11], 4
      %s703 = int_to_ptr.vmem [resolvable:$true] %s702
      %708 = dma.vmem_to_hbm [thread:$0]  %s703, 256, %s5, [#allocation4], 128, 128, 8
    $region45: #{mechanism_transformer_forward.25} parent=1 // pred_fallthru
      _
    // Predicated region
    $region46: #{mechanism_transformer_forward.25} parent=1 // pred_check
      _
    $region47: #{mechanism_transformer_forward.25} parent=1 // pred_check_branch
      %710 = sbr.rel (0) target = $region49
    $region48: #{mechanism_transformer_forward.25} parent=1 // pred_region
      %711 = dma.done [#allocation4], 256
    $region49: #{mechanism_transformer_forward.25} parent=1 // pred_fallthru
      _
    %712 = vsyncpa [#allocation3], 1
    %713 = vsyncpa [#allocation6], 1
    %714 = vsyncpa [#allocation9], 1
    %715 = vsyncpa [#allocation4], 1

// kernel: mechanism_transformer_forward.24
$region0: #{mechanism_transformer_forward.24}
  #allocation0 [shape = 'u32[]', space=smem, size = 0x4, offset = 0x4, fixed_abs, tag = 'smem constant byte address 0x4 - core index']
  #allocation1 [shape = 'u32[144,128]{1,0:T(1,128)}', space=vmem, size = 0x12000, scoped, tag = 'internal scratch']
  %s0 = inlined_call_operand.hbm [shape: f32[16,32], index: 0, kind: input, shape index: {}]
  %s1 = inlined_call_operand.hbm [shape: f32[32,32], index: 1, kind: input, shape index: {}]
  %s2 = inlined_call_operand.hbm [shape: f32[1,32], index: 2, kind: input, shape index: {}]
  %s3 = inlined_call_operand.hbm [shape: f32[1,32], index: 3, kind: input, shape index: {}]
  %s4 = inlined_call_operand.hbm [shape: f32[1,32], index: 4, kind: input, shape index: {}]
  %s5 = inlined_call_operand.hbm [shape: f32[16,32], index: 5, kind: output, shape index: {}]
  %s6 = sld [smem:[#allocation0]]
  $region50: #{mechanism_transformer_forward.24} parent=0
    _
  %s8 = ssub.s32 1, %s6
  %s9 = scalar_select 0, %s8, %s6
  $region1: #{mechanism_transformer_forward.24} parent=0
    #allocation2 [shape = 'u8[8192]{0}', space=vmem, size = 0x2000, scoped, tag = 'input window, operand 0, single buffered']
    #allocation3 [shape = 's32[1]{0}', space=sflag, size = 0x4, scoped, tag = 'scoped memory for mechanism_transformer_forward.24']
    #allocation4 [shape = 's32[1]{0}', space=sflag, size = 0x4, scoped, tag = 'scoped memory for mechanism_transformer_forward.24']
    #allocation5 [shape = 'u8[16384]{0}', space=vmem, size = 0x4000, scoped, tag = 'input window, operand 1, single buffered']
    #allocation6 [shape = 's32[1]{0}', space=sflag, size = 0x4, scoped, tag = 'scoped memory for mechanism_transformer_forward.24']
    #allocation7 [shape = 'u8[512]{0}', space=vmem, size = 0x400, scoped, tag = 'input window, operand 2, single buffered']
    #allocation8 [shape = 'u8[512]{0}', space=vmem, size = 0x400, scoped, tag = 'input window, operand 3, single buffered']
    #allocation9 [shape = 's32[1]{0}', space=sflag, size = 0x4, scoped, tag = 'scoped memory for mechanism_transformer_forward.24']
    #allocation10 [shape = 'u8[512]{0}', space=vmem, size = 0x400, scoped, tag = 'input window, operand 4, single buffered']
    #allocation11 [shape = 'u8[8192]{0}', space=vmem, size = 0x2000, scoped, tag = 'output window, operand 0, single buffered']
    %10 = vsyncpa [#allocation3], 0
    %11 = vsyncpa [#allocation6], 0
    %12 = vsyncpa [#allocation9], 0
    %13 = vsyncpa [#allocation4], 0
    // Predicated region
    $region2: #{mechanism_transformer_forward.24} parent=1 // pred_check
      _
    $region3: #{mechanism_transformer_forward.24} parent=1 // pred_check_branch
      %15 = sbr.rel (0) target = $region5
    $region4: #{mechanism_transformer_forward.24} parent=1 // pred_region
      %s17 = ssub.s32 256, 256
      %18 = vsyncadd [#allocation3], %s17
      %s19 = sshll.u32 [#allocation2], 4
      %s20 = int_to_ptr.vmem [resolvable:$true] %s19
      %25 = dma.hbm_to_vmem [thread:$0]  %s0, 256, %s20, [#allocation3], 128, 128, 8
    $region5: #{mechanism_transformer_forward.24} parent=1 // pred_fallthru
      _
    // Predicated region
    $region6: #{mechanism_transformer_forward.24} parent=1 // pred_check
      _
    $region7: #{mechanism_transformer_forward.24} parent=1 // pred_check_branch
      %27 = sbr.rel (0) target = $region9
    $region8: #{mechanism_transformer_forward.24} parent=1 // pred_region
      %s29 = ssub.s32 512, 512
      %30 = vsyncadd [#allocation6], %s29
      %s31 = sshll.u32 [#allocation5], 4
      %s32 = int_to_ptr.vmem [resolvable:$true] %s31
      %37 = dma.hbm_to_vmem [thread:$0]  %s1, 512, %s32, [#allocation6], 128, 128, 8
    $region9: #{mechanism_transformer_forward.24} parent=1 // pred_fallthru
      _
    // Predicated region
    $region10: #{mechanism_transformer_forward.24} parent=1 // pred_check
      _
    $region11: #{mechanism_transformer_forward.24} parent=1 // pred_check_branch
      %39 = sbr.rel (0) target = $region13
    $region12: #{mechanism_transformer_forward.24} parent=1 // pred_region
      %s41 = ssub.s32 16, 16
      %42 = vsyncadd [#allocation6], %s41
      %s44 = sshll.u32 [#allocation7], 4
      %s45 = int_to_ptr.vmem [resolvable:$true] %s44
      %47 = dma.hbm_to_vmem [thread:$0]  %s2, 16, %s45, [#allocation6]
    $region13: #{mechanism_transformer_forward.24} parent=1 // pred_fallthru
      _
    // Predicated region
    $region14: #{mechanism_transformer_forward.24} parent=1 // pred_check
      _
    $region15: #{mechanism_transformer_forward.24} parent=1 // pred_check_branch
      %49 = sbr.rel (0) target = $region17
    $region16: #{mechanism_transformer_forward.24} parent=1 // pred_region
      %s51 = ssub.s32 16, 16
      %52 = vsyncadd [#allocation9], %s51
      %s54 = sshll.u32 [#allocation8], 4
      %s55 = int_to_ptr.vmem [resolvable:$true] %s54
      %57 = dma.hbm_to_vmem [thread:$0]  %s3, 16, %s55, [#allocation9]
    $region17: #{mechanism_transformer_forward.24} parent=1 // pred_fallthru
      _
    // Predicated region
    $region18: #{mechanism_transformer_forward.24} parent=1 // pred_check
      _
    $region19: #{mechanism_transformer_forward.24} parent=1 // pred_check_branch
      %59 = sbr.rel (0) target = $region21
    $region20: #{mechanism_transformer_forward.24} parent=1 // pred_region
      %s61 = ssub.s32 16, 16
      %62 = vsyncadd [#allocation9], %s61
      %s64 = sshll.u32 [#allocation10], 4
      %s65 = int_to_ptr.vmem [resolvable:$true] %s64
      %67 = dma.hbm_to_vmem [thread:$0]  %s4, 16, %s65, [#allocation9]
    $region21: #{mechanism_transformer_forward.24} parent=1 // pred_fallthru
      _
    // Predicated region
    $region22: #{mechanism_transformer_forward.24} parent=1 // pred_check
      _
    $region23: #{mechanism_transformer_forward.24} parent=1 // pred_check_branch
      %69 = sbr.rel (0) target = $region25
    $region24: #{mechanism_transformer_forward.24} parent=1 // pred_region
      %70 = dma.done [#allocation3], 256
    $region25: #{mechanism_transformer_forward.24} parent=1 // pred_fallthru
      _
    // Predicated region
    $region26: #{mechanism_transformer_forward.24} parent=1 // pred_check
      _
    $region27: #{mechanism_transformer_forward.24} parent=1 // pred_check_branch
      %72 = sbr.rel (0) target = $region29
    $region28: #{mechanism_transformer_forward.24} parent=1 // pred_region
      %73 = dma.done [#allocation6], 512
    $region29: #{mechanism_transformer_forward.24} parent=1 // pred_fallthru
      _
    // Predicated region
    $region30: #{mechanism_transformer_forward.24} parent=1 // pred_check
      _
    $region31: #{mechanism_transformer_forward.24} parent=1 // pred_check_branch
      %75 = sbr.rel (0) target = $region33
    $region32: #{mechanism_transformer_forward.24} parent=1 // pred_region
      %76 = dma.done [#allocation6], 16
    $region33: #{mechanism_transformer_forward.24} parent=1 // pred_fallthru
      _
    // Predicated region
    $region34: #{mechanism_transformer_forward.24} parent=1 // pred_check
      _
    $region35: #{mechanism_transformer_forward.24} parent=1 // pred_check_branch
      %78 = sbr.rel (0) target = $region37
    $region36: #{mechanism_transformer_forward.24} parent=1 // pred_region
      %79 = dma.done [#allocation9], 16
    $region37: #{mechanism_transformer_forward.24} parent=1 // pred_fallthru
      _
    // Predicated region
    $region38: #{mechanism_transformer_forward.24} parent=1 // pred_check
      _
    $region39: #{mechanism_transformer_forward.24} parent=1 // pred_check_branch
      %81 = sbr.rel (0) target = $region41
    $region40: #{mechanism_transformer_forward.24} parent=1 // pred_region
      %82 = dma.done [#allocation9], 16
    $region41: #{mechanism_transformer_forward.24} parent=1 // pred_fallthru
      _
    %v83 = vld [vmem:[#allocation2] sm:$0xff]
    %v84 = vld [vmem:[#allocation2 + $0x8] sm:$0xff]
    %vm85 = vcmask 261120
    %v86 = vsel %vm85, %v83, 0.0
    %87 = vadd.xlane.f32.xlu0 %v86
    %v88 = vpop.xlane.xlu0 %87
    %v89 = vsel %vm85, %v84, 0.0
    %90 = vadd.xlane.f32.xlu0 %v89
    %v91 = vpop.xlane.xlu0 %90
    %v92 = vrcp.pop 32.0
    %v93 = vmul.f32 %v88, %v92
    %v94 = vmul.f32 %v91, %v92
    %v95 = vsub.f32 %v83, %v93
    %v96 = vsub.f32 %v84, %v94
    %v97 = vmul.f32 %v95, %v95
    %v98 = vmul.f32 %v96, %v96
    %v99 = vsel %vm85, %v97, 0.0
    %100 = vadd.xlane.f32.xlu0 %v99
    %v101 = vpop.xlane.xlu0 %100
    %v102 = vsel %vm85, %v98, 0.0
    %103 = vadd.xlane.f32.xlu0 %v102
    %v104 = vpop.xlane.xlu0 %103
    %v105 = vmul.f32 %v101, %v92
    %v106 = vmul.f32 %v104, %v92
    %v107 = vadd.f32 %v105, 1e-05
    %v108 = vadd.f32 %v106, 1e-05
    %v109 = vrsqrt.pop %v107
    %v110 = vrsqrt.pop %v108
    %v111 = vmul.f32 %v95, %v109
    %v112 = vmul.f32 %v96, %v110
    %v113 = vld [vmem:[#allocation8] sm:$0x1]
    %v115 = vlaneseq
    %v116 = vshrl.u32 %v115, 7
    %v117 = vsub.s32 0, %v116
    %v118 = vrot.slane %v113, %v117
    %v120 = vmul.f32 %v111, %v118
    %v121 = vmul.f32 %v112, %v118
    %v122 = vld [vmem:[#allocation10] sm:$0x1]
    %v124 = vlaneseq
    %v125 = vshrl.u32 %v124, 7
    %v126 = vsub.s32 0, %v125
    %v127 = vrot.slane %v122, %v126
    %v129 = vadd.f32 %v120, %v127
    %v130 = vadd.f32 %v121, %v127
    %v131 = vld [vmem:[#allocation5] sm:$0xff]
    %v132 = vld [vmem:[#allocation5 + $0x8] sm:$0xff]
    %v133 = vld [vmem:[#allocation5 + $0x10] sm:$0xff]
    %v134 = vld [vmem:[#allocation5 + $0x18] sm:$0xff]
    %v135 = vld [vmem:[#allocation7] sm:$0x1]
    %v137 = vlaneseq
    %v138 = vshrl.u32 %v137, 7
    %v139 = vsub.s32 0, %v138
    %v140 = vrot.slane %v135, %v139
    %v143 = vsel %vm85, %v129, 0
    %v146 = vsel %vm85, %v130, 0
    %148 = vmatprep.subr.mxu0 0.0
    %v149 = vand.u32 %v131, 4294901760
    %150 = vmatpush1.msra.mxu0 %v149
    %151 = vmatprep.subr.mxu0 0.0
    %v152 = vand.u32 %v132, 4294901760
    %153 = vmatpush1.msra.mxu0 %v152
    %154 = vmatprep.subr.mxu0 0.0
    %v155 = vand.u32 %v133, 4294901760
    %156 = vmatpush1.msra.mxu0 %v155
    %157 = vmatprep.subr.mxu0 0.0
    %v158 = vand.u32 %v134, 4294901760
    %159 = vmatpush1.msra.mxu0 %v158
    %160 = vmatprep.subr.mxu0 0.0
    %161 = vmatpush1.msra.mxu0 0.0
    %162 = vmatprep.subr.mxu0 0.0
    %163 = vmatpush1.msra.mxu0 0.0
    %164 = vmatprep.subr.mxu0 0.0
    %165 = vmatpush1.msra.mxu0 0.0
    %166 = vmatprep.subr.mxu0 0.0
    %167 = vmatpush1.msra.mxu0 0.0
    %168 = vmatprep.subr.mxu0 0.0
    %169 = vmatpush1.msra.mxu0 0.0
    %170 = vmatprep.subr.mxu0 0.0
    %171 = vmatpush1.msra.mxu0 0.0
    %172 = vmatprep.subr.mxu0 0.0
    %173 = vmatpush1.msra.mxu0 0.0
    %174 = vmatprep.subr.mxu0 0.0
    %175 = vmatpush1.msra.mxu0 0.0
    %176 = vmatprep.subr.mxu0 0.0
    %177 = vmatpush1.msra.mxu0 0.0
    %178 = vmatprep.subr.mxu0 0.0
    %179 = vmatpush1.msra.mxu0 0.0
    %180 = vmatprep.subr.mxu0 0.0
    %181 = vmatpush1.msra.mxu0 0.0
    %182 = vmatprep.subr.mxu0 0.0
    %183 = vmatpush1.msra.mxu0 0.0
    %184 = vmatprep.subr.mxu0 0.0
    %185 = vmatpush1.msra.mxu0 0.0
    %186 = vmatprep.subr.mxu0 0.0
    %187 = vmatpush1.msra.mxu0 0.0
    %188 = vmatprep.subr.mxu0 0.0
    %189 = vmatpush1.msra.mxu0 0.0
    %190 = vmatprep.subr.mxu0 0.0
    %191 = vmatpush1.msra.mxu0 0.0
    %192 = vmatprep.subr.mxu0 0.0
    %193 = vmatpush1.msra.mxu0 0.0
    %194 = vmatprep.subr.mxu0 0.0
    %195 = vmatpush1.msra.mxu0 0.0
    %196 = vmatprep.subr.mxu0 0.0
    %197 = vmatpush1.msra.mxu0 0.0
    %198 = vmatprep.subr.mxu0 0.0
    %199 = vmatpush1.msra.mxu0 0.0
    %200 = vmatprep.subr.mxu0 0.0
    %201 = vmatpush1.msra.mxu0 0.0
    %202 = vmatprep.subr.mxu0 0.0
    %203 = vmatpush1.msra.mxu0 0.0
    %204 = vmatprep.subr.mxu0 0.0
    %205 = vmatpush1.msra.mxu0 0.0
    %206 = vmatprep.subr.mxu0 0.0
    %207 = vmatpush1.msra.mxu0 0.0
    %208 = vmatprep.subr.mxu0 0.0
    %209 = vmatpush1.msra.mxu0 0.0
    %210 = vmatprep.subr.mxu0 0.0
    %211 = vmatpush1.msra.mxu0 0.0
    %212 = vmatprep.subr.mxu0 0.0
    %213 = vmatpush1.msra.mxu0 0.0
    %214 = vmatprep.subr.mxu0 0.0
    %215 = vmatpush1.msra.mxu0 0.0
    %216 = vmatprep.mubr.f32.mxu0 0.0
    %v217 = vand.u32 %v143, 4294901760
    %v218 = vsub.f32 %v143, %v217
    %v219 = vand.u32 %v218, 4294901760
    %v220 = vsub.f32 %v218, %v219
    %v221 = vand.u32 %v220, 4294901760
    %222 = vmatmul.mubr.f32.gmra.mrb[0].mxu0 %v221
    %v223 = vpop.f32.mrb[0].mxu0
    %v224 = vadd.f32 %v140, %v223
    %v225 = vpop.f32.mrb[0].mxu0
    %226 = vmatprep.mubr.f32.mxu0 0.0
    %v227 = vand.u32 %v146, 4294901760
    %v228 = vsub.f32 %v146, %v227
    %v229 = vand.u32 %v228, 4294901760
    %v230 = vsub.f32 %v228, %v229
    %v231 = vand.u32 %v230, 4294901760
    %232 = vmatmul.mubr.f32.gmra.mrb[0].mxu0 %v231
    %v233 = vpop.f32.mrb[0].mxu0
    %v234 = vadd.f32 %v140, %v233
    %v235 = vpop.f32.mrb[0].mxu0
    %236 = vdwg.mxu0
    %237 = vmatprep.subr.mxu0 0.0
    %v238 = vand.u32 %v131, 4294901760
    %v239 = vsub.f32 %v131, %v238
    %v240 = vand.u32 %v239, 4294901760
    %v241 = vsub.f32 %v239, %v240
    %v242 = vand.u32 %v241, 4294901760
    %243 = vmatpush1.msra.mxu0 %v242
    %244 = vmatprep.subr.mxu0 0.0
    %v245 = vand.u32 %v132, 4294901760
    %v246 = vsub.f32 %v132, %v245
    %v247 = vand.u32 %v246, 4294901760
    %v248 = vsub.f32 %v246, %v247
    %v249 = vand.u32 %v248, 4294901760
    %250 = vmatpush1.msra.mxu0 %v249
    %251 = vmatprep.subr.mxu0 0.0
    %v252 = vand.u32 %v133, 4294901760
    %v253 = vsub.f32 %v133, %v252
    %v254 = vand.u32 %v253, 4294901760
    %v255 = vsub.f32 %v253, %v254
    %v256 = vand.u32 %v255, 4294901760
    %257 = vmatpush1.msra.mxu0 %v256
    %258 = vmatprep.subr.mxu0 0.0
    %v259 = vand.u32 %v134, 4294901760
    %v260 = vsub.f32 %v134, %v259
    %v261 = vand.u32 %v260, 4294901760
    %v262 = vsub.f32 %v260, %v261
    %v263 = vand.u32 %v262, 4294901760
    %264 = vmatpush1.msra.mxu0 %v263
    %265 = vmatprep.subr.mxu0 0.0
    %266 = vmatpush1.msra.mxu0 0.0
    %267 = vmatprep.subr.mxu0 0.0
    %268 = vmatpush1.msra.mxu0 0.0
    %269 = vmatprep.subr.mxu0 0.0
    %270 = vmatpush1.msra.mxu0 0.0
    %271 = vmatprep.subr.mxu0 0.0
    %272 = vmatpush1.msra.mxu0 0.0
    %273 = vmatprep.subr.mxu0 0.0
    %274 = vmatpush1.msra.mxu0 0.0
    %275 = vmatprep.subr.mxu0 0.0
    %276 = vmatpush1.msra.mxu0 0.0
    %277 = vmatprep.subr.mxu0 0.0
    %278 = vmatpush1.msra.mxu0 0.0
    %279 = vmatprep.subr.mxu0 0.0
    %280 = vmatpush1.msra.mxu0 0.0
    %281 = vmatprep.subr.mxu0 0.0
    %282 = vmatpush1.msra.mxu0 0.0
    %283 = vmatprep.subr.mxu0 0.0
    %284 = vmatpush1.msra.mxu0 0.0
    %285 = vmatprep.subr.mxu0 0.0
    %286 = vmatpush1.msra.mxu0 0.0
    %287 = vmatprep.subr.mxu0 0.0
    %288 = vmatpush1.msra.mxu0 0.0
    %289 = vmatprep.subr.mxu0 0.0
    %290 = vmatpush1.msra.mxu0 0.0
    %291 = vmatprep.subr.mxu0 0.0
    %292 = vmatpush1.msra.mxu0 0.0
    %293 = vmatprep.subr.mxu0 0.0
    %294 = vmatpush1.msra.mxu0 0.0
    %295 = vmatprep.subr.mxu0 0.0
    %296 = vmatpush1.msra.mxu0 0.0
    %297 = vmatprep.subr.mxu0 0.0
    %298 = vmatpush1.msra.mxu0 0.0
    %299 = vmatprep.subr.mxu0 0.0
    %300 = vmatpush1.msra.mxu0 0.0
    %301 = vmatprep.subr.mxu0 0.0
    %302 = vmatpush1.msra.mxu0 0.0
    %303 = vmatprep.subr.mxu0 0.0
    %304 = vmatpush1.msra.mxu0 0.0
    %305 = vmatprep.subr.mxu0 0.0
    %306 = vmatpush1.msra.mxu0 0.0
    %307 = vmatprep.subr.mxu0 0.0
    %308 = vmatpush1.msra.mxu0 0.0
    %309 = vmatprep.subr.mxu0 0.0
    %310 = vmatpush1.msra.mxu0 0.0
    %311 = vmatprep.subr.mxu0 0.0
    %312 = vmatpush1.msra.mxu0 0.0
    %313 = vmatprep.subr.mxu0 0.0
    %314 = vmatpush1.msra.mxu0 0.0
    %315 = vmatprep.subr.mxu0 0.0
    %316 = vmatpush1.msra.mxu0 0.0
    %317 = vmatprep.subr.mxu0 0.0
    %318 = vmatpush1.msra.mxu0 0.0
    %319 = vmatprep.subr.mxu0 0.0
    %320 = vmatpush1.msra.mxu0 0.0
    %321 = vmatprep.mubr.f32.mxu0 0.0
    %v322 = vand.u32 %v143, 4294901760
    %323 = vmatmul.mubr.f32.gmra.mrb[0].mxu0 %v322
    %v324 = vpop.f32.mrb[0].mxu0
    %v325 = vadd.f32 %v224, %v324
    %v326 = vpop.f32.mrb[0].mxu0
    %327 = vmatprep.mubr.f32.mxu0 0.0
    %v328 = vand.u32 %v146, 4294901760
    %329 = vmatmul.mubr.f32.gmra.mrb[0].mxu0 %v328
    %v330 = vpop.f32.mrb[0].mxu0
    %v331 = vadd.f32 %v234, %v330
    %v332 = vpop.f32.mrb[0].mxu0
    %333 = vdwg.mxu0
    %334 = vmatprep.subr.mxu0 0.0
    %v335 = vand.u32 %v131, 4294901760
    %v336 = vsub.f32 %v131, %v335
    %337 = vmatpush1.msra.mxu0 %v336
    %338 = vmatprep.subr.mxu0 0.0
    %v339 = vand.u32 %v132, 4294901760
    %v340 = vsub.f32 %v132, %v339
    %341 = vmatpush1.msra.mxu0 %v340
    %342 = vmatprep.subr.mxu0 0.0
    %v343 = vand.u32 %v133, 4294901760
    %v344 = vsub.f32 %v133, %v343
    %345 = vmatpush1.msra.mxu0 %v344
    %346 = vmatprep.subr.mxu0 0.0
    %v347 = vand.u32 %v134, 4294901760
    %v348 = vsub.f32 %v134, %v347
    %349 = vmatpush1.msra.mxu0 %v348
    %350 = vmatprep.subr.mxu0 0.0
    %351 = vmatpush1.msra.mxu0 0.0
    %352 = vmatprep.subr.mxu0 0.0
    %353 = vmatpush1.msra.mxu0 0.0
    %354 = vmatprep.subr.mxu0 0.0
    %355 = vmatpush1.msra.mxu0 0.0
    %356 = vmatprep.subr.mxu0 0.0
    %357 = vmatpush1.msra.mxu0 0.0
    %358 = vmatprep.subr.mxu0 0.0
    %359 = vmatpush1.msra.mxu0 0.0
    %360 = vmatprep.subr.mxu0 0.0
    %361 = vmatpush1.msra.mxu0 0.0
    %362 = vmatprep.subr.mxu0 0.0
    %363 = vmatpush1.msra.mxu0 0.0
    %364 = vmatprep.subr.mxu0 0.0
    %365 = vmatpush1.msra.mxu0 0.0
    %366 = vmatprep.subr.mxu0 0.0
    %367 = vmatpush1.msra.mxu0 0.0
    %368 = vmatprep.subr.mxu0 0.0
    %369 = vmatpush1.msra.mxu0 0.0
    %370 = vmatprep.subr.mxu0 0.0
    %371 = vmatpush1.msra.mxu0 0.0
    %372 = vmatprep.subr.mxu0 0.0
    %373 = vmatpush1.msra.mxu0 0.0
    %374 = vmatprep.subr.mxu0 0.0
    %375 = vmatpush1.msra.mxu0 0.0
    %376 = vmatprep.subr.mxu0 0.0
    %377 = vmatpush1.msra.mxu0 0.0
    %378 = vmatprep.subr.mxu0 0.0
    %379 = vmatpush1.msra.mxu0 0.0
    %380 = vmatprep.subr.mxu0 0.0
    %381 = vmatpush1.msra.mxu0 0.0
    %382 = vmatprep.subr.mxu0 0.0
    %383 = vmatpush1.msra.mxu0 0.0
    %384 = vmatprep.subr.mxu0 0.0
    %385 = vmatpush1.msra.mxu0 0.0
    %386 = vmatprep.subr.mxu0 0.0
    %387 = vmatpush1.msra.mxu0 0.0
    %388 = vmatprep.subr.mxu0 0.0
    %389 = vmatpush1.msra.mxu0 0.0
    %390 = vmatprep.subr.mxu0 0.0
    %391 = vmatpush1.msra.mxu0 0.0
    %392 = vmatprep.subr.mxu0 0.0
    %393 = vmatpush1.msra.mxu0 0.0
    %394 = vmatprep.subr.mxu0 0.0
    %395 = vmatpush1.msra.mxu0 0.0
    %396 = vmatprep.subr.mxu0 0.0
    %397 = vmatpush1.msra.mxu0 0.0
    %398 = vmatprep.subr.mxu0 0.0
    %399 = vmatpush1.msra.mxu0 0.0
    %400 = vmatprep.subr.mxu0 0.0
    %401 = vmatpush1.msra.mxu0 0.0
    %402 = vmatprep.subr.mxu0 0.0
    %403 = vmatpush1.msra.mxu0 0.0
    %404 = vmatprep.subr.mxu0 0.0
    %405 = vmatpush1.msra.mxu0 0.0
    %406 = vmatprep.mubr.f32.mxu0 0.0
    %v407 = vand.u32 %v143, 4294901760
    %v408 = vsub.f32 %v143, %v407
    %409 = vmatmul.mubr.f32.gmra.mrb[0].mxu0 %v408
    %v410 = vpop.f32.mrb[0].mxu0
    %v411 = vadd.f32 %v325, %v410
    %v412 = vpop.f32.mrb[0].mxu0
    %413 = vmatprep.mubr.f32.mxu0 0.0
    %v414 = vand.u32 %v146, 4294901760
    %v415 = vsub.f32 %v146, %v414
    %416 = vmatmul.mubr.f32.gmra.mrb[0].mxu0 %v415
    %v417 = vpop.f32.mrb[0].mxu0
    %v418 = vadd.f32 %v331, %v417
    %v419 = vpop.f32.mrb[0].mxu0
    %420 = vdwg.mxu0
    %421 = vmatprep.subr.mxu0 0.0
    %v422 = vand.u32 %v131, 4294901760
    %423 = vmatpush1.msra.mxu0 %v422
    %424 = vmatprep.subr.mxu0 0.0
    %v425 = vand.u32 %v132, 4294901760
    %426 = vmatpush1.msra.mxu0 %v425
    %427 = vmatprep.subr.mxu0 0.0
    %v428 = vand.u32 %v133, 4294901760
    %429 = vmatpush1.msra.mxu0 %v428
    %430 = vmatprep.subr.mxu0 0.0
    %v431 = vand.u32 %v134, 4294901760
    %432 = vmatpush1.msra.mxu0 %v431
    %433 = vmatprep.subr.mxu0 0.0
    %434 = vmatpush1.msra.mxu0 0.0
    %435 = vmatprep.subr.mxu0 0.0
    %436 = vmatpush1.msra.mxu0 0.0
    %437 = vmatprep.subr.mxu0 0.0
    %438 = vmatpush1.msra.mxu0 0.0
    %439 = vmatprep.subr.mxu0 0.0
    %440 = vmatpush1.msra.mxu0 0.0
    %441 = vmatprep.subr.mxu0 0.0
    %442 = vmatpush1.msra.mxu0 0.0
    %443 = vmatprep.subr.mxu0 0.0
    %444 = vmatpush1.msra.mxu0 0.0
    %445 = vmatprep.subr.mxu0 0.0
    %446 = vmatpush1.msra.mxu0 0.0
    %447 = vmatprep.subr.mxu0 0.0
    %448 = vmatpush1.msra.mxu0 0.0
    %449 = vmatprep.subr.mxu0 0.0
    %450 = vmatpush1.msra.mxu0 0.0
    %451 = vmatprep.subr.mxu0 0.0
    %452 = vmatpush1.msra.mxu0 0.0
    %453 = vmatprep.subr.mxu0 0.0
    %454 = vmatpush1.msra.mxu0 0.0
    %455 = vmatprep.subr.mxu0 0.0
    %456 = vmatpush1.msra.mxu0 0.0
    %457 = vmatprep.subr.mxu0 0.0
    %458 = vmatpush1.msra.mxu0 0.0
    %459 = vmatprep.subr.mxu0 0.0
    %460 = vmatpush1.msra.mxu0 0.0
    %461 = vmatprep.subr.mxu0 0.0
    %462 = vmatpush1.msra.mxu0 0.0
    %463 = vmatprep.subr.mxu0 0.0
    %464 = vmatpush1.msra.mxu0 0.0
    %465 = vmatprep.subr.mxu0 0.0
    %466 = vmatpush1.msra.mxu0 0.0
    %467 = vmatprep.subr.mxu0 0.0
    %468 = vmatpush1.msra.mxu0 0.0
    %469 = vmatprep.subr.mxu0 0.0
    %470 = vmatpush1.msra.mxu0 0.0
    %471 = vmatprep.subr.mxu0 0.0
    %472 = vmatpush1.msra.mxu0 0.0
    %473 = vmatprep.subr.mxu0 0.0
    %474 = vmatpush1.msra.mxu0 0.0
    %475 = vmatprep.subr.mxu0 0.0
    %476 = vmatpush1.msra.mxu0 0.0
    %477 = vmatprep.subr.mxu0 0.0
    %478 = vmatpush1.msra.mxu0 0.0
    %479 = vmatprep.subr.mxu0 0.0
    %480 = vmatpush1.msra.mxu0 0.0
    %481 = vmatprep.subr.mxu0 0.0
    %482 = vmatpush1.msra.mxu0 0.0
    %483 = vmatprep.subr.mxu0 0.0
    %484 = vmatpush1.msra.mxu0 0.0
    %485 = vmatprep.subr.mxu0 0.0
    %486 = vmatpush1.msra.mxu0 0.0
    %487 = vmatprep.subr.mxu0 0.0
    %488 = vmatpush1.msra.mxu0 0.0
    %489 = vmatprep.mubr.f32.mxu0 0.0
    %v490 = vand.u32 %v143, 4294901760
    %v491 = vsub.f32 %v143, %v490
    %v492 = vand.u32 %v491, 4294901760
    %493 = vmatmul.mubr.f32.gmra.mrb[0].mxu0 %v492
    %v494 = vpop.f32.mrb[0].mxu0
    %v495 = vadd.f32 %v411, %v494
    %v496 = vpop.f32.mrb[0].mxu0
    %497 = vmatprep.mubr.f32.mxu0 0.0
    %v498 = vand.u32 %v146, 4294901760
    %v499 = vsub.f32 %v146, %v498
    %v500 = vand.u32 %v499, 4294901760
    %501 = vmatmul.mubr.f32.gmra.mrb[0].mxu0 %v500
    %v502 = vpop.f32.mrb[0].mxu0
    %v503 = vadd.f32 %v418, %v502
    %v504 = vpop.f32.mrb[0].mxu0
    %505 = vdwg.mxu0
    %506 = vmatprep.subr.mxu0 0.0
    %v507 = vand.u32 %v131, 4294901760
    %v508 = vsub.f32 %v131, %v507
    %v509 = vand.u32 %v508, 4294901760
    %510 = vmatpush1.msra.mxu0 %v509
    %511 = vmatprep.subr.mxu0 0.0
    %v512 = vand.u32 %v132, 4294901760
    %v513 = vsub.f32 %v132, %v512
    %v514 = vand.u32 %v513, 4294901760
    %515 = vmatpush1.msra.mxu0 %v514
    %516 = vmatprep.subr.mxu0 0.0
    %v517 = vand.u32 %v133, 4294901760
    %v518 = vsub.f32 %v133, %v517
    %v519 = vand.u32 %v518, 4294901760
    %520 = vmatpush1.msra.mxu0 %v519
    %521 = vmatprep.subr.mxu0 0.0
    %v522 = vand.u32 %v134, 4294901760
    %v523 = vsub.f32 %v134, %v522
    %v524 = vand.u32 %v523, 4294901760
    %525 = vmatpush1.msra.mxu0 %v524
    %526 = vmatprep.subr.mxu0 0.0
    %527 = vmatpush1.msra.mxu0 0.0
    %528 = vmatprep.subr.mxu0 0.0
    %529 = vmatpush1.msra.mxu0 0.0
    %530 = vmatprep.subr.mxu0 0.0
    %531 = vmatpush1.msra.mxu0 0.0
    %532 = vmatprep.subr.mxu0 0.0
    %533 = vmatpush1.msra.mxu0 0.0
    %534 = vmatprep.subr.mxu0 0.0
    %535 = vmatpush1.msra.mxu0 0.0
    %536 = vmatprep.subr.mxu0 0.0
    %537 = vmatpush1.msra.mxu0 0.0
    %538 = vmatprep.subr.mxu0 0.0
    %539 = vmatpush1.msra.mxu0 0.0
    %540 = vmatprep.subr.mxu0 0.0
    %541 = vmatpush1.msra.mxu0 0.0
    %542 = vmatprep.subr.mxu0 0.0
    %543 = vmatpush1.msra.mxu0 0.0
    %544 = vmatprep.subr.mxu0 0.0
    %545 = vmatpush1.msra.mxu0 0.0
    %546 = vmatprep.subr.mxu0 0.0
    %547 = vmatpush1.msra.mxu0 0.0
    %548 = vmatprep.subr.mxu0 0.0
    %549 = vmatpush1.msra.mxu0 0.0
    %550 = vmatprep.subr.mxu0 0.0
    %551 = vmatpush1.msra.mxu0 0.0
    %552 = vmatprep.subr.mxu0 0.0
    %553 = vmatpush1.msra.mxu0 0.0
    %554 = vmatprep.subr.mxu0 0.0
    %555 = vmatpush1.msra.mxu0 0.0
    %556 = vmatprep.subr.mxu0 0.0
    %557 = vmatpush1.msra.mxu0 0.0
    %558 = vmatprep.subr.mxu0 0.0
    %559 = vmatpush1.msra.mxu0 0.0
    %560 = vmatprep.subr.mxu0 0.0
    %561 = vmatpush1.msra.mxu0 0.0
    %562 = vmatprep.subr.mxu0 0.0
    %563 = vmatpush1.msra.mxu0 0.0
    %564 = vmatprep.subr.mxu0 0.0
    %565 = vmatpush1.msra.mxu0 0.0
    %566 = vmatprep.subr.mxu0 0.0
    %567 = vmatpush1.msra.mxu0 0.0
    %568 = vmatprep.subr.mxu0 0.0
    %569 = vmatpush1.msra.mxu0 0.0
    %570 = vmatprep.subr.mxu0 0.0
    %571 = vmatpush1.msra.mxu0 0.0
    %572 = vmatprep.subr.mxu0 0.0
    %573 = vmatpush1.msra.mxu0 0.0
    %574 = vmatprep.subr.mxu0 0.0
    %575 = vmatpush1.msra.mxu0 0.0
    %576 = vmatprep.subr.mxu0 0.0
    %577 = vmatpush1.msra.mxu0 0.0
    %578 = vmatprep.subr.mxu0 0.0
    %579 = vmatpush1.msra.mxu0 0.0
    %580 = vmatprep.subr.mxu0 0.0
    %581 = vmatpush1.msra.mxu0 0.0
    %582 = vmatprep.mubr.f32.mxu0 0.0
    %v583 = vand.u32 %v143, 4294901760
    %584 = vmatmul.mubr.f32.gmra.mrb[0].mxu0 %v583
    %v585 = vpop.f32.mrb[0].mxu0
    %v586 = vadd.f32 %v495, %v585
    %v587 = vpop.f32.mrb[0].mxu0
    %588 = vmatprep.mubr.f32.mxu0 0.0
    %v589 = vand.u32 %v146, 4294901760
    %590 = vmatmul.mubr.f32.gmra.mrb[0].mxu0 %v589
    %v591 = vpop.f32.mrb[0].mxu0
    %v592 = vadd.f32 %v503, %v591
    %v593 = vpop.f32.mrb[0].mxu0
    %594 = vdwg.mxu0
    %595 = vmatprep.subr.mxu0 0.0
    %v596 = vand.u32 %v131, 4294901760
    %597 = vmatpush1.msra.mxu0 %v596
    %598 = vmatprep.subr.mxu0 0.0
    %v599 = vand.u32 %v132, 4294901760
    %600 = vmatpush1.msra.mxu0 %v599
    %601 = vmatprep.subr.mxu0 0.0
    %v602 = vand.u32 %v133, 4294901760
    %603 = vmatpush1.msra.mxu0 %v602
    %604 = vmatprep.subr.mxu0 0.0
    %v605 = vand.u32 %v134, 4294901760
    %606 = vmatpush1.msra.mxu0 %v605
    %607 = vmatprep.subr.mxu0 0.0
    %608 = vmatpush1.msra.mxu0 0.0
    %609 = vmatprep.subr.mxu0 0.0
    %610 = vmatpush1.msra.mxu0 0.0
    %611 = vmatprep.subr.mxu0 0.0
    %612 = vmatpush1.msra.mxu0 0.0
    %613 = vmatprep.subr.mxu0 0.0
    %614 = vmatpush1.msra.mxu0 0.0
    %615 = vmatprep.subr.mxu0 0.0
    %616 = vmatpush1.msra.mxu0 0.0
    %617 = vmatprep.subr.mxu0 0.0
    %618 = vmatpush1.msra.mxu0 0.0
    %619 = vmatprep.subr.mxu0 0.0
    %620 = vmatpush1.msra.mxu0 0.0
    %621 = vmatprep.subr.mxu0 0.0
    %622 = vmatpush1.msra.mxu0 0.0
    %623 = vmatprep.subr.mxu0 0.0
    %624 = vmatpush1.msra.mxu0 0.0
    %625 = vmatprep.subr.mxu0 0.0
    %626 = vmatpush1.msra.mxu0 0.0
    %627 = vmatprep.subr.mxu0 0.0
    %628 = vmatpush1.msra.mxu0 0.0
    %629 = vmatprep.subr.mxu0 0.0
    %630 = vmatpush1.msra.mxu0 0.0
    %631 = vmatprep.subr.mxu0 0.0
    %632 = vmatpush1.msra.mxu0 0.0
    %633 = vmatprep.subr.mxu0 0.0
    %634 = vmatpush1.msra.mxu0 0.0
    %635 = vmatprep.subr.mxu0 0.0
    %636 = vmatpush1.msra.mxu0 0.0
    %637 = vmatprep.subr.mxu0 0.0
    %638 = vmatpush1.msra.mxu0 0.0
    %639 = vmatprep.subr.mxu0 0.0
    %640 = vmatpush1.msra.mxu0 0.0
    %641 = vmatprep.subr.mxu0 0.0
    %642 = vmatpush1.msra.mxu0 0.0
    %643 = vmatprep.subr.mxu0 0.0
    %644 = vmatpush1.msra.mxu0 0.0
    %645 = vmatprep.subr.mxu0 0.0
    %646 = vmatpush1.msra.mxu0 0.0
    %647 = vmatprep.subr.mxu0 0.0
    %648 = vmatpush1.msra.mxu0 0.0
    %649 = vmatprep.subr.mxu0 0.0
    %650 = vmatpush1.msra.mxu0 0.0
    %651 = vmatprep.subr.mxu0 0.0
    %652 = vmatpush1.msra.mxu0 0.0
    %653 = vmatprep.subr.mxu0 0.0
    %654 = vmatpush1.msra.mxu0 0.0
    %655 = vmatprep.subr.mxu0 0.0
    %656 = vmatpush1.msra.mxu0 0.0
    %657 = vmatprep.subr.mxu0 0.0
    %658 = vmatpush1.msra.mxu0 0.0
    %659 = vmatprep.subr.mxu0 0.0
    %660 = vmatpush1.msra.mxu0 0.0
    %661 = vmatprep.subr.mxu0 0.0
    %662 = vmatpush1.msra.mxu0 0.0
    %663 = vmatprep.mubr.f32.mxu0 0.0
    %v664 = vand.u32 %v143, 4294901760
    %665 = vmatmul.mubr.f32.gmra.mrb[0].mxu0 %v664
    %v666 = vpop.f32.mrb[0].mxu0
    %v667 = vadd.f32 %v586, %v666
    %v668 = vpop.f32.mrb[0].mxu0
    %669 = vmatprep.mubr.f32.mxu0 0.0
    %v670 = vand.u32 %v146, 4294901760
    %671 = vmatmul.mubr.f32.gmra.mrb[0].mxu0 %v670
    %v672 = vpop.f32.mrb[0].mxu0
    %v673 = vadd.f32 %v592, %v672
    %v674 = vpop.f32.mrb[0].mxu0
    %675 = vdwg.mxu0
    %v676 = vadd.f32 %v667, %v83
    %v677 = vadd.f32 %v673, %v84
    %678 = vst.msk [vmem:[#allocation11] sm:$0xff] %vm85, %v676
    %679 = vst.msk [vmem:[#allocation11 + $0x8] sm:$0xff] %vm85, %v677
    // Predicated region
    $region42: #{mechanism_transformer_forward.24} parent=1 // pred_check
      _
    $region43: #{mechanism_transformer_forward.24} parent=1 // pred_check_branch
      %681 = sbr.rel (0) target = $region45
    $region44: #{mechanism_transformer_forward.24} parent=1 // pred_region
      %s683 = ssub.s32 256, 256
      %684 = vsyncadd [#allocation4], %s683
      %s685 = sshll.u32 [#allocation11], 4
      %s686 = int_to_ptr.vmem [resolvable:$true] %s685
      %691 = dma.vmem_to_hbm [thread:$0]  %s686, 256, %s5, [#allocation4], 128, 128, 8
    $region45: #{mechanism_transformer_forward.24} parent=1 // pred_fallthru
      _
    // Predicated region
    $region46: #{mechanism_transformer_forward.24} parent=1 // pred_check
      _
    $region47: #{mechanism_transformer_forward.24} parent=1 // pred_check_branch
      %693 = sbr.rel (0) target = $region49
    $region48: #{mechanism_transformer_forward.24} parent=1 // pred_region
      %694 = dma.done [#allocation4], 256
    $region49: #{mechanism_transformer_forward.24} parent=1 // pred_fallthru
      _
    %695 = vsyncpa [#allocation3], 1
    %696 = vsyncpa [#allocation6], 1
    %697 = vsyncpa [#allocation9], 1
    %698 = vsyncpa [#allocation4], 1

// kernel: mechanism_transformer_forward.22
$region0: #{mechanism_transformer_forward.22}
  #allocation0 [shape = 'u32[]', space=smem, size = 0x4, offset = 0x4, fixed_abs, tag = 'smem constant byte address 0x4 - core index']
  #allocation1 [shape = 'u32[144,128]{1,0:T(1,128)}', space=vmem, size = 0x12000, scoped, tag = 'internal scratch']
  %s0 = inlined_call_operand.hbm [shape: f32[2,8,32], index: 0, kind: input, shape index: {}]
  %s1 = inlined_call_operand.hbm [shape: f32[2,8,32], index: 1, kind: input, shape index: {}]
  %s2 = inlined_call_operand.hbm [shape: f32[2,8,32], index: 2, kind: input, shape index: {}]
  %s3 = inlined_call_operand.hbm [shape: f32[2,1,8], index: 3, kind: input, shape index: {}]
  %s4 = inlined_call_operand.hbm [shape: f32[2,8,32], index: 4, kind: output, shape index: {}]
  %s5 = sld [smem:[#allocation0]]
  $region65: #{mechanism_transformer_forward.22} parent=0
    _
  %s7 = ssub.s32 1, %s5
  %s8 = scalar_select 0, %s7, %s5
  $region1: #{mechanism_transformer_forward.22} parent=0
    #allocation2 [shape = 'u8[8192]{0}', space=vmem, size = 0x2000, scoped, tag = 'input window, operand 0']
    #allocation3 [shape = 's32[2]{0}', space=sflag, size = 0x8, scoped, tag = 'scoped memory for mechanism_transformer_forward.22']
    #allocation4 [shape = 's32[2]{0}', space=sflag, size = 0x8, scoped, tag = 'scoped memory for mechanism_transformer_forward.22']
    #allocation5 [shape = 'u8[8192]{0}', space=vmem, size = 0x2000, scoped, tag = 'input window, operand 1']
    #allocation6 [shape = 's32[2]{0}', space=sflag, size = 0x8, scoped, tag = 'scoped memory for mechanism_transformer_forward.22']
    #allocation7 [shape = 'u8[8192]{0}', space=vmem, size = 0x2000, scoped, tag = 'input window, operand 2']
    #allocation8 [shape = 'u8[1024]{0}', space=vmem, size = 0x400, scoped, tag = 'input window, operand 3']
    #allocation9 [shape = 's32[2]{0}', space=sflag, size = 0x8, scoped, tag = 'scoped memory for mechanism_transformer_forward.22']
    #allocation10 [shape = 'u8[8192]{0}', space=vmem, size = 0x2000, scoped, tag = 'output window, operand 0']
    %9 = vsyncpa [#allocation3], 0
    %s10 = scalar_lea.sflag [#allocation3], 1
    %11 = vsyncpa %s10, 0
    %12 = vsyncpa [#allocation6], 0
    %s13 = scalar_lea.sflag [#allocation6], 1
    %14 = vsyncpa %s13, 0
    %15 = vsyncpa [#allocation9], 0
    %s16 = scalar_lea.sflag [#allocation9], 1
    %17 = vsyncpa %s16, 0
    %18 = vsyncpa [#allocation4], 0
    %s19 = scalar_lea.sflag [#allocation4], 1
    %20 = vsyncpa %s19, 0
    loop: start=0, step=1, limit=4
    $region2: #{mechanism_transformer_forward.22} parent=1 // loop_pre_header
      _
    $region3: #{mechanism_transformer_forward.22} parent=1 // loop_header
      %s22 = sphi 0, %s26
      %p23 = scmp.ge.s32.totalorder %s22, 4
      %s29 = sphi 0, %s41
      %s30 = sphi 0, %s37
      %s31 = sphi 0, %s29
      %s32 = sphi 0, %s30
      %s33 = sphi 0, %s31
      %s34 = sphi 0, %s32
      %s46 = sphi 0, %s48
      %s49 = sphi 0, %s46
      %s50 = sphi 0, %s49
      %s66 = sphi 0, %s50
      %s72 = sphi 0, %s74
      %s75 = sphi 0, %s72
      %s76 = sphi 0, %s75
      %s92 = sphi 0, %s76
      %s98 = sphi 0, %s100
      %s101 = sphi 0, %s98
      %s102 = sphi 0, %s101
      %s118 = sphi 0, %s102
      %s124 = sphi 0, %s126
      %s127 = sphi 0, %s124
      %s128 = sphi 0, %s127
      %s144 = sphi 0, %s128
      %s152 = sphi 0, %s154
      %s155 = sphi 0, %s152
      %s156 = sphi 0, %s155
      %s172 = sphi 0, %s156
    $region4: #{mechanism_transformer_forward.22} parent=1 // loop_header_branch
      %25 = sbr.rel (%p23) target = $region8
    $region5: #{mechanism_transformer_forward.22} parent=1 // loop_body
      %s27 = ssub.s32 %s22, 1
      %s28 = ssub.s32 %s22, 2
      %s35 = sadd.s32 1, %s30
      %p36 = scmp.ge.s32.totalorder %s35, 1
      %s37 = scalar_select %p36, 0, %s35
      %s38 = sadd.s32 1, %s29
      %s39 = scalar_select %p36, %s38, %s29
      %p40 = scmp.ge.s32.totalorder %s39, 2
      %s41 = scalar_select %p40, 0, %s39
      %s42 = ssub.s32 %s29, %s41
      %s43 = ssub.s32 %s30, %s37
      %s44 = sor.u32 %s42, %s43
      %p45 = scmp.eq.s32.totalorder %s44, 0
      %s47 = sadd.s32 %s46, 1
      %s48 = scalar_select %p45, %s46, %s47
      %p51 = pneg %p45
      %p52 = scmp.eq.s32.totalorder %s22, 1
      %p53 = por %p51, %p52
      %p54 = scmp.ne.s32.totalorder %s46, %s49
      %p55 = scmp.eq.s32.totalorder %s22, 0
      %p56 = por %p54, %p55
      %p57 = scmp.ne.s32.totalorder %s46, %s49
      %p58 = scmp.eq.s32.totalorder %s27, 1
      %p59 = por %p57, %p58
      %p60 = scmp.ne.s32.totalorder %s49, %s50
      %p61 = scmp.eq.s32.totalorder %s27, 0
      %p62 = por %p60, %p61
      %p63 = scmp.ne.s32.totalorder %s49, %s50
      %p64 = scmp.eq.s32.totalorder %s28, 1
      %p65 = por %p63, %p64
      %p67 = scmp.ne.s32.totalorder %s50, %s66
      %p68 = scmp.eq.s32.totalorder %s28, 0
      %p69 = por %p67, %p68
      %s70 = ssub.s32 %s29, %s41
      %p71 = scmp.eq.s32.totalorder %s70, 0
      %s73 = sadd.s32 %s72, 1
      %s74 = scalar_select %p71, %s72, %s73
      %p77 = pneg %p71
      %p78 = scmp.eq.s32.totalorder %s22, 1
      %p79 = por %p77, %p78
      %p80 = scmp.ne.s32.totalorder %s72, %s75
      %p81 = scmp.eq.s32.totalorder %s22, 0
      %p82 = por %p80, %p81
      %p83 = scmp.ne.s32.totalorder %s72, %s75
      %p84 = scmp.eq.s32.totalorder %s27, 1
      %p85 = por %p83, %p84
      %p86 = scmp.ne.s32.totalorder %s75, %s76
      %p87 = scmp.eq.s32.totalorder %s27, 0
      %p88 = por %p86, %p87
      %p89 = scmp.ne.s32.totalorder %s75, %s76
      %p90 = scmp.eq.s32.totalorder %s28, 1
      %p91 = por %p89, %p90
      %p93 = scmp.ne.s32.totalorder %s76, %s92
      %p94 = scmp.eq.s32.totalorder %s28, 0
      %p95 = por %p93, %p94
      %s96 = ssub.s32 %s29, %s41
      %p97 = scmp.eq.s32.totalorder %s96, 0
      %s99 = sadd.s32 %s98, 1
      %s100 = scalar_select %p97, %s98, %s99
      %p103 = pneg %p97
      %p104 = scmp.eq.s32.totalorder %s22, 1
      %p105 = por %p103, %p104
      %p106 = scmp.ne.s32.totalorder %s98, %s101
      %p107 = scmp.eq.s32.totalorder %s22, 0
      %p108 = por %p106, %p107
      %p109 = scmp.ne.s32.totalorder %s98, %s101
      %p110 = scmp.eq.s32.totalorder %s27, 1
      %p111 = por %p109, %p110
      %p112 = scmp.ne.s32.totalorder %s101, %s102
      %p113 = scmp.eq.s32.totalorder %s27, 0
      %p114 = por %p112, %p113
      %p115 = scmp.ne.s32.totalorder %s101, %s102
      %p116 = scmp.eq.s32.totalorder %s28, 1
      %p117 = por %p115, %p116
      %p119 = scmp.ne.s32.totalorder %s102, %s118
      %p120 = scmp.eq.s32.totalorder %s28, 0
      %p121 = por %p119, %p120
      %s122 = ssub.s32 %s29, %s41
      %p123 = scmp.eq.s32.totalorder %s122, 0
      %s125 = sadd.s32 %s124, 1
      %s126 = scalar_select %p123, %s124, %s125
      %p129 = pneg %p123
      %p130 = scmp.eq.s32.totalorder %s22, 1
      %p131 = por %p129, %p130
      %p132 = scmp.ne.s32.totalorder %s124, %s127
      %p133 = scmp.eq.s32.totalorder %s22, 0
      %p134 = por %p132, %p133
      %p135 = scmp.ne.s32.totalorder %s124, %s127
      %p136 = scmp.eq.s32.totalorder %s27, 1
      %p137 = por %p135, %p136
      %p138 = scmp.ne.s32.totalorder %s127, %s128
      %p139 = scmp.eq.s32.totalorder %s27, 0
      %p140 = por %p138, %p139
      %p141 = scmp.ne.s32.totalorder %s127, %s128
      %p142 = scmp.eq.s32.totalorder %s28, 1
      %p143 = por %p141, %p142
      %p145 = scmp.ne.s32.totalorder %s128, %s144
      %p146 = scmp.eq.s32.totalorder %s28, 0
      %p147 = por %p145, %p146
      %s148 = ssub.s32 %s29, %s41
      %s149 = ssub.s32 %s30, %s37
      %s150 = sor.u32 %s148, %s149
      %p151 = scmp.eq.s32.totalorder %s150, 0
      %s153 = sadd.s32 %s152, 1
      %s154 = scalar_select %p151, %s152, %s153
      %p157 = pneg %p151
      %p158 = scmp.eq.s32.totalorder %s22, 1
      %p159 = por %p157, %p158
      %p160 = scmp.ne.s32.totalorder %s152, %s155
      %p161 = scmp.eq.s32.totalorder %s22, 0
      %p162 = por %p160, %p161
      %p163 = scmp.ne.s32.totalorder %s152, %s155
      %p164 = scmp.eq.s32.totalorder %s27, 1
      %p165 = por %p163, %p164
      %p166 = scmp.ne.s32.totalorder %s155, %s156
      %p167 = scmp.eq.s32.totalorder %s27, 0
      %p168 = por %p166, %p167
      %p169 = scmp.ne.s32.totalorder %s155, %s156
      %p170 = scmp.eq.s32.totalorder %s28, 1
      %p171 = por %p169, %p170
      %p173 = scmp.ne.s32.totalorder %s156, %s172
      %p174 = scmp.eq.s32.totalorder %s28, 0
      %p175 = por %p173, %p174
      %p176 = scmp.le.s32.totalorder 1, %s22
      %p177 = scmp.lt.s32.totalorder %s22, 3
      %p178 = pnand %p176, %p177
      %p179 = pneg %p178
      // Predicated region
      $region9: #{mechanism_transformer_forward.22} parent=5 // pred_check
        _
      $region10: #{mechanism_transformer_forward.22} parent=5 // pred_check_branch
        %181 = sbr.rel (%p178) target = $region12
      $region11: #{mechanism_transformer_forward.22} parent=5 // pred_region
        %s182 = ssub.s32 %s22, 1
      $region12: #{mechanism_transformer_forward.22} parent=5 // pred_fallthru
        _
      %p183 = scmp.lt.s32.totalorder %s22, 2
      // Predicated region
      $region13: #{mechanism_transformer_forward.22} parent=5 // pred_check
        %p184 = pneg %p183
      $region14: #{mechanism_transformer_forward.22} parent=5 // pred_check_branch
        %186 = sbr.rel (%p184) target = $region16
      $region15: #{mechanism_transformer_forward.22} parent=5 // pred_region
        // Predicated region
        $region17: #{mechanism_transformer_forward.22} parent=15 // pred_check
          %p187 = pneg %p56
        $region18: #{mechanism_transformer_forward.22} parent=15 // pred_check_branch
          %189 = sbr.rel (%p187) target = $region20
        $region19: #{mechanism_transformer_forward.22} parent=15 // pred_region
          %s190 = sand.u32 %s46, 1
          %s191 = scalar_lea.sflag [#allocation3], %s190
          %s192 = sand.u32 %s46, 1
          %s193 = smul.addr %s192, 8
          %s194 = scalar_lea.vmem [#allocation2], %s193
          %s196 = ssub.s32 128, 128
          %197 = vsyncadd %s191, %s196
          %s198 = sadd.s32 %s30, %s29
          %s199 = smul.addr %s198, 128
          %s200 = scalar_lea.hbm %s0, %s199
          %s202 = sshll.u32 %s194, 4
          %s203 = int_to_ptr.vmem [resolvable:$true] %s202
          %205 = dma.hbm_to_vmem [thread:$0]  %s200, 128, %s203, %s191
        $region20: #{mechanism_transformer_forward.22} parent=15 // pred_fallthru
          _
        // Predicated region
        $region21: #{mechanism_transformer_forward.22} parent=15 // pred_check
          %p206 = pneg %p82
        $region22: #{mechanism_transformer_forward.22} parent=15 // pred_check_branch
          %208 = sbr.rel (%p206) target = $region24
        $region23: #{mechanism_transformer_forward.22} parent=15 // pred_region
          %s209 = sand.u32 %s22, 1
          %s210 = scalar_lea.sflag [#allocation6], %s209
          %s211 = sand.u32 %s72, 1
          %s212 = smul.addr %s211, 8
          %s213 = scalar_lea.vmem [#allocation5], %s212
          %s215 = ssub.s32 128, 128
          %216 = vsyncadd %s210, %s215
          %s217 = smul.addr %s29, 128
          %s218 = scalar_lea.hbm %s1, %s217
          %s220 = sshll.u32 %s213, 4
          %s221 = int_to_ptr.vmem [resolvable:$true] %s220
          %223 = dma.hbm_to_vmem [thread:$0]  %s218, 128, %s221, %s210
        $region24: #{mechanism_transformer_forward.22} parent=15 // pred_fallthru
          _
        // Predicated region
        $region25: #{mechanism_transformer_forward.22} parent=15 // pred_check
          %p224 = pneg %p108
        $region26: #{mechanism_transformer_forward.22} parent=15 // pred_check_branch
          %226 = sbr.rel (%p224) target = $region28
        $region27: #{mechanism_transformer_forward.22} parent=15 // pred_region
          %s227 = sand.u32 %s22, 1
          %s228 = scalar_lea.sflag [#allocation6], %s227
          %s229 = sand.u32 %s98, 1
          %s230 = smul.addr %s229, 8
          %s231 = scalar_lea.vmem [#allocation7], %s230
          %s233 = ssub.s32 128, 128
          %234 = vsyncadd %s228, %s233
          %s235 = smul.addr %s29, 128
          %s236 = scalar_lea.hbm %s2, %s235
          %s238 = sshll.u32 %s231, 4
          %s239 = int_to_ptr.vmem [resolvable:$true] %s238
          %241 = dma.hbm_to_vmem [thread:$0]  %s236, 128, %s239, %s228
        $region28: #{mechanism_transformer_forward.22} parent=15 // pred_fallthru
          _
        // Predicated region
        $region29: #{mechanism_transformer_forward.22} parent=15 // pred_check
          %p242 = pneg %p134
        $region30: #{mechanism_transformer_forward.22} parent=15 // pred_check_branch
          %244 = sbr.rel (%p242) target = $region32
        $region31: #{mechanism_transformer_forward.22} parent=15 // pred_region
          %s245 = sand.u32 %s124, 1
          %s246 = scalar_lea.sflag [#allocation9], %s245
          %s247 = sand.u32 %s124, 1
          %s248 = scalar_lea.vmem [#allocation8], %s247
          %s250 = ssub.s32 16, 16
          %251 = vsyncadd %s246, %s250
          %s252 = smul.addr %s29, 16
          %s253 = scalar_lea.hbm %s3, %s252
          %s255 = sshll.u32 %s248, 4
          %s256 = int_to_ptr.vmem [resolvable:$true] %s255
          %258 = dma.hbm_to_vmem [thread:$0]  %s253, 16, %s256, %s246
        $region32: #{mechanism_transformer_forward.22} parent=15 // pred_fallthru
          _
      $region16: #{mechanism_transformer_forward.22} parent=5 // pred_fallthru
        _
      %p259 = scmp.le.s32.totalorder 1, %s22
      %p260 = scmp.lt.s32.totalorder %s22, 3
      %p261 = pnand %p259, %p260
      %p262 = pneg %p261
      // Predicated region
      $region33: #{mechanism_transformer_forward.22} parent=5 // pred_check
        _
      $region34: #{mechanism_transformer_forward.22} parent=5 // pred_check_branch
        %264 = sbr.rel (%p261) target = $region36
      $region35: #{mechanism_transformer_forward.22} parent=5 // pred_region
        %s265 = ssub.s32 %s22, 1
        %s266 = sand.u32 %s49, 1
        %s267 = scalar_lea.sflag [#allocation3], %s266
        %s268 = sand.u32 %s49, 1
        %s269 = smul.addr %s268, 8
        %s270 = scalar_lea.vmem [#allocation2], %s269
        // Predicated region
        $region37: #{mechanism_transformer_forward.22} parent=35 // pred_check
          %p271 = pneg %p62
        $region38: #{mechanism_transformer_forward.22} parent=35 // pred_check_branch
          %273 = sbr.rel (%p271) target = $region40
        $region39: #{mechanism_transformer_forward.22} parent=35 // pred_region
          %274 = dma.done %s267, 128
        $region40: #{mechanism_transformer_forward.22} parent=35 // pred_fallthru
          _
        %s275 = sand.u32 %s27, 1
        %s276 = scalar_lea.sflag [#allocation6], %s275
        %s277 = sand.u32 %s75, 1
        %s278 = smul.addr %s277, 8
        %s279 = scalar_lea.vmem [#allocation5], %s278
        // Predicated region
        $region41: #{mechanism_transformer_forward.22} parent=35 // pred_check
          %p280 = pneg %p88
        $region42: #{mechanism_transformer_forward.22} parent=35 // pred_check_branch
          %282 = sbr.rel (%p280) target = $region44
        $region43: #{mechanism_transformer_forward.22} parent=35 // pred_region
          %283 = dma.done %s276, 128
        $region44: #{mechanism_transformer_forward.22} parent=35 // pred_fallthru
          _
        %s284 = sand.u32 %s27, 1
        %s285 = scalar_lea.sflag [#allocation6], %s284
        %s286 = sand.u32 %s101, 1
        %s287 = smul.addr %s286, 8
        %s288 = scalar_lea.vmem [#allocation7], %s287
        // Predicated region
        $region45: #{mechanism_transformer_forward.22} parent=35 // pred_check
          %p289 = pneg %p114
        $region46: #{mechanism_transformer_forward.22} parent=35 // pred_check_branch
          %291 = sbr.rel (%p289) target = $region48
        $region47: #{mechanism_transformer_forward.22} parent=35 // pred_region
          %292 = dma.done %s285, 128
        $region48: #{mechanism_transformer_forward.22} parent=35 // pred_fallthru
          _
        %s293 = sand.u32 %s127, 1
        %s294 = scalar_lea.sflag [#allocation9], %s293
        %s295 = sand.u32 %s127, 1
        %s296 = scalar_lea.vmem [#allocation8], %s295
        // Predicated region
        $region49: #{mechanism_transformer_forward.22} parent=35 // pred_check
          %p297 = pneg %p140
        $region50: #{mechanism_transformer_forward.22} parent=35 // pred_check_branch
          %299 = sbr.rel (%p297) target = $region52
        $region51: #{mechanism_transformer_forward.22} parent=35 // pred_region
          %300 = dma.done %s294, 16
        $region52: #{mechanism_transformer_forward.22} parent=35 // pred_fallthru
          _
        %s301 = sand.u32 %s49, 1
        %s302 = scalar_lea.sflag [#allocation3], %s301
        %s303 = sand.u32 %s49, 1
        %s304 = smul.addr %s303, 8
        %s305 = scalar_lea.vmem [#allocation2], %s304
        %p306 = pneg %p62
        %p307 = pneg %p59
        %s308 = sand.u32 %s27, 1
        %s309 = scalar_lea.sflag [#allocation6], %s308
        %s310 = sand.u32 %s75, 1
        %s311 = smul.addr %s310, 8
        %s312 = scalar_lea.vmem [#allocation5], %s311
        %p313 = pneg %p88
        %p314 = pneg %p85
        %s315 = sand.u32 %s27, 1
        %s316 = scalar_lea.sflag [#allocation6], %s315
        %s317 = sand.u32 %s101, 1
        %s318 = smul.addr %s317, 8
        %s319 = scalar_lea.vmem [#allocation7], %s318
        %p320 = pneg %p114
        %p321 = pneg %p111
        %s322 = sand.u32 %s127, 1
        %s323 = scalar_lea.sflag [#allocation9], %s322
        %s324 = sand.u32 %s127, 1
        %s325 = scalar_lea.vmem [#allocation8], %s324
        %p326 = pneg %p140
        %p327 = pneg %p137
        %p328 = pneg %p168
        %p329 = pneg %p165
        %s330 = sand.u32 %s155, 1
        %s331 = scalar_lea.sflag [#allocation4], %s330
        %s332 = sand.u32 %s155, 1
        %s333 = smul.addr %s332, 8
        %s334 = scalar_lea.vmem [#allocation10], %s333
        %v335 = vld [vmem:[%s270] sm:$0xff]
        %v336 = vld [vmem:[%s279] sm:$0xff]
        %v337 = vld [vmem:[%s288] sm:$0xff]
        %v338 = vld [vmem:[%s296] sm:$0x1]
        %vm339 = vcmask 64512
        %v341 = vsel %vm339, %v335, 0
        %v344 = vsel %vm339, %v336, 0
        %346 = vmatprep.subr.mxu0 0.0
        %v347 = vand.u32 %v344, 4294901760
        %348 = vmatpush1.xpose.msra.mxu0 %v347
        %349 = vmatprep.subr.mxu0 0.0
        %350 = vmatpush1.xpose.msra.mxu0 0.0
        %351 = vmatprep.subr.mxu0 0.0
        %352 = vmatpush1.xpose.msra.mxu0 0.0
        %353 = vmatprep.subr.mxu0 0.0
        %354 = vmatpush1.xpose.msra.mxu0 0.0
        %355 = vmatprep.subr.mxu0 0.0
        %356 = vmatpush1.xpose.msra.mxu0 0.0
        %357 = vmatprep.subr.mxu0 0.0
        %358 = vmatpush1.xpose.msra.mxu0 0.0
        %359 = vmatprep.subr.mxu0 0.0
        %360 = vmatpush1.xpose.msra.mxu0 0.0
        %361 = vmatprep.subr.mxu0 0.0
        %362 = vmatpush1.xpose.msra.mxu0 0.0
        %363 = vmatprep.subr.mxu0 0.0
        %364 = vmatpush1.xpose.msra.mxu0 0.0
        %365 = vmatprep.subr.mxu0 0.0
        %366 = vmatpush1.xpose.msra.mxu0 0.0
        %367 = vmatprep.subr.mxu0 0.0
        %368 = vmatpush1.xpose.msra.mxu0 0.0
        %369 = vmatprep.subr.mxu0 0.0
        %370 = vmatpush1.xpose.msra.mxu0 0.0
        %371 = vmatprep.subr.mxu0 0.0
        %372 = vmatpush1.xpose.msra.mxu0 0.0
        %373 = vmatprep.subr.mxu0 0.0
        %374 = vmatpush1.xpose.msra.mxu0 0.0
        %375 = vmatprep.subr.mxu0 0.0
        %376 = vmatpush1.xpose.msra.mxu0 0.0
        %377 = vmatprep.subr.mxu0 0.0
        %378 = vmatpush1.xpose.msra.mxu0 0.0
        %379 = vmatprep.subr.mxu0 0.0
        %380 = vmatpush1.xpose.msra.mxu0 0.0
        %381 = vmatprep.subr.mxu0 0.0
        %382 = vmatpush1.xpose.msra.mxu0 0.0
        %383 = vmatprep.subr.mxu0 0.0
        %384 = vmatpush1.xpose.msra.mxu0 0.0
        %385 = vmatprep.subr.mxu0 0.0
        %386 = vmatpush1.xpose.msra.mxu0 0.0
        %387 = vmatprep.subr.mxu0 0.0
        %388 = vmatpush1.xpose.msra.mxu0 0.0
        %389 = vmatprep.subr.mxu0 0.0
        %390 = vmatpush1.xpose.msra.mxu0 0.0
        %391 = vmatprep.subr.mxu0 0.0
        %392 = vmatpush1.xpose.msra.mxu0 0.0
        %393 = vmatprep.subr.mxu0 0.0
        %394 = vmatpush1.xpose.msra.mxu0 0.0
        %395 = vmatprep.subr.mxu0 0.0
        %396 = vmatpush1.xpose.msra.mxu0 0.0
        %397 = vmatprep.subr.mxu0 0.0
        %398 = vmatpush1.xpose.msra.mxu0 0.0
        %399 = vmatprep.subr.mxu0 0.0
        %400 = vmatpush1.xpose.msra.mxu0 0.0
        %401 = vmatprep.subr.mxu0 0.0
        %402 = vmatpush1.xpose.msra.mxu0 0.0
        %403 = vmatprep.subr.mxu0 0.0
        %404 = vmatpush1.xpose.msra.mxu0 0.0
        %405 = vmatprep.subr.mxu0 0.0
        %406 = vmatpush1.xpose.msra.mxu0 0.0
        %407 = vmatprep.subr.mxu0 0.0
        %408 = vmatpush1.xpose.msra.mxu0 0.0
        %409 = vmatprep.subr.mxu0 0.0
        %410 = vmatpush1.xpose.msra.mxu0 0.0
        %411 = vmatprep.mubr.f32.mxu0 0.0
        %v412 = vand.u32 %v341, 4294901760
        %v413 = vsub.f32 %v341, %v412
        %v414 = vand.u32 %v413, 4294901760
        %v415 = vsub.f32 %v413, %v414
        %v416 = vand.u32 %v415, 4294901760
        %417 = vmatmul.mubr.f32.gmra.mrb[0].mxu0 %v416
        %v418 = vpop.f32.mrb[0].mxu0
        %v419 = vadd.f32 0.0, %v418
        %v420 = vpop.f32.mrb[0].mxu0
        %421 = vdwg.mxu0
        %422 = vmatprep.subr.mxu0 0.0
        %v423 = vand.u32 %v344, 4294901760
        %v424 = vsub.f32 %v344, %v423
        %v425 = vand.u32 %v424, 4294901760
        %v426 = vsub.f32 %v424, %v425
        %v427 = vand.u32 %v426, 4294901760
        %428 = vmatpush1.xpose.msra.mxu0 %v427
        %429 = vmatprep.subr.mxu0 0.0
        %430 = vmatpush1.xpose.msra.mxu0 0.0
        %431 = vmatprep.subr.mxu0 0.0
        %432 = vmatpush1.xpose.msra.mxu0 0.0
        %433 = vmatprep.subr.mxu0 0.0
        %434 = vmatpush1.xpose.msra.mxu0 0.0
        %435 = vmatprep.subr.mxu0 0.0
        %436 = vmatpush1.xpose.msra.mxu0 0.0
        %437 = vmatprep.subr.mxu0 0.0
        %438 = vmatpush1.xpose.msra.mxu0 0.0
        %439 = vmatprep.subr.mxu0 0.0
        %440 = vmatpush1.xpose.msra.mxu0 0.0
        %441 = vmatprep.subr.mxu0 0.0
        %442 = vmatpush1.xpose.msra.mxu0 0.0
        %443 = vmatprep.subr.mxu0 0.0
        %444 = vmatpush1.xpose.msra.mxu0 0.0
        %445 = vmatprep.subr.mxu0 0.0
        %446 = vmatpush1.xpose.msra.mxu0 0.0
        %447 = vmatprep.subr.mxu0 0.0
        %448 = vmatpush1.xpose.msra.mxu0 0.0
        %449 = vmatprep.subr.mxu0 0.0
        %450 = vmatpush1.xpose.msra.mxu0 0.0
        %451 = vmatprep.subr.mxu0 0.0
        %452 = vmatpush1.xpose.msra.mxu0 0.0
        %453 = vmatprep.subr.mxu0 0.0
        %454 = vmatpush1.xpose.msra.mxu0 0.0
        %455 = vmatprep.subr.mxu0 0.0
        %456 = vmatpush1.xpose.msra.mxu0 0.0
        %457 = vmatprep.subr.mxu0 0.0
        %458 = vmatpush1.xpose.msra.mxu0 0.0
        %459 = vmatprep.subr.mxu0 0.0
        %460 = vmatpush1.xpose.msra.mxu0 0.0
        %461 = vmatprep.subr.mxu0 0.0
        %462 = vmatpush1.xpose.msra.mxu0 0.0
        %463 = vmatprep.subr.mxu0 0.0
        %464 = vmatpush1.xpose.msra.mxu0 0.0
        %465 = vmatprep.subr.mxu0 0.0
        %466 = vmatpush1.xpose.msra.mxu0 0.0
        %467 = vmatprep.subr.mxu0 0.0
        %468 = vmatpush1.xpose.msra.mxu0 0.0
        %469 = vmatprep.subr.mxu0 0.0
        %470 = vmatpush1.xpose.msra.mxu0 0.0
        %471 = vmatprep.subr.mxu0 0.0
        %472 = vmatpush1.xpose.msra.mxu0 0.0
        %473 = vmatprep.subr.mxu0 0.0
        %474 = vmatpush1.xpose.msra.mxu0 0.0
        %475 = vmatprep.subr.mxu0 0.0
        %476 = vmatpush1.xpose.msra.mxu0 0.0
        %477 = vmatprep.subr.mxu0 0.0
        %478 = vmatpush1.xpose.msra.mxu0 0.0
        %479 = vmatprep.subr.mxu0 0.0
        %480 = vmatpush1.xpose.msra.mxu0 0.0
        %481 = vmatprep.subr.mxu0 0.0
        %482 = vmatpush1.xpose.msra.mxu0 0.0
        %483 = vmatprep.subr.mxu0 0.0
        %484 = vmatpush1.xpose.msra.mxu0 0.0
        %485 = vmatprep.subr.mxu0 0.0
        %486 = vmatpush1.xpose.msra.mxu0 0.0
        %487 = vmatprep.subr.mxu0 0.0
        %488 = vmatpush1.xpose.msra.mxu0 0.0
        %489 = vmatprep.subr.mxu0 0.0
        %490 = vmatpush1.xpose.msra.mxu0 0.0
        %491 = vmatprep.mubr.f32.mxu0 0.0
        %v492 = vand.u32 %v341, 4294901760
        %493 = vmatmul.mubr.f32.gmra.mrb[0].mxu0 %v492
        %v494 = vpop.f32.mrb[0].mxu0
        %v495 = vadd.f32 %v419, %v494
        %v496 = vpop.f32.mrb[0].mxu0
        %497 = vdwg.mxu0
        %498 = vmatprep.subr.mxu0 0.0
        %v499 = vand.u32 %v344, 4294901760
        %v500 = vsub.f32 %v344, %v499
        %501 = vmatpush1.xpose.msra.mxu0 %v500
        %502 = vmatprep.subr.mxu0 0.0
        %503 = vmatpush1.xpose.msra.mxu0 0.0
        %504 = vmatprep.subr.mxu0 0.0
        %505 = vmatpush1.xpose.msra.mxu0 0.0
        %506 = vmatprep.subr.mxu0 0.0
        %507 = vmatpush1.xpose.msra.mxu0 0.0
        %508 = vmatprep.subr.mxu0 0.0
        %509 = vmatpush1.xpose.msra.mxu0 0.0
        %510 = vmatprep.subr.mxu0 0.0
        %511 = vmatpush1.xpose.msra.mxu0 0.0
        %512 = vmatprep.subr.mxu0 0.0
        %513 = vmatpush1.xpose.msra.mxu0 0.0
        %514 = vmatprep.subr.mxu0 0.0
        %515 = vmatpush1.xpose.msra.mxu0 0.0
        %516 = vmatprep.subr.mxu0 0.0
        %517 = vmatpush1.xpose.msra.mxu0 0.0
        %518 = vmatprep.subr.mxu0 0.0
        %519 = vmatpush1.xpose.msra.mxu0 0.0
        %520 = vmatprep.subr.mxu0 0.0
        %521 = vmatpush1.xpose.msra.mxu0 0.0
        %522 = vmatprep.subr.mxu0 0.0
        %523 = vmatpush1.xpose.msra.mxu0 0.0
        %524 = vmatprep.subr.mxu0 0.0
        %525 = vmatpush1.xpose.msra.mxu0 0.0
        %526 = vmatprep.subr.mxu0 0.0
        %527 = vmatpush1.xpose.msra.mxu0 0.0
        %528 = vmatprep.subr.mxu0 0.0
        %529 = vmatpush1.xpose.msra.mxu0 0.0
        %530 = vmatprep.subr.mxu0 0.0
        %531 = vmatpush1.xpose.msra.mxu0 0.0
        %532 = vmatprep.subr.mxu0 0.0
        %533 = vmatpush1.xpose.msra.mxu0 0.0
        %534 = vmatprep.subr.mxu0 0.0
        %535 = vmatpush1.xpose.msra.mxu0 0.0
        %536 = vmatprep.subr.mxu0 0.0
        %537 = vmatpush1.xpose.msra.mxu0 0.0
        %538 = vmatprep.subr.mxu0 0.0
        %539 = vmatpush1.xpose.msra.mxu0 0.0
        %540 = vmatprep.subr.mxu0 0.0
        %541 = vmatpush1.xpose.msra.mxu0 0.0
        %542 = vmatprep.subr.mxu0 0.0
        %543 = vmatpush1.xpose.msra.mxu0 0.0
        %544 = vmatprep.subr.mxu0 0.0
        %545 = vmatpush1.xpose.msra.mxu0 0.0
        %546 = vmatprep.subr.mxu0 0.0
        %547 = vmatpush1.xpose.msra.mxu0 0.0
        %548 = vmatprep.subr.mxu0 0.0
        %549 = vmatpush1.xpose.msra.mxu0 0.0
        %550 = vmatprep.subr.mxu0 0.0
        %551 = vmatpush1.xpose.msra.mxu0 0.0
        %552 = vmatprep.subr.mxu0 0.0
        %553 = vmatpush1.xpose.msra.mxu0 0.0
        %554 = vmatprep.subr.mxu0 0.0
        %555 = vmatpush1.xpose.msra.mxu0 0.0
        %556 = vmatprep.subr.mxu0 0.0
        %557 = vmatpush1.xpose.msra.mxu0 0.0
        %558 = vmatprep.subr.mxu0 0.0
        %559 = vmatpush1.xpose.msra.mxu0 0.0
        %560 = vmatprep.subr.mxu0 0.0
        %561 = vmatpush1.xpose.msra.mxu0 0.0
        %562 = vmatprep.subr.mxu0 0.0
        %563 = vmatpush1.xpose.msra.mxu0 0.0
        %564 = vmatprep.mubr.f32.mxu0 0.0
        %v565 = vand.u32 %v341, 4294901760
        %v566 = vsub.f32 %v341, %v565
        %567 = vmatmul.mubr.f32.gmra.mrb[0].mxu0 %v566
        %v568 = vpop.f32.mrb[0].mxu0
        %v569 = vadd.f32 %v495, %v568
        %v570 = vpop.f32.mrb[0].mxu0
        %571 = vdwg.mxu0
        %572 = vmatprep.subr.mxu0 0.0
        %v573 = vand.u32 %v344, 4294901760
        %574 = vmatpush1.xpose.msra.mxu0 %v573
        %575 = vmatprep.subr.mxu0 0.0
        %576 = vmatpush1.xpose.msra.mxu0 0.0
        %577 = vmatprep.subr.mxu0 0.0
        %578 = vmatpush1.xpose.msra.mxu0 0.0
        %579 = vmatprep.subr.mxu0 0.0
        %580 = vmatpush1.xpose.msra.mxu0 0.0
        %581 = vmatprep.subr.mxu0 0.0
        %582 = vmatpush1.xpose.msra.mxu0 0.0
        %583 = vmatprep.subr.mxu0 0.0
        %584 = vmatpush1.xpose.msra.mxu0 0.0
        %585 = vmatprep.subr.mxu0 0.0
        %586 = vmatpush1.xpose.msra.mxu0 0.0
        %587 = vmatprep.subr.mxu0 0.0
        %588 = vmatpush1.xpose.msra.mxu0 0.0
        %589 = vmatprep.subr.mxu0 0.0
        %590 = vmatpush1.xpose.msra.mxu0 0.0
        %591 = vmatprep.subr.mxu0 0.0
        %592 = vmatpush1.xpose.msra.mxu0 0.0
        %593 = vmatprep.subr.mxu0 0.0
        %594 = vmatpush1.xpose.msra.mxu0 0.0
        %595 = vmatprep.subr.mxu0 0.0
        %596 = vmatpush1.xpose.msra.mxu0 0.0
        %597 = vmatprep.subr.mxu0 0.0
        %598 = vmatpush1.xpose.msra.mxu0 0.0
        %599 = vmatprep.subr.mxu0 0.0
        %600 = vmatpush1.xpose.msra.mxu0 0.0
        %601 = vmatprep.subr.mxu0 0.0
        %602 = vmatpush1.xpose.msra.mxu0 0.0
        %603 = vmatprep.subr.mxu0 0.0
        %604 = vmatpush1.xpose.msra.mxu0 0.0
        %605 = vmatprep.subr.mxu0 0.0
        %606 = vmatpush1.xpose.msra.mxu0 0.0
        %607 = vmatprep.subr.mxu0 0.0
        %608 = vmatpush1.xpose.msra.mxu0 0.0
        %609 = vmatprep.subr.mxu0 0.0
        %610 = vmatpush1.xpose.msra.mxu0 0.0
        %611 = vmatprep.subr.mxu0 0.0
        %612 = vmatpush1.xpose.msra.mxu0 0.0
        %613 = vmatprep.subr.mxu0 0.0
        %614 = vmatpush1.xpose.msra.mxu0 0.0
        %615 = vmatprep.subr.mxu0 0.0
        %616 = vmatpush1.xpose.msra.mxu0 0.0
        %617 = vmatprep.subr.mxu0 0.0
        %618 = vmatpush1.xpose.msra.mxu0 0.0
        %619 = vmatprep.subr.mxu0 0.0
        %620 = vmatpush1.xpose.msra.mxu0 0.0
        %621 = vmatprep.subr.mxu0 0.0
        %622 = vmatpush1.xpose.msra.mxu0 0.0
        %623 = vmatprep.subr.mxu0 0.0
        %624 = vmatpush1.xpose.msra.mxu0 0.0
        %625 = vmatprep.subr.mxu0 0.0
        %626 = vmatpush1.xpose.msra.mxu0 0.0
        %627 = vmatprep.subr.mxu0 0.0
        %628 = vmatpush1.xpose.msra.mxu0 0.0
        %629 = vmatprep.subr.mxu0 0.0
        %630 = vmatpush1.xpose.msra.mxu0 0.0
        %631 = vmatprep.subr.mxu0 0.0
        %632 = vmatpush1.xpose.msra.mxu0 0.0
        %633 = vmatprep.subr.mxu0 0.0
        %634 = vmatpush1.xpose.msra.mxu0 0.0
        %635 = vmatprep.subr.mxu0 0.0
        %636 = vmatpush1.xpose.msra.mxu0 0.0
        %637 = vmatprep.mubr.f32.mxu0 0.0
        %v638 = vand.u32 %v341, 4294901760
        %v639 = vsub.f32 %v341, %v638
        %v640 = vand.u32 %v639, 4294901760
        %641 = vmatmul.mubr.f32.gmra.mrb[0].mxu0 %v640
        %v642 = vpop.f32.mrb[0].mxu0
        %v643 = vadd.f32 %v569, %v642
        %v644 = vpop.f32.mrb[0].mxu0
        %645 = vdwg.mxu0
        %646 = vmatprep.subr.mxu0 0.0
        %v647 = vand.u32 %v344, 4294901760
        %v648 = vsub.f32 %v344, %v647
        %v649 = vand.u32 %v648, 4294901760
        %650 = vmatpush1.xpose.msra.mxu0 %v649
        %651 = vmatprep.subr.mxu0 0.0
        %652 = vmatpush1.xpose.msra.mxu0 0.0
        %653 = vmatprep.subr.mxu0 0.0
        %654 = vmatpush1.xpose.msra.mxu0 0.0
        %655 = vmatprep.subr.mxu0 0.0
        %656 = vmatpush1.xpose.msra.mxu0 0.0
        %657 = vmatprep.subr.mxu0 0.0
        %658 = vmatpush1.xpose.msra.mxu0 0.0
        %659 = vmatprep.subr.mxu0 0.0
        %660 = vmatpush1.xpose.msra.mxu0 0.0
        %661 = vmatprep.subr.mxu0 0.0
        %662 = vmatpush1.xpose.msra.mxu0 0.0
        %663 = vmatprep.subr.mxu0 0.0
        %664 = vmatpush1.xpose.msra.mxu0 0.0
        %665 = vmatprep.subr.mxu0 0.0
        %666 = vmatpush1.xpose.msra.mxu0 0.0
        %667 = vmatprep.subr.mxu0 0.0
        %668 = vmatpush1.xpose.msra.mxu0 0.0
        %669 = vmatprep.subr.mxu0 0.0
        %670 = vmatpush1.xpose.msra.mxu0 0.0
        %671 = vmatprep.subr.mxu0 0.0
        %672 = vmatpush1.xpose.msra.mxu0 0.0
        %673 = vmatprep.subr.mxu0 0.0
        %674 = vmatpush1.xpose.msra.mxu0 0.0
        %675 = vmatprep.subr.mxu0 0.0
        %676 = vmatpush1.xpose.msra.mxu0 0.0
        %677 = vmatprep.subr.mxu0 0.0
        %678 = vmatpush1.xpose.msra.mxu0 0.0
        %679 = vmatprep.subr.mxu0 0.0
        %680 = vmatpush1.xpose.msra.mxu0 0.0
        %681 = vmatprep.subr.mxu0 0.0
        %682 = vmatpush1.xpose.msra.mxu0 0.0
        %683 = vmatprep.subr.mxu0 0.0
        %684 = vmatpush1.xpose.msra.mxu0 0.0
        %685 = vmatprep.subr.mxu0 0.0
        %686 = vmatpush1.xpose.msra.mxu0 0.0
        %687 = vmatprep.subr.mxu0 0.0
        %688 = vmatpush1.xpose.msra.mxu0 0.0
        %689 = vmatprep.subr.mxu0 0.0
        %690 = vmatpush1.xpose.msra.mxu0 0.0
        %691 = vmatprep.subr.mxu0 0.0
        %692 = vmatpush1.xpose.msra.mxu0 0.0
        %693 = vmatprep.subr.mxu0 0.0
        %694 = vmatpush1.xpose.msra.mxu0 0.0
        %695 = vmatprep.subr.mxu0 0.0
        %696 = vmatpush1.xpose.msra.mxu0 0.0
        %697 = vmatprep.subr.mxu0 0.0
        %698 = vmatpush1.xpose.msra.mxu0 0.0
        %699 = vmatprep.subr.mxu0 0.0
        %700 = vmatpush1.xpose.msra.mxu0 0.0
        %701 = vmatprep.subr.mxu0 0.0
        %702 = vmatpush1.xpose.msra.mxu0 0.0
        %703 = vmatprep.subr.mxu0 0.0
        %704 = vmatpush1.xpose.msra.mxu0 0.0
        %705 = vmatprep.subr.mxu0 0.0
        %706 = vmatpush1.xpose.msra.mxu0 0.0
        %707 = vmatprep.subr.mxu0 0.0
        %708 = vmatpush1.xpose.msra.mxu0 0.0
        %709 = vmatprep.subr.mxu0 0.0
        %710 = vmatpush1.xpose.msra.mxu0 0.0
        %711 = vmatprep.subr.mxu0 0.0
        %712 = vmatpush1.xpose.msra.mxu0 0.0
        %713 = vmatprep.mubr.f32.mxu0 0.0
        %v714 = vand.u32 %v341, 4294901760
        %715 = vmatmul.mubr.f32.gmra.mrb[0].mxu0 %v714
        %v716 = vpop.f32.mrb[0].mxu0
        %v717 = vadd.f32 %v643, %v716
        %v718 = vpop.f32.mrb[0].mxu0
        %719 = vdwg.mxu0
        %720 = vmatprep.subr.mxu0 0.0
        %v721 = vand.u32 %v344, 4294901760
        %722 = vmatpush1.xpose.msra.mxu0 %v721
        %723 = vmatprep.subr.mxu0 0.0
        %724 = vmatpush1.xpose.msra.mxu0 0.0
        %725 = vmatprep.subr.mxu0 0.0
        %726 = vmatpush1.xpose.msra.mxu0 0.0
        %727 = vmatprep.subr.mxu0 0.0
        %728 = vmatpush1.xpose.msra.mxu0 0.0
        %729 = vmatprep.subr.mxu0 0.0
        %730 = vmatpush1.xpose.msra.mxu0 0.0
        %731 = vmatprep.subr.mxu0 0.0
        %732 = vmatpush1.xpose.msra.mxu0 0.0
        %733 = vmatprep.subr.mxu0 0.0
        %734 = vmatpush1.xpose.msra.mxu0 0.0
        %735 = vmatprep.subr.mxu0 0.0
        %736 = vmatpush1.xpose.msra.mxu0 0.0
        %737 = vmatprep.subr.mxu0 0.0
        %738 = vmatpush1.xpose.msra.mxu0 0.0
        %739 = vmatprep.subr.mxu0 0.0
        %740 = vmatpush1.xpose.msra.mxu0 0.0
        %741 = vmatprep.subr.mxu0 0.0
        %742 = vmatpush1.xpose.msra.mxu0 0.0
        %743 = vmatprep.subr.mxu0 0.0
        %744 = vmatpush1.xpose.msra.mxu0 0.0
        %745 = vmatprep.subr.mxu0 0.0
        %746 = vmatpush1.xpose.msra.mxu0 0.0
        %747 = vmatprep.subr.mxu0 0.0
        %748 = vmatpush1.xpose.msra.mxu0 0.0
        %749 = vmatprep.subr.mxu0 0.0
        %750 = vmatpush1.xpose.msra.mxu0 0.0
        %751 = vmatprep.subr.mxu0 0.0
        %752 = vmatpush1.xpose.msra.mxu0 0.0
        %753 = vmatprep.subr.mxu0 0.0
        %754 = vmatpush1.xpose.msra.mxu0 0.0
        %755 = vmatprep.subr.mxu0 0.0
        %756 = vmatpush1.xpose.msra.mxu0 0.0
        %757 = vmatprep.subr.mxu0 0.0
        %758 = vmatpush1.xpose.msra.mxu0 0.0
        %759 = vmatprep.subr.mxu0 0.0
        %760 = vmatpush1.xpose.msra.mxu0 0.0
        %761 = vmatprep.subr.mxu0 0.0
        %762 = vmatpush1.xpose.msra.mxu0 0.0
        %763 = vmatprep.subr.mxu0 0.0
        %764 = vmatpush1.xpose.msra.mxu0 0.0
        %765 = vmatprep.subr.mxu0 0.0
        %766 = vmatpush1.xpose.msra.mxu0 0.0
        %767 = vmatprep.subr.mxu0 0.0
        %768 = vmatpush1.xpose.msra.mxu0 0.0
        %769 = vmatprep.subr.mxu0 0.0
        %770 = vmatpush1.xpose.msra.mxu0 0.0
        %771 = vmatprep.subr.mxu0 0.0
        %772 = vmatpush1.xpose.msra.mxu0 0.0
        %773 = vmatprep.subr.mxu0 0.0
        %774 = vmatpush1.xpose.msra.mxu0 0.0
        %775 = vmatprep.subr.mxu0 0.0
        %776 = vmatpush1.xpose.msra.mxu0 0.0
        %777 = vmatprep.subr.mxu0 0.0
        %778 = vmatpush1.xpose.msra.mxu0 0.0
        %779 = vmatprep.subr.mxu0 0.0
        %780 = vmatpush1.xpose.msra.mxu0 0.0
        %781 = vmatprep.subr.mxu0 0.0
        %782 = vmatpush1.xpose.msra.mxu0 0.0
        %783 = vmatprep.subr.mxu0 0.0
        %784 = vmatpush1.xpose.msra.mxu0 0.0
        %785 = vmatprep.mubr.f32.mxu0 0.0
        %v786 = vand.u32 %v341, 4294901760
        %787 = vmatmul.mubr.f32.gmra.mrb[0].mxu0 %v786
        %v788 = vpop.f32.mrb[0].mxu0
        %v789 = vadd.f32 %v717, %v788
        %v790 = vpop.f32.mrb[0].mxu0
        %791 = vdwg.mxu0
        %v792 = vmul.f32 %v789, 0.35355338
        %v793 = vadd.f32 %v338, 1.0
        %v795 = vlaneseq
        %v796 = vshrl.u32 %v795, 7
        %v797 = vsub.s32 0, %v796
        %v798 = vrot.slane %v793, %v797
        %v800 = vmul.f32 %v792, %v798
        %v801 = vsel %vm339, %v800, -inf
        %802 = vmax.xlane.f32.xlu0 %v801
        %v803 = vpop.xlane.xlu0 %802
        %v804 = vsub.f32 %v800, %v803
        %v805 = vmul.f32 %v804, 1.442695
        %v806 = vpow.pop %v805
        %v807 = vsel %vm339, %v806, 0.0
        %808 = vadd.xlane.f32.xlu0 %v807
        %v809 = vpop.xlane.xlu0 %808
        %v810 = vrcp.pop %v809
        %v811 = vmul.f32 %v806, %v810
        %v813 = vsel %vm339, %v811, 0
        %815 = vmatprep.subr.mxu0 0.0
        %v816 = vand.u32 %v337, 4294901760
        %817 = vmatpush1.msra.mxu0 %v816
        %818 = vmatprep.subr.mxu0 0.0
        %819 = vmatpush1.msra.mxu0 0.0
        %820 = vmatprep.subr.mxu0 0.0
        %821 = vmatpush1.msra.mxu0 0.0
        %822 = vmatprep.subr.mxu0 0.0
        %823 = vmatpush1.msra.mxu0 0.0
        %824 = vmatprep.subr.mxu0 0.0
        %825 = vmatpush1.msra.mxu0 0.0
        %826 = vmatprep.subr.mxu0 0.0
        %827 = vmatpush1.msra.mxu0 0.0
        %828 = vmatprep.subr.mxu0 0.0
        %829 = vmatpush1.msra.mxu0 0.0
        %830 = vmatprep.subr.mxu0 0.0
        %831 = vmatpush1.msra.mxu0 0.0
        %832 = vmatprep.subr.mxu0 0.0
        %833 = vmatpush1.msra.mxu0 0.0
        %834 = vmatprep.subr.mxu0 0.0
        %835 = vmatpush1.msra.mxu0 0.0
        %836 = vmatprep.subr.mxu0 0.0
        %837 = vmatpush1.msra.mxu0 0.0
        %838 = vmatprep.subr.mxu0 0.0
        %839 = vmatpush1.msra.mxu0 0.0
        %840 = vmatprep.subr.mxu0 0.0
        %841 = vmatpush1.msra.mxu0 0.0
        %842 = vmatprep.subr.mxu0 0.0
        %843 = vmatpush1.msra.mxu0 0.0
        %844 = vmatprep.subr.mxu0 0.0
        %845 = vmatpush1.msra.mxu0 0.0
        %846 = vmatprep.subr.mxu0 0.0
        %847 = vmatpush1.msra.mxu0 0.0
        %848 = vmatprep.subr.mxu0 0.0
        %849 = vmatpush1.msra.mxu0 0.0
        %850 = vmatprep.subr.mxu0 0.0
        %851 = vmatpush1.msra.mxu0 0.0
        %852 = vmatprep.subr.mxu0 0.0
        %853 = vmatpush1.msra.mxu0 0.0
        %854 = vmatprep.subr.mxu0 0.0
        %855 = vmatpush1.msra.mxu0 0.0
        %856 = vmatprep.subr.mxu0 0.0
        %857 = vmatpush1.msra.mxu0 0.0
        %858 = vmatprep.subr.mxu0 0.0
        %859 = vmatpush1.msra.mxu0 0.0
        %860 = vmatprep.subr.mxu0 0.0
        %861 = vmatpush1.msra.mxu0 0.0
        %862 = vmatprep.subr.mxu0 0.0
        %863 = vmatpush1.msra.mxu0 0.0
        %864 = vmatprep.subr.mxu0 0.0
        %865 = vmatpush1.msra.mxu0 0.0
        %866 = vmatprep.subr.mxu0 0.0
        %867 = vmatpush1.msra.mxu0 0.0
        %868 = vmatprep.subr.mxu0 0.0
        %869 = vmatpush1.msra.mxu0 0.0
        %870 = vmatprep.subr.mxu0 0.0
        %871 = vmatpush1.msra.mxu0 0.0
        %872 = vmatprep.subr.mxu0 0.0
        %873 = vmatpush1.msra.mxu0 0.0
        %874 = vmatprep.subr.mxu0 0.0
        %875 = vmatpush1.msra.mxu0 0.0
        %876 = vmatprep.subr.mxu0 0.0
        %877 = vmatpush1.msra.mxu0 0.0
        %878 = vmatprep.subr.mxu0 0.0
        %879 = vmatpush1.msra.mxu0 0.0
        %880 = vmatprep.mubr.f32.mxu0 0.0
        %v881 = vand.u32 %v813, 4294901760
        %v882 = vsub.f32 %v813, %v881
        %v883 = vand.u32 %v882, 4294901760
        %v884 = vsub.f32 %v882, %v883
        %v885 = vand.u32 %v884, 4294901760
        %886 = vmatmul.mubr.f32.gmra.mrb[0].mxu0 %v885
        %v887 = vpop.f32.mrb[0].mxu0
        %v888 = vadd.f32 0.0, %v887
        %v889 = vpop.f32.mrb[0].mxu0
        %890 = vdwg.mxu0
        %891 = vmatprep.subr.mxu0 0.0
        %v892 = vand.u32 %v337, 4294901760
        %v893 = vsub.f32 %v337, %v892
        %v894 = vand.u32 %v893, 4294901760
        %v895 = vsub.f32 %v893, %v894
        %v896 = vand.u32 %v895, 4294901760
        %897 = vmatpush1.msra.mxu0 %v896
        %898 = vmatprep.subr.mxu0 0.0
        %899 = vmatpush1.msra.mxu0 0.0
        %900 = vmatprep.subr.mxu0 0.0
        %901 = vmatpush1.msra.mxu0 0.0
        %902 = vmatprep.subr.mxu0 0.0
        %903 = vmatpush1.msra.mxu0 0.0
        %904 = vmatprep.subr.mxu0 0.0
        %905 = vmatpush1.msra.mxu0 0.0
        %906 = vmatprep.subr.mxu0 0.0
        %907 = vmatpush1.msra.mxu0 0.0
        %908 = vmatprep.subr.mxu0 0.0
        %909 = vmatpush1.msra.mxu0 0.0
        %910 = vmatprep.subr.mxu0 0.0
        %911 = vmatpush1.msra.mxu0 0.0
        %912 = vmatprep.subr.mxu0 0.0
        %913 = vmatpush1.msra.mxu0 0.0
        %914 = vmatprep.subr.mxu0 0.0
        %915 = vmatpush1.msra.mxu0 0.0
        %916 = vmatprep.subr.mxu0 0.0
        %917 = vmatpush1.msra.mxu0 0.0
        %918 = vmatprep.subr.mxu0 0.0
        %919 = vmatpush1.msra.mxu0 0.0
        %920 = vmatprep.subr.mxu0 0.0
        %921 = vmatpush1.msra.mxu0 0.0
        %922 = vmatprep.subr.mxu0 0.0
        %923 = vmatpush1.msra.mxu0 0.0
        %924 = vmatprep.subr.mxu0 0.0
        %925 = vmatpush1.msra.mxu0 0.0
        %926 = vmatprep.subr.mxu0 0.0
        %927 = vmatpush1.msra.mxu0 0.0
        %928 = vmatprep.subr.mxu0 0.0
        %929 = vmatpush1.msra.mxu0 0.0
        %930 = vmatprep.subr.mxu0 0.0
        %931 = vmatpush1.msra.mxu0 0.0
        %932 = vmatprep.subr.mxu0 0.0
        %933 = vmatpush1.msra.mxu0 0.0
        %934 = vmatprep.subr.mxu0 0.0
        %935 = vmatpush1.msra.mxu0 0.0
        %936 = vmatprep.subr.mxu0 0.0
        %937 = vmatpush1.msra.mxu0 0.0
        %938 = vmatprep.subr.mxu0 0.0
        %939 = vmatpush1.msra.mxu0 0.0
        %940 = vmatprep.subr.mxu0 0.0
        %941 = vmatpush1.msra.mxu0 0.0
        %942 = vmatprep.subr.mxu0 0.0
        %943 = vmatpush1.msra.mxu0 0.0
        %944 = vmatprep.subr.mxu0 0.0
        %945 = vmatpush1.msra.mxu0 0.0
        %946 = vmatprep.subr.mxu0 0.0
        %947 = vmatpush1.msra.mxu0 0.0
        %948 = vmatprep.subr.mxu0 0.0
        %949 = vmatpush1.msra.mxu0 0.0
        %950 = vmatprep.subr.mxu0 0.0
        %951 = vmatpush1.msra.mxu0 0.0
        %952 = vmatprep.subr.mxu0 0.0
        %953 = vmatpush1.msra.mxu0 0.0
        %954 = vmatprep.subr.mxu0 0.0
        %955 = vmatpush1.msra.mxu0 0.0
        %956 = vmatprep.subr.mxu0 0.0
        %957 = vmatpush1.msra.mxu0 0.0
        %958 = vmatprep.subr.mxu0 0.0
        %959 = vmatpush1.msra.mxu0 0.0
        %960 = vmatprep.mubr.f32.mxu0 0.0
        %v961 = vand.u32 %v813, 4294901760
        %962 = vmatmul.mubr.f32.gmra.mrb[0].mxu0 %v961
        %v963 = vpop.f32.mrb[0].mxu0
        %v964 = vadd.f32 %v888, %v963
        %v965 = vpop.f32.mrb[0].mxu0
        %966 = vdwg.mxu0
        %967 = vmatprep.subr.mxu0 0.0
        %v968 = vand.u32 %v337, 4294901760
        %v969 = vsub.f32 %v337, %v968
        %970 = vmatpush1.msra.mxu0 %v969
        %971 = vmatprep.subr.mxu0 0.0
        %972 = vmatpush1.msra.mxu0 0.0
        %973 = vmatprep.subr.mxu0 0.0
        %974 = vmatpush1.msra.mxu0 0.0
        %975 = vmatprep.subr.mxu0 0.0
        %976 = vmatpush1.msra.mxu0 0.0
        %977 = vmatprep.subr.mxu0 0.0
        %978 = vmatpush1.msra.mxu0 0.0
        %979 = vmatprep.subr.mxu0 0.0
        %980 = vmatpush1.msra.mxu0 0.0
        %981 = vmatprep.subr.mxu0 0.0
        %982 = vmatpush1.msra.mxu0 0.0
        %983 = vmatprep.subr.mxu0 0.0
        %984 = vmatpush1.msra.mxu0 0.0
        %985 = vmatprep.subr.mxu0 0.0
        %986 = vmatpush1.msra.mxu0 0.0
        %987 = vmatprep.subr.mxu0 0.0
        %988 = vmatpush1.msra.mxu0 0.0
        %989 = vmatprep.subr.mxu0 0.0
        %990 = vmatpush1.msra.mxu0 0.0
        %991 = vmatprep.subr.mxu0 0.0
        %992 = vmatpush1.msra.mxu0 0.0
        %993 = vmatprep.subr.mxu0 0.0
        %994 = vmatpush1.msra.mxu0 0.0
        %995 = vmatprep.subr.mxu0 0.0
        %996 = vmatpush1.msra.mxu0 0.0
        %997 = vmatprep.subr.mxu0 0.0
        %998 = vmatpush1.msra.mxu0 0.0
        %999 = vmatprep.subr.mxu0 0.0
        %1000 = vmatpush1.msra.mxu0 0.0
        %1001 = vmatprep.subr.mxu0 0.0
        %1002 = vmatpush1.msra.mxu0 0.0
        %1003 = vmatprep.subr.mxu0 0.0
        %1004 = vmatpush1.msra.mxu0 0.0
        %1005 = vmatprep.subr.mxu0 0.0
        %1006 = vmatpush1.msra.mxu0 0.0
        %1007 = vmatprep.subr.mxu0 0.0
        %1008 = vmatpush1.msra.mxu0 0.0
        %1009 = vmatprep.subr.mxu0 0.0
        %1010 = vmatpush1.msra.mxu0 0.0
        %1011 = vmatprep.subr.mxu0 0.0
        %1012 = vmatpush1.msra.mxu0 0.0
        %1013 = vmatprep.subr.mxu0 0.0
        %1014 = vmatpush1.msra.mxu0 0.0
        %1015 = vmatprep.subr.mxu0 0.0
        %1016 = vmatpush1.msra.mxu0 0.0
        %1017 = vmatprep.subr.mxu0 0.0
        %1018 = vmatpush1.msra.mxu0 0.0
        %1019 = vmatprep.subr.mxu0 0.0
        %1020 = vmatpush1.msra.mxu0 0.0
        %1021 = vmatprep.subr.mxu0 0.0
        %1022 = vmatpush1.msra.mxu0 0.0
        %1023 = vmatprep.subr.mxu0 0.0
        %1024 = vmatpush1.msra.mxu0 0.0
        %1025 = vmatprep.subr.mxu0 0.0
        %1026 = vmatpush1.msra.mxu0 0.0
        %1027 = vmatprep.subr.mxu0 0.0
        %1028 = vmatpush1.msra.mxu0 0.0
        %1029 = vmatprep.subr.mxu0 0.0
        %1030 = vmatpush1.msra.mxu0 0.0
        %1031 = vmatprep.subr.mxu0 0.0
        %1032 = vmatpush1.msra.mxu0 0.0
        %1033 = vmatprep.mubr.f32.mxu0 0.0
        %v1034 = vand.u32 %v813, 4294901760
        %v1035 = vsub.f32 %v813, %v1034
        %1036 = vmatmul.mubr.f32.gmra.mrb[0].mxu0 %v1035
        %v1037 = vpop.f32.mrb[0].mxu0
        %v1038 = vadd.f32 %v964, %v1037
        %v1039 = vpop.f32.mrb[0].mxu0
        %1040 = vdwg.mxu0
        %1041 = vmatprep.subr.mxu0 0.0
        %v1042 = vand.u32 %v337, 4294901760
        %1043 = vmatpush1.msra.mxu0 %v1042
        %1044 = vmatprep.subr.mxu0 0.0
        %1045 = vmatpush1.msra.mxu0 0.0
        %1046 = vmatprep.subr.mxu0 0.0
        %1047 = vmatpush1.msra.mxu0 0.0
        %1048 = vmatprep.subr.mxu0 0.0
        %1049 = vmatpush1.msra.mxu0 0.0
        %1050 = vmatprep.subr.mxu0 0.0
        %1051 = vmatpush1.msra.mxu0 0.0
        %1052 = vmatprep.subr.mxu0 0.0
        %1053 = vmatpush1.msra.mxu0 0.0
        %1054 = vmatprep.subr.mxu0 0.0
        %1055 = vmatpush1.msra.mxu0 0.0
        %1056 = vmatprep.subr.mxu0 0.0
        %1057 = vmatpush1.msra.mxu0 0.0
        %1058 = vmatprep.subr.mxu0 0.0
        %1059 = vmatpush1.msra.mxu0 0.0
        %1060 = vmatprep.subr.mxu0 0.0
        %1061 = vmatpush1.msra.mxu0 0.0
        %1062 = vmatprep.subr.mxu0 0.0
        %1063 = vmatpush1.msra.mxu0 0.0
        %1064 = vmatprep.subr.mxu0 0.0
        %1065 = vmatpush1.msra.mxu0 0.0
        %1066 = vmatprep.subr.mxu0 0.0
        %1067 = vmatpush1.msra.mxu0 0.0
        %1068 = vmatprep.subr.mxu0 0.0
        %1069 = vmatpush1.msra.mxu0 0.0
        %1070 = vmatprep.subr.mxu0 0.0
        %1071 = vmatpush1.msra.mxu0 0.0
        %1072 = vmatprep.subr.mxu0 0.0
        %1073 = vmatpush1.msra.mxu0 0.0
        %1074 = vmatprep.subr.mxu0 0.0
        %1075 = vmatpush1.msra.mxu0 0.0
        %1076 = vmatprep.subr.mxu0 0.0
        %1077 = vmatpush1.msra.mxu0 0.0
        %1078 = vmatprep.subr.mxu0 0.0
        %1079 = vmatpush1.msra.mxu0 0.0
        %1080 = vmatprep.subr.mxu0 0.0
        %1081 = vmatpush1.msra.mxu0 0.0
        %1082 = vmatprep.subr.mxu0 0.0
        %1083 = vmatpush1.msra.mxu0 0.0
        %1084 = vmatprep.subr.mxu0 0.0
        %1085 = vmatpush1.msra.mxu0 0.0
        %1086 = vmatprep.subr.mxu0 0.0
        %1087 = vmatpush1.msra.mxu0 0.0
        %1088 = vmatprep.subr.mxu0 0.0
        %1089 = vmatpush1.msra.mxu0 0.0
        %1090 = vmatprep.subr.mxu0 0.0
        %1091 = vmatpush1.msra.mxu0 0.0
        %1092 = vmatprep.subr.mxu0 0.0
        %1093 = vmatpush1.msra.mxu0 0.0
        %1094 = vmatprep.subr.mxu0 0.0
        %1095 = vmatpush1.msra.mxu0 0.0
        %1096 = vmatprep.subr.mxu0 0.0
        %1097 = vmatpush1.msra.mxu0 0.0
        %1098 = vmatprep.subr.mxu0 0.0
        %1099 = vmatpush1.msra.mxu0 0.0
        %1100 = vmatprep.subr.mxu0 0.0
        %1101 = vmatpush1.msra.mxu0 0.0
        %1102 = vmatprep.subr.mxu0 0.0
        %1103 = vmatpush1.msra.mxu0 0.0
        %1104 = vmatprep.subr.mxu0 0.0
        %1105 = vmatpush1.msra.mxu0 0.0
        %1106 = vmatprep.mubr.f32.mxu0 0.0
        %v1107 = vand.u32 %v813, 4294901760
        %v1108 = vsub.f32 %v813, %v1107
        %v1109 = vand.u32 %v1108, 4294901760
        %1110 = vmatmul.mubr.f32.gmra.mrb[0].mxu0 %v1109
        %v1111 = vpop.f32.mrb[0].mxu0
        %v1112 = vadd.f32 %v1038, %v1111
        %v1113 = vpop.f32.mrb[0].mxu0
        %1114 = vdwg.mxu0
        %1115 = vmatprep.subr.mxu0 0.0
        %v1116 = vand.u32 %v337, 4294901760
        %v1117 = vsub.f32 %v337, %v1116
        %v1118 = vand.u32 %v1117, 4294901760
        %1119 = vmatpush1.msra.mxu0 %v1118
        %1120 = vmatprep.subr.mxu0 0.0
        %1121 = vmatpush1.msra.mxu0 0.0
        %1122 = vmatprep.subr.mxu0 0.0
        %1123 = vmatpush1.msra.mxu0 0.0
        %1124 = vmatprep.subr.mxu0 0.0
        %1125 = vmatpush1.msra.mxu0 0.0
        %1126 = vmatprep.subr.mxu0 0.0
        %1127 = vmatpush1.msra.mxu0 0.0
        %1128 = vmatprep.subr.mxu0 0.0
        %1129 = vmatpush1.msra.mxu0 0.0
        %1130 = vmatprep.subr.mxu0 0.0
        %1131 = vmatpush1.msra.mxu0 0.0
        %1132 = vmatprep.subr.mxu0 0.0
        %1133 = vmatpush1.msra.mxu0 0.0
        %1134 = vmatprep.subr.mxu0 0.0
        %1135 = vmatpush1.msra.mxu0 0.0
        %1136 = vmatprep.subr.mxu0 0.0
        %1137 = vmatpush1.msra.mxu0 0.0
        %1138 = vmatprep.subr.mxu0 0.0
        %1139 = vmatpush1.msra.mxu0 0.0
        %1140 = vmatprep.subr.mxu0 0.0
        %1141 = vmatpush1.msra.mxu0 0.0
        %1142 = vmatprep.subr.mxu0 0.0
        %1143 = vmatpush1.msra.mxu0 0.0
        %1144 = vmatprep.subr.mxu0 0.0
        %1145 = vmatpush1.msra.mxu0 0.0
        %1146 = vmatprep.subr.mxu0 0.0
        %1147 = vmatpush1.msra.mxu0 0.0
        %1148 = vmatprep.subr.mxu0 0.0
        %1149 = vmatpush1.msra.mxu0 0.0
        %1150 = vmatprep.subr.mxu0 0.0
        %1151 = vmatpush1.msra.mxu0 0.0
        %1152 = vmatprep.subr.mxu0 0.0
        %1153 = vmatpush1.msra.mxu0 0.0
        %1154 = vmatprep.subr.mxu0 0.0
        %1155 = vmatpush1.msra.mxu0 0.0
        %1156 = vmatprep.subr.mxu0 0.0
        %1157 = vmatpush1.msra.mxu0 0.0
        %1158 = vmatprep.subr.mxu0 0.0
        %1159 = vmatpush1.msra.mxu0 0.0
        %1160 = vmatprep.subr.mxu0 0.0
        %1161 = vmatpush1.msra.mxu0 0.0
        %1162 = vmatprep.subr.mxu0 0.0
        %1163 = vmatpush1.msra.mxu0 0.0
        %1164 = vmatprep.subr.mxu0 0.0
        %1165 = vmatpush1.msra.mxu0 0.0
        %1166 = vmatprep.subr.mxu0 0.0
        %1167 = vmatpush1.msra.mxu0 0.0
        %1168 = vmatprep.subr.mxu0 0.0
        %1169 = vmatpush1.msra.mxu0 0.0
        %1170 = vmatprep.subr.mxu0 0.0
        %1171 = vmatpush1.msra.mxu0 0.0
        %1172 = vmatprep.subr.mxu0 0.0
        %1173 = vmatpush1.msra.mxu0 0.0
        %1174 = vmatprep.subr.mxu0 0.0
        %1175 = vmatpush1.msra.mxu0 0.0
        %1176 = vmatprep.subr.mxu0 0.0
        %1177 = vmatpush1.msra.mxu0 0.0
        %1178 = vmatprep.subr.mxu0 0.0
        %1179 = vmatpush1.msra.mxu0 0.0
        %1180 = vmatprep.subr.mxu0 0.0
        %1181 = vmatpush1.msra.mxu0 0.0
        %1182 = vmatprep.mubr.f32.mxu0 0.0
        %v1183 = vand.u32 %v813, 4294901760
        %1184 = vmatmul.mubr.f32.gmra.mrb[0].mxu0 %v1183
        %v1185 = vpop.f32.mrb[0].mxu0
        %v1186 = vadd.f32 %v1112, %v1185
        %v1187 = vpop.f32.mrb[0].mxu0
        %1188 = vdwg.mxu0
        %1189 = vmatprep.subr.mxu0 0.0
        %v1190 = vand.u32 %v337, 4294901760
        %1191 = vmatpush1.msra.mxu0 %v1190
        %1192 = vmatprep.subr.mxu0 0.0
        %1193 = vmatpush1.msra.mxu0 0.0
        %1194 = vmatprep.subr.mxu0 0.0
        %1195 = vmatpush1.msra.mxu0 0.0
        %1196 = vmatprep.subr.mxu0 0.0
        %1197 = vmatpush1.msra.mxu0 0.0
        %1198 = vmatprep.subr.mxu0 0.0
        %1199 = vmatpush1.msra.mxu0 0.0
        %1200 = vmatprep.subr.mxu0 0.0
        %1201 = vmatpush1.msra.mxu0 0.0
        %1202 = vmatprep.subr.mxu0 0.0
        %1203 = vmatpush1.msra.mxu0 0.0
        %1204 = vmatprep.subr.mxu0 0.0
        %1205 = vmatpush1.msra.mxu0 0.0
        %1206 = vmatprep.subr.mxu0 0.0
        %1207 = vmatpush1.msra.mxu0 0.0
        %1208 = vmatprep.subr.mxu0 0.0
        %1209 = vmatpush1.msra.mxu0 0.0
        %1210 = vmatprep.subr.mxu0 0.0
        %1211 = vmatpush1.msra.mxu0 0.0
        %1212 = vmatprep.subr.mxu0 0.0
        %1213 = vmatpush1.msra.mxu0 0.0
        %1214 = vmatprep.subr.mxu0 0.0
        %1215 = vmatpush1.msra.mxu0 0.0
        %1216 = vmatprep.subr.mxu0 0.0
        %1217 = vmatpush1.msra.mxu0 0.0
        %1218 = vmatprep.subr.mxu0 0.0
        %1219 = vmatpush1.msra.mxu0 0.0
        %1220 = vmatprep.subr.mxu0 0.0
        %1221 = vmatpush1.msra.mxu0 0.0
        %1222 = vmatprep.subr.mxu0 0.0
        %1223 = vmatpush1.msra.mxu0 0.0
        %1224 = vmatprep.subr.mxu0 0.0
        %1225 = vmatpush1.msra.mxu0 0.0
        %1226 = vmatprep.subr.mxu0 0.0
        %1227 = vmatpush1.msra.mxu0 0.0
        %1228 = vmatprep.subr.mxu0 0.0
        %1229 = vmatpush1.msra.mxu0 0.0
        %1230 = vmatprep.subr.mxu0 0.0
        %1231 = vmatpush1.msra.mxu0 0.0
        %1232 = vmatprep.subr.mxu0 0.0
        %1233 = vmatpush1.msra.mxu0 0.0
        %1234 = vmatprep.subr.mxu0 0.0
        %1235 = vmatpush1.msra.mxu0 0.0
        %1236 = vmatprep.subr.mxu0 0.0
        %1237 = vmatpush1.msra.mxu0 0.0
        %1238 = vmatprep.subr.mxu0 0.0
        %1239 = vmatpush1.msra.mxu0 0.0
        %1240 = vmatprep.subr.mxu0 0.0
        %1241 = vmatpush1.msra.mxu0 0.0
        %1242 = vmatprep.subr.mxu0 0.0
        %1243 = vmatpush1.msra.mxu0 0.0
        %1244 = vmatprep.subr.mxu0 0.0
        %1245 = vmatpush1.msra.mxu0 0.0
        %1246 = vmatprep.subr.mxu0 0.0
        %1247 = vmatpush1.msra.mxu0 0.0
        %1248 = vmatprep.subr.mxu0 0.0
        %1249 = vmatpush1.msra.mxu0 0.0
        %1250 = vmatprep.subr.mxu0 0.0
        %1251 = vmatpush1.msra.mxu0 0.0
        %1252 = vmatprep.subr.mxu0 0.0
        %1253 = vmatpush1.msra.mxu0 0.0
        %1254 = vmatprep.mubr.f32.mxu0 0.0
        %v1255 = vand.u32 %v813, 4294901760
        %1256 = vmatmul.mubr.f32.gmra.mrb[0].mxu0 %v1255
        %v1257 = vpop.f32.mrb[0].mxu0
        %v1258 = vadd.f32 %v1186, %v1257
        %v1259 = vpop.f32.mrb[0].mxu0
        %1260 = vdwg.mxu0
        %1261 = vrot.lane.b32.xlu0 %v335, 120
        %v1262 = vpop.permute.xlu0 %1261
        %1263 = vrot.lane.b32.xlu0 %v336, 120
        %v1264 = vpop.permute.xlu0 %1263
        %v1265 = vsel %vm339, %v1262, 0
        %v1267 = vsel %vm339, %v1264, 0
        %1269 = vmatprep.subr.mxu0 0.0
        %v1270 = vand.u32 %v1267, 4294901760
        %1271 = vmatpush1.xpose.msra.mxu0 %v1270
        %1272 = vmatprep.subr.mxu0 0.0
        %1273 = vmatpush1.xpose.msra.mxu0 0.0
        %1274 = vmatprep.subr.mxu0 0.0
        %1275 = vmatpush1.xpose.msra.mxu0 0.0
        %1276 = vmatprep.subr.mxu0 0.0
        %1277 = vmatpush1.xpose.msra.mxu0 0.0
        %1278 = vmatprep.subr.mxu0 0.0
        %1279 = vmatpush1.xpose.msra.mxu0 0.0
        %1280 = vmatprep.subr.mxu0 0.0
        %1281 = vmatpush1.xpose.msra.mxu0 0.0
        %1282 = vmatprep.subr.mxu0 0.0
        %1283 = vmatpush1.xpose.msra.mxu0 0.0
        %1284 = vmatprep.subr.mxu0 0.0
        %1285 = vmatpush1.xpose.msra.mxu0 0.0
        %1286 = vmatprep.subr.mxu0 0.0
        %1287 = vmatpush1.xpose.msra.mxu0 0.0
        %1288 = vmatprep.subr.mxu0 0.0
        %1289 = vmatpush1.xpose.msra.mxu0 0.0
        %1290 = vmatprep.subr.mxu0 0.0
        %1291 = vmatpush1.xpose.msra.mxu0 0.0
        %1292 = vmatprep.subr.mxu0 0.0
        %1293 = vmatpush1.xpose.msra.mxu0 0.0
        %1294 = vmatprep.subr.mxu0 0.0
        %1295 = vmatpush1.xpose.msra.mxu0 0.0
        %1296 = vmatprep.subr.mxu0 0.0
        %1297 = vmatpush1.xpose.msra.mxu0 0.0
        %1298 = vmatprep.subr.mxu0 0.0
        %1299 = vmatpush1.xpose.msra.mxu0 0.0
        %1300 = vmatprep.subr.mxu0 0.0
        %1301 = vmatpush1.xpose.msra.mxu0 0.0
        %1302 = vmatprep.subr.mxu0 0.0
        %1303 = vmatpush1.xpose.msra.mxu0 0.0
        %1304 = vmatprep.subr.mxu0 0.0
        %1305 = vmatpush1.xpose.msra.mxu0 0.0
        %1306 = vmatprep.subr.mxu0 0.0
        %1307 = vmatpush1.xpose.msra.mxu0 0.0
        %1308 = vmatprep.subr.mxu0 0.0
        %1309 = vmatpush1.xpose.msra.mxu0 0.0
        %1310 = vmatprep.subr.mxu0 0.0
        %1311 = vmatpush1.xpose.msra.mxu0 0.0
        %1312 = vmatprep.subr.mxu0 0.0
        %1313 = vmatpush1.xpose.msra.mxu0 0.0
        %1314 = vmatprep.subr.mxu0 0.0
        %1315 = vmatpush1.xpose.msra.mxu0 0.0
        %1316 = vmatprep.subr.mxu0 0.0
        %1317 = vmatpush1.xpose.msra.mxu0 0.0
        %1318 = vmatprep.subr.mxu0 0.0
        %1319 = vmatpush1.xpose.msra.mxu0 0.0
        %1320 = vmatprep.subr.mxu0 0.0
        %1321 = vmatpush1.xpose.msra.mxu0 0.0
        %1322 = vmatprep.subr.mxu0 0.0
        %1323 = vmatpush1.xpose.msra.mxu0 0.0
        %1324 = vmatprep.subr.mxu0 0.0
        %1325 = vmatpush1.xpose.msra.mxu0 0.0
        %1326 = vmatprep.subr.mxu0 0.0
        %1327 = vmatpush1.xpose.msra.mxu0 0.0
        %1328 = vmatprep.subr.mxu0 0.0
        %1329 = vmatpush1.xpose.msra.mxu0 0.0
        %1330 = vmatprep.subr.mxu0 0.0
        %1331 = vmatpush1.xpose.msra.mxu0 0.0
        %1332 = vmatprep.subr.mxu0 0.0
        %1333 = vmatpush1.xpose.msra.mxu0 0.0
        %1334 = vmatprep.mubr.f32.mxu0 0.0
        %v1335 = vand.u32 %v1265, 4294901760
        %v1336 = vsub.f32 %v1265, %v1335
        %v1337 = vand.u32 %v1336, 4294901760
        %v1338 = vsub.f32 %v1336, %v1337
        %v1339 = vand.u32 %v1338, 4294901760
        %1340 = vmatmul.mubr.f32.gmra.mrb[0].mxu0 %v1339
        %v1341 = vpop.f32.mrb[0].mxu0
        %v1342 = vadd.f32 0.0, %v1341
        %v1343 = vpop.f32.mrb[0].mxu0
        %1344 = vdwg.mxu0
        %1345 = vmatprep.subr.mxu0 0.0
        %v1346 = vand.u32 %v1267, 4294901760
        %v1347 = vsub.f32 %v1267, %v1346
        %v1348 = vand.u32 %v1347, 4294901760
        %v1349 = vsub.f32 %v1347, %v1348
        %v1350 = vand.u32 %v1349, 4294901760
        %1351 = vmatpush1.xpose.msra.mxu0 %v1350
        %1352 = vmatprep.subr.mxu0 0.0
        %1353 = vmatpush1.xpose.msra.mxu0 0.0
        %1354 = vmatprep.subr.mxu0 0.0
        %1355 = vmatpush1.xpose.msra.mxu0 0.0
        %1356 = vmatprep.subr.mxu0 0.0
        %1357 = vmatpush1.xpose.msra.mxu0 0.0
        %1358 = vmatprep.subr.mxu0 0.0
        %1359 = vmatpush1.xpose.msra.mxu0 0.0
        %1360 = vmatprep.subr.mxu0 0.0
        %1361 = vmatpush1.xpose.msra.mxu0 0.0
        %1362 = vmatprep.subr.mxu0 0.0
        %1363 = vmatpush1.xpose.msra.mxu0 0.0
        %1364 = vmatprep.subr.mxu0 0.0
        %1365 = vmatpush1.xpose.msra.mxu0 0.0
        %1366 = vmatprep.subr.mxu0 0.0
        %1367 = vmatpush1.xpose.msra.mxu0 0.0
        %1368 = vmatprep.subr.mxu0 0.0
        %1369 = vmatpush1.xpose.msra.mxu0 0.0
        %1370 = vmatprep.subr.mxu0 0.0
        %1371 = vmatpush1.xpose.msra.mxu0 0.0
        %1372 = vmatprep.subr.mxu0 0.0
        %1373 = vmatpush1.xpose.msra.mxu0 0.0
        %1374 = vmatprep.subr.mxu0 0.0
        %1375 = vmatpush1.xpose.msra.mxu0 0.0
        %1376 = vmatprep.subr.mxu0 0.0
        %1377 = vmatpush1.xpose.msra.mxu0 0.0
        %1378 = vmatprep.subr.mxu0 0.0
        %1379 = vmatpush1.xpose.msra.mxu0 0.0
        %1380 = vmatprep.subr.mxu0 0.0
        %1381 = vmatpush1.xpose.msra.mxu0 0.0
        %1382 = vmatprep.subr.mxu0 0.0
        %1383 = vmatpush1.xpose.msra.mxu0 0.0
        %1384 = vmatprep.subr.mxu0 0.0
        %1385 = vmatpush1.xpose.msra.mxu0 0.0
        %1386 = vmatprep.subr.mxu0 0.0
        %1387 = vmatpush1.xpose.msra.mxu0 0.0
        %1388 = vmatprep.subr.mxu0 0.0
        %1389 = vmatpush1.xpose.msra.mxu0 0.0
        %1390 = vmatprep.subr.mxu0 0.0
        %1391 = vmatpush1.xpose.msra.mxu0 0.0
        %1392 = vmatprep.subr.mxu0 0.0
        %1393 = vmatpush1.xpose.msra.mxu0 0.0
        %1394 = vmatprep.subr.mxu0 0.0
        %1395 = vmatpush1.xpose.msra.mxu0 0.0
        %1396 = vmatprep.subr.mxu0 0.0
        %1397 = vmatpush1.xpose.msra.mxu0 0.0
        %1398 = vmatprep.subr.mxu0 0.0
        %1399 = vmatpush1.xpose.msra.mxu0 0.0
        %1400 = vmatprep.subr.mxu0 0.0
        %1401 = vmatpush1.xpose.msra.mxu0 0.0
        %1402 = vmatprep.subr.mxu0 0.0
        %1403 = vmatpush1.xpose.msra.mxu0 0.0
        %1404 = vmatprep.subr.mxu0 0.0
        %1405 = vmatpush1.xpose.msra.mxu0 0.0
        %1406 = vmatprep.subr.mxu0 0.0
        %1407 = vmatpush1.xpose.msra.mxu0 0.0
        %1408 = vmatprep.subr.mxu0 0.0
        %1409 = vmatpush1.xpose.msra.mxu0 0.0
        %1410 = vmatprep.subr.mxu0 0.0
        %1411 = vmatpush1.xpose.msra.mxu0 0.0
        %1412 = vmatprep.subr.mxu0 0.0
        %1413 = vmatpush1.xpose.msra.mxu0 0.0
        %1414 = vmatprep.mubr.f32.mxu0 0.0
        %v1415 = vand.u32 %v1265, 4294901760
        %1416 = vmatmul.mubr.f32.gmra.mrb[0].mxu0 %v1415
        %v1417 = vpop.f32.mrb[0].mxu0
        %v1418 = vadd.f32 %v1342, %v1417
        %v1419 = vpop.f32.mrb[0].mxu0
        %1420 = vdwg.mxu0
        %1421 = vmatprep.subr.mxu0 0.0
        %v1422 = vand.u32 %v1267, 4294901760
        %v1423 = vsub.f32 %v1267, %v1422
        %1424 = vmatpush1.xpose.msra.mxu0 %v1423
        %1425 = vmatprep.subr.mxu0 0.0
        %1426 = vmatpush1.xpose.msra.mxu0 0.0
        %1427 = vmatprep.subr.mxu0 0.0
        %1428 = vmatpush1.xpose.msra.mxu0 0.0
        %1429 = vmatprep.subr.mxu0 0.0
        %1430 = vmatpush1.xpose.msra.mxu0 0.0
        %1431 = vmatprep.subr.mxu0 0.0
        %1432 = vmatpush1.xpose.msra.mxu0 0.0
        %1433 = vmatprep.subr.mxu0 0.0
        %1434 = vmatpush1.xpose.msra.mxu0 0.0
        %1435 = vmatprep.subr.mxu0 0.0
        %1436 = vmatpush1.xpose.msra.mxu0 0.0
        %1437 = vmatprep.subr.mxu0 0.0
        %1438 = vmatpush1.xpose.msra.mxu0 0.0
        %1439 = vmatprep.subr.mxu0 0.0
        %1440 = vmatpush1.xpose.msra.mxu0 0.0
        %1441 = vmatprep.subr.mxu0 0.0
        %1442 = vmatpush1.xpose.msra.mxu0 0.0
        %1443 = vmatprep.subr.mxu0 0.0
        %1444 = vmatpush1.xpose.msra.mxu0 0.0
        %1445 = vmatprep.subr.mxu0 0.0
        %1446 = vmatpush1.xpose.msra.mxu0 0.0
        %1447 = vmatprep.subr.mxu0 0.0
        %1448 = vmatpush1.xpose.msra.mxu0 0.0
        %1449 = vmatprep.subr.mxu0 0.0
        %1450 = vmatpush1.xpose.msra.mxu0 0.0
        %1451 = vmatprep.subr.mxu0 0.0
        %1452 = vmatpush1.xpose.msra.mxu0 0.0
        %1453 = vmatprep.subr.mxu0 0.0
        %1454 = vmatpush1.xpose.msra.mxu0 0.0
        %1455 = vmatprep.subr.mxu0 0.0
        %1456 = vmatpush1.xpose.msra.mxu0 0.0
        %1457 = vmatprep.subr.mxu0 0.0
        %1458 = vmatpush1.xpose.msra.mxu0 0.0
        %1459 = vmatprep.subr.mxu0 0.0
        %1460 = vmatpush1.xpose.msra.mxu0 0.0
        %1461 = vmatprep.subr.mxu0 0.0
        %1462 = vmatpush1.xpose.msra.mxu0 0.0
        %1463 = vmatprep.subr.mxu0 0.0
        %1464 = vmatpush1.xpose.msra.mxu0 0.0
        %1465 = vmatprep.subr.mxu0 0.0
        %1466 = vmatpush1.xpose.msra.mxu0 0.0
        %1467 = vmatprep.subr.mxu0 0.0
        %1468 = vmatpush1.xpose.msra.mxu0 0.0
        %1469 = vmatprep.subr.mxu0 0.0
        %1470 = vmatpush1.xpose.msra.mxu0 0.0
        %1471 = vmatprep.subr.mxu0 0.0
        %1472 = vmatpush1.xpose.msra.mxu0 0.0
        %1473 = vmatprep.subr.mxu0 0.0
        %1474 = vmatpush1.xpose.msra.mxu0 0.0
        %1475 = vmatprep.subr.mxu0 0.0
        %1476 = vmatpush1.xpose.msra.mxu0 0.0
        %1477 = vmatprep.subr.mxu0 0.0
        %1478 = vmatpush1.xpose.msra.mxu0 0.0
        %1479 = vmatprep.subr.mxu0 0.0
        %1480 = vmatpush1.xpose.msra.mxu0 0.0
        %1481 = vmatprep.subr.mxu0 0.0
        %1482 = vmatpush1.xpose.msra.mxu0 0.0
        %1483 = vmatprep.subr.mxu0 0.0
        %1484 = vmatpush1.xpose.msra.mxu0 0.0
        %1485 = vmatprep.subr.mxu0 0.0
        %1486 = vmatpush1.xpose.msra.mxu0 0.0
        %1487 = vmatprep.mubr.f32.mxu0 0.0
        %v1488 = vand.u32 %v1265, 4294901760
        %v1489 = vsub.f32 %v1265, %v1488
        %1490 = vmatmul.mubr.f32.gmra.mrb[0].mxu0 %v1489
        %v1491 = vpop.f32.mrb[0].mxu0
        %v1492 = vadd.f32 %v1418, %v1491
        %v1493 = vpop.f32.mrb[0].mxu0
        %1494 = vdwg.mxu0
        %1495 = vmatprep.subr.mxu0 0.0
        %v1496 = vand.u32 %v1267, 4294901760
        %1497 = vmatpush1.xpose.msra.mxu0 %v1496
        %1498 = vmatprep.subr.mxu0 0.0
        %1499 = vmatpush1.xpose.msra.mxu0 0.0
        %1500 = vmatprep.subr.mxu0 0.0
        %1501 = vmatpush1.xpose.msra.mxu0 0.0
        %1502 = vmatprep.subr.mxu0 0.0
        %1503 = vmatpush1.xpose.msra.mxu0 0.0
        %1504 = vmatprep.subr.mxu0 0.0
        %1505 = vmatpush1.xpose.msra.mxu0 0.0
        %1506 = vmatprep.subr.mxu0 0.0
        %1507 = vmatpush1.xpose.msra.mxu0 0.0
        %1508 = vmatprep.subr.mxu0 0.0
        %1509 = vmatpush1.xpose.msra.mxu0 0.0
        %1510 = vmatprep.subr.mxu0 0.0
        %1511 = vmatpush1.xpose.msra.mxu0 0.0
        %1512 = vmatprep.subr.mxu0 0.0
        %1513 = vmatpush1.xpose.msra.mxu0 0.0
        %1514 = vmatprep.subr.mxu0 0.0
        %1515 = vmatpush1.xpose.msra.mxu0 0.0
        %1516 = vmatprep.subr.mxu0 0.0
        %1517 = vmatpush1.xpose.msra.mxu0 0.0
        %1518 = vmatprep.subr.mxu0 0.0
        %1519 = vmatpush1.xpose.msra.mxu0 0.0
        %1520 = vmatprep.subr.mxu0 0.0
        %1521 = vmatpush1.xpose.msra.mxu0 0.0
        %1522 = vmatprep.subr.mxu0 0.0
        %1523 = vmatpush1.xpose.msra.mxu0 0.0
        %1524 = vmatprep.subr.mxu0 0.0
        %1525 = vmatpush1.xpose.msra.mxu0 0.0
        %1526 = vmatprep.subr.mxu0 0.0
        %1527 = vmatpush1.xpose.msra.mxu0 0.0
        %1528 = vmatprep.subr.mxu0 0.0
        %1529 = vmatpush1.xpose.msra.mxu0 0.0
        %1530 = vmatprep.subr.mxu0 0.0
        %1531 = vmatpush1.xpose.msra.mxu0 0.0
        %1532 = vmatprep.subr.mxu0 0.0
        %1533 = vmatpush1.xpose.msra.mxu0 0.0
        %1534 = vmatprep.subr.mxu0 0.0
        %1535 = vmatpush1.xpose.msra.mxu0 0.0
        %1536 = vmatprep.subr.mxu0 0.0
        %1537 = vmatpush1.xpose.msra.mxu0 0.0
        %1538 = vmatprep.subr.mxu0 0.0
        %1539 = vmatpush1.xpose.msra.mxu0 0.0
        %1540 = vmatprep.subr.mxu0 0.0
        %1541 = vmatpush1.xpose.msra.mxu0 0.0
        %1542 = vmatprep.subr.mxu0 0.0
        %1543 = vmatpush1.xpose.msra.mxu0 0.0
        %1544 = vmatprep.subr.mxu0 0.0
        %1545 = vmatpush1.xpose.msra.mxu0 0.0
        %1546 = vmatprep.subr.mxu0 0.0
        %1547 = vmatpush1.xpose.msra.mxu0 0.0
        %1548 = vmatprep.subr.mxu0 0.0
        %1549 = vmatpush1.xpose.msra.mxu0 0.0
        %1550 = vmatprep.subr.mxu0 0.0
        %1551 = vmatpush1.xpose.msra.mxu0 0.0
        %1552 = vmatprep.subr.mxu0 0.0
        %1553 = vmatpush1.xpose.msra.mxu0 0.0
        %1554 = vmatprep.subr.mxu0 0.0
        %1555 = vmatpush1.xpose.msra.mxu0 0.0
        %1556 = vmatprep.subr.mxu0 0.0
        %1557 = vmatpush1.xpose.msra.mxu0 0.0
        %1558 = vmatprep.subr.mxu0 0.0
        %1559 = vmatpush1.xpose.msra.mxu0 0.0
        %1560 = vmatprep.mubr.f32.mxu0 0.0
        %v1561 = vand.u32 %v1265, 4294901760
        %v1562 = vsub.f32 %v1265, %v1561
        %v1563 = vand.u32 %v1562, 4294901760
        %1564 = vmatmul.mubr.f32.gmra.mrb[0].mxu0 %v1563
        %v1565 = vpop.f32.mrb[0].mxu0
        %v1566 = vadd.f32 %v1492, %v1565
        %v1567 = vpop.f32.mrb[0].mxu0
        %1568 = vdwg.mxu0
        %1569 = vmatprep.subr.mxu0 0.0
        %v1570 = vand.u32 %v1267, 4294901760
        %v1571 = vsub.f32 %v1267, %v1570
        %v1572 = vand.u32 %v1571, 4294901760
        %1573 = vmatpush1.xpose.msra.mxu0 %v1572
        %1574 = vmatprep.subr.mxu0 0.0
        %1575 = vmatpush1.xpose.msra.mxu0 0.0
        %1576 = vmatprep.subr.mxu0 0.0
        %1577 = vmatpush1.xpose.msra.mxu0 0.0
        %1578 = vmatprep.subr.mxu0 0.0
        %1579 = vmatpush1.xpose.msra.mxu0 0.0
        %1580 = vmatprep.subr.mxu0 0.0
        %1581 = vmatpush1.xpose.msra.mxu0 0.0
        %1582 = vmatprep.subr.mxu0 0.0
        %1583 = vmatpush1.xpose.msra.mxu0 0.0
        %1584 = vmatprep.subr.mxu0 0.0
        %1585 = vmatpush1.xpose.msra.mxu0 0.0
        %1586 = vmatprep.subr.mxu0 0.0
        %1587 = vmatpush1.xpose.msra.mxu0 0.0
        %1588 = vmatprep.subr.mxu0 0.0
        %1589 = vmatpush1.xpose.msra.mxu0 0.0
        %1590 = vmatprep.subr.mxu0 0.0
        %1591 = vmatpush1.xpose.msra.mxu0 0.0
        %1592 = vmatprep.subr.mxu0 0.0
        %1593 = vmatpush1.xpose.msra.mxu0 0.0
        %1594 = vmatprep.subr.mxu0 0.0
        %1595 = vmatpush1.xpose.msra.mxu0 0.0
        %1596 = vmatprep.subr.mxu0 0.0
        %1597 = vmatpush1.xpose.msra.mxu0 0.0
        %1598 = vmatprep.subr.mxu0 0.0
        %1599 = vmatpush1.xpose.msra.mxu0 0.0
        %1600 = vmatprep.subr.mxu0 0.0
        %1601 = vmatpush1.xpose.msra.mxu0 0.0
        %1602 = vmatprep.subr.mxu0 0.0
        %1603 = vmatpush1.xpose.msra.mxu0 0.0
        %1604 = vmatprep.subr.mxu0 0.0
        %1605 = vmatpush1.xpose.msra.mxu0 0.0
        %1606 = vmatprep.subr.mxu0 0.0
        %1607 = vmatpush1.xpose.msra.mxu0 0.0
        %1608 = vmatprep.subr.mxu0 0.0
        %1609 = vmatpush1.xpose.msra.mxu0 0.0
        %1610 = vmatprep.subr.mxu0 0.0
        %1611 = vmatpush1.xpose.msra.mxu0 0.0
        %1612 = vmatprep.subr.mxu0 0.0
        %1613 = vmatpush1.xpose.msra.mxu0 0.0
        %1614 = vmatprep.subr.mxu0 0.0
        %1615 = vmatpush1.xpose.msra.mxu0 0.0
        %1616 = vmatprep.subr.mxu0 0.0
        %1617 = vmatpush1.xpose.msra.mxu0 0.0
        %1618 = vmatprep.subr.mxu0 0.0
        %1619 = vmatpush1.xpose.msra.mxu0 0.0
        %1620 = vmatprep.subr.mxu0 0.0
        %1621 = vmatpush1.xpose.msra.mxu0 0.0
        %1622 = vmatprep.subr.mxu0 0.0
        %1623 = vmatpush1.xpose.msra.mxu0 0.0
        %1624 = vmatprep.subr.mxu0 0.0
        %1625 = vmatpush1.xpose.msra.mxu0 0.0
        %1626 = vmatprep.subr.mxu0 0.0
        %1627 = vmatpush1.xpose.msra.mxu0 0.0
        %1628 = vmatprep.subr.mxu0 0.0
        %1629 = vmatpush1.xpose.msra.mxu0 0.0
        %1630 = vmatprep.subr.mxu0 0.0
        %1631 = vmatpush1.xpose.msra.mxu0 0.0
        %1632 = vmatprep.subr.mxu0 0.0
        %1633 = vmatpush1.xpose.msra.mxu0 0.0
        %1634 = vmatprep.subr.mxu0 0.0
        %1635 = vmatpush1.xpose.msra.mxu0 0.0
        %1636 = vmatprep.mubr.f32.mxu0 0.0
        %v1637 = vand.u32 %v1265, 4294901760
        %1638 = vmatmul.mubr.f32.gmra.mrb[0].mxu0 %v1637
        %v1639 = vpop.f32.mrb[0].mxu0
        %v1640 = vadd.f32 %v1566, %v1639
        %v1641 = vpop.f32.mrb[0].mxu0
        %1642 = vdwg.mxu0
        %1643 = vmatprep.subr.mxu0 0.0
        %v1644 = vand.u32 %v1267, 4294901760
        %1645 = vmatpush1.xpose.msra.mxu0 %v1644
        %1646 = vmatprep.subr.mxu0 0.0
        %1647 = vmatpush1.xpose.msra.mxu0 0.0
        %1648 = vmatprep.subr.mxu0 0.0
        %1649 = vmatpush1.xpose.msra.mxu0 0.0
        %1650 = vmatprep.subr.mxu0 0.0
        %1651 = vmatpush1.xpose.msra.mxu0 0.0
        %1652 = vmatprep.subr.mxu0 0.0
        %1653 = vmatpush1.xpose.msra.mxu0 0.0
        %1654 = vmatprep.subr.mxu0 0.0
        %1655 = vmatpush1.xpose.msra.mxu0 0.0
        %1656 = vmatprep.subr.mxu0 0.0
        %1657 = vmatpush1.xpose.msra.mxu0 0.0
        %1658 = vmatprep.subr.mxu0 0.0
        %1659 = vmatpush1.xpose.msra.mxu0 0.0
        %1660 = vmatprep.subr.mxu0 0.0
        %1661 = vmatpush1.xpose.msra.mxu0 0.0
        %1662 = vmatprep.subr.mxu0 0.0
        %1663 = vmatpush1.xpose.msra.mxu0 0.0
        %1664 = vmatprep.subr.mxu0 0.0
        %1665 = vmatpush1.xpose.msra.mxu0 0.0
        %1666 = vmatprep.subr.mxu0 0.0
        %1667 = vmatpush1.xpose.msra.mxu0 0.0
        %1668 = vmatprep.subr.mxu0 0.0
        %1669 = vmatpush1.xpose.msra.mxu0 0.0
        %1670 = vmatprep.subr.mxu0 0.0
        %1671 = vmatpush1.xpose.msra.mxu0 0.0
        %1672 = vmatprep.subr.mxu0 0.0
        %1673 = vmatpush1.xpose.msra.mxu0 0.0
        %1674 = vmatprep.subr.mxu0 0.0
        %1675 = vmatpush1.xpose.msra.mxu0 0.0
        %1676 = vmatprep.subr.mxu0 0.0
        %1677 = vmatpush1.xpose.msra.mxu0 0.0
        %1678 = vmatprep.subr.mxu0 0.0
        %1679 = vmatpush1.xpose.msra.mxu0 0.0
        %1680 = vmatprep.subr.mxu0 0.0
        %1681 = vmatpush1.xpose.msra.mxu0 0.0
        %1682 = vmatprep.subr.mxu0 0.0
        %1683 = vmatpush1.xpose.msra.mxu0 0.0
        %1684 = vmatprep.subr.mxu0 0.0
        %1685 = vmatpush1.xpose.msra.mxu0 0.0
        %1686 = vmatprep.subr.mxu0 0.0
        %1687 = vmatpush1.xpose.msra.mxu0 0.0
        %1688 = vmatprep.subr.mxu0 0.0
        %1689 = vmatpush1.xpose.msra.mxu0 0.0
        %1690 = vmatprep.subr.mxu0 0.0
        %1691 = vmatpush1.xpose.msra.mxu0 0.0
        %1692 = vmatprep.subr.mxu0 0.0
        %1693 = vmatpush1.xpose.msra.mxu0 0.0
        %1694 = vmatprep.subr.mxu0 0.0
        %1695 = vmatpush1.xpose.msra.mxu0 0.0
        %1696 = vmatprep.subr.mxu0 0.0
        %1697 = vmatpush1.xpose.msra.mxu0 0.0
        %1698 = vmatprep.subr.mxu0 0.0
        %1699 = vmatpush1.xpose.msra.mxu0 0.0
        %1700 = vmatprep.subr.mxu0 0.0
        %1701 = vmatpush1.xpose.msra.mxu0 0.0
        %1702 = vmatprep.subr.mxu0 0.0
        %1703 = vmatpush1.xpose.msra.mxu0 0.0
        %1704 = vmatprep.subr.mxu0 0.0
        %1705 = vmatpush1.xpose.msra.mxu0 0.0
        %1706 = vmatprep.subr.mxu0 0.0
        %1707 = vmatpush1.xpose.msra.mxu0 0.0
        %1708 = vmatprep.mubr.f32.mxu0 0.0
        %v1709 = vand.u32 %v1265, 4294901760
        %1710 = vmatmul.mubr.f32.gmra.mrb[0].mxu0 %v1709
        %v1711 = vpop.f32.mrb[0].mxu0
        %v1712 = vadd.f32 %v1640, %v1711
        %v1713 = vpop.f32.mrb[0].mxu0
        %1714 = vdwg.mxu0
        %v1715 = vmul.f32 %v1712, 0.35355338
        %v1716 = vmul.f32 %v1715, %v798
        %v1717 = vsel %vm339, %v1716, -inf
        %1718 = vmax.xlane.f32.xlu0 %v1717
        %v1719 = vpop.xlane.xlu0 %1718
        %v1720 = vsub.f32 %v1716, %v1719
        %v1721 = vmul.f32 %v1720, 1.442695
        %v1722 = vpow.pop %v1721
        %v1723 = vsel %vm339, %v1722, 0.0
        %1724 = vadd.xlane.f32.xlu0 %v1723
        %v1725 = vpop.xlane.xlu0 %1724
        %v1726 = vrcp.pop %v1725
        %v1727 = vmul.f32 %v1722, %v1726
        %1729 = vrot.lane.b32.xlu0 %v337, 120
        %v1730 = vpop.permute.xlu0 %1729
        %v1733 = vsel %vm339, %v1727, 0
        %1735 = vmatprep.subr.mxu0 0.0
        %v1736 = vand.u32 %v1730, 4294901760
        %1737 = vmatpush1.msra.mxu0 %v1736
        %1738 = vmatprep.subr.mxu0 0.0
        %1739 = vmatpush1.msra.mxu0 0.0
        %1740 = vmatprep.subr.mxu0 0.0
        %1741 = vmatpush1.msra.mxu0 0.0
        %1742 = vmatprep.subr.mxu0 0.0
        %1743 = vmatpush1.msra.mxu0 0.0
        %1744 = vmatprep.subr.mxu0 0.0
        %1745 = vmatpush1.msra.mxu0 0.0
        %1746 = vmatprep.subr.mxu0 0.0
        %1747 = vmatpush1.msra.mxu0 0.0
        %1748 = vmatprep.subr.mxu0 0.0
        %1749 = vmatpush1.msra.mxu0 0.0
        %1750 = vmatprep.subr.mxu0 0.0
        %1751 = vmatpush1.msra.mxu0 0.0
        %1752 = vmatprep.subr.mxu0 0.0
        %1753 = vmatpush1.msra.mxu0 0.0
        %1754 = vmatprep.subr.mxu0 0.0
        %1755 = vmatpush1.msra.mxu0 0.0
        %1756 = vmatprep.subr.mxu0 0.0
        %1757 = vmatpush1.msra.mxu0 0.0
        %1758 = vmatprep.subr.mxu0 0.0
        %1759 = vmatpush1.msra.mxu0 0.0
        %1760 = vmatprep.subr.mxu0 0.0
        %1761 = vmatpush1.msra.mxu0 0.0
        %1762 = vmatprep.subr.mxu0 0.0
        %1763 = vmatpush1.msra.mxu0 0.0
        %1764 = vmatprep.subr.mxu0 0.0
        %1765 = vmatpush1.msra.mxu0 0.0
        %1766 = vmatprep.subr.mxu0 0.0
        %1767 = vmatpush1.msra.mxu0 0.0
        %1768 = vmatprep.subr.mxu0 0.0
        %1769 = vmatpush1.msra.mxu0 0.0
        %1770 = vmatprep.subr.mxu0 0.0
        %1771 = vmatpush1.msra.mxu0 0.0
        %1772 = vmatprep.subr.mxu0 0.0
        %1773 = vmatpush1.msra.mxu0 0.0
        %1774 = vmatprep.subr.mxu0 0.0
        %1775 = vmatpush1.msra.mxu0 0.0
        %1776 = vmatprep.subr.mxu0 0.0
        %1777 = vmatpush1.msra.mxu0 0.0
        %1778 = vmatprep.subr.mxu0 0.0
        %1779 = vmatpush1.msra.mxu0 0.0
        %1780 = vmatprep.subr.mxu0 0.0
        %1781 = vmatpush1.msra.mxu0 0.0
        %1782 = vmatprep.subr.mxu0 0.0
        %1783 = vmatpush1.msra.mxu0 0.0
        %1784 = vmatprep.subr.mxu0 0.0
        %1785 = vmatpush1.msra.mxu0 0.0
        %1786 = vmatprep.subr.mxu0 0.0
        %1787 = vmatpush1.msra.mxu0 0.0
        %1788 = vmatprep.subr.mxu0 0.0
        %1789 = vmatpush1.msra.mxu0 0.0
        %1790 = vmatprep.subr.mxu0 0.0
        %1791 = vmatpush1.msra.mxu0 0.0
        %1792 = vmatprep.subr.mxu0 0.0
        %1793 = vmatpush1.msra.mxu0 0.0
        %1794 = vmatprep.subr.mxu0 0.0
        %1795 = vmatpush1.msra.mxu0 0.0
        %1796 = vmatprep.subr.mxu0 0.0
        %1797 = vmatpush1.msra.mxu0 0.0
        %1798 = vmatprep.subr.mxu0 0.0
        %1799 = vmatpush1.msra.mxu0 0.0
        %1800 = vmatprep.mubr.f32.mxu0 0.0
        %v1801 = vand.u32 %v1733, 4294901760
        %v1802 = vsub.f32 %v1733, %v1801
        %v1803 = vand.u32 %v1802, 4294901760
        %v1804 = vsub.f32 %v1802, %v1803
        %v1805 = vand.u32 %v1804, 4294901760
        %1806 = vmatmul.mubr.f32.gmra.mrb[0].mxu0 %v1805
        %v1807 = vpop.f32.mrb[0].mxu0
        %v1808 = vadd.f32 0.0, %v1807
        %v1809 = vpop.f32.mrb[0].mxu0
        %1810 = vdwg.mxu0
        %1811 = vmatprep.subr.mxu0 0.0
        %v1812 = vand.u32 %v1730, 4294901760
        %v1813 = vsub.f32 %v1730, %v1812
        %v1814 = vand.u32 %v1813, 4294901760
        %v1815 = vsub.f32 %v1813, %v1814
        %v1816 = vand.u32 %v1815, 4294901760
        %1817 = vmatpush1.msra.mxu0 %v1816
        %1818 = vmatprep.subr.mxu0 0.0
        %1819 = vmatpush1.msra.mxu0 0.0
        %1820 = vmatprep.subr.mxu0 0.0
        %1821 = vmatpush1.msra.mxu0 0.0
        %1822 = vmatprep.subr.mxu0 0.0
        %1823 = vmatpush1.msra.mxu0 0.0
        %1824 = vmatprep.subr.mxu0 0.0
        %1825 = vmatpush1.msra.mxu0 0.0
        %1826 = vmatprep.subr.mxu0 0.0
        %1827 = vmatpush1.msra.mxu0 0.0
        %1828 = vmatprep.subr.mxu0 0.0
        %1829 = vmatpush1.msra.mxu0 0.0
        %1830 = vmatprep.subr.mxu0 0.0
        %1831 = vmatpush1.msra.mxu0 0.0
        %1832 = vmatprep.subr.mxu0 0.0
        %1833 = vmatpush1.msra.mxu0 0.0
        %1834 = vmatprep.subr.mxu0 0.0
        %1835 = vmatpush1.msra.mxu0 0.0
        %1836 = vmatprep.subr.mxu0 0.0
        %1837 = vmatpush1.msra.mxu0 0.0
        %1838 = vmatprep.subr.mxu0 0.0
        %1839 = vmatpush1.msra.mxu0 0.0
        %1840 = vmatprep.subr.mxu0 0.0
        %1841 = vmatpush1.msra.mxu0 0.0
        %1842 = vmatprep.subr.mxu0 0.0
        %1843 = vmatpush1.msra.mxu0 0.0
        %1844 = vmatprep.subr.mxu0 0.0
        %1845 = vmatpush1.msra.mxu0 0.0
        %1846 = vmatprep.subr.mxu0 0.0
        %1847 = vmatpush1.msra.mxu0 0.0
        %1848 = vmatprep.subr.mxu0 0.0
        %1849 = vmatpush1.msra.mxu0 0.0
        %1850 = vmatprep.subr.mxu0 0.0
        %1851 = vmatpush1.msra.mxu0 0.0
        %1852 = vmatprep.subr.mxu0 0.0
        %1853 = vmatpush1.msra.mxu0 0.0
        %1854 = vmatprep.subr.mxu0 0.0
        %1855 = vmatpush1.msra.mxu0 0.0
        %1856 = vmatprep.subr.mxu0 0.0
        %1857 = vmatpush1.msra.mxu0 0.0
        %1858 = vmatprep.subr.mxu0 0.0
        %1859 = vmatpush1.msra.mxu0 0.0
        %1860 = vmatprep.subr.mxu0 0.0
        %1861 = vmatpush1.msra.mxu0 0.0
        %1862 = vmatprep.subr.mxu0 0.0
        %1863 = vmatpush1.msra.mxu0 0.0
        %1864 = vmatprep.subr.mxu0 0.0
        %1865 = vmatpush1.msra.mxu0 0.0
        %1866 = vmatprep.subr.mxu0 0.0
        %1867 = vmatpush1.msra.mxu0 0.0
        %1868 = vmatprep.subr.mxu0 0.0
        %1869 = vmatpush1.msra.mxu0 0.0
        %1870 = vmatprep.subr.mxu0 0.0
        %1871 = vmatpush1.msra.mxu0 0.0
        %1872 = vmatprep.subr.mxu0 0.0
        %1873 = vmatpush1.msra.mxu0 0.0
        %1874 = vmatprep.subr.mxu0 0.0
        %1875 = vmatpush1.msra.mxu0 0.0
        %1876 = vmatprep.subr.mxu0 0.0
        %1877 = vmatpush1.msra.mxu0 0.0
        %1878 = vmatprep.subr.mxu0 0.0
        %1879 = vmatpush1.msra.mxu0 0.0
        %1880 = vmatprep.mubr.f32.mxu0 0.0
        %v1881 = vand.u32 %v1733, 4294901760
        %1882 = vmatmul.mubr.f32.gmra.mrb[0].mxu0 %v1881
        %v1883 = vpop.f32.mrb[0].mxu0
        %v1884 = vadd.f32 %v1808, %v1883
        %v1885 = vpop.f32.mrb[0].mxu0
        %1886 = vdwg.mxu0
        %1887 = vmatprep.subr.mxu0 0.0
        %v1888 = vand.u32 %v1730, 4294901760
        %v1889 = vsub.f32 %v1730, %v1888
        %1890 = vmatpush1.msra.mxu0 %v1889
        %1891 = vmatprep.subr.mxu0 0.0
        %1892 = vmatpush1.msra.mxu0 0.0
        %1893 = vmatprep.subr.mxu0 0.0
        %1894 = vmatpush1.msra.mxu0 0.0
        %1895 = vmatprep.subr.mxu0 0.0
        %1896 = vmatpush1.msra.mxu0 0.0
        %1897 = vmatprep.subr.mxu0 0.0
        %1898 = vmatpush1.msra.mxu0 0.0
        %1899 = vmatprep.subr.mxu0 0.0
        %1900 = vmatpush1.msra.mxu0 0.0
        %1901 = vmatprep.subr.mxu0 0.0
        %1902 = vmatpush1.msra.mxu0 0.0
        %1903 = vmatprep.subr.mxu0 0.0
        %1904 = vmatpush1.msra.mxu0 0.0
        %1905 = vmatprep.subr.mxu0 0.0
        %1906 = vmatpush1.msra.mxu0 0.0
        %1907 = vmatprep.subr.mxu0 0.0
        %1908 = vmatpush1.msra.mxu0 0.0
        %1909 = vmatprep.subr.mxu0 0.0
        %1910 = vmatpush1.msra.mxu0 0.0
        %1911 = vmatprep.subr.mxu0 0.0
        %1912 = vmatpush1.msra.mxu0 0.0
        %1913 = vmatprep.subr.mxu0 0.0
        %1914 = vmatpush1.msra.mxu0 0.0
        %1915 = vmatprep.subr.mxu0 0.0
        %1916 = vmatpush1.msra.mxu0 0.0
        %1917 = vmatprep.subr.mxu0 0.0
        %1918 = vmatpush1.msra.mxu0 0.0
        %1919 = vmatprep.subr.mxu0 0.0
        %1920 = vmatpush1.msra.mxu0 0.0
        %1921 = vmatprep.subr.mxu0 0.0
        %1922 = vmatpush1.msra.mxu0 0.0
        %1923 = vmatprep.subr.mxu0 0.0
        %1924 = vmatpush1.msra.mxu0 0.0
        %1925 = vmatprep.subr.mxu0 0.0
        %1926 = vmatpush1.msra.mxu0 0.0
        %1927 = vmatprep.subr.mxu0 0.0
        %1928 = vmatpush1.msra.mxu0 0.0
        %1929 = vmatprep.subr.mxu0 0.0
        %1930 = vmatpush1.msra.mxu0 0.0
        %1931 = vmatprep.subr.mxu0 0.0
        %1932 = vmatpush1.msra.mxu0 0.0
        %1933 = vmatprep.subr.mxu0 0.0
        %1934 = vmatpush1.msra.mxu0 0.0
        %1935 = vmatprep.subr.mxu0 0.0
        %1936 = vmatpush1.msra.mxu0 0.0
        %1937 = vmatprep.subr.mxu0 0.0
        %1938 = vmatpush1.msra.mxu0 0.0
        %1939 = vmatprep.subr.mxu0 0.0
        %1940 = vmatpush1.msra.mxu0 0.0
        %1941 = vmatprep.subr.mxu0 0.0
        %1942 = vmatpush1.msra.mxu0 0.0
        %1943 = vmatprep.subr.mxu0 0.0
        %1944 = vmatpush1.msra.mxu0 0.0
        %1945 = vmatprep.subr.mxu0 0.0
        %1946 = vmatpush1.msra.mxu0 0.0
        %1947 = vmatprep.subr.mxu0 0.0
        %1948 = vmatpush1.msra.mxu0 0.0
        %1949 = vmatprep.subr.mxu0 0.0
        %1950 = vmatpush1.msra.mxu0 0.0
        %1951 = vmatprep.subr.mxu0 0.0
        %1952 = vmatpush1.msra.mxu0 0.0
        %1953 = vmatprep.mubr.f32.mxu0 0.0
        %v1954 = vand.u32 %v1733, 4294901760
        %v1955 = vsub.f32 %v1733, %v1954
        %1956 = vmatmul.mubr.f32.gmra.mrb[0].mxu0 %v1955
        %v1957 = vpop.f32.mrb[0].mxu0
        %v1958 = vadd.f32 %v1884, %v1957
        %v1959 = vpop.f32.mrb[0].mxu0
        %1960 = vdwg.mxu0
        %1961 = vmatprep.subr.mxu0 0.0
        %v1962 = vand.u32 %v1730, 4294901760
        %1963 = vmatpush1.msra.mxu0 %v1962
        %1964 = vmatprep.subr.mxu0 0.0
        %1965 = vmatpush1.msra.mxu0 0.0
        %1966 = vmatprep.subr.mxu0 0.0
        %1967 = vmatpush1.msra.mxu0 0.0
        %1968 = vmatprep.subr.mxu0 0.0
        %1969 = vmatpush1.msra.mxu0 0.0
        %1970 = vmatprep.subr.mxu0 0.0
        %1971 = vmatpush1.msra.mxu0 0.0
        %1972 = vmatprep.subr.mxu0 0.0
        %1973 = vmatpush1.msra.mxu0 0.0
        %1974 = vmatprep.subr.mxu0 0.0
        %1975 = vmatpush1.msra.mxu0 0.0
        %1976 = vmatprep.subr.mxu0 0.0
        %1977 = vmatpush1.msra.mxu0 0.0
        %1978 = vmatprep.subr.mxu0 0.0
        %1979 = vmatpush1.msra.mxu0 0.0
        %1980 = vmatprep.subr.mxu0 0.0
        %1981 = vmatpush1.msra.mxu0 0.0
        %1982 = vmatprep.subr.mxu0 0.0
        %1983 = vmatpush1.msra.mxu0 0.0
        %1984 = vmatprep.subr.mxu0 0.0
        %1985 = vmatpush1.msra.mxu0 0.0
        %1986 = vmatprep.subr.mxu0 0.0
        %1987 = vmatpush1.msra.mxu0 0.0
        %1988 = vmatprep.subr.mxu0 0.0
        %1989 = vmatpush1.msra.mxu0 0.0
        %1990 = vmatprep.subr.mxu0 0.0
        %1991 = vmatpush1.msra.mxu0 0.0
        %1992 = vmatprep.subr.mxu0 0.0
        %1993 = vmatpush1.msra.mxu0 0.0
        %1994 = vmatprep.subr.mxu0 0.0
        %1995 = vmatpush1.msra.mxu0 0.0
        %1996 = vmatprep.subr.mxu0 0.0
        %1997 = vmatpush1.msra.mxu0 0.0
        %1998 = vmatprep.subr.mxu0 0.0
        %1999 = vmatpush1.msra.mxu0 0.0
        %2000 = vmatprep.subr.mxu0 0.0
        %2001 = vmatpush1.msra.mxu0 0.0
        %2002 = vmatprep.subr.mxu0 0.0
        %2003 = vmatpush1.msra.mxu0 0.0
        %2004 = vmatprep.subr.mxu0 0.0
        %2005 = vmatpush1.msra.mxu0 0.0
        %2006 = vmatprep.subr.mxu0 0.0
        %2007 = vmatpush1.msra.mxu0 0.0
        %2008 = vmatprep.subr.mxu0 0.0
        %2009 = vmatpush1.msra.mxu0 0.0
        %2010 = vmatprep.subr.mxu0 0.0
        %2011 = vmatpush1.msra.mxu0 0.0
        %2012 = vmatprep.subr.mxu0 0.0
        %2013 = vmatpush1.msra.mxu0 0.0
        %2014 = vmatprep.subr.mxu0 0.0
        %2015 = vmatpush1.msra.mxu0 0.0
        %2016 = vmatprep.subr.mxu0 0.0
        %2017 = vmatpush1.msra.mxu0 0.0
        %2018 = vmatprep.subr.mxu0 0.0
        %2019 = vmatpush1.msra.mxu0 0.0
        %2020 = vmatprep.subr.mxu0 0.0
        %2021 = vmatpush1.msra.mxu0 0.0
        %2022 = vmatprep.subr.mxu0 0.0
        %2023 = vmatpush1.msra.mxu0 0.0
        %2024 = vmatprep.subr.mxu0 0.0
        %2025 = vmatpush1.msra.mxu0 0.0
        %2026 = vmatprep.mubr.f32.mxu0 0.0
        %v2027 = vand.u32 %v1733, 4294901760
        %v2028 = vsub.f32 %v1733, %v2027
        %v2029 = vand.u32 %v2028, 4294901760
        %2030 = vmatmul.mubr.f32.gmra.mrb[0].mxu0 %v2029
        %v2031 = vpop.f32.mrb[0].mxu0
        %v2032 = vadd.f32 %v1958, %v2031
        %v2033 = vpop.f32.mrb[0].mxu0
        %2034 = vdwg.mxu0
        %2035 = vmatprep.subr.mxu0 0.0
        %v2036 = vand.u32 %v1730, 4294901760
        %v2037 = vsub.f32 %v1730, %v2036
        %v2038 = vand.u32 %v2037, 4294901760
        %2039 = vmatpush1.msra.mxu0 %v2038
        %2040 = vmatprep.subr.mxu0 0.0
        %2041 = vmatpush1.msra.mxu0 0.0
        %2042 = vmatprep.subr.mxu0 0.0
        %2043 = vmatpush1.msra.mxu0 0.0
        %2044 = vmatprep.subr.mxu0 0.0
        %2045 = vmatpush1.msra.mxu0 0.0
        %2046 = vmatprep.subr.mxu0 0.0
        %2047 = vmatpush1.msra.mxu0 0.0
        %2048 = vmatprep.subr.mxu0 0.0
        %2049 = vmatpush1.msra.mxu0 0.0
        %2050 = vmatprep.subr.mxu0 0.0
        %2051 = vmatpush1.msra.mxu0 0.0
        %2052 = vmatprep.subr.mxu0 0.0
        %2053 = vmatpush1.msra.mxu0 0.0
        %2054 = vmatprep.subr.mxu0 0.0
        %2055 = vmatpush1.msra.mxu0 0.0
        %2056 = vmatprep.subr.mxu0 0.0
        %2057 = vmatpush1.msra.mxu0 0.0
        %2058 = vmatprep.subr.mxu0 0.0
        %2059 = vmatpush1.msra.mxu0 0.0
        %2060 = vmatprep.subr.mxu0 0.0
        %2061 = vmatpush1.msra.mxu0 0.0
        %2062 = vmatprep.subr.mxu0 0.0
        %2063 = vmatpush1.msra.mxu0 0.0
        %2064 = vmatprep.subr.mxu0 0.0
        %2065 = vmatpush1.msra.mxu0 0.0
        %2066 = vmatprep.subr.mxu0 0.0
        %2067 = vmatpush1.msra.mxu0 0.0
        %2068 = vmatprep.subr.mxu0 0.0
        %2069 = vmatpush1.msra.mxu0 0.0
        %2070 = vmatprep.subr.mxu0 0.0
        %2071 = vmatpush1.msra.mxu0 0.0
        %2072 = vmatprep.subr.mxu0 0.0
        %2073 = vmatpush1.msra.mxu0 0.0
        %2074 = vmatprep.subr.mxu0 0.0
        %2075 = vmatpush1.msra.mxu0 0.0
        %2076 = vmatprep.subr.mxu0 0.0
        %2077 = vmatpush1.msra.mxu0 0.0
        %2078 = vmatprep.subr.mxu0 0.0
        %2079 = vmatpush1.msra.mxu0 0.0
        %2080 = vmatprep.subr.mxu0 0.0
        %2081 = vmatpush1.msra.mxu0 0.0
        %2082 = vmatprep.subr.mxu0 0.0
        %2083 = vmatpush1.msra.mxu0 0.0
        %2084 = vmatprep.subr.mxu0 0.0
        %2085 = vmatpush1.msra.mxu0 0.0
        %2086 = vmatprep.subr.mxu0 0.0
        %2087 = vmatpush1.msra.mxu0 0.0
        %2088 = vmatprep.subr.mxu0 0.0
        %2089 = vmatpush1.msra.mxu0 0.0
        %2090 = vmatprep.subr.mxu0 0.0
        %2091 = vmatpush1.msra.mxu0 0.0
        %2092 = vmatprep.subr.mxu0 0.0
        %2093 = vmatpush1.msra.mxu0 0.0
        %2094 = vmatprep.subr.mxu0 0.0
        %2095 = vmatpush1.msra.mxu0 0.0
        %2096 = vmatprep.subr.mxu0 0.0
        %2097 = vmatpush1.msra.mxu0 0.0
        %2098 = vmatprep.subr.mxu0 0.0
        %2099 = vmatpush1.msra.mxu0 0.0
        %2100 = vmatprep.subr.mxu0 0.0
        %2101 = vmatpush1.msra.mxu0 0.0
        %2102 = vmatprep.mubr.f32.mxu0 0.0
        %v2103 = vand.u32 %v1733, 4294901760
        %2104 = vmatmul.mubr.f32.gmra.mrb[0].mxu0 %v2103
        %v2105 = vpop.f32.mrb[0].mxu0
        %v2106 = vadd.f32 %v2032, %v2105
        %v2107 = vpop.f32.mrb[0].mxu0
        %2108 = vdwg.mxu0
        %2109 = vmatprep.subr.mxu0 0.0
        %v2110 = vand.u32 %v1730, 4294901760
        %2111 = vmatpush1.msra.mxu0 %v2110
        %2112 = vmatprep.subr.mxu0 0.0
        %2113 = vmatpush1.msra.mxu0 0.0
        %2114 = vmatprep.subr.mxu0 0.0
        %2115 = vmatpush1.msra.mxu0 0.0
        %2116 = vmatprep.subr.mxu0 0.0
        %2117 = vmatpush1.msra.mxu0 0.0
        %2118 = vmatprep.subr.mxu0 0.0
        %2119 = vmatpush1.msra.mxu0 0.0
        %2120 = vmatprep.subr.mxu0 0.0
        %2121 = vmatpush1.msra.mxu0 0.0
        %2122 = vmatprep.subr.mxu0 0.0
        %2123 = vmatpush1.msra.mxu0 0.0
        %2124 = vmatprep.subr.mxu0 0.0
        %2125 = vmatpush1.msra.mxu0 0.0
        %2126 = vmatprep.subr.mxu0 0.0
        %2127 = vmatpush1.msra.mxu0 0.0
        %2128 = vmatprep.subr.mxu0 0.0
        %2129 = vmatpush1.msra.mxu0 0.0
        %2130 = vmatprep.subr.mxu0 0.0
        %2131 = vmatpush1.msra.mxu0 0.0
        %2132 = vmatprep.subr.mxu0 0.0
        %2133 = vmatpush1.msra.mxu0 0.0
        %2134 = vmatprep.subr.mxu0 0.0
        %2135 = vmatpush1.msra.mxu0 0.0
        %2136 = vmatprep.subr.mxu0 0.0
        %2137 = vmatpush1.msra.mxu0 0.0
        %2138 = vmatprep.subr.mxu0 0.0
        %2139 = vmatpush1.msra.mxu0 0.0
        %2140 = vmatprep.subr.mxu0 0.0
        %2141 = vmatpush1.msra.mxu0 0.0
        %2142 = vmatprep.subr.mxu0 0.0
        %2143 = vmatpush1.msra.mxu0 0.0
        %2144 = vmatprep.subr.mxu0 0.0
        %2145 = vmatpush1.msra.mxu0 0.0
        %2146 = vmatprep.subr.mxu0 0.0
        %2147 = vmatpush1.msra.mxu0 0.0
        %2148 = vmatprep.subr.mxu0 0.0
        %2149 = vmatpush1.msra.mxu0 0.0
        %2150 = vmatprep.subr.mxu0 0.0
        %2151 = vmatpush1.msra.mxu0 0.0
        %2152 = vmatprep.subr.mxu0 0.0
        %2153 = vmatpush1.msra.mxu0 0.0
        %2154 = vmatprep.subr.mxu0 0.0
        %2155 = vmatpush1.msra.mxu0 0.0
        %2156 = vmatprep.subr.mxu0 0.0
        %2157 = vmatpush1.msra.mxu0 0.0
        %2158 = vmatprep.subr.mxu0 0.0
        %2159 = vmatpush1.msra.mxu0 0.0
        %2160 = vmatprep.subr.mxu0 0.0
        %2161 = vmatpush1.msra.mxu0 0.0
        %2162 = vmatprep.subr.mxu0 0.0
        %2163 = vmatpush1.msra.mxu0 0.0
        %2164 = vmatprep.subr.mxu0 0.0
        %2165 = vmatpush1.msra.mxu0 0.0
        %2166 = vmatprep.subr.mxu0 0.0
        %2167 = vmatpush1.msra.mxu0 0.0
        %2168 = vmatprep.subr.mxu0 0.0
        %2169 = vmatpush1.msra.mxu0 0.0
        %2170 = vmatprep.subr.mxu0 0.0
        %2171 = vmatpush1.msra.mxu0 0.0
        %2172 = vmatprep.subr.mxu0 0.0
        %2173 = vmatpush1.msra.mxu0 0.0
        %2174 = vmatprep.mubr.f32.mxu0 0.0
        %v2175 = vand.u32 %v1733, 4294901760
        %2176 = vmatmul.mubr.f32.gmra.mrb[0].mxu0 %v2175
        %v2177 = vpop.f32.mrb[0].mxu0
        %v2178 = vadd.f32 %v2106, %v2177
        %v2179 = vpop.f32.mrb[0].mxu0
        %2180 = vdwg.mxu0
        %2181 = vrot.lane.b32.xlu0 %v335, 112
        %v2182 = vpop.permute.xlu0 %2181
        %2183 = vrot.lane.b32.xlu0 %v336, 112
        %v2184 = vpop.permute.xlu0 %2183
        %v2185 = vsel %vm339, %v2182, 0
        %v2187 = vsel %vm339, %v2184, 0
        %2189 = vmatprep.subr.mxu0 0.0
        %v2190 = vand.u32 %v2187, 4294901760
        %2191 = vmatpush1.xpose.msra.mxu0 %v2190
        %2192 = vmatprep.subr.mxu0 0.0
        %2193 = vmatpush1.xpose.msra.mxu0 0.0
        %2194 = vmatprep.subr.mxu0 0.0
        %2195 = vmatpush1.xpose.msra.mxu0 0.0
        %2196 = vmatprep.subr.mxu0 0.0
        %2197 = vmatpush1.xpose.msra.mxu0 0.0
        %2198 = vmatprep.subr.mxu0 0.0
        %2199 = vmatpush1.xpose.msra.mxu0 0.0
        %2200 = vmatprep.subr.mxu0 0.0
        %2201 = vmatpush1.xpose.msra.mxu0 0.0
        %2202 = vmatprep.subr.mxu0 0.0
        %2203 = vmatpush1.xpose.msra.mxu0 0.0
        %2204 = vmatprep.subr.mxu0 0.0
        %2205 = vmatpush1.xpose.msra.mxu0 0.0
        %2206 = vmatprep.subr.mxu0 0.0
        %2207 = vmatpush1.xpose.msra.mxu0 0.0
        %2208 = vmatprep.subr.mxu0 0.0
        %2209 = vmatpush1.xpose.msra.mxu0 0.0
        %2210 = vmatprep.subr.mxu0 0.0
        %2211 = vmatpush1.xpose.msra.mxu0 0.0
        %2212 = vmatprep.subr.mxu0 0.0
        %2213 = vmatpush1.xpose.msra.mxu0 0.0
        %2214 = vmatprep.subr.mxu0 0.0
        %2215 = vmatpush1.xpose.msra.mxu0 0.0
        %2216 = vmatprep.subr.mxu0 0.0
        %2217 = vmatpush1.xpose.msra.mxu0 0.0
        %2218 = vmatprep.subr.mxu0 0.0
        %2219 = vmatpush1.xpose.msra.mxu0 0.0
        %2220 = vmatprep.subr.mxu0 0.0
        %2221 = vmatpush1.xpose.msra.mxu0 0.0
        %2222 = vmatprep.subr.mxu0 0.0
        %2223 = vmatpush1.xpose.msra.mxu0 0.0
        %2224 = vmatprep.subr.mxu0 0.0
        %2225 = vmatpush1.xpose.msra.mxu0 0.0
        %2226 = vmatprep.subr.mxu0 0.0
        %2227 = vmatpush1.xpose.msra.mxu0 0.0
        %2228 = vmatprep.subr.mxu0 0.0
        %2229 = vmatpush1.xpose.msra.mxu0 0.0
        %2230 = vmatprep.subr.mxu0 0.0
        %2231 = vmatpush1.xpose.msra.mxu0 0.0
        %2232 = vmatprep.subr.mxu0 0.0
        %2233 = vmatpush1.xpose.msra.mxu0 0.0
        %2234 = vmatprep.subr.mxu0 0.0
        %2235 = vmatpush1.xpose.msra.mxu0 0.0
        %2236 = vmatprep.subr.mxu0 0.0
        %2237 = vmatpush1.xpose.msra.mxu0 0.0
        %2238 = vmatprep.subr.mxu0 0.0
        %2239 = vmatpush1.xpose.msra.mxu0 0.0
        %2240 = vmatprep.subr.mxu0 0.0
        %2241 = vmatpush1.xpose.msra.mxu0 0.0
        %2242 = vmatprep.subr.mxu0 0.0
        %2243 = vmatpush1.xpose.msra.mxu0 0.0
        %2244 = vmatprep.subr.mxu0 0.0
        %2245 = vmatpush1.xpose.msra.mxu0 0.0
        %2246 = vmatprep.subr.mxu0 0.0
        %2247 = vmatpush1.xpose.msra.mxu0 0.0
        %2248 = vmatprep.subr.mxu0 0.0
        %2249 = vmatpush1.xpose.msra.mxu0 0.0
        %2250 = vmatprep.subr.mxu0 0.0
        %2251 = vmatpush1.xpose.msra.mxu0 0.0
        %2252 = vmatprep.subr.mxu0 0.0
        %2253 = vmatpush1.xpose.msra.mxu0 0.0
        %2254 = vmatprep.mubr.f32.mxu0 0.0
        %v2255 = vand.u32 %v2185, 4294901760
        %v2256 = vsub.f32 %v2185, %v2255
        %v2257 = vand.u32 %v2256, 4294901760
        %v2258 = vsub.f32 %v2256, %v2257
        %v2259 = vand.u32 %v2258, 4294901760
        %2260 = vmatmul.mubr.f32.gmra.mrb[0].mxu0 %v2259
        %v2261 = vpop.f32.mrb[0].mxu0
        %v2262 = vadd.f32 0.0, %v2261
        %v2263 = vpop.f32.mrb[0].mxu0
        %2264 = vdwg.mxu0
        %2265 = vmatprep.subr.mxu0 0.0
        %v2266 = vand.u32 %v2187, 4294901760
        %v2267 = vsub.f32 %v2187, %v2266
        %v2268 = vand.u32 %v2267, 4294901760
        %v2269 = vsub.f32 %v2267, %v2268
        %v2270 = vand.u32 %v2269, 4294901760
        %2271 = vmatpush1.xpose.msra.mxu0 %v2270
        %2272 = vmatprep.subr.mxu0 0.0
        %2273 = vmatpush1.xpose.msra.mxu0 0.0
        %2274 = vmatprep.subr.mxu0 0.0
        %2275 = vmatpush1.xpose.msra.mxu0 0.0
        %2276 = vmatprep.subr.mxu0 0.0
        %2277 = vmatpush1.xpose.msra.mxu0 0.0
        %2278 = vmatprep.subr.mxu0 0.0
        %2279 = vmatpush1.xpose.msra.mxu0 0.0
        %2280 = vmatprep.subr.mxu0 0.0
        %2281 = vmatpush1.xpose.msra.mxu0 0.0
        %2282 = vmatprep.subr.mxu0 0.0
        %2283 = vmatpush1.xpose.msra.mxu0 0.0
        %2284 = vmatprep.subr.mxu0 0.0
        %2285 = vmatpush1.xpose.msra.mxu0 0.0
        %2286 = vmatprep.subr.mxu0 0.0
        %2287 = vmatpush1.xpose.msra.mxu0 0.0
        %2288 = vmatprep.subr.mxu0 0.0
        %2289 = vmatpush1.xpose.msra.mxu0 0.0
        %2290 = vmatprep.subr.mxu0 0.0
        %2291 = vmatpush1.xpose.msra.mxu0 0.0
        %2292 = vmatprep.subr.mxu0 0.0
        %2293 = vmatpush1.xpose.msra.mxu0 0.0
        %2294 = vmatprep.subr.mxu0 0.0
        %2295 = vmatpush1.xpose.msra.mxu0 0.0
        %2296 = vmatprep.subr.mxu0 0.0
        %2297 = vmatpush1.xpose.msra.mxu0 0.0
        %2298 = vmatprep.subr.mxu0 0.0
        %2299 = vmatpush1.xpose.msra.mxu0 0.0
        %2300 = vmatprep.subr.mxu0 0.0
        %2301 = vmatpush1.xpose.msra.mxu0 0.0
        %2302 = vmatprep.subr.mxu0 0.0
        %2303 = vmatpush1.xpose.msra.mxu0 0.0
        %2304 = vmatprep.subr.mxu0 0.0
        %2305 = vmatpush1.xpose.msra.mxu0 0.0
        %2306 = vmatprep.subr.mxu0 0.0
        %2307 = vmatpush1.xpose.msra.mxu0 0.0
        %2308 = vmatprep.subr.mxu0 0.0
        %2309 = vmatpush1.xpose.msra.mxu0 0.0
        %2310 = vmatprep.subr.mxu0 0.0
        %2311 = vmatpush1.xpose.msra.mxu0 0.0
        %2312 = vmatprep.subr.mxu0 0.0
        %2313 = vmatpush1.xpose.msra.mxu0 0.0
        %2314 = vmatprep.subr.mxu0 0.0
        %2315 = vmatpush1.xpose.msra.mxu0 0.0
        %2316 = vmatprep.subr.mxu0 0.0
        %2317 = vmatpush1.xpose.msra.mxu0 0.0
        %2318 = vmatprep.subr.mxu0 0.0
        %2319 = vmatpush1.xpose.msra.mxu0 0.0
        %2320 = vmatprep.subr.mxu0 0.0
        %2321 = vmatpush1.xpose.msra.mxu0 0.0
        %2322 = vmatprep.subr.mxu0 0.0
        %2323 = vmatpush1.xpose.msra.mxu0 0.0
        %2324 = vmatprep.subr.mxu0 0.0
        %2325 = vmatpush1.xpose.msra.mxu0 0.0
        %2326 = vmatprep.subr.mxu0 0.0
        %2327 = vmatpush1.xpose.msra.mxu0 0.0
        %2328 = vmatprep.subr.mxu0 0.0
        %2329 = vmatpush1.xpose.msra.mxu0 0.0
        %2330 = vmatprep.subr.mxu0 0.0
        %2331 = vmatpush1.xpose.msra.mxu0 0.0
        %2332 = vmatprep.subr.mxu0 0.0
        %2333 = vmatpush1.xpose.msra.mxu0 0.0
        %2334 = vmatprep.mubr.f32.mxu0 0.0
        %v2335 = vand.u32 %v2185, 4294901760
        %2336 = vmatmul.mubr.f32.gmra.mrb[0].mxu0 %v2335
        %v2337 = vpop.f32.mrb[0].mxu0
        %v2338 = vadd.f32 %v2262, %v2337
        %v2339 = vpop.f32.mrb[0].mxu0
        %2340 = vdwg.mxu0
        %2341 = vmatprep.subr.mxu0 0.0
        %v2342 = vand.u32 %v2187, 4294901760
        %v2343 = vsub.f32 %v2187, %v2342
        %2344 = vmatpush1.xpose.msra.mxu0 %v2343
        %2345 = vmatprep.subr.mxu0 0.0
        %2346 = vmatpush1.xpose.msra.mxu0 0.0
        %2347 = vmatprep.subr.mxu0 0.0
        %2348 = vmatpush1.xpose.msra.mxu0 0.0
        %2349 = vmatprep.subr.mxu0 0.0
        %2350 = vmatpush1.xpose.msra.mxu0 0.0
        %2351 = vmatprep.subr.mxu0 0.0
        %2352 = vmatpush1.xpose.msra.mxu0 0.0
        %2353 = vmatprep.subr.mxu0 0.0
        %2354 = vmatpush1.xpose.msra.mxu0 0.0
        %2355 = vmatprep.subr.mxu0 0.0
        %2356 = vmatpush1.xpose.msra.mxu0 0.0
        %2357 = vmatprep.subr.mxu0 0.0
        %2358 = vmatpush1.xpose.msra.mxu0 0.0
        %2359 = vmatprep.subr.mxu0 0.0
        %2360 = vmatpush1.xpose.msra.mxu0 0.0
        %2361 = vmatprep.subr.mxu0 0.0
        %2362 = vmatpush1.xpose.msra.mxu0 0.0
        %2363 = vmatprep.subr.mxu0 0.0
        %2364 = vmatpush1.xpose.msra.mxu0 0.0
        %2365 = vmatprep.subr.mxu0 0.0
        %2366 = vmatpush1.xpose.msra.mxu0 0.0
        %2367 = vmatprep.subr.mxu0 0.0
        %2368 = vmatpush1.xpose.msra.mxu0 0.0
        %2369 = vmatprep.subr.mxu0 0.0
        %2370 = vmatpush1.xpose.msra.mxu0 0.0
        %2371 = vmatprep.subr.mxu0 0.0
        %2372 = vmatpush1.xpose.msra.mxu0 0.0
        %2373 = vmatprep.subr.mxu0 0.0
        %2374 = vmatpush1.xpose.msra.mxu0 0.0
        %2375 = vmatprep.subr.mxu0 0.0
        %2376 = vmatpush1.xpose.msra.mxu0 0.0
        %2377 = vmatprep.subr.mxu0 0.0
        %2378 = vmatpush1.xpose.msra.mxu0 0.0
        %2379 = vmatprep.subr.mxu0 0.0
        %2380 = vmatpush1.xpose.msra.mxu0 0.0
        %2381 = vmatprep.subr.mxu0 0.0
        %2382 = vmatpush1.xpose.msra.mxu0 0.0
        %2383 = vmatprep.subr.mxu0 0.0
        %2384 = vmatpush1.xpose.msra.mxu0 0.0
        %2385 = vmatprep.subr.mxu0 0.0
        %2386 = vmatpush1.xpose.msra.mxu0 0.0
        %2387 = vmatprep.subr.mxu0 0.0
        %2388 = vmatpush1.xpose.msra.mxu0 0.0
        %2389 = vmatprep.subr.mxu0 0.0
        %2390 = vmatpush1.xpose.msra.mxu0 0.0
        %2391 = vmatprep.subr.mxu0 0.0
        %2392 = vmatpush1.xpose.msra.mxu0 0.0
        %2393 = vmatprep.subr.mxu0 0.0
        %2394 = vmatpush1.xpose.msra.mxu0 0.0
        %2395 = vmatprep.subr.mxu0 0.0
        %2396 = vmatpush1.xpose.msra.mxu0 0.0
        %2397 = vmatprep.subr.mxu0 0.0
        %2398 = vmatpush1.xpose.msra.mxu0 0.0
        %2399 = vmatprep.subr.mxu0 0.0
        %2400 = vmatpush1.xpose.msra.mxu0 0.0
        %2401 = vmatprep.subr.mxu0 0.0
        %2402 = vmatpush1.xpose.msra.mxu0 0.0
        %2403 = vmatprep.subr.mxu0 0.0
        %2404 = vmatpush1.xpose.msra.mxu0 0.0
        %2405 = vmatprep.subr.mxu0 0.0
        %2406 = vmatpush1.xpose.msra.mxu0 0.0
        %2407 = vmatprep.mubr.f32.mxu0 0.0
        %v2408 = vand.u32 %v2185, 4294901760
        %v2409 = vsub.f32 %v2185, %v2408
        %2410 = vmatmul.mubr.f32.gmra.mrb[0].mxu0 %v2409
        %v2411 = vpop.f32.mrb[0].mxu0
        %v2412 = vadd.f32 %v2338, %v2411
        %v2413 = vpop.f32.mrb[0].mxu0
        %2414 = vdwg.mxu0
        %2415 = vmatprep.subr.mxu0 0.0
        %v2416 = vand.u32 %v2187, 4294901760
        %2417 = vmatpush1.xpose.msra.mxu0 %v2416
        %2418 = vmatprep.subr.mxu0 0.0
        %2419 = vmatpush1.xpose.msra.mxu0 0.0
        %2420 = vmatprep.subr.mxu0 0.0
        %2421 = vmatpush1.xpose.msra.mxu0 0.0
        %2422 = vmatprep.subr.mxu0 0.0
        %2423 = vmatpush1.xpose.msra.mxu0 0.0
        %2424 = vmatprep.subr.mxu0 0.0
        %2425 = vmatpush1.xpose.msra.mxu0 0.0
        %2426 = vmatprep.subr.mxu0 0.0
        %2427 = vmatpush1.xpose.msra.mxu0 0.0
        %2428 = vmatprep.subr.mxu0 0.0
        %2429 = vmatpush1.xpose.msra.mxu0 0.0
        %2430 = vmatprep.subr.mxu0 0.0
        %2431 = vmatpush1.xpose.msra.mxu0 0.0
        %2432 = vmatprep.subr.mxu0 0.0
        %2433 = vmatpush1.xpose.msra.mxu0 0.0
        %2434 = vmatprep.subr.mxu0 0.0
        %2435 = vmatpush1.xpose.msra.mxu0 0.0
        %2436 = vmatprep.subr.mxu0 0.0
        %2437 = vmatpush1.xpose.msra.mxu0 0.0
        %2438 = vmatprep.subr.mxu0 0.0
        %2439 = vmatpush1.xpose.msra.mxu0 0.0
        %2440 = vmatprep.subr.mxu0 0.0
        %2441 = vmatpush1.xpose.msra.mxu0 0.0
        %2442 = vmatprep.subr.mxu0 0.0
        %2443 = vmatpush1.xpose.msra.mxu0 0.0
        %2444 = vmatprep.subr.mxu0 0.0
        %2445 = vmatpush1.xpose.msra.mxu0 0.0
        %2446 = vmatprep.subr.mxu0 0.0
        %2447 = vmatpush1.xpose.msra.mxu0 0.0
        %2448 = vmatprep.subr.mxu0 0.0
        %2449 = vmatpush1.xpose.msra.mxu0 0.0
        %2450 = vmatprep.subr.mxu0 0.0
        %2451 = vmatpush1.xpose.msra.mxu0 0.0
        %2452 = vmatprep.subr.mxu0 0.0
        %2453 = vmatpush1.xpose.msra.mxu0 0.0
        %2454 = vmatprep.subr.mxu0 0.0
        %2455 = vmatpush1.xpose.msra.mxu0 0.0
        %2456 = vmatprep.subr.mxu0 0.0
        %2457 = vmatpush1.xpose.msra.mxu0 0.0
        %2458 = vmatprep.subr.mxu0 0.0
        %2459 = vmatpush1.xpose.msra.mxu0 0.0
        %2460 = vmatprep.subr.mxu0 0.0
        %2461 = vmatpush1.xpose.msra.mxu0 0.0
        %2462 = vmatprep.subr.mxu0 0.0
        %2463 = vmatpush1.xpose.msra.mxu0 0.0
        %2464 = vmatprep.subr.mxu0 0.0
        %2465 = vmatpush1.xpose.msra.mxu0 0.0
        %2466 = vmatprep.subr.mxu0 0.0
        %2467 = vmatpush1.xpose.msra.mxu0 0.0
        %2468 = vmatprep.subr.mxu0 0.0
        %2469 = vmatpush1.xpose.msra.mxu0 0.0
        %2470 = vmatprep.subr.mxu0 0.0
        %2471 = vmatpush1.xpose.msra.mxu0 0.0
        %2472 = vmatprep.subr.mxu0 0.0
        %2473 = vmatpush1.xpose.msra.mxu0 0.0
        %2474 = vmatprep.subr.mxu0 0.0
        %2475 = vmatpush1.xpose.msra.mxu0 0.0
        %2476 = vmatprep.subr.mxu0 0.0
        %2477 = vmatpush1.xpose.msra.mxu0 0.0
        %2478 = vmatprep.subr.mxu0 0.0
        %2479 = vmatpush1.xpose.msra.mxu0 0.0
        %2480 = vmatprep.mubr.f32.mxu0 0.0
        %v2481 = vand.u32 %v2185, 4294901760
        %v2482 = vsub.f32 %v2185, %v2481
        %v2483 = vand.u32 %v2482, 4294901760
        %2484 = vmatmul.mubr.f32.gmra.mrb[0].mxu0 %v2483
        %v2485 = vpop.f32.mrb[0].mxu0
        %v2486 = vadd.f32 %v2412, %v2485
        %v2487 = vpop.f32.mrb[0].mxu0
        %2488 = vdwg.mxu0
        %2489 = vmatprep.subr.mxu0 0.0
        %v2490 = vand.u32 %v2187, 4294901760
        %v2491 = vsub.f32 %v2187, %v2490
        %v2492 = vand.u32 %v2491, 4294901760
        %2493 = vmatpush1.xpose.msra.mxu0 %v2492
        %2494 = vmatprep.subr.mxu0 0.0
        %2495 = vmatpush1.xpose.msra.mxu0 0.0
        %2496 = vmatprep.subr.mxu0 0.0
        %2497 = vmatpush1.xpose.msra.mxu0 0.0
        %2498 = vmatprep.subr.mxu0 0.0
        %2499 = vmatpush1.xpose.msra.mxu0 0.0
        %2500 = vmatprep.subr.mxu0 0.0
        %2501 = vmatpush1.xpose.msra.mxu0 0.0
        %2502 = vmatprep.subr.mxu0 0.0
        %2503 = vmatpush1.xpose.msra.mxu0 0.0
        %2504 = vmatprep.subr.mxu0 0.0
        %2505 = vmatpush1.xpose.msra.mxu0 0.0
        %2506 = vmatprep.subr.mxu0 0.0
        %2507 = vmatpush1.xpose.msra.mxu0 0.0
        %2508 = vmatprep.subr.mxu0 0.0
        %2509 = vmatpush1.xpose.msra.mxu0 0.0
        %2510 = vmatprep.subr.mxu0 0.0
        %2511 = vmatpush1.xpose.msra.mxu0 0.0
        %2512 = vmatprep.subr.mxu0 0.0
        %2513 = vmatpush1.xpose.msra.mxu0 0.0
        %2514 = vmatprep.subr.mxu0 0.0
        %2515 = vmatpush1.xpose.msra.mxu0 0.0
        %2516 = vmatprep.subr.mxu0 0.0
        %2517 = vmatpush1.xpose.msra.mxu0 0.0
        %2518 = vmatprep.subr.mxu0 0.0
        %2519 = vmatpush1.xpose.msra.mxu0 0.0
        %2520 = vmatprep.subr.mxu0 0.0
        %2521 = vmatpush1.xpose.msra.mxu0 0.0
        %2522 = vmatprep.subr.mxu0 0.0
        %2523 = vmatpush1.xpose.msra.mxu0 0.0
        %2524 = vmatprep.subr.mxu0 0.0
        %2525 = vmatpush1.xpose.msra.mxu0 0.0
        %2526 = vmatprep.subr.mxu0 0.0
        %2527 = vmatpush1.xpose.msra.mxu0 0.0
        %2528 = vmatprep.subr.mxu0 0.0
        %2529 = vmatpush1.xpose.msra.mxu0 0.0
        %2530 = vmatprep.subr.mxu0 0.0
        %2531 = vmatpush1.xpose.msra.mxu0 0.0
        %2532 = vmatprep.subr.mxu0 0.0
        %2533 = vmatpush1.xpose.msra.mxu0 0.0
        %2534 = vmatprep.subr.mxu0 0.0
        %2535 = vmatpush1.xpose.msra.mxu0 0.0
        %2536 = vmatprep.subr.mxu0 0.0
        %2537 = vmatpush1.xpose.msra.mxu0 0.0
        %2538 = vmatprep.subr.mxu0 0.0
        %2539 = vmatpush1.xpose.msra.mxu0 0.0
        %2540 = vmatprep.subr.mxu0 0.0
        %2541 = vmatpush1.xpose.msra.mxu0 0.0
        %2542 = vmatprep.subr.mxu0 0.0
        %2543 = vmatpush1.xpose.msra.mxu0 0.0
        %2544 = vmatprep.subr.mxu0 0.0
        %2545 = vmatpush1.xpose.msra.mxu0 0.0
        %2546 = vmatprep.subr.mxu0 0.0
        %2547 = vmatpush1.xpose.msra.mxu0 0.0
        %2548 = vmatprep.subr.mxu0 0.0
        %2549 = vmatpush1.xpose.msra.mxu0 0.0
        %2550 = vmatprep.subr.mxu0 0.0
        %2551 = vmatpush1.xpose.msra.mxu0 0.0
        %2552 = vmatprep.subr.mxu0 0.0
        %2553 = vmatpush1.xpose.msra.mxu0 0.0
        %2554 = vmatprep.subr.mxu0 0.0
        %2555 = vmatpush1.xpose.msra.mxu0 0.0
        %2556 = vmatprep.mubr.f32.mxu0 0.0
        %v2557 = vand.u32 %v2185, 4294901760
        %2558 = vmatmul.mubr.f32.gmra.mrb[0].mxu0 %v2557
        %v2559 = vpop.f32.mrb[0].mxu0
        %v2560 = vadd.f32 %v2486, %v2559
        %v2561 = vpop.f32.mrb[0].mxu0
        %2562 = vdwg.mxu0
        %2563 = vmatprep.subr.mxu0 0.0
        %v2564 = vand.u32 %v2187, 4294901760
        %2565 = vmatpush1.xpose.msra.mxu0 %v2564
        %2566 = vmatprep.subr.mxu0 0.0
        %2567 = vmatpush1.xpose.msra.mxu0 0.0
        %2568 = vmatprep.subr.mxu0 0.0
        %2569 = vmatpush1.xpose.msra.mxu0 0.0
        %2570 = vmatprep.subr.mxu0 0.0
        %2571 = vmatpush1.xpose.msra.mxu0 0.0
        %2572 = vmatprep.subr.mxu0 0.0
        %2573 = vmatpush1.xpose.msra.mxu0 0.0
        %2574 = vmatprep.subr.mxu0 0.0
        %2575 = vmatpush1.xpose.msra.mxu0 0.0
        %2576 = vmatprep.subr.mxu0 0.0
        %2577 = vmatpush1.xpose.msra.mxu0 0.0
        %2578 = vmatprep.subr.mxu0 0.0
        %2579 = vmatpush1.xpose.msra.mxu0 0.0
        %2580 = vmatprep.subr.mxu0 0.0
        %2581 = vmatpush1.xpose.msra.mxu0 0.0
        %2582 = vmatprep.subr.mxu0 0.0
        %2583 = vmatpush1.xpose.msra.mxu0 0.0
        %2584 = vmatprep.subr.mxu0 0.0
        %2585 = vmatpush1.xpose.msra.mxu0 0.0
        %2586 = vmatprep.subr.mxu0 0.0
        %2587 = vmatpush1.xpose.msra.mxu0 0.0
        %2588 = vmatprep.subr.mxu0 0.0
        %2589 = vmatpush1.xpose.msra.mxu0 0.0
        %2590 = vmatprep.subr.mxu0 0.0
        %2591 = vmatpush1.xpose.msra.mxu0 0.0
        %2592 = vmatprep.subr.mxu0 0.0
        %2593 = vmatpush1.xpose.msra.mxu0 0.0
        %2594 = vmatprep.subr.mxu0 0.0
        %2595 = vmatpush1.xpose.msra.mxu0 0.0
        %2596 = vmatprep.subr.mxu0 0.0
        %2597 = vmatpush1.xpose.msra.mxu0 0.0
        %2598 = vmatprep.subr.mxu0 0.0
        %2599 = vmatpush1.xpose.msra.mxu0 0.0
        %2600 = vmatprep.subr.mxu0 0.0
        %2601 = vmatpush1.xpose.msra.mxu0 0.0
        %2602 = vmatprep.subr.mxu0 0.0
        %2603 = vmatpush1.xpose.msra.mxu0 0.0
        %2604 = vmatprep.subr.mxu0 0.0
        %2605 = vmatpush1.xpose.msra.mxu0 0.0
        %2606 = vmatprep.subr.mxu0 0.0
        %2607 = vmatpush1.xpose.msra.mxu0 0.0
        %2608 = vmatprep.subr.mxu0 0.0
        %2609 = vmatpush1.xpose.msra.mxu0 0.0
        %2610 = vmatprep.subr.mxu0 0.0
        %2611 = vmatpush1.xpose.msra.mxu0 0.0
        %2612 = vmatprep.subr.mxu0 0.0
        %2613 = vmatpush1.xpose.msra.mxu0 0.0
        %2614 = vmatprep.subr.mxu0 0.0
        %2615 = vmatpush1.xpose.msra.mxu0 0.0
        %2616 = vmatprep.subr.mxu0 0.0
        %2617 = vmatpush1.xpose.msra.mxu0 0.0
        %2618 = vmatprep.subr.mxu0 0.0
        %2619 = vmatpush1.xpose.msra.mxu0 0.0
        %2620 = vmatprep.subr.mxu0 0.0
        %2621 = vmatpush1.xpose.msra.mxu0 0.0
        %2622 = vmatprep.subr.mxu0 0.0
        %2623 = vmatpush1.xpose.msra.mxu0 0.0
        %2624 = vmatprep.subr.mxu0 0.0
        %2625 = vmatpush1.xpose.msra.mxu0 0.0
        %2626 = vmatprep.subr.mxu0 0.0
        %2627 = vmatpush1.xpose.msra.mxu0 0.0
        %2628 = vmatprep.mubr.f32.mxu0 0.0
        %v2629 = vand.u32 %v2185, 4294901760
        %2630 = vmatmul.mubr.f32.gmra.mrb[0].mxu0 %v2629
        %v2631 = vpop.f32.mrb[0].mxu0
        %v2632 = vadd.f32 %v2560, %v2631
        %v2633 = vpop.f32.mrb[0].mxu0
        %2634 = vdwg.mxu0
        %v2635 = vmul.f32 %v2632, 0.35355338
        %v2636 = vmul.f32 %v2635, %v798
        %v2637 = vsel %vm339, %v2636, -inf
        %2638 = vmax.xlane.f32.xlu0 %v2637
        %v2639 = vpop.xlane.xlu0 %2638
        %v2640 = vsub.f32 %v2636, %v2639
        %v2641 = vmul.f32 %v2640, 1.442695
        %v2642 = vpow.pop %v2641
        %v2643 = vsel %vm339, %v2642, 0.0
        %2644 = vadd.xlane.f32.xlu0 %v2643
        %v2645 = vpop.xlane.xlu0 %2644
        %v2646 = vrcp.pop %v2645
        %v2647 = vmul.f32 %v2642, %v2646
        %2648 = vrot.lane.b32.xlu0 %v337, 112
        %v2649 = vpop.permute.xlu0 %2648
        %v2652 = vsel %vm339, %v2647, 0
        %2654 = vmatprep.subr.mxu0 0.0
        %v2655 = vand.u32 %v2649, 4294901760
        %2656 = vmatpush1.msra.mxu0 %v2655
        %2657 = vmatprep.subr.mxu0 0.0
        %2658 = vmatpush1.msra.mxu0 0.0
        %2659 = vmatprep.subr.mxu0 0.0
        %2660 = vmatpush1.msra.mxu0 0.0
        %2661 = vmatprep.subr.mxu0 0.0
        %2662 = vmatpush1.msra.mxu0 0.0
        %2663 = vmatprep.subr.mxu0 0.0
        %2664 = vmatpush1.msra.mxu0 0.0
        %2665 = vmatprep.subr.mxu0 0.0
        %2666 = vmatpush1.msra.mxu0 0.0
        %2667 = vmatprep.subr.mxu0 0.0
        %2668 = vmatpush1.msra.mxu0 0.0
        %2669 = vmatprep.subr.mxu0 0.0
        %2670 = vmatpush1.msra.mxu0 0.0
        %2671 = vmatprep.subr.mxu0 0.0
        %2672 = vmatpush1.msra.mxu0 0.0
        %2673 = vmatprep.subr.mxu0 0.0
        %2674 = vmatpush1.msra.mxu0 0.0
        %2675 = vmatprep.subr.mxu0 0.0
        %2676 = vmatpush1.msra.mxu0 0.0
        %2677 = vmatprep.subr.mxu0 0.0
        %2678 = vmatpush1.msra.mxu0 0.0
        %2679 = vmatprep.subr.mxu0 0.0
        %2680 = vmatpush1.msra.mxu0 0.0
        %2681 = vmatprep.subr.mxu0 0.0
        %2682 = vmatpush1.msra.mxu0 0.0
        %2683 = vmatprep.subr.mxu0 0.0
        %2684 = vmatpush1.msra.mxu0 0.0
        %2685 = vmatprep.subr.mxu0 0.0
        %2686 = vmatpush1.msra.mxu0 0.0
        %2687 = vmatprep.subr.mxu0 0.0
        %2688 = vmatpush1.msra.mxu0 0.0
        %2689 = vmatprep.subr.mxu0 0.0
        %2690 = vmatpush1.msra.mxu0 0.0
        %2691 = vmatprep.subr.mxu0 0.0
        %2692 = vmatpush1.msra.mxu0 0.0
        %2693 = vmatprep.subr.mxu0 0.0
        %2694 = vmatpush1.msra.mxu0 0.0
        %2695 = vmatprep.subr.mxu0 0.0
        %2696 = vmatpush1.msra.mxu0 0.0
        %2697 = vmatprep.subr.mxu0 0.0
        %2698 = vmatpush1.msra.mxu0 0.0
        %2699 = vmatprep.subr.mxu0 0.0
        %2700 = vmatpush1.msra.mxu0 0.0
        %2701 = vmatprep.subr.mxu0 0.0
        %2702 = vmatpush1.msra.mxu0 0.0
        %2703 = vmatprep.subr.mxu0 0.0
        %2704 = vmatpush1.msra.mxu0 0.0
        %2705 = vmatprep.subr.mxu0 0.0
        %2706 = vmatpush1.msra.mxu0 0.0
        %2707 = vmatprep.subr.mxu0 0.0
        %2708 = vmatpush1.msra.mxu0 0.0
        %2709 = vmatprep.subr.mxu0 0.0
        %2710 = vmatpush1.msra.mxu0 0.0
        %2711 = vmatprep.subr.mxu0 0.0
        %2712 = vmatpush1.msra.mxu0 0.0
        %2713 = vmatprep.subr.mxu0 0.0
        %2714 = vmatpush1.msra.mxu0 0.0
        %2715 = vmatprep.subr.mxu0 0.0
        %2716 = vmatpush1.msra.mxu0 0.0
        %2717 = vmatprep.subr.mxu0 0.0
        %2718 = vmatpush1.msra.mxu0 0.0
        %2719 = vmatprep.mubr.f32.mxu0 0.0
        %v2720 = vand.u32 %v2652, 4294901760
        %v2721 = vsub.f32 %v2652, %v2720
        %v2722 = vand.u32 %v2721, 4294901760
        %v2723 = vsub.f32 %v2721, %v2722
        %v2724 = vand.u32 %v2723, 4294901760
        %2725 = vmatmul.mubr.f32.gmra.mrb[0].mxu0 %v2724
        %v2726 = vpop.f32.mrb[0].mxu0
        %v2727 = vadd.f32 0.0, %v2726
        %v2728 = vpop.f32.mrb[0].mxu0
        %2729 = vdwg.mxu0
        %2730 = vmatprep.subr.mxu0 0.0
        %v2731 = vand.u32 %v2649, 4294901760
        %v2732 = vsub.f32 %v2649, %v2731
        %v2733 = vand.u32 %v2732, 4294901760
        %v2734 = vsub.f32 %v2732, %v2733
        %v2735 = vand.u32 %v2734, 4294901760
        %2736 = vmatpush1.msra.mxu0 %v2735
        %2737 = vmatprep.subr.mxu0 0.0
        %2738 = vmatpush1.msra.mxu0 0.0
        %2739 = vmatprep.subr.mxu0 0.0
        %2740 = vmatpush1.msra.mxu0 0.0
        %2741 = vmatprep.subr.mxu0 0.0
        %2742 = vmatpush1.msra.mxu0 0.0
        %2743 = vmatprep.subr.mxu0 0.0
        %2744 = vmatpush1.msra.mxu0 0.0
        %2745 = vmatprep.subr.mxu0 0.0
        %2746 = vmatpush1.msra.mxu0 0.0
        %2747 = vmatprep.subr.mxu0 0.0
        %2748 = vmatpush1.msra.mxu0 0.0
        %2749 = vmatprep.subr.mxu0 0.0
        %2750 = vmatpush1.msra.mxu0 0.0
        %2751 = vmatprep.subr.mxu0 0.0
        %2752 = vmatpush1.msra.mxu0 0.0
        %2753 = vmatprep.subr.mxu0 0.0
        %2754 = vmatpush1.msra.mxu0 0.0
        %2755 = vmatprep.subr.mxu0 0.0
        %2756 = vmatpush1.msra.mxu0 0.0
        %2757 = vmatprep.subr.mxu0 0.0
        %2758 = vmatpush1.msra.mxu0 0.0
        %2759 = vmatprep.subr.mxu0 0.0
        %2760 = vmatpush1.msra.mxu0 0.0
        %2761 = vmatprep.subr.mxu0 0.0
        %2762 = vmatpush1.msra.mxu0 0.0
        %2763 = vmatprep.subr.mxu0 0.0
        %2764 = vmatpush1.msra.mxu0 0.0
        %2765 = vmatprep.subr.mxu0 0.0
        %2766 = vmatpush1.msra.mxu0 0.0
        %2767 = vmatprep.subr.mxu0 0.0
        %2768 = vmatpush1.msra.mxu0 0.0
        %2769 = vmatprep.subr.mxu0 0.0
        %2770 = vmatpush1.msra.mxu0 0.0
        %2771 = vmatprep.subr.mxu0 0.0
        %2772 = vmatpush1.msra.mxu0 0.0
        %2773 = vmatprep.subr.mxu0 0.0
        %2774 = vmatpush1.msra.mxu0 0.0
        %2775 = vmatprep.subr.mxu0 0.0
        %2776 = vmatpush1.msra.mxu0 0.0
        %2777 = vmatprep.subr.mxu0 0.0
        %2778 = vmatpush1.msra.mxu0 0.0
        %2779 = vmatprep.subr.mxu0 0.0
        %2780 = vmatpush1.msra.mxu0 0.0
        %2781 = vmatprep.subr.mxu0 0.0
        %2782 = vmatpush1.msra.mxu0 0.0
        %2783 = vmatprep.subr.mxu0 0.0
        %2784 = vmatpush1.msra.mxu0 0.0
        %2785 = vmatprep.subr.mxu0 0.0
        %2786 = vmatpush1.msra.mxu0 0.0
        %2787 = vmatprep.subr.mxu0 0.0
        %2788 = vmatpush1.msra.mxu0 0.0
        %2789 = vmatprep.subr.mxu0 0.0
        %2790 = vmatpush1.msra.mxu0 0.0
        %2791 = vmatprep.subr.mxu0 0.0
        %2792 = vmatpush1.msra.mxu0 0.0
        %2793 = vmatprep.subr.mxu0 0.0
        %2794 = vmatpush1.msra.mxu0 0.0
        %2795 = vmatprep.subr.mxu0 0.0
        %2796 = vmatpush1.msra.mxu0 0.0
        %2797 = vmatprep.subr.mxu0 0.0
        %2798 = vmatpush1.msra.mxu0 0.0
        %2799 = vmatprep.mubr.f32.mxu0 0.0
        %v2800 = vand.u32 %v2652, 4294901760
        %2801 = vmatmul.mubr.f32.gmra.mrb[0].mxu0 %v2800
        %v2802 = vpop.f32.mrb[0].mxu0
        %v2803 = vadd.f32 %v2727, %v2802
        %v2804 = vpop.f32.mrb[0].mxu0
        %2805 = vdwg.mxu0
        %2806 = vmatprep.subr.mxu0 0.0
        %v2807 = vand.u32 %v2649, 4294901760
        %v2808 = vsub.f32 %v2649, %v2807
        %2809 = vmatpush1.msra.mxu0 %v2808
        %2810 = vmatprep.subr.mxu0 0.0
        %2811 = vmatpush1.msra.mxu0 0.0
        %2812 = vmatprep.subr.mxu0 0.0
        %2813 = vmatpush1.msra.mxu0 0.0
        %2814 = vmatprep.subr.mxu0 0.0
        %2815 = vmatpush1.msra.mxu0 0.0
        %2816 = vmatprep.subr.mxu0 0.0
        %2817 = vmatpush1.msra.mxu0 0.0
        %2818 = vmatprep.subr.mxu0 0.0
        %2819 = vmatpush1.msra.mxu0 0.0
        %2820 = vmatprep.subr.mxu0 0.0
        %2821 = vmatpush1.msra.mxu0 0.0
        %2822 = vmatprep.subr.mxu0 0.0
        %2823 = vmatpush1.msra.mxu0 0.0
        %2824 = vmatprep.subr.mxu0 0.0
        %2825 = vmatpush1.msra.mxu0 0.0
        %2826 = vmatprep.subr.mxu0 0.0
        %2827 = vmatpush1.msra.mxu0 0.0
        %2828 = vmatprep.subr.mxu0 0.0
        %2829 = vmatpush1.msra.mxu0 0.0
        %2830 = vmatprep.subr.mxu0 0.0
        %2831 = vmatpush1.msra.mxu0 0.0
        %2832 = vmatprep.subr.mxu0 0.0
        %2833 = vmatpush1.msra.mxu0 0.0
        %2834 = vmatprep.subr.mxu0 0.0
        %2835 = vmatpush1.msra.mxu0 0.0
        %2836 = vmatprep.subr.mxu0 0.0
        %2837 = vmatpush1.msra.mxu0 0.0
        %2838 = vmatprep.subr.mxu0 0.0
        %2839 = vmatpush1.msra.mxu0 0.0
        %2840 = vmatprep.subr.mxu0 0.0
        %2841 = vmatpush1.msra.mxu0 0.0
        %2842 = vmatprep.subr.mxu0 0.0
        %2843 = vmatpush1.msra.mxu0 0.0
        %2844 = vmatprep.subr.mxu0 0.0
        %2845 = vmatpush1.msra.mxu0 0.0
        %2846 = vmatprep.subr.mxu0 0.0
        %2847 = vmatpush1.msra.mxu0 0.0
        %2848 = vmatprep.subr.mxu0 0.0
        %2849 = vmatpush1.msra.mxu0 0.0
        %2850 = vmatprep.subr.mxu0 0.0
        %2851 = vmatpush1.msra.mxu0 0.0
        %2852 = vmatprep.subr.mxu0 0.0
        %2853 = vmatpush1.msra.mxu0 0.0
        %2854 = vmatprep.subr.mxu0 0.0
        %2855 = vmatpush1.msra.mxu0 0.0
        %2856 = vmatprep.subr.mxu0 0.0
        %2857 = vmatpush1.msra.mxu0 0.0
        %2858 = vmatprep.subr.mxu0 0.0
        %2859 = vmatpush1.msra.mxu0 0.0
        %2860 = vmatprep.subr.mxu0 0.0
        %2861 = vmatpush1.msra.mxu0 0.0
        %2862 = vmatprep.subr.mxu0 0.0
        %2863 = vmatpush1.msra.mxu0 0.0
        %2864 = vmatprep.subr.mxu0 0.0
        %2865 = vmatpush1.msra.mxu0 0.0
        %2866 = vmatprep.subr.mxu0 0.0
        %2867 = vmatpush1.msra.mxu0 0.0
        %2868 = vmatprep.subr.mxu0 0.0
        %2869 = vmatpush1.msra.mxu0 0.0
        %2870 = vmatprep.subr.mxu0 0.0
        %2871 = vmatpush1.msra.mxu0 0.0
        %2872 = vmatprep.mubr.f32.mxu0 0.0
        %v2873 = vand.u32 %v2652, 4294901760
        %v2874 = vsub.f32 %v2652, %v2873
        %2875 = vmatmul.mubr.f32.gmra.mrb[0].mxu0 %v2874
        %v2876 = vpop.f32.mrb[0].mxu0
        %v2877 = vadd.f32 %v2803, %v2876
        %v2878 = vpop.f32.mrb[0].mxu0
        %2879 = vdwg.mxu0
        %2880 = vmatprep.subr.mxu0 0.0
        %v2881 = vand.u32 %v2649, 4294901760
        %2882 = vmatpush1.msra.mxu0 %v2881
        %2883 = vmatprep.subr.mxu0 0.0
        %2884 = vmatpush1.msra.mxu0 0.0
        %2885 = vmatprep.subr.mxu0 0.0
        %2886 = vmatpush1.msra.mxu0 0.0
        %2887 = vmatprep.subr.mxu0 0.0
        %2888 = vmatpush1.msra.mxu0 0.0
        %2889 = vmatprep.subr.mxu0 0.0
        %2890 = vmatpush1.msra.mxu0 0.0
        %2891 = vmatprep.subr.mxu0 0.0
        %2892 = vmatpush1.msra.mxu0 0.0
        %2893 = vmatprep.subr.mxu0 0.0
        %2894 = vmatpush1.msra.mxu0 0.0
        %2895 = vmatprep.subr.mxu0 0.0
        %2896 = vmatpush1.msra.mxu0 0.0
        %2897 = vmatprep.subr.mxu0 0.0
        %2898 = vmatpush1.msra.mxu0 0.0
        %2899 = vmatprep.subr.mxu0 0.0
        %2900 = vmatpush1.msra.mxu0 0.0
        %2901 = vmatprep.subr.mxu0 0.0
        %2902 = vmatpush1.msra.mxu0 0.0
        %2903 = vmatprep.subr.mxu0 0.0
        %2904 = vmatpush1.msra.mxu0 0.0
        %2905 = vmatprep.subr.mxu0 0.0
        %2906 = vmatpush1.msra.mxu0 0.0
        %2907 = vmatprep.subr.mxu0 0.0
        %2908 = vmatpush1.msra.mxu0 0.0
        %2909 = vmatprep.subr.mxu0 0.0
        %2910 = vmatpush1.msra.mxu0 0.0
        %2911 = vmatprep.subr.mxu0 0.0
        %2912 = vmatpush1.msra.mxu0 0.0
        %2913 = vmatprep.subr.mxu0 0.0
        %2914 = vmatpush1.msra.mxu0 0.0
        %2915 = vmatprep.subr.mxu0 0.0
        %2916 = vmatpush1.msra.mxu0 0.0
        %2917 = vmatprep.subr.mxu0 0.0
        %2918 = vmatpush1.msra.mxu0 0.0
        %2919 = vmatprep.subr.mxu0 0.0
        %2920 = vmatpush1.msra.mxu0 0.0
        %2921 = vmatprep.subr.mxu0 0.0
        %2922 = vmatpush1.msra.mxu0 0.0
        %2923 = vmatprep.subr.mxu0 0.0
        %2924 = vmatpush1.msra.mxu0 0.0
        %2925 = vmatprep.subr.mxu0 0.0
        %2926 = vmatpush1.msra.mxu0 0.0
        %2927 = vmatprep.subr.mxu0 0.0
        %2928 = vmatpush1.msra.mxu0 0.0
        %2929 = vmatprep.subr.mxu0 0.0
        %2930 = vmatpush1.msra.mxu0 0.0
        %2931 = vmatprep.subr.mxu0 0.0
        %2932 = vmatpush1.msra.mxu0 0.0
        %2933 = vmatprep.subr.mxu0 0.0
        %2934 = vmatpush1.msra.mxu0 0.0
        %2935 = vmatprep.subr.mxu0 0.0
        %2936 = vmatpush1.msra.mxu0 0.0
        %2937 = vmatprep.subr.mxu0 0.0
        %2938 = vmatpush1.msra.mxu0 0.0
        %2939 = vmatprep.subr.mxu0 0.0
        %2940 = vmatpush1.msra.mxu0 0.0
        %2941 = vmatprep.subr.mxu0 0.0
        %2942 = vmatpush1.msra.mxu0 0.0
        %2943 = vmatprep.subr.mxu0 0.0
        %2944 = vmatpush1.msra.mxu0 0.0
        %2945 = vmatprep.mubr.f32.mxu0 0.0
        %v2946 = vand.u32 %v2652, 4294901760
        %v2947 = vsub.f32 %v2652, %v2946
        %v2948 = vand.u32 %v2947, 4294901760
        %2949 = vmatmul.mubr.f32.gmra.mrb[0].mxu0 %v2948
        %v2950 = vpop.f32.mrb[0].mxu0
        %v2951 = vadd.f32 %v2877, %v2950
        %v2952 = vpop.f32.mrb[0].mxu0
        %2953 = vdwg.mxu0
        %2954 = vmatprep.subr.mxu0 0.0
        %v2955 = vand.u32 %v2649, 4294901760
        %v2956 = vsub.f32 %v2649, %v2955
        %v2957 = vand.u32 %v2956, 4294901760
        %2958 = vmatpush1.msra.mxu0 %v2957
        %2959 = vmatprep.subr.mxu0 0.0
        %2960 = vmatpush1.msra.mxu0 0.0
        %2961 = vmatprep.subr.mxu0 0.0
        %2962 = vmatpush1.msra.mxu0 0.0
        %2963 = vmatprep.subr.mxu0 0.0
        %2964 = vmatpush1.msra.mxu0 0.0
        %2965 = vmatprep.subr.mxu0 0.0
        %2966 = vmatpush1.msra.mxu0 0.0
        %2967 = vmatprep.subr.mxu0 0.0
        %2968 = vmatpush1.msra.mxu0 0.0
        %2969 = vmatprep.subr.mxu0 0.0
        %2970 = vmatpush1.msra.mxu0 0.0
        %2971 = vmatprep.subr.mxu0 0.0
        %2972 = vmatpush1.msra.mxu0 0.0
        %2973 = vmatprep.subr.mxu0 0.0
        %2974 = vmatpush1.msra.mxu0 0.0
        %2975 = vmatprep.subr.mxu0 0.0
        %2976 = vmatpush1.msra.mxu0 0.0
        %2977 = vmatprep.subr.mxu0 0.0
        %2978 = vmatpush1.msra.mxu0 0.0
        %2979 = vmatprep.subr.mxu0 0.0
        %2980 = vmatpush1.msra.mxu0 0.0
        %2981 = vmatprep.subr.mxu0 0.0
        %2982 = vmatpush1.msra.mxu0 0.0
        %2983 = vmatprep.subr.mxu0 0.0
        %2984 = vmatpush1.msra.mxu0 0.0
        %2985 = vmatprep.subr.mxu0 0.0
        %2986 = vmatpush1.msra.mxu0 0.0
        %2987 = vmatprep.subr.mxu0 0.0
        %2988 = vmatpush1.msra.mxu0 0.0
        %2989 = vmatprep.subr.mxu0 0.0
        %2990 = vmatpush1.msra.mxu0 0.0
        %2991 = vmatprep.subr.mxu0 0.0
        %2992 = vmatpush1.msra.mxu0 0.0
        %2993 = vmatprep.subr.mxu0 0.0
        %2994 = vmatpush1.msra.mxu0 0.0
        %2995 = vmatprep.subr.mxu0 0.0
        %2996 = vmatpush1.msra.mxu0 0.0
        %2997 = vmatprep.subr.mxu0 0.0
        %2998 = vmatpush1.msra.mxu0 0.0
        %2999 = vmatprep.subr.mxu0 0.0
        %3000 = vmatpush1.msra.mxu0 0.0
        %3001 = vmatprep.subr.mxu0 0.0
        %3002 = vmatpush1.msra.mxu0 0.0
        %3003 = vmatprep.subr.mxu0 0.0
        %3004 = vmatpush1.msra.mxu0 0.0
        %3005 = vmatprep.subr.mxu0 0.0
        %3006 = vmatpush1.msra.mxu0 0.0
        %3007 = vmatprep.subr.mxu0 0.0
        %3008 = vmatpush1.msra.mxu0 0.0
        %3009 = vmatprep.subr.mxu0 0.0
        %3010 = vmatpush1.msra.mxu0 0.0
        %3011 = vmatprep.subr.mxu0 0.0
        %3012 = vmatpush1.msra.mxu0 0.0
        %3013 = vmatprep.subr.mxu0 0.0
        %3014 = vmatpush1.msra.mxu0 0.0
        %3015 = vmatprep.subr.mxu0 0.0
        %3016 = vmatpush1.msra.mxu0 0.0
        %3017 = vmatprep.subr.mxu0 0.0
        %3018 = vmatpush1.msra.mxu0 0.0
        %3019 = vmatprep.subr.mxu0 0.0
        %3020 = vmatpush1.msra.mxu0 0.0
        %3021 = vmatprep.mubr.f32.mxu0 0.0
        %v3022 = vand.u32 %v2652, 4294901760
        %3023 = vmatmul.mubr.f32.gmra.mrb[0].mxu0 %v3022
        %v3024 = vpop.f32.mrb[0].mxu0
        %v3025 = vadd.f32 %v2951, %v3024
        %v3026 = vpop.f32.mrb[0].mxu0
        %3027 = vdwg.mxu0
        %3028 = vmatprep.subr.mxu0 0.0
        %v3029 = vand.u32 %v2649, 4294901760
        %3030 = vmatpush1.msra.mxu0 %v3029
        %3031 = vmatprep.subr.mxu0 0.0
        %3032 = vmatpush1.msra.mxu0 0.0
        %3033 = vmatprep.subr.mxu0 0.0
        %3034 = vmatpush1.msra.mxu0 0.0
        %3035 = vmatprep.subr.mxu0 0.0
        %3036 = vmatpush1.msra.mxu0 0.0
        %3037 = vmatprep.subr.mxu0 0.0
        %3038 = vmatpush1.msra.mxu0 0.0
        %3039 = vmatprep.subr.mxu0 0.0
        %3040 = vmatpush1.msra.mxu0 0.0
        %3041 = vmatprep.subr.mxu0 0.0
        %3042 = vmatpush1.msra.mxu0 0.0
        %3043 = vmatprep.subr.mxu0 0.0
        %3044 = vmatpush1.msra.mxu0 0.0
        %3045 = vmatprep.subr.mxu0 0.0
        %3046 = vmatpush1.msra.mxu0 0.0
        %3047 = vmatprep.subr.mxu0 0.0
        %3048 = vmatpush1.msra.mxu0 0.0
        %3049 = vmatprep.subr.mxu0 0.0
        %3050 = vmatpush1.msra.mxu0 0.0
        %3051 = vmatprep.subr.mxu0 0.0
        %3052 = vmatpush1.msra.mxu0 0.0
        %3053 = vmatprep.subr.mxu0 0.0
        %3054 = vmatpush1.msra.mxu0 0.0
        %3055 = vmatprep.subr.mxu0 0.0
        %3056 = vmatpush1.msra.mxu0 0.0
        %3057 = vmatprep.subr.mxu0 0.0
        %3058 = vmatpush1.msra.mxu0 0.0
        %3059 = vmatprep.subr.mxu0 0.0
        %3060 = vmatpush1.msra.mxu0 0.0
        %3061 = vmatprep.subr.mxu0 0.0
        %3062 = vmatpush1.msra.mxu0 0.0
        %3063 = vmatprep.subr.mxu0 0.0
        %3064 = vmatpush1.msra.mxu0 0.0
        %3065 = vmatprep.subr.mxu0 0.0
        %3066 = vmatpush1.msra.mxu0 0.0
        %3067 = vmatprep.subr.mxu0 0.0
        %3068 = vmatpush1.msra.mxu0 0.0
        %3069 = vmatprep.subr.mxu0 0.0
        %3070 = vmatpush1.msra.mxu0 0.0
        %3071 = vmatprep.subr.mxu0 0.0
        %3072 = vmatpush1.msra.mxu0 0.0
        %3073 = vmatprep.subr.mxu0 0.0
        %3074 = vmatpush1.msra.mxu0 0.0
        %3075 = vmatprep.subr.mxu0 0.0
        %3076 = vmatpush1.msra.mxu0 0.0
        %3077 = vmatprep.subr.mxu0 0.0
        %3078 = vmatpush1.msra.mxu0 0.0
        %3079 = vmatprep.subr.mxu0 0.0
        %3080 = vmatpush1.msra.mxu0 0.0
        %3081 = vmatprep.subr.mxu0 0.0
        %3082 = vmatpush1.msra.mxu0 0.0
        %3083 = vmatprep.subr.mxu0 0.0
        %3084 = vmatpush1.msra.mxu0 0.0
        %3085 = vmatprep.subr.mxu0 0.0
        %3086 = vmatpush1.msra.mxu0 0.0
        %3087 = vmatprep.subr.mxu0 0.0
        %3088 = vmatpush1.msra.mxu0 0.0
        %3089 = vmatprep.subr.mxu0 0.0
        %3090 = vmatpush1.msra.mxu0 0.0
        %3091 = vmatprep.subr.mxu0 0.0
        %3092 = vmatpush1.msra.mxu0 0.0
        %3093 = vmatprep.mubr.f32.mxu0 0.0
        %v3094 = vand.u32 %v2652, 4294901760
        %3095 = vmatmul.mubr.f32.gmra.mrb[0].mxu0 %v3094
        %v3096 = vpop.f32.mrb[0].mxu0
        %v3097 = vadd.f32 %v3025, %v3096
        %v3098 = vpop.f32.mrb[0].mxu0
        %3099 = vdwg.mxu0
        %3100 = vrot.lane.b32.xlu0 %v335, 104
        %v3101 = vpop.permute.xlu0 %3100
        %3102 = vrot.lane.b32.xlu0 %v336, 104
        %v3103 = vpop.permute.xlu0 %3102
        %v3104 = vsel %vm339, %v3101, 0
        %v3106 = vsel %vm339, %v3103, 0
        %3108 = vmatprep.subr.mxu0 0.0
        %v3109 = vand.u32 %v3106, 4294901760
        %3110 = vmatpush1.xpose.msra.mxu0 %v3109
        %3111 = vmatprep.subr.mxu0 0.0
        %3112 = vmatpush1.xpose.msra.mxu0 0.0
        %3113 = vmatprep.subr.mxu0 0.0
        %3114 = vmatpush1.xpose.msra.mxu0 0.0
        %3115 = vmatprep.subr.mxu0 0.0
        %3116 = vmatpush1.xpose.msra.mxu0 0.0
        %3117 = vmatprep.subr.mxu0 0.0
        %3118 = vmatpush1.xpose.msra.mxu0 0.0
        %3119 = vmatprep.subr.mxu0 0.0
        %3120 = vmatpush1.xpose.msra.mxu0 0.0
        %3121 = vmatprep.subr.mxu0 0.0
        %3122 = vmatpush1.xpose.msra.mxu0 0.0
        %3123 = vmatprep.subr.mxu0 0.0
        %3124 = vmatpush1.xpose.msra.mxu0 0.0
        %3125 = vmatprep.subr.mxu0 0.0
        %3126 = vmatpush1.xpose.msra.mxu0 0.0
        %3127 = vmatprep.subr.mxu0 0.0
        %3128 = vmatpush1.xpose.msra.mxu0 0.0
        %3129 = vmatprep.subr.mxu0 0.0
        %3130 = vmatpush1.xpose.msra.mxu0 0.0
        %3131 = vmatprep.subr.mxu0 0.0
        %3132 = vmatpush1.xpose.msra.mxu0 0.0
        %3133 = vmatprep.subr.mxu0 0.0
        %3134 = vmatpush1.xpose.msra.mxu0 0.0
        %3135 = vmatprep.subr.mxu0 0.0
        %3136 = vmatpush1.xpose.msra.mxu0 0.0
        %3137 = vmatprep.subr.mxu0 0.0
        %3138 = vmatpush1.xpose.msra.mxu0 0.0
        %3139 = vmatprep.subr.mxu0 0.0
        %3140 = vmatpush1.xpose.msra.mxu0 0.0
        %3141 = vmatprep.subr.mxu0 0.0
        %3142 = vmatpush1.xpose.msra.mxu0 0.0
        %3143 = vmatprep.subr.mxu0 0.0
        %3144 = vmatpush1.xpose.msra.mxu0 0.0
        %3145 = vmatprep.subr.mxu0 0.0
        %3146 = vmatpush1.xpose.msra.mxu0 0.0
        %3147 = vmatprep.subr.mxu0 0.0
        %3148 = vmatpush1.xpose.msra.mxu0 0.0
        %3149 = vmatprep.subr.mxu0 0.0
        %3150 = vmatpush1.xpose.msra.mxu0 0.0
        %3151 = vmatprep.subr.mxu0 0.0
        %3152 = vmatpush1.xpose.msra.mxu0 0.0
        %3153 = vmatprep.subr.mxu0 0.0
        %3154 = vmatpush1.xpose.msra.mxu0 0.0
        %3155 = vmatprep.subr.mxu0 0.0
        %3156 = vmatpush1.xpose.msra.mxu0 0.0
        %3157 = vmatprep.subr.mxu0 0.0
        %3158 = vmatpush1.xpose.msra.mxu0 0.0
        %3159 = vmatprep.subr.mxu0 0.0
        %3160 = vmatpush1.xpose.msra.mxu0 0.0
        %3161 = vmatprep.subr.mxu0 0.0
        %3162 = vmatpush1.xpose.msra.mxu0 0.0
        %3163 = vmatprep.subr.mxu0 0.0
        %3164 = vmatpush1.xpose.msra.mxu0 0.0
        %3165 = vmatprep.subr.mxu0 0.0
        %3166 = vmatpush1.xpose.msra.mxu0 0.0
        %3167 = vmatprep.subr.mxu0 0.0
        %3168 = vmatpush1.xpose.msra.mxu0 0.0
        %3169 = vmatprep.subr.mxu0 0.0
        %3170 = vmatpush1.xpose.msra.mxu0 0.0
        %3171 = vmatprep.subr.mxu0 0.0
        %3172 = vmatpush1.xpose.msra.mxu0 0.0
        %3173 = vmatprep.mubr.f32.mxu0 0.0
        %v3174 = vand.u32 %v3104, 4294901760
        %v3175 = vsub.f32 %v3104, %v3174
        %v3176 = vand.u32 %v3175, 4294901760
        %v3177 = vsub.f32 %v3175, %v3176
        %v3178 = vand.u32 %v3177, 4294901760
        %3179 = vmatmul.mubr.f32.gmra.mrb[0].mxu0 %v3178
        %v3180 = vpop.f32.mrb[0].mxu0
        %v3181 = vadd.f32 0.0, %v3180
        %v3182 = vpop.f32.mrb[0].mxu0
        %3183 = vdwg.mxu0
        %3184 = vmatprep.subr.mxu0 0.0
        %v3185 = vand.u32 %v3106, 4294901760
        %v3186 = vsub.f32 %v3106, %v3185
        %v3187 = vand.u32 %v3186, 4294901760
        %v3188 = vsub.f32 %v3186, %v3187
        %v3189 = vand.u32 %v3188, 4294901760
        %3190 = vmatpush1.xpose.msra.mxu0 %v3189
        %3191 = vmatprep.subr.mxu0 0.0
        %3192 = vmatpush1.xpose.msra.mxu0 0.0
        %3193 = vmatprep.subr.mxu0 0.0
        %3194 = vmatpush1.xpose.msra.mxu0 0.0
        %3195 = vmatprep.subr.mxu0 0.0
        %3196 = vmatpush1.xpose.msra.mxu0 0.0
        %3197 = vmatprep.subr.mxu0 0.0
        %3198 = vmatpush1.xpose.msra.mxu0 0.0
        %3199 = vmatprep.subr.mxu0 0.0
        %3200 = vmatpush1.xpose.msra.mxu0 0.0
        %3201 = vmatprep.subr.mxu0 0.0
        %3202 = vmatpush1.xpose.msra.mxu0 0.0
        %3203 = vmatprep.subr.mxu0 0.0
        %3204 = vmatpush1.xpose.msra.mxu0 0.0
        %3205 = vmatprep.subr.mxu0 0.0
        %3206 = vmatpush1.xpose.msra.mxu0 0.0
        %3207 = vmatprep.subr.mxu0 0.0
        %3208 = vmatpush1.xpose.msra.mxu0 0.0
        %3209 = vmatprep.subr.mxu0 0.0
        %3210 = vmatpush1.xpose.msra.mxu0 0.0
        %3211 = vmatprep.subr.mxu0 0.0
        %3212 = vmatpush1.xpose.msra.mxu0 0.0
        %3213 = vmatprep.subr.mxu0 0.0
        %3214 = vmatpush1.xpose.msra.mxu0 0.0
        %3215 = vmatprep.subr.mxu0 0.0
        %3216 = vmatpush1.xpose.msra.mxu0 0.0
        %3217 = vmatprep.subr.mxu0 0.0
        %3218 = vmatpush1.xpose.msra.mxu0 0.0
        %3219 = vmatprep.subr.mxu0 0.0
        %3220 = vmatpush1.xpose.msra.mxu0 0.0
        %3221 = vmatprep.subr.mxu0 0.0
        %3222 = vmatpush1.xpose.msra.mxu0 0.0
        %3223 = vmatprep.subr.mxu0 0.0
        %3224 = vmatpush1.xpose.msra.mxu0 0.0
        %3225 = vmatprep.subr.mxu0 0.0
        %3226 = vmatpush1.xpose.msra.mxu0 0.0
        %3227 = vmatprep.subr.mxu0 0.0
        %3228 = vmatpush1.xpose.msra.mxu0 0.0
        %3229 = vmatprep.subr.mxu0 0.0
        %3230 = vmatpush1.xpose.msra.mxu0 0.0
        %3231 = vmatprep.subr.mxu0 0.0
        %3232 = vmatpush1.xpose.msra.mxu0 0.0
        %3233 = vmatprep.subr.mxu0 0.0
        %3234 = vmatpush1.xpose.msra.mxu0 0.0
        %3235 = vmatprep.subr.mxu0 0.0
        %3236 = vmatpush1.xpose.msra.mxu0 0.0
        %3237 = vmatprep.subr.mxu0 0.0
        %3238 = vmatpush1.xpose.msra.mxu0 0.0
        %3239 = vmatprep.subr.mxu0 0.0
        %3240 = vmatpush1.xpose.msra.mxu0 0.0
        %3241 = vmatprep.subr.mxu0 0.0
        %3242 = vmatpush1.xpose.msra.mxu0 0.0
        %3243 = vmatprep.subr.mxu0 0.0
        %3244 = vmatpush1.xpose.msra.mxu0 0.0
        %3245 = vmatprep.subr.mxu0 0.0
        %3246 = vmatpush1.xpose.msra.mxu0 0.0
        %3247 = vmatprep.subr.mxu0 0.0
        %3248 = vmatpush1.xpose.msra.mxu0 0.0
        %3249 = vmatprep.subr.mxu0 0.0
        %3250 = vmatpush1.xpose.msra.mxu0 0.0
        %3251 = vmatprep.subr.mxu0 0.0
        %3252 = vmatpush1.xpose.msra.mxu0 0.0
        %3253 = vmatprep.mubr.f32.mxu0 0.0
        %v3254 = vand.u32 %v3104, 4294901760
        %3255 = vmatmul.mubr.f32.gmra.mrb[0].mxu0 %v3254
        %v3256 = vpop.f32.mrb[0].mxu0
        %v3257 = vadd.f32 %v3181, %v3256
        %v3258 = vpop.f32.mrb[0].mxu0
        %3259 = vdwg.mxu0
        %3260 = vmatprep.subr.mxu0 0.0
        %v3261 = vand.u32 %v3106, 4294901760
        %v3262 = vsub.f32 %v3106, %v3261
        %3263 = vmatpush1.xpose.msra.mxu0 %v3262
        %3264 = vmatprep.subr.mxu0 0.0
        %3265 = vmatpush1.xpose.msra.mxu0 0.0
        %3266 = vmatprep.subr.mxu0 0.0
        %3267 = vmatpush1.xpose.msra.mxu0 0.0
        %3268 = vmatprep.subr.mxu0 0.0
        %3269 = vmatpush1.xpose.msra.mxu0 0.0
        %3270 = vmatprep.subr.mxu0 0.0
        %3271 = vmatpush1.xpose.msra.mxu0 0.0
        %3272 = vmatprep.subr.mxu0 0.0
        %3273 = vmatpush1.xpose.msra.mxu0 0.0
        %3274 = vmatprep.subr.mxu0 0.0
        %3275 = vmatpush1.xpose.msra.mxu0 0.0
        %3276 = vmatprep.subr.mxu0 0.0
        %3277 = vmatpush1.xpose.msra.mxu0 0.0
        %3278 = vmatprep.subr.mxu0 0.0
        %3279 = vmatpush1.xpose.msra.mxu0 0.0
        %3280 = vmatprep.subr.mxu0 0.0
        %3281 = vmatpush1.xpose.msra.mxu0 0.0
        %3282 = vmatprep.subr.mxu0 0.0
        %3283 = vmatpush1.xpose.msra.mxu0 0.0
        %3284 = vmatprep.subr.mxu0 0.0
        %3285 = vmatpush1.xpose.msra.mxu0 0.0
        %3286 = vmatprep.subr.mxu0 0.0
        %3287 = vmatpush1.xpose.msra.mxu0 0.0
        %3288 = vmatprep.subr.mxu0 0.0
        %3289 = vmatpush1.xpose.msra.mxu0 0.0
        %3290 = vmatprep.subr.mxu0 0.0
        %3291 = vmatpush1.xpose.msra.mxu0 0.0
        %3292 = vmatprep.subr.mxu0 0.0
        %3293 = vmatpush1.xpose.msra.mxu0 0.0
        %3294 = vmatprep.subr.mxu0 0.0
        %3295 = vmatpush1.xpose.msra.mxu0 0.0
        %3296 = vmatprep.subr.mxu0 0.0
        %3297 = vmatpush1.xpose.msra.mxu0 0.0
        %3298 = vmatprep.subr.mxu0 0.0
        %3299 = vmatpush1.xpose.msra.mxu0 0.0
        %3300 = vmatprep.subr.mxu0 0.0
        %3301 = vmatpush1.xpose.msra.mxu0 0.0
        %3302 = vmatprep.subr.mxu0 0.0
        %3303 = vmatpush1.xpose.msra.mxu0 0.0
        %3304 = vmatprep.subr.mxu0 0.0
        %3305 = vmatpush1.xpose.msra.mxu0 0.0
        %3306 = vmatprep.subr.mxu0 0.0
        %3307 = vmatpush1.xpose.msra.mxu0 0.0
        %3308 = vmatprep.subr.mxu0 0.0
        %3309 = vmatpush1.xpose.msra.mxu0 0.0
        %3310 = vmatprep.subr.mxu0 0.0
        %3311 = vmatpush1.xpose.msra.mxu0 0.0
        %3312 = vmatprep.subr.mxu0 0.0
        %3313 = vmatpush1.xpose.msra.mxu0 0.0
        %3314 = vmatprep.subr.mxu0 0.0
        %3315 = vmatpush1.xpose.msra.mxu0 0.0
        %3316 = vmatprep.subr.mxu0 0.0
        %3317 = vmatpush1.xpose.msra.mxu0 0.0
        %3318 = vmatprep.subr.mxu0 0.0
        %3319 = vmatpush1.xpose.msra.mxu0 0.0
        %3320 = vmatprep.subr.mxu0 0.0
        %3321 = vmatpush1.xpose.msra.mxu0 0.0
        %3322 = vmatprep.subr.mxu0 0.0
        %3323 = vmatpush1.xpose.msra.mxu0 0.0
        %3324 = vmatprep.subr.mxu0 0.0
        %3325 = vmatpush1.xpose.msra.mxu0 0.0
        %3326 = vmatprep.mubr.f32.mxu0 0.0
        %v3327 = vand.u32 %v3104, 4294901760
        %v3328 = vsub.f32 %v3104, %v3327
        %3329 = vmatmul.mubr.f32.gmra.mrb[0].mxu0 %v3328
        %v3330 = vpop.f32.mrb[0].mxu0
        %v3331 = vadd.f32 %v3257, %v3330
        %v3332 = vpop.f32.mrb[0].mxu0
        %3333 = vdwg.mxu0
        %3334 = vmatprep.subr.mxu0 0.0
        %v3335 = vand.u32 %v3106, 4294901760
        %3336 = vmatpush1.xpose.msra.mxu0 %v3335
        %3337 = vmatprep.subr.mxu0 0.0
        %3338 = vmatpush1.xpose.msra.mxu0 0.0
        %3339 = vmatprep.subr.mxu0 0.0
        %3340 = vmatpush1.xpose.msra.mxu0 0.0
        %3341 = vmatprep.subr.mxu0 0.0
        %3342 = vmatpush1.xpose.msra.mxu0 0.0
        %3343 = vmatprep.subr.mxu0 0.0
        %3344 = vmatpush1.xpose.msra.mxu0 0.0
        %3345 = vmatprep.subr.mxu0 0.0
        %3346 = vmatpush1.xpose.msra.mxu0 0.0
        %3347 = vmatprep.subr.mxu0 0.0
        %3348 = vmatpush1.xpose.msra.mxu0 0.0
        %3349 = vmatprep.subr.mxu0 0.0
        %3350 = vmatpush1.xpose.msra.mxu0 0.0
        %3351 = vmatprep.subr.mxu0 0.0
        %3352 = vmatpush1.xpose.msra.mxu0 0.0
        %3353 = vmatprep.subr.mxu0 0.0
        %3354 = vmatpush1.xpose.msra.mxu0 0.0
        %3355 = vmatprep.subr.mxu0 0.0
        %3356 = vmatpush1.xpose.msra.mxu0 0.0
        %3357 = vmatprep.subr.mxu0 0.0
        %3358 = vmatpush1.xpose.msra.mxu0 0.0
        %3359 = vmatprep.subr.mxu0 0.0
        %3360 = vmatpush1.xpose.msra.mxu0 0.0
        %3361 = vmatprep.subr.mxu0 0.0
        %3362 = vmatpush1.xpose.msra.mxu0 0.0
        %3363 = vmatprep.subr.mxu0 0.0
        %3364 = vmatpush1.xpose.msra.mxu0 0.0
        %3365 = vmatprep.subr.mxu0 0.0
        %3366 = vmatpush1.xpose.msra.mxu0 0.0
        %3367 = vmatprep.subr.mxu0 0.0
        %3368 = vmatpush1.xpose.msra.mxu0 0.0
        %3369 = vmatprep.subr.mxu0 0.0
        %3370 = vmatpush1.xpose.msra.mxu0 0.0
        %3371 = vmatprep.subr.mxu0 0.0
        %3372 = vmatpush1.xpose.msra.mxu0 0.0
        %3373 = vmatprep.subr.mxu0 0.0
        %3374 = vmatpush1.xpose.msra.mxu0 0.0
        %3375 = vmatprep.subr.mxu0 0.0
        %3376 = vmatpush1.xpose.msra.mxu0 0.0
        %3377 = vmatprep.subr.mxu0 0.0
        %3378 = vmatpush1.xpose.msra.mxu0 0.0
        %3379 = vmatprep.subr.mxu0 0.0
        %3380 = vmatpush1.xpose.msra.mxu0 0.0
        %3381 = vmatprep.subr.mxu0 0.0
        %3382 = vmatpush1.xpose.msra.mxu0 0.0
        %3383 = vmatprep.subr.mxu0 0.0
        %3384 = vmatpush1.xpose.msra.mxu0 0.0
        %3385 = vmatprep.subr.mxu0 0.0
        %3386 = vmatpush1.xpose.msra.mxu0 0.0
        %3387 = vmatprep.subr.mxu0 0.0
        %3388 = vmatpush1.xpose.msra.mxu0 0.0
        %3389 = vmatprep.subr.mxu0 0.0
        %3390 = vmatpush1.xpose.msra.mxu0 0.0
        %3391 = vmatprep.subr.mxu0 0.0
        %3392 = vmatpush1.xpose.msra.mxu0 0.0
        %3393 = vmatprep.subr.mxu0 0.0
        %3394 = vmatpush1.xpose.msra.mxu0 0.0
        %3395 = vmatprep.subr.mxu0 0.0
        %3396 = vmatpush1.xpose.msra.mxu0 0.0
        %3397 = vmatprep.subr.mxu0 0.0
        %3398 = vmatpush1.xpose.msra.mxu0 0.0
        %3399 = vmatprep.mubr.f32.mxu0 0.0
        %v3400 = vand.u32 %v3104, 4294901760
        %v3401 = vsub.f32 %v3104, %v3400
        %v3402 = vand.u32 %v3401, 4294901760
        %3403 = vmatmul.mubr.f32.gmra.mrb[0].mxu0 %v3402
        %v3404 = vpop.f32.mrb[0].mxu0
        %v3405 = vadd.f32 %v3331, %v3404
        %v3406 = vpop.f32.mrb[0].mxu0
        %3407 = vdwg.mxu0
        %3408 = vmatprep.subr.mxu0 0.0
        %v3409 = vand.u32 %v3106, 4294901760
        %v3410 = vsub.f32 %v3106, %v3409
        %v3411 = vand.u32 %v3410, 4294901760
        %3412 = vmatpush1.xpose.msra.mxu0 %v3411
        %3413 = vmatprep.subr.mxu0 0.0
        %3414 = vmatpush1.xpose.msra.mxu0 0.0
        %3415 = vmatprep.subr.mxu0 0.0
        %3416 = vmatpush1.xpose.msra.mxu0 0.0
        %3417 = vmatprep.subr.mxu0 0.0
        %3418 = vmatpush1.xpose.msra.mxu0 0.0
        %3419 = vmatprep.subr.mxu0 0.0
        %3420 = vmatpush1.xpose.msra.mxu0 0.0
        %3421 = vmatprep.subr.mxu0 0.0
        %3422 = vmatpush1.xpose.msra.mxu0 0.0
        %3423 = vmatprep.subr.mxu0 0.0
        %3424 = vmatpush1.xpose.msra.mxu0 0.0
        %3425 = vmatprep.subr.mxu0 0.0
        %3426 = vmatpush1.xpose.msra.mxu0 0.0
        %3427 = vmatprep.subr.mxu0 0.0
        %3428 = vmatpush1.xpose.msra.mxu0 0.0
        %3429 = vmatprep.subr.mxu0 0.0
        %3430 = vmatpush1.xpose.msra.mxu0 0.0
        %3431 = vmatprep.subr.mxu0 0.0
        %3432 = vmatpush1.xpose.msra.mxu0 0.0
        %3433 = vmatprep.subr.mxu0 0.0
        %3434 = vmatpush1.xpose.msra.mxu0 0.0
        %3435 = vmatprep.subr.mxu0 0.0
        %3436 = vmatpush1.xpose.msra.mxu0 0.0
        %3437 = vmatprep.subr.mxu0 0.0
        %3438 = vmatpush1.xpose.msra.mxu0 0.0
        %3439 = vmatprep.subr.mxu0 0.0
        %3440 = vmatpush1.xpose.msra.mxu0 0.0
        %3441 = vmatprep.subr.mxu0 0.0
        %3442 = vmatpush1.xpose.msra.mxu0 0.0
        %3443 = vmatprep.subr.mxu0 0.0
        %3444 = vmatpush1.xpose.msra.mxu0 0.0
        %3445 = vmatprep.subr.mxu0 0.0
        %3446 = vmatpush1.xpose.msra.mxu0 0.0
        %3447 = vmatprep.subr.mxu0 0.0
        %3448 = vmatpush1.xpose.msra.mxu0 0.0
        %3449 = vmatprep.subr.mxu0 0.0
        %3450 = vmatpush1.xpose.msra.mxu0 0.0
        %3451 = vmatprep.subr.mxu0 0.0
        %3452 = vmatpush1.xpose.msra.mxu0 0.0
        %3453 = vmatprep.subr.mxu0 0.0
        %3454 = vmatpush1.xpose.msra.mxu0 0.0
        %3455 = vmatprep.subr.mxu0 0.0
        %3456 = vmatpush1.xpose.msra.mxu0 0.0
        %3457 = vmatprep.subr.mxu0 0.0
        %3458 = vmatpush1.xpose.msra.mxu0 0.0
        %3459 = vmatprep.subr.mxu0 0.0
        %3460 = vmatpush1.xpose.msra.mxu0 0.0
        %3461 = vmatprep.subr.mxu0 0.0
        %3462 = vmatpush1.xpose.msra.mxu0 0.0
        %3463 = vmatprep.subr.mxu0 0.0
        %3464 = vmatpush1.xpose.msra.mxu0 0.0
        %3465 = vmatprep.subr.mxu0 0.0
        %3466 = vmatpush1.xpose.msra.mxu0 0.0
        %3467 = vmatprep.subr.mxu0 0.0
        %3468 = vmatpush1.xpose.msra.mxu0 0.0
        %3469 = vmatprep.subr.mxu0 0.0
        %3470 = vmatpush1.xpose.msra.mxu0 0.0
        %3471 = vmatprep.subr.mxu0 0.0
        %3472 = vmatpush1.xpose.msra.mxu0 0.0
        %3473 = vmatprep.subr.mxu0 0.0
        %3474 = vmatpush1.xpose.msra.mxu0 0.0
        %3475 = vmatprep.mubr.f32.mxu0 0.0
        %v3476 = vand.u32 %v3104, 4294901760
        %3477 = vmatmul.mubr.f32.gmra.mrb[0].mxu0 %v3476
        %v3478 = vpop.f32.mrb[0].mxu0
        %v3479 = vadd.f32 %v3405, %v3478
        %v3480 = vpop.f32.mrb[0].mxu0
        %3481 = vdwg.mxu0
        %3482 = vmatprep.subr.mxu0 0.0
        %v3483 = vand.u32 %v3106, 4294901760
        %3484 = vmatpush1.xpose.msra.mxu0 %v3483
        %3485 = vmatprep.subr.mxu0 0.0
        %3486 = vmatpush1.xpose.msra.mxu0 0.0
        %3487 = vmatprep.subr.mxu0 0.0
        %3488 = vmatpush1.xpose.msra.mxu0 0.0
        %3489 = vmatprep.subr.mxu0 0.0
        %3490 = vmatpush1.xpose.msra.mxu0 0.0
        %3491 = vmatprep.subr.mxu0 0.0
        %3492 = vmatpush1.xpose.msra.mxu0 0.0
        %3493 = vmatprep.subr.mxu0 0.0
        %3494 = vmatpush1.xpose.msra.mxu0 0.0
        %3495 = vmatprep.subr.mxu0 0.0
        %3496 = vmatpush1.xpose.msra.mxu0 0.0
        %3497 = vmatprep.subr.mxu0 0.0
        %3498 = vmatpush1.xpose.msra.mxu0 0.0
        %3499 = vmatprep.subr.mxu0 0.0
        %3500 = vmatpush1.xpose.msra.mxu0 0.0
        %3501 = vmatprep.subr.mxu0 0.0
        %3502 = vmatpush1.xpose.msra.mxu0 0.0
        %3503 = vmatprep.subr.mxu0 0.0
        %3504 = vmatpush1.xpose.msra.mxu0 0.0
        %3505 = vmatprep.subr.mxu0 0.0
        %3506 = vmatpush1.xpose.msra.mxu0 0.0
        %3507 = vmatprep.subr.mxu0 0.0
        %3508 = vmatpush1.xpose.msra.mxu0 0.0
        %3509 = vmatprep.subr.mxu0 0.0
        %3510 = vmatpush1.xpose.msra.mxu0 0.0
        %3511 = vmatprep.subr.mxu0 0.0
        %3512 = vmatpush1.xpose.msra.mxu0 0.0
        %3513 = vmatprep.subr.mxu0 0.0
        %3514 = vmatpush1.xpose.msra.mxu0 0.0
        %3515 = vmatprep.subr.mxu0 0.0
        %3516 = vmatpush1.xpose.msra.mxu0 0.0
        %3517 = vmatprep.subr.mxu0 0.0
        %3518 = vmatpush1.xpose.msra.mxu0 0.0
        %3519 = vmatprep.subr.mxu0 0.0
        %3520 = vmatpush1.xpose.msra.mxu0 0.0
        %3521 = vmatprep.subr.mxu0 0.0
        %3522 = vmatpush1.xpose.msra.mxu0 0.0
        %3523 = vmatprep.subr.mxu0 0.0
        %3524 = vmatpush1.xpose.msra.mxu0 0.0
        %3525 = vmatprep.subr.mxu0 0.0
        %3526 = vmatpush1.xpose.msra.mxu0 0.0
        %3527 = vmatprep.subr.mxu0 0.0
        %3528 = vmatpush1.xpose.msra.mxu0 0.0
        %3529 = vmatprep.subr.mxu0 0.0
        %3530 = vmatpush1.xpose.msra.mxu0 0.0
        %3531 = vmatprep.subr.mxu0 0.0
        %3532 = vmatpush1.xpose.msra.mxu0 0.0
        %3533 = vmatprep.subr.mxu0 0.0
        %3534 = vmatpush1.xpose.msra.mxu0 0.0
        %3535 = vmatprep.subr.mxu0 0.0
        %3536 = vmatpush1.xpose.msra.mxu0 0.0
        %3537 = vmatprep.subr.mxu0 0.0
        %3538 = vmatpush1.xpose.msra.mxu0 0.0
        %3539 = vmatprep.subr.mxu0 0.0
        %3540 = vmatpush1.xpose.msra.mxu0 0.0
        %3541 = vmatprep.subr.mxu0 0.0
        %3542 = vmatpush1.xpose.msra.mxu0 0.0
        %3543 = vmatprep.subr.mxu0 0.0
        %3544 = vmatpush1.xpose.msra.mxu0 0.0
        %3545 = vmatprep.subr.mxu0 0.0
        %3546 = vmatpush1.xpose.msra.mxu0 0.0
        %3547 = vmatprep.mubr.f32.mxu0 0.0
        %v3548 = vand.u32 %v3104, 4294901760
        %3549 = vmatmul.mubr.f32.gmra.mrb[0].mxu0 %v3548
        %v3550 = vpop.f32.mrb[0].mxu0
        %v3551 = vadd.f32 %v3479, %v3550
        %v3552 = vpop.f32.mrb[0].mxu0
        %3553 = vdwg.mxu0
        %v3554 = vmul.f32 %v3551, 0.35355338
        %v3555 = vmul.f32 %v3554, %v798
        %v3556 = vsel %vm339, %v3555, -inf
        %3557 = vmax.xlane.f32.xlu0 %v3556
        %v3558 = vpop.xlane.xlu0 %3557
        %v3559 = vsub.f32 %v3555, %v3558
        %v3560 = vmul.f32 %v3559, 1.442695
        %v3561 = vpow.pop %v3560
        %v3562 = vsel %vm339, %v3561, 0.0
        %3563 = vadd.xlane.f32.xlu0 %v3562
        %v3564 = vpop.xlane.xlu0 %3563
        %v3565 = vrcp.pop %v3564
        %v3566 = vmul.f32 %v3561, %v3565
        %3567 = vrot.lane.b32.xlu0 %v337, 104
        %v3568 = vpop.permute.xlu0 %3567
        %v3571 = vsel %vm339, %v3566, 0
        %3573 = vmatprep.subr.mxu0 0.0
        %v3574 = vand.u32 %v3568, 4294901760
        %3575 = vmatpush1.msra.mxu0 %v3574
        %3576 = vmatprep.subr.mxu0 0.0
        %3577 = vmatpush1.msra.mxu0 0.0
        %3578 = vmatprep.subr.mxu0 0.0
        %3579 = vmatpush1.msra.mxu0 0.0
        %3580 = vmatprep.subr.mxu0 0.0
        %3581 = vmatpush1.msra.mxu0 0.0
        %3582 = vmatprep.subr.mxu0 0.0
        %3583 = vmatpush1.msra.mxu0 0.0
        %3584 = vmatprep.subr.mxu0 0.0
        %3585 = vmatpush1.msra.mxu0 0.0
        %3586 = vmatprep.subr.mxu0 0.0
        %3587 = vmatpush1.msra.mxu0 0.0
        %3588 = vmatprep.subr.mxu0 0.0
        %3589 = vmatpush1.msra.mxu0 0.0
        %3590 = vmatprep.subr.mxu0 0.0
        %3591 = vmatpush1.msra.mxu0 0.0
        %3592 = vmatprep.subr.mxu0 0.0
        %3593 = vmatpush1.msra.mxu0 0.0
        %3594 = vmatprep.subr.mxu0 0.0
        %3595 = vmatpush1.msra.mxu0 0.0
        %3596 = vmatprep.subr.mxu0 0.0
        %3597 = vmatpush1.msra.mxu0 0.0
        %3598 = vmatprep.subr.mxu0 0.0
        %3599 = vmatpush1.msra.mxu0 0.0
        %3600 = vmatprep.subr.mxu0 0.0
        %3601 = vmatpush1.msra.mxu0 0.0
        %3602 = vmatprep.subr.mxu0 0.0
        %3603 = vmatpush1.msra.mxu0 0.0
        %3604 = vmatprep.subr.mxu0 0.0
        %3605 = vmatpush1.msra.mxu0 0.0
        %3606 = vmatprep.subr.mxu0 0.0
        %3607 = vmatpush1.msra.mxu0 0.0
        %3608 = vmatprep.subr.mxu0 0.0
        %3609 = vmatpush1.msra.mxu0 0.0
        %3610 = vmatprep.subr.mxu0 0.0
        %3611 = vmatpush1.msra.mxu0 0.0
        %3612 = vmatprep.subr.mxu0 0.0
        %3613 = vmatpush1.msra.mxu0 0.0
        %3614 = vmatprep.subr.mxu0 0.0
        %3615 = vmatpush1.msra.mxu0 0.0
        %3616 = vmatprep.subr.mxu0 0.0
        %3617 = vmatpush1.msra.mxu0 0.0
        %3618 = vmatprep.subr.mxu0 0.0
        %3619 = vmatpush1.msra.mxu0 0.0
        %3620 = vmatprep.subr.mxu0 0.0
        %3621 = vmatpush1.msra.mxu0 0.0
        %3622 = vmatprep.subr.mxu0 0.0
        %3623 = vmatpush1.msra.mxu0 0.0
        %3624 = vmatprep.subr.mxu0 0.0
        %3625 = vmatpush1.msra.mxu0 0.0
        %3626 = vmatprep.subr.mxu0 0.0
        %3627 = vmatpush1.msra.mxu0 0.0
        %3628 = vmatprep.subr.mxu0 0.0
        %3629 = vmatpush1.msra.mxu0 0.0
        %3630 = vmatprep.subr.mxu0 0.0
        %3631 = vmatpush1.msra.mxu0 0.0
        %3632 = vmatprep.subr.mxu0 0.0
        %3633 = vmatpush1.msra.mxu0 0.0
        %3634 = vmatprep.subr.mxu0 0.0
        %3635 = vmatpush1.msra.mxu0 0.0
        %3636 = vmatprep.subr.mxu0 0.0
        %3637 = vmatpush1.msra.mxu0 0.0
        %3638 = vmatprep.mubr.f32.mxu0 0.0
        %v3639 = vand.u32 %v3571, 4294901760
        %v3640 = vsub.f32 %v3571, %v3639
        %v3641 = vand.u32 %v3640, 4294901760
        %v3642 = vsub.f32 %v3640, %v3641
        %v3643 = vand.u32 %v3642, 4294901760
        %3644 = vmatmul.mubr.f32.gmra.mrb[0].mxu0 %v3643
        %v3645 = vpop.f32.mrb[0].mxu0
        %v3646 = vadd.f32 0.0, %v3645
        %v3647 = vpop.f32.mrb[0].mxu0
        %3648 = vdwg.mxu0
        %3649 = vmatprep.subr.mxu0 0.0
        %v3650 = vand.u32 %v3568, 4294901760
        %v3651 = vsub.f32 %v3568, %v3650
        %v3652 = vand.u32 %v3651, 4294901760
        %v3653 = vsub.f32 %v3651, %v3652
        %v3654 = vand.u32 %v3653, 4294901760
        %3655 = vmatpush1.msra.mxu0 %v3654
        %3656 = vmatprep.subr.mxu0 0.0
        %3657 = vmatpush1.msra.mxu0 0.0
        %3658 = vmatprep.subr.mxu0 0.0
        %3659 = vmatpush1.msra.mxu0 0.0
        %3660 = vmatprep.subr.mxu0 0.0
        %3661 = vmatpush1.msra.mxu0 0.0
        %3662 = vmatprep.subr.mxu0 0.0
        %3663 = vmatpush1.msra.mxu0 0.0
        %3664 = vmatprep.subr.mxu0 0.0
        %3665 = vmatpush1.msra.mxu0 0.0
        %3666 = vmatprep.subr.mxu0 0.0
        %3667 = vmatpush1.msra.mxu0 0.0
        %3668 = vmatprep.subr.mxu0 0.0
        %3669 = vmatpush1.msra.mxu0 0.0
        %3670 = vmatprep.subr.mxu0 0.0
        %3671 = vmatpush1.msra.mxu0 0.0
        %3672 = vmatprep.subr.mxu0 0.0
        %3673 = vmatpush1.msra.mxu0 0.0
        %3674 = vmatprep.subr.mxu0 0.0
        %3675 = vmatpush1.msra.mxu0 0.0
        %3676 = vmatprep.subr.mxu0 0.0
        %3677 = vmatpush1.msra.mxu0 0.0
        %3678 = vmatprep.subr.mxu0 0.0
        %3679 = vmatpush1.msra.mxu0 0.0
        %3680 = vmatprep.subr.mxu0 0.0
        %3681 = vmatpush1.msra.mxu0 0.0
        %3682 = vmatprep.subr.mxu0 0.0
        %3683 = vmatpush1.msra.mxu0 0.0
        %3684 = vmatprep.subr.mxu0 0.0
        %3685 = vmatpush1.msra.mxu0 0.0
        %3686 = vmatprep.subr.mxu0 0.0
        %3687 = vmatpush1.msra.mxu0 0.0
        %3688 = vmatprep.subr.mxu0 0.0
        %3689 = vmatpush1.msra.mxu0 0.0
        %3690 = vmatprep.subr.mxu0 0.0
        %3691 = vmatpush1.msra.mxu0 0.0
        %3692 = vmatprep.subr.mxu0 0.0
        %3693 = vmatpush1.msra.mxu0 0.0
        %3694 = vmatprep.subr.mxu0 0.0
        %3695 = vmatpush1.msra.mxu0 0.0
        %3696 = vmatprep.subr.mxu0 0.0
        %3697 = vmatpush1.msra.mxu0 0.0
        %3698 = vmatprep.subr.mxu0 0.0
        %3699 = vmatpush1.msra.mxu0 0.0
        %3700 = vmatprep.subr.mxu0 0.0
        %3701 = vmatpush1.msra.mxu0 0.0
        %3702 = vmatprep.subr.mxu0 0.0
        %3703 = vmatpush1.msra.mxu0 0.0
        %3704 = vmatprep.subr.mxu0 0.0
        %3705 = vmatpush1.msra.mxu0 0.0
        %3706 = vmatprep.subr.mxu0 0.0
        %3707 = vmatpush1.msra.mxu0 0.0
        %3708 = vmatprep.subr.mxu0 0.0
        %3709 = vmatpush1.msra.mxu0 0.0
        %3710 = vmatprep.subr.mxu0 0.0
        %3711 = vmatpush1.msra.mxu0 0.0
        %3712 = vmatprep.subr.mxu0 0.0
        %3713 = vmatpush1.msra.mxu0 0.0
        %3714 = vmatprep.subr.mxu0 0.0
        %3715 = vmatpush1.msra.mxu0 0.0
        %3716 = vmatprep.subr.mxu0 0.0
        %3717 = vmatpush1.msra.mxu0 0.0
        %3718 = vmatprep.mubr.f32.mxu0 0.0
        %v3719 = vand.u32 %v3571, 4294901760
        %3720 = vmatmul.mubr.f32.gmra.mrb[0].mxu0 %v3719
        %v3721 = vpop.f32.mrb[0].mxu0
        %v3722 = vadd.f32 %v3646, %v3721
        %v3723 = vpop.f32.mrb[0].mxu0
        %3724 = vdwg.mxu0
        %3725 = vmatprep.subr.mxu0 0.0
        %v3726 = vand.u32 %v3568, 4294901760
        %v3727 = vsub.f32 %v3568, %v3726
        %3728 = vmatpush1.msra.mxu0 %v3727
        %3729 = vmatprep.subr.mxu0 0.0
        %3730 = vmatpush1.msra.mxu0 0.0
        %3731 = vmatprep.subr.mxu0 0.0
        %3732 = vmatpush1.msra.mxu0 0.0
        %3733 = vmatprep.subr.mxu0 0.0
        %3734 = vmatpush1.msra.mxu0 0.0
        %3735 = vmatprep.subr.mxu0 0.0
        %3736 = vmatpush1.msra.mxu0 0.0
        %3737 = vmatprep.subr.mxu0 0.0
        %3738 = vmatpush1.msra.mxu0 0.0
        %3739 = vmatprep.subr.mxu0 0.0
        %3740 = vmatpush1.msra.mxu0 0.0
        %3741 = vmatprep.subr.mxu0 0.0
        %3742 = vmatpush1.msra.mxu0 0.0
        %3743 = vmatprep.subr.mxu0 0.0
        %3744 = vmatpush1.msra.mxu0 0.0
        %3745 = vmatprep.subr.mxu0 0.0
        %3746 = vmatpush1.msra.mxu0 0.0
        %3747 = vmatprep.subr.mxu0 0.0
        %3748 = vmatpush1.msra.mxu0 0.0
        %3749 = vmatprep.subr.mxu0 0.0
        %3750 = vmatpush1.msra.mxu0 0.0
        %3751 = vmatprep.subr.mxu0 0.0
        %3752 = vmatpush1.msra.mxu0 0.0
        %3753 = vmatprep.subr.mxu0 0.0
        %3754 = vmatpush1.msra.mxu0 0.0
        %3755 = vmatprep.subr.mxu0 0.0
        %3756 = vmatpush1.msra.mxu0 0.0
        %3757 = vmatprep.subr.mxu0 0.0
        %3758 = vmatpush1.msra.mxu0 0.0
        %3759 = vmatprep.subr.mxu0 0.0
        %3760 = vmatpush1.msra.mxu0 0.0
        %3761 = vmatprep.subr.mxu0 0.0
        %3762 = vmatpush1.msra.mxu0 0.0
        %3763 = vmatprep.subr.mxu0 0.0
        %3764 = vmatpush1.msra.mxu0 0.0
        %3765 = vmatprep.subr.mxu0 0.0
        %3766 = vmatpush1.msra.mxu0 0.0
        %3767 = vmatprep.subr.mxu0 0.0
        %3768 = vmatpush1.msra.mxu0 0.0
        %3769 = vmatprep.subr.mxu0 0.0
        %3770 = vmatpush1.msra.mxu0 0.0
        %3771 = vmatprep.subr.mxu0 0.0
        %3772 = vmatpush1.msra.mxu0 0.0
        %3773 = vmatprep.subr.mxu0 0.0
        %3774 = vmatpush1.msra.mxu0 0.0
        %3775 = vmatprep.subr.mxu0 0.0
        %3776 = vmatpush1.msra.mxu0 0.0
        %3777 = vmatprep.subr.mxu0 0.0
        %3778 = vmatpush1.msra.mxu0 0.0
        %3779 = vmatprep.subr.mxu0 0.0
        %3780 = vmatpush1.msra.mxu0 0.0
        %3781 = vmatprep.subr.mxu0 0.0
        %3782 = vmatpush1.msra.mxu0 0.0
        %3783 = vmatprep.subr.mxu0 0.0
        %3784 = vmatpush1.msra.mxu0 0.0
        %3785 = vmatprep.subr.mxu0 0.0
        %3786 = vmatpush1.msra.mxu0 0.0
        %3787 = vmatprep.subr.mxu0 0.0
        %3788 = vmatpush1.msra.mxu0 0.0
        %3789 = vmatprep.subr.mxu0 0.0
        %3790 = vmatpush1.msra.mxu0 0.0
        %3791 = vmatprep.mubr.f32.mxu0 0.0
        %v3792 = vand.u32 %v3571, 4294901760
        %v3793 = vsub.f32 %v3571, %v3792
        %3794 = vmatmul.mubr.f32.gmra.mrb[0].mxu0 %v3793
        %v3795 = vpop.f32.mrb[0].mxu0
        %v3796 = vadd.f32 %v3722, %v3795
        %v3797 = vpop.f32.mrb[0].mxu0
        %3798 = vdwg.mxu0
        %3799 = vmatprep.subr.mxu0 0.0
        %v3800 = vand.u32 %v3568, 4294901760
        %3801 = vmatpush1.msra.mxu0 %v3800
        %3802 = vmatprep.subr.mxu0 0.0
        %3803 = vmatpush1.msra.mxu0 0.0
        %3804 = vmatprep.subr.mxu0 0.0
        %3805 = vmatpush1.msra.mxu0 0.0
        %3806 = vmatprep.subr.mxu0 0.0
        %3807 = vmatpush1.msra.mxu0 0.0
        %3808 = vmatprep.subr.mxu0 0.0
        %3809 = vmatpush1.msra.mxu0 0.0
        %3810 = vmatprep.subr.mxu0 0.0
        %3811 = vmatpush1.msra.mxu0 0.0
        %3812 = vmatprep.subr.mxu0 0.0
        %3813 = vmatpush1.msra.mxu0 0.0
        %3814 = vmatprep.subr.mxu0 0.0
        %3815 = vmatpush1.msra.mxu0 0.0
        %3816 = vmatprep.subr.mxu0 0.0
        %3817 = vmatpush1.msra.mxu0 0.0
        %3818 = vmatprep.subr.mxu0 0.0
        %3819 = vmatpush1.msra.mxu0 0.0
        %3820 = vmatprep.subr.mxu0 0.0
        %3821 = vmatpush1.msra.mxu0 0.0
        %3822 = vmatprep.subr.mxu0 0.0
        %3823 = vmatpush1.msra.mxu0 0.0
        %3824 = vmatprep.subr.mxu0 0.0
        %3825 = vmatpush1.msra.mxu0 0.0
        %3826 = vmatprep.subr.mxu0 0.0
        %3827 = vmatpush1.msra.mxu0 0.0
        %3828 = vmatprep.subr.mxu0 0.0
        %3829 = vmatpush1.msra.mxu0 0.0
        %3830 = vmatprep.subr.mxu0 0.0
        %3831 = vmatpush1.msra.mxu0 0.0
        %3832 = vmatprep.subr.mxu0 0.0
        %3833 = vmatpush1.msra.mxu0 0.0
        %3834 = vmatprep.subr.mxu0 0.0
        %3835 = vmatpush1.msra.mxu0 0.0
        %3836 = vmatprep.subr.mxu0 0.0
        %3837 = vmatpush1.msra.mxu0 0.0
        %3838 = vmatprep.subr.mxu0 0.0
        %3839 = vmatpush1.msra.mxu0 0.0
        %3840 = vmatprep.subr.mxu0 0.0
        %3841 = vmatpush1.msra.mxu0 0.0
        %3842 = vmatprep.subr.mxu0 0.0
        %3843 = vmatpush1.msra.mxu0 0.0
        %3844 = vmatprep.subr.mxu0 0.0
        %3845 = vmatpush1.msra.mxu0 0.0
        %3846 = vmatprep.subr.mxu0 0.0
        %3847 = vmatpush1.msra.mxu0 0.0
        %3848 = vmatprep.subr.mxu0 0.0
        %3849 = vmatpush1.msra.mxu0 0.0
        %3850 = vmatprep.subr.mxu0 0.0
        %3851 = vmatpush1.msra.mxu0 0.0
        %3852 = vmatprep.subr.mxu0 0.0
        %3853 = vmatpush1.msra.mxu0 0.0
        %3854 = vmatprep.subr.mxu0 0.0
        %3855 = vmatpush1.msra.mxu0 0.0
        %3856 = vmatprep.subr.mxu0 0.0
        %3857 = vmatpush1.msra.mxu0 0.0
        %3858 = vmatprep.subr.mxu0 0.0
        %3859 = vmatpush1.msra.mxu0 0.0
        %3860 = vmatprep.subr.mxu0 0.0
        %3861 = vmatpush1.msra.mxu0 0.0
        %3862 = vmatprep.subr.mxu0 0.0
        %3863 = vmatpush1.msra.mxu0 0.0
        %3864 = vmatprep.mubr.f32.mxu0 0.0
        %v3865 = vand.u32 %v3571, 4294901760
        %v3866 = vsub.f32 %v3571, %v3865
        %v3867 = vand.u32 %v3866, 4294901760
        %3868 = vmatmul.mubr.f32.gmra.mrb[0].mxu0 %v3867
        %v3869 = vpop.f32.mrb[0].mxu0
        %v3870 = vadd.f32 %v3796, %v3869
        %v3871 = vpop.f32.mrb[0].mxu0
        %3872 = vdwg.mxu0
        %3873 = vmatprep.subr.mxu0 0.0
        %v3874 = vand.u32 %v3568, 4294901760
        %v3875 = vsub.f32 %v3568, %v3874
        %v3876 = vand.u32 %v3875, 4294901760
        %3877 = vmatpush1.msra.mxu0 %v3876
        %3878 = vmatprep.subr.mxu0 0.0
        %3879 = vmatpush1.msra.mxu0 0.0
        %3880 = vmatprep.subr.mxu0 0.0
        %3881 = vmatpush1.msra.mxu0 0.0
        %3882 = vmatprep.subr.mxu0 0.0
        %3883 = vmatpush1.msra.mxu0 0.0
        %3884 = vmatprep.subr.mxu0 0.0
        %3885 = vmatpush1.msra.mxu0 0.0
        %3886 = vmatprep.subr.mxu0 0.0
        %3887 = vmatpush1.msra.mxu0 0.0
        %3888 = vmatprep.subr.mxu0 0.0
        %3889 = vmatpush1.msra.mxu0 0.0
        %3890 = vmatprep.subr.mxu0 0.0
        %3891 = vmatpush1.msra.mxu0 0.0
        %3892 = vmatprep.subr.mxu0 0.0
        %3893 = vmatpush1.msra.mxu0 0.0
        %3894 = vmatprep.subr.mxu0 0.0
        %3895 = vmatpush1.msra.mxu0 0.0
        %3896 = vmatprep.subr.mxu0 0.0
        %3897 = vmatpush1.msra.mxu0 0.0
        %3898 = vmatprep.subr.mxu0 0.0
        %3899 = vmatpush1.msra.mxu0 0.0
        %3900 = vmatprep.subr.mxu0 0.0
        %3901 = vmatpush1.msra.mxu0 0.0
        %3902 = vmatprep.subr.mxu0 0.0
        %3903 = vmatpush1.msra.mxu0 0.0
        %3904 = vmatprep.subr.mxu0 0.0
        %3905 = vmatpush1.msra.mxu0 0.0
        %3906 = vmatprep.subr.mxu0 0.0
        %3907 = vmatpush1.msra.mxu0 0.0
        %3908 = vmatprep.subr.mxu0 0.0
        %3909 = vmatpush1.msra.mxu0 0.0
        %3910 = vmatprep.subr.mxu0 0.0
        %3911 = vmatpush1.msra.mxu0 0.0
        %3912 = vmatprep.subr.mxu0 0.0
        %3913 = vmatpush1.msra.mxu0 0.0
        %3914 = vmatprep.subr.mxu0 0.0
        %3915 = vmatpush1.msra.mxu0 0.0
        %3916 = vmatprep.subr.mxu0 0.0
        %3917 = vmatpush1.msra.mxu0 0.0
        %3918 = vmatprep.subr.mxu0 0.0
        %3919 = vmatpush1.msra.mxu0 0.0
        %3920 = vmatprep.subr.mxu0 0.0
        %3921 = vmatpush1.msra.mxu0 0.0
        %3922 = vmatprep.subr.mxu0 0.0
        %3923 = vmatpush1.msra.mxu0 0.0
        %3924 = vmatprep.subr.mxu0 0.0
        %3925 = vmatpush1.msra.mxu0 0.0
        %3926 = vmatprep.subr.mxu0 0.0
        %3927 = vmatpush1.msra.mxu0 0.0
        %3928 = vmatprep.subr.mxu0 0.0
        %3929 = vmatpush1.msra.mxu0 0.0
        %3930 = vmatprep.subr.mxu0 0.0
        %3931 = vmatpush1.msra.mxu0 0.0
        %3932 = vmatprep.subr.mxu0 0.0
        %3933 = vmatpush1.msra.mxu0 0.0
        %3934 = vmatprep.subr.mxu0 0.0
        %3935 = vmatpush1.msra.mxu0 0.0
        %3936 = vmatprep.subr.mxu0 0.0
        %3937 = vmatpush1.msra.mxu0 0.0
        %3938 = vmatprep.subr.mxu0 0.0
        %3939 = vmatpush1.msra.mxu0 0.0
        %3940 = vmatprep.mubr.f32.mxu0 0.0
        %v3941 = vand.u32 %v3571, 4294901760
        %3942 = vmatmul.mubr.f32.gmra.mrb[0].mxu0 %v3941
        %v3943 = vpop.f32.mrb[0].mxu0
        %v3944 = vadd.f32 %v3870, %v3943
        %v3945 = vpop.f32.mrb[0].mxu0
        %3946 = vdwg.mxu0
        %3947 = vmatprep.subr.mxu0 0.0
        %v3948 = vand.u32 %v3568, 4294901760
        %3949 = vmatpush1.msra.mxu0 %v3948
        %3950 = vmatprep.subr.mxu0 0.0
        %3951 = vmatpush1.msra.mxu0 0.0
        %3952 = vmatprep.subr.mxu0 0.0
        %3953 = vmatpush1.msra.mxu0 0.0
        %3954 = vmatprep.subr.mxu0 0.0
        %3955 = vmatpush1.msra.mxu0 0.0
        %3956 = vmatprep.subr.mxu0 0.0
        %3957 = vmatpush1.msra.mxu0 0.0
        %3958 = vmatprep.subr.mxu0 0.0
        %3959 = vmatpush1.msra.mxu0 0.0
        %3960 = vmatprep.subr.mxu0 0.0
        %3961 = vmatpush1.msra.mxu0 0.0
        %3962 = vmatprep.subr.mxu0 0.0
        %3963 = vmatpush1.msra.mxu0 0.0
        %3964 = vmatprep.subr.mxu0 0.0
        %3965 = vmatpush1.msra.mxu0 0.0
        %3966 = vmatprep.subr.mxu0 0.0
        %3967 = vmatpush1.msra.mxu0 0.0
        %3968 = vmatprep.subr.mxu0 0.0
        %3969 = vmatpush1.msra.mxu0 0.0
        %3970 = vmatprep.subr.mxu0 0.0
        %3971 = vmatpush1.msra.mxu0 0.0
        %3972 = vmatprep.subr.mxu0 0.0
        %3973 = vmatpush1.msra.mxu0 0.0
        %3974 = vmatprep.subr.mxu0 0.0
        %3975 = vmatpush1.msra.mxu0 0.0
        %3976 = vmatprep.subr.mxu0 0.0
        %3977 = vmatpush1.msra.mxu0 0.0
        %3978 = vmatprep.subr.mxu0 0.0
        %3979 = vmatpush1.msra.mxu0 0.0
        %3980 = vmatprep.subr.mxu0 0.0
        %3981 = vmatpush1.msra.mxu0 0.0
        %3982 = vmatprep.subr.mxu0 0.0
        %3983 = vmatpush1.msra.mxu0 0.0
        %3984 = vmatprep.subr.mxu0 0.0
        %3985 = vmatpush1.msra.mxu0 0.0
        %3986 = vmatprep.subr.mxu0 0.0
        %3987 = vmatpush1.msra.mxu0 0.0
        %3988 = vmatprep.subr.mxu0 0.0
        %3989 = vmatpush1.msra.mxu0 0.0
        %3990 = vmatprep.subr.mxu0 0.0
        %3991 = vmatpush1.msra.mxu0 0.0
        %3992 = vmatprep.subr.mxu0 0.0
        %3993 = vmatpush1.msra.mxu0 0.0
        %3994 = vmatprep.subr.mxu0 0.0
        %3995 = vmatpush1.msra.mxu0 0.0
        %3996 = vmatprep.subr.mxu0 0.0
        %3997 = vmatpush1.msra.mxu0 0.0
        %3998 = vmatprep.subr.mxu0 0.0
        %3999 = vmatpush1.msra.mxu0 0.0
        %4000 = vmatprep.subr.mxu0 0.0
        %4001 = vmatpush1.msra.mxu0 0.0
        %4002 = vmatprep.subr.mxu0 0.0
        %4003 = vmatpush1.msra.mxu0 0.0
        %4004 = vmatprep.subr.mxu0 0.0
        %4005 = vmatpush1.msra.mxu0 0.0
        %4006 = vmatprep.subr.mxu0 0.0
        %4007 = vmatpush1.msra.mxu0 0.0
        %4008 = vmatprep.subr.mxu0 0.0
        %4009 = vmatpush1.msra.mxu0 0.0
        %4010 = vmatprep.subr.mxu0 0.0
        %4011 = vmatpush1.msra.mxu0 0.0
        %4012 = vmatprep.mubr.f32.mxu0 0.0
        %v4013 = vand.u32 %v3571, 4294901760
        %4014 = vmatmul.mubr.f32.gmra.mrb[0].mxu0 %v4013
        %v4015 = vpop.f32.mrb[0].mxu0
        %v4016 = vadd.f32 %v3944, %v4015
        %v4017 = vpop.f32.mrb[0].mxu0
        %4018 = vdwg.mxu0
        %4020 = vrot.lane.b32.xlu0 %v2178, 8
        %v4021 = vpop.permute.xlu0 %4020
        %4024 = vrot.lane.b32.xlu0 %v3097, 16
        %v4025 = vpop.permute.xlu0 %4024
        %4028 = vrot.lane.b32.xlu0 %v4016, 24
        %v4029 = vpop.permute.xlu0 %4028
        %v4031 = vsel %vm339, %v1258, %v4021
        %vm4032 = vcmask 130048
        %v4033 = vsel %vm4032, %v4031, %v4025
        %vm4034 = vcmask 195584
        %v4035 = vsel %vm4034, %v4033, %v4029
        %vm4036 = vcmask 261120
        %4037 = vst.msk [vmem:[%s334] sm:$0xff] %vm4036, %v4035
        %s4038 = sand.u32 %s155, 1
        %s4039 = scalar_lea.sflag [#allocation4], %s4038
        %s4040 = sand.u32 %s155, 1
        %s4041 = smul.addr %s4040, 8
        %s4042 = scalar_lea.vmem [#allocation10], %s4041
        // Predicated region
        $region53: #{mechanism_transformer_forward.22} parent=35 // pred_check
          %p4043 = pneg %p165
        $region54: #{mechanism_transformer_forward.22} parent=35 // pred_check_branch
          %4045 = sbr.rel (%p4043) target = $region56
        $region55: #{mechanism_transformer_forward.22} parent=35 // pred_region
          %s4047 = ssub.s32 128, 128
          %4048 = vsyncadd %s4039, %s4047
          %s4049 = sadd.s32 %s32, %s31
          %s4050 = smul.addr %s4049, 128
          %s4051 = scalar_lea.hbm %s4, %s4050
          %s4053 = sshll.u32 %s4042, 4
          %s4054 = int_to_ptr.vmem [resolvable:$true] %s4053
          %4056 = dma.vmem_to_hbm [thread:$0]  %s4054, 128, %s4051, %s4039
        $region56: #{mechanism_transformer_forward.22} parent=35 // pred_fallthru
          _
      $region36: #{mechanism_transformer_forward.22} parent=5 // pred_fallthru
        _
      %p4057 = scmp.le.s32.totalorder 2, %s22
      // Predicated region
      $region57: #{mechanism_transformer_forward.22} parent=5 // pred_check
        %p4058 = pneg %p4057
      $region58: #{mechanism_transformer_forward.22} parent=5 // pred_check_branch
        %4060 = sbr.rel (%p4058) target = $region60
      $region59: #{mechanism_transformer_forward.22} parent=5 // pred_region
        %s4061 = ssub.s32 %s22, 2
        // Predicated region
        $region61: #{mechanism_transformer_forward.22} parent=59 // pred_check
          %p4062 = pneg %p171
        $region62: #{mechanism_transformer_forward.22} parent=59 // pred_check_branch
          %4064 = sbr.rel (%p4062) target = $region64
        $region63: #{mechanism_transformer_forward.22} parent=59 // pred_region
          %s4065 = sand.u32 %s156, 1
          %s4066 = scalar_lea.sflag [#allocation4], %s4065
          %s4067 = sand.u32 %s156, 1
          %s4068 = smul.addr %s4067, 8
          %s4069 = scalar_lea.vmem [#allocation10], %s4068
          %4070 = dma.done %s4066, 128
        $region64: #{mechanism_transformer_forward.22} parent=59 // pred_fallthru
          _
      $region60: #{mechanism_transformer_forward.22} parent=5 // pred_fallthru
        _
    $region6: #{mechanism_transformer_forward.22} parent=1 // loop_footer
      %s26 = sadd.s32 1, %s22
    $region7: #{mechanism_transformer_forward.22} parent=1 // loop_footer_branch
      %21 = sbr.rel target = $region3
    $region8: #{mechanism_transformer_forward.22} parent=1 // loop_exit
      _
    %4071 = vsyncpa [#allocation3], 1
    %s4072 = scalar_lea.sflag [#allocation3], 1
    %4073 = vsyncpa %s4072, 1
    %4074 = vsyncpa [#allocation6], 1
    %s4075 = scalar_lea.sflag [#allocation6], 1
    %4076 = vsyncpa %s4075, 1
    %4077 = vsyncpa [#allocation9], 1
    %s4078 = scalar_lea.sflag [#allocation9], 1
    %4079 = vsyncpa %s4078, 1
    %4080 = vsyncpa [#allocation4], 1
    %s4081 = scalar_lea.sflag [#allocation4], 1
    %4082 = vsyncpa %s4081, 1

// kernel: mechanism_transformer_forward.26
$region0: #{mechanism_transformer_forward.26}
  #allocation0 [shape = 'u32[]', space=smem, size = 0x4, offset = 0x4, fixed_abs, tag = 'smem constant byte address 0x4 - core index']
  #allocation1 [shape = 'u32[144,128]{1,0:T(1,128)}', space=vmem, size = 0x12000, scoped, tag = 'internal scratch']
  %s0 = inlined_call_operand.hbm [shape: f32[16,64], index: 0, kind: input, shape index: {}]
  %s1 = inlined_call_operand.hbm [shape: f32[64,32], index: 1, kind: input, shape index: {}]
  %s2 = inlined_call_operand.hbm [shape: f32[1,32], index: 2, kind: input, shape index: {}]
  %s3 = inlined_call_operand.hbm [shape: f32[16,32], index: 3, kind: input, shape index: {}]
  %s4 = inlined_call_operand.hbm [shape: f32[16,32], index: 4, kind: output, shape index: {}]
  %s5 = sld [smem:[#allocation0]]
  $region42: #{mechanism_transformer_forward.26} parent=0
    _
  %s7 = ssub.s32 1, %s5
  %s8 = scalar_select 0, %s7, %s5
  $region1: #{mechanism_transformer_forward.26} parent=0
    #allocation2 [shape = 'u8[8192]{0}', space=vmem, size = 0x2000, scoped, tag = 'input window, operand 0, single buffered']
    #allocation3 [shape = 's32[1]{0}', space=sflag, size = 0x4, scoped, tag = 'scoped memory for mechanism_transformer_forward.26']
    #allocation4 [shape = 's32[1]{0}', space=sflag, size = 0x4, scoped, tag = 'scoped memory for mechanism_transformer_forward.26']
    #allocation5 [shape = 'u8[32768]{0}', space=vmem, size = 0x8000, scoped, tag = 'input window, operand 1, single buffered']
    #allocation6 [shape = 's32[1]{0}', space=sflag, size = 0x4, scoped, tag = 'scoped memory for mechanism_transformer_forward.26']
    #allocation7 [shape = 'u8[512]{0}', space=vmem, size = 0x400, scoped, tag = 'input window, operand 2, single buffered']
    #allocation8 [shape = 'u8[8192]{0}', space=vmem, size = 0x2000, scoped, tag = 'input window, operand 3, single buffered']
    #allocation9 [shape = 's32[1]{0}', space=sflag, size = 0x4, scoped, tag = 'scoped memory for mechanism_transformer_forward.26']
    #allocation10 [shape = 'u8[8192]{0}', space=vmem, size = 0x2000, scoped, tag = 'output window, operand 0, single buffered']
    %9 = vsyncpa [#allocation3], 0
    %10 = vsyncpa [#allocation6], 0
    %11 = vsyncpa [#allocation9], 0
    %12 = vsyncpa [#allocation4], 0
    // Predicated region
    $region2: #{mechanism_transformer_forward.26} parent=1 // pred_check
      _
    $region3: #{mechanism_transformer_forward.26} parent=1 // pred_check_branch
      %14 = sbr.rel (0) target = $region5
    $region4: #{mechanism_transformer_forward.26} parent=1 // pred_region
      %s16 = ssub.s32 256, 256
      %17 = vsyncadd [#allocation3], %s16
      %s18 = sshll.u32 [#allocation2], 4
      %s19 = int_to_ptr.vmem [resolvable:$true] %s18
      %24 = dma.hbm_to_vmem [thread:$0]  %s0, 256, %s19, [#allocation3], 128, 128, 8
    $region5: #{mechanism_transformer_forward.26} parent=1 // pred_fallthru
      _
    // Predicated region
    $region6: #{mechanism_transformer_forward.26} parent=1 // pred_check
      _
    $region7: #{mechanism_transformer_forward.26} parent=1 // pred_check_branch
      %26 = sbr.rel (0) target = $region9
    $region8: #{mechanism_transformer_forward.26} parent=1 // pred_region
      %s28 = ssub.s32 1024, 1024
      %29 = vsyncadd [#allocation6], %s28
      %s30 = sshll.u32 [#allocation5], 4
      %s31 = int_to_ptr.vmem [resolvable:$true] %s30
      %36 = dma.hbm_to_vmem [thread:$0]  %s1, 1024, %s31, [#allocation6], 128, 128, 8
    $region9: #{mechanism_transformer_forward.26} parent=1 // pred_fallthru
      _
    // Predicated region
    $region10: #{mechanism_transformer_forward.26} parent=1 // pred_check
      _
    $region11: #{mechanism_transformer_forward.26} parent=1 // pred_check_branch
      %38 = sbr.rel (0) target = $region13
    $region12: #{mechanism_transformer_forward.26} parent=1 // pred_region
      %s40 = ssub.s32 16, 16
      %41 = vsyncadd [#allocation6], %s40
      %s43 = sshll.u32 [#allocation7], 4
      %s44 = int_to_ptr.vmem [resolvable:$true] %s43
      %46 = dma.hbm_to_vmem [thread:$0]  %s2, 16, %s44, [#allocation6]
    $region13: #{mechanism_transformer_forward.26} parent=1 // pred_fallthru
      _
    // Predicated region
    $region14: #{mechanism_transformer_forward.26} parent=1 // pred_check
      _
    $region15: #{mechanism_transformer_forward.26} parent=1 // pred_check_branch
      %48 = sbr.rel (0) target = $region17
    $region16: #{mechanism_transformer_forward.26} parent=1 // pred_region
      %s50 = ssub.s32 256, 256
      %51 = vsyncadd [#allocation9], %s50
      %s52 = sshll.u32 [#allocation8], 4
      %s53 = int_to_ptr.vmem [resolvable:$true] %s52
      %58 = dma.hbm_to_vmem [thread:$0]  %s3, 256, %s53, [#allocation9], 128, 128, 8
    $region17: #{mechanism_transformer_forward.26} parent=1 // pred_fallthru
      _
    // Predicated region
    $region18: #{mechanism_transformer_forward.26} parent=1 // pred_check
      _
    $region19: #{mechanism_transformer_forward.26} parent=1 // pred_check_branch
      %60 = sbr.rel (0) target = $region21
    $region20: #{mechanism_transformer_forward.26} parent=1 // pred_region
      %61 = dma.done [#allocation3], 256
    $region21: #{mechanism_transformer_forward.26} parent=1 // pred_fallthru
      _
    // Predicated region
    $region22: #{mechanism_transformer_forward.26} parent=1 // pred_check
      _
    $region23: #{mechanism_transformer_forward.26} parent=1 // pred_check_branch
      %63 = sbr.rel (0) target = $region25
    $region24: #{mechanism_transformer_forward.26} parent=1 // pred_region
      %64 = dma.done [#allocation6], 1024
    $region25: #{mechanism_transformer_forward.26} parent=1 // pred_fallthru
      _
    // Predicated region
    $region26: #{mechanism_transformer_forward.26} parent=1 // pred_check
      _
    $region27: #{mechanism_transformer_forward.26} parent=1 // pred_check_branch
      %66 = sbr.rel (0) target = $region29
    $region28: #{mechanism_transformer_forward.26} parent=1 // pred_region
      %67 = dma.done [#allocation6], 16
    $region29: #{mechanism_transformer_forward.26} parent=1 // pred_fallthru
      _
    // Predicated region
    $region30: #{mechanism_transformer_forward.26} parent=1 // pred_check
      _
    $region31: #{mechanism_transformer_forward.26} parent=1 // pred_check_branch
      %69 = sbr.rel (0) target = $region33
    $region32: #{mechanism_transformer_forward.26} parent=1 // pred_region
      %70 = dma.done [#allocation9], 256
    $region33: #{mechanism_transformer_forward.26} parent=1 // pred_fallthru
      _
    %v71 = vld [vmem:[#allocation2] sm:$0xff]
    %v72 = vld [vmem:[#allocation2 + $0x8] sm:$0xff]
    %v73 = vld [vmem:[#allocation5] sm:$0xff]
    %v74 = vld [vmem:[#allocation5 + $0x8] sm:$0xff]
    %v75 = vld [vmem:[#allocation5 + $0x10] sm:$0xff]
    %v76 = vld [vmem:[#allocation5 + $0x18] sm:$0xff]
    %v77 = vld [vmem:[#allocation5 + $0x20] sm:$0xff]
    %v78 = vld [vmem:[#allocation5 + $0x28] sm:$0xff]
    %v79 = vld [vmem:[#allocation5 + $0x30] sm:$0xff]
    %v80 = vld [vmem:[#allocation5 + $0x38] sm:$0xff]
    %v81 = vld [vmem:[#allocation7] sm:$0x1]
    %v83 = vlaneseq
    %v84 = vshrl.u32 %v83, 7
    %v85 = vsub.s32 0, %v84
    %v86 = vrot.slane %v81, %v85
    %vm88 = vcmask 523264
    %v90 = vsel %vm88, %v71, 0
    %v93 = vsel %vm88, %v72, 0
    %95 = vmatprep.subr.mxu0 0.0
    %v96 = vand.u32 %v73, 4294901760
    %97 = vmatpush1.msra.mxu0 %v96
    %98 = vmatprep.subr.mxu0 0.0
    %v99 = vand.u32 %v74, 4294901760
    %100 = vmatpush1.msra.mxu0 %v99
    %101 = vmatprep.subr.mxu0 0.0
    %v102 = vand.u32 %v75, 4294901760
    %103 = vmatpush1.msra.mxu0 %v102
    %104 = vmatprep.subr.mxu0 0.0
    %v105 = vand.u32 %v76, 4294901760
    %106 = vmatpush1.msra.mxu0 %v105
    %107 = vmatprep.subr.mxu0 0.0
    %v108 = vand.u32 %v77, 4294901760
    %109 = vmatpush1.msra.mxu0 %v108
    %110 = vmatprep.subr.mxu0 0.0
    %v111 = vand.u32 %v78, 4294901760
    %112 = vmatpush1.msra.mxu0 %v111
    %113 = vmatprep.subr.mxu0 0.0
    %v114 = vand.u32 %v79, 4294901760
    %115 = vmatpush1.msra.mxu0 %v114
    %116 = vmatprep.subr.mxu0 0.0
    %v117 = vand.u32 %v80, 4294901760
    %118 = vmatpush1.msra.mxu0 %v117
    %119 = vmatprep.subr.mxu0 0.0
    %120 = vmatpush1.msra.mxu0 0.0
    %121 = vmatprep.subr.mxu0 0.0
    %122 = vmatpush1.msra.mxu0 0.0
    %123 = vmatprep.subr.mxu0 0.0
    %124 = vmatpush1.msra.mxu0 0.0
    %125 = vmatprep.subr.mxu0 0.0
    %126 = vmatpush1.msra.mxu0 0.0
    %127 = vmatprep.subr.mxu0 0.0
    %128 = vmatpush1.msra.mxu0 0.0
    %129 = vmatprep.subr.mxu0 0.0
    %130 = vmatpush1.msra.mxu0 0.0
    %131 = vmatprep.subr.mxu0 0.0
    %132 = vmatpush1.msra.mxu0 0.0
    %133 = vmatprep.subr.mxu0 0.0
    %134 = vmatpush1.msra.mxu0 0.0
    %135 = vmatprep.subr.mxu0 0.0
    %136 = vmatpush1.msra.mxu0 0.0
    %137 = vmatprep.subr.mxu0 0.0
    %138 = vmatpush1.msra.mxu0 0.0
    %139 = vmatprep.subr.mxu0 0.0
    %140 = vmatpush1.msra.mxu0 0.0
    %141 = vmatprep.subr.mxu0 0.0
    %142 = vmatpush1.msra.mxu0 0.0
    %143 = vmatprep.subr.mxu0 0.0
    %144 = vmatpush1.msra.mxu0 0.0
    %145 = vmatprep.subr.mxu0 0.0
    %146 = vmatpush1.msra.mxu0 0.0
    %147 = vmatprep.subr.mxu0 0.0
    %148 = vmatpush1.msra.mxu0 0.0
    %149 = vmatprep.subr.mxu0 0.0
    %150 = vmatpush1.msra.mxu0 0.0
    %151 = vmatprep.subr.mxu0 0.0
    %152 = vmatpush1.msra.mxu0 0.0
    %153 = vmatprep.subr.mxu0 0.0
    %154 = vmatpush1.msra.mxu0 0.0
    %155 = vmatprep.subr.mxu0 0.0
    %156 = vmatpush1.msra.mxu0 0.0
    %157 = vmatprep.subr.mxu0 0.0
    %158 = vmatpush1.msra.mxu0 0.0
    %159 = vmatprep.subr.mxu0 0.0
    %160 = vmatpush1.msra.mxu0 0.0
    %161 = vmatprep.subr.mxu0 0.0
    %162 = vmatpush1.msra.mxu0 0.0
    %163 = vmatprep.subr.mxu0 0.0
    %164 = vmatpush1.msra.mxu0 0.0
    %165 = vmatprep.subr.mxu0 0.0
    %166 = vmatpush1.msra.mxu0 0.0
    %167 = vmatprep.mubr.f32.mxu0 0.0
    %v168 = vand.u32 %v90, 4294901760
    %v169 = vsub.f32 %v90, %v168
    %v170 = vand.u32 %v169, 4294901760
    %v171 = vsub.f32 %v169, %v170
    %v172 = vand.u32 %v171, 4294901760
    %173 = vmatmul.mubr.f32.gmra.mrb[0].mxu0 %v172
    %v174 = vpop.f32.mrb[0].mxu0
    %v175 = vadd.f32 %v86, %v174
    %v176 = vpop.f32.mrb[0].mxu0
    %177 = vmatprep.mubr.f32.mxu0 0.0
    %v178 = vand.u32 %v93, 4294901760
    %v179 = vsub.f32 %v93, %v178
    %v180 = vand.u32 %v179, 4294901760
    %v181 = vsub.f32 %v179, %v180
    %v182 = vand.u32 %v181, 4294901760
    %183 = vmatmul.mubr.f32.gmra.mrb[0].mxu0 %v182
    %v184 = vpop.f32.mrb[0].mxu0
    %v185 = vadd.f32 %v86, %v184
    %v186 = vpop.f32.mrb[0].mxu0
    %187 = vdwg.mxu0
    %188 = vmatprep.subr.mxu0 0.0
    %v189 = vand.u32 %v73, 4294901760
    %v190 = vsub.f32 %v73, %v189
    %v191 = vand.u32 %v190, 4294901760
    %v192 = vsub.f32 %v190, %v191
    %v193 = vand.u32 %v192, 4294901760
    %194 = vmatpush1.msra.mxu0 %v193
    %195 = vmatprep.subr.mxu0 0.0
    %v196 = vand.u32 %v74, 4294901760
    %v197 = vsub.f32 %v74, %v196
    %v198 = vand.u32 %v197, 4294901760
    %v199 = vsub.f32 %v197, %v198
    %v200 = vand.u32 %v199, 4294901760
    %201 = vmatpush1.msra.mxu0 %v200
    %202 = vmatprep.subr.mxu0 0.0
    %v203 = vand.u32 %v75, 4294901760
    %v204 = vsub.f32 %v75, %v203
    %v205 = vand.u32 %v204, 4294901760
    %v206 = vsub.f32 %v204, %v205
    %v207 = vand.u32 %v206, 4294901760
    %208 = vmatpush1.msra.mxu0 %v207
    %209 = vmatprep.subr.mxu0 0.0
    %v210 = vand.u32 %v76, 4294901760
    %v211 = vsub.f32 %v76, %v210
    %v212 = vand.u32 %v211, 4294901760
    %v213 = vsub.f32 %v211, %v212
    %v214 = vand.u32 %v213, 4294901760
    %215 = vmatpush1.msra.mxu0 %v214
    %216 = vmatprep.subr.mxu0 0.0
    %v217 = vand.u32 %v77, 4294901760
    %v218 = vsub.f32 %v77, %v217
    %v219 = vand.u32 %v218, 4294901760
    %v220 = vsub.f32 %v218, %v219
    %v221 = vand.u32 %v220, 4294901760
    %222 = vmatpush1.msra.mxu0 %v221
    %223 = vmatprep.subr.mxu0 0.0
    %v224 = vand.u32 %v78, 4294901760
    %v225 = vsub.f32 %v78, %v224
    %v226 = vand.u32 %v225, 4294901760
    %v227 = vsub.f32 %v225, %v226
    %v228 = vand.u32 %v227, 4294901760
    %229 = vmatpush1.msra.mxu0 %v228
    %230 = vmatprep.subr.mxu0 0.0
    %v231 = vand.u32 %v79, 4294901760
    %v232 = vsub.f32 %v79, %v231
    %v233 = vand.u32 %v232, 4294901760
    %v234 = vsub.f32 %v232, %v233
    %v235 = vand.u32 %v234, 4294901760
    %236 = vmatpush1.msra.mxu0 %v235
    %237 = vmatprep.subr.mxu0 0.0
    %v238 = vand.u32 %v80, 4294901760
    %v239 = vsub.f32 %v80, %v238
    %v240 = vand.u32 %v239, 4294901760
    %v241 = vsub.f32 %v239, %v240
    %v242 = vand.u32 %v241, 4294901760
    %243 = vmatpush1.msra.mxu0 %v242
    %244 = vmatprep.subr.mxu0 0.0
    %245 = vmatpush1.msra.mxu0 0.0
    %246 = vmatprep.subr.mxu0 0.0
    %247 = vmatpush1.msra.mxu0 0.0
    %248 = vmatprep.subr.mxu0 0.0
    %249 = vmatpush1.msra.mxu0 0.0
    %250 = vmatprep.subr.mxu0 0.0
    %251 = vmatpush1.msra.mxu0 0.0
    %252 = vmatprep.subr.mxu0 0.0
    %253 = vmatpush1.msra.mxu0 0.0
    %254 = vmatprep.subr.mxu0 0.0
    %255 = vmatpush1.msra.mxu0 0.0
    %256 = vmatprep.subr.mxu0 0.0
    %257 = vmatpush1.msra.mxu0 0.0
    %258 = vmatprep.subr.mxu0 0.0
    %259 = vmatpush1.msra.mxu0 0.0
    %260 = vmatprep.subr.mxu0 0.0
    %261 = vmatpush1.msra.mxu0 0.0
    %262 = vmatprep.subr.mxu0 0.0
    %263 = vmatpush1.msra.mxu0 0.0
    %264 = vmatprep.subr.mxu0 0.0
    %265 = vmatpush1.msra.mxu0 0.0
    %266 = vmatprep.subr.mxu0 0.0
    %267 = vmatpush1.msra.mxu0 0.0
    %268 = vmatprep.subr.mxu0 0.0
    %269 = vmatpush1.msra.mxu0 0.0
    %270 = vmatprep.subr.mxu0 0.0
    %271 = vmatpush1.msra.mxu0 0.0
    %272 = vmatprep.subr.mxu0 0.0
    %273 = vmatpush1.msra.mxu0 0.0
    %274 = vmatprep.subr.mxu0 0.0
    %275 = vmatpush1.msra.mxu0 0.0
    %276 = vmatprep.subr.mxu0 0.0
    %277 = vmatpush1.msra.mxu0 0.0
    %278 = vmatprep.subr.mxu0 0.0
    %279 = vmatpush1.msra.mxu0 0.0
    %280 = vmatprep.subr.mxu0 0.0
    %281 = vmatpush1.msra.mxu0 0.0
    %282 = vmatprep.subr.mxu0 0.0
    %283 = vmatpush1.msra.mxu0 0.0
    %284 = vmatprep.subr.mxu0 0.0
    %285 = vmatpush1.msra.mxu0 0.0
    %286 = vmatprep.subr.mxu0 0.0
    %287 = vmatpush1.msra.mxu0 0.0
    %288 = vmatprep.subr.mxu0 0.0
    %289 = vmatpush1.msra.mxu0 0.0
    %290 = vmatprep.subr.mxu0 0.0
    %291 = vmatpush1.msra.mxu0 0.0
    %292 = vmatprep.mubr.f32.mxu0 0.0
    %v293 = vand.u32 %v90, 4294901760
    %294 = vmatmul.mubr.f32.gmra.mrb[0].mxu0 %v293
    %v295 = vpop.f32.mrb[0].mxu0
    %v296 = vadd.f32 %v175, %v295
    %v297 = vpop.f32.mrb[0].mxu0
    %298 = vmatprep.mubr.f32.mxu0 0.0
    %v299 = vand.u32 %v93, 4294901760
    %300 = vmatmul.mubr.f32.gmra.mrb[0].mxu0 %v299
    %v301 = vpop.f32.mrb[0].mxu0
    %v302 = vadd.f32 %v185, %v301
    %v303 = vpop.f32.mrb[0].mxu0
    %304 = vdwg.mxu0
    %305 = vmatprep.subr.mxu0 0.0
    %v306 = vand.u32 %v73, 4294901760
    %v307 = vsub.f32 %v73, %v306
    %308 = vmatpush1.msra.mxu0 %v307
    %309 = vmatprep.subr.mxu0 0.0
    %v310 = vand.u32 %v74, 4294901760
    %v311 = vsub.f32 %v74, %v310
    %312 = vmatpush1.msra.mxu0 %v311
    %313 = vmatprep.subr.mxu0 0.0
    %v314 = vand.u32 %v75, 4294901760
    %v315 = vsub.f32 %v75, %v314
    %316 = vmatpush1.msra.mxu0 %v315
    %317 = vmatprep.subr.mxu0 0.0
    %v318 = vand.u32 %v76, 4294901760
    %v319 = vsub.f32 %v76, %v318
    %320 = vmatpush1.msra.mxu0 %v319
    %321 = vmatprep.subr.mxu0 0.0
    %v322 = vand.u32 %v77, 4294901760
    %v323 = vsub.f32 %v77, %v322
    %324 = vmatpush1.msra.mxu0 %v323
    %325 = vmatprep.subr.mxu0 0.0
    %v326 = vand.u32 %v78, 4294901760
    %v327 = vsub.f32 %v78, %v326
    %328 = vmatpush1.msra.mxu0 %v327
    %329 = vmatprep.subr.mxu0 0.0
    %v330 = vand.u32 %v79, 4294901760
    %v331 = vsub.f32 %v79, %v330
    %332 = vmatpush1.msra.mxu0 %v331
    %333 = vmatprep.subr.mxu0 0.0
    %v334 = vand.u32 %v80, 4294901760
    %v335 = vsub.f32 %v80, %v334
    %336 = vmatpush1.msra.mxu0 %v335
    %337 = vmatprep.subr.mxu0 0.0
    %338 = vmatpush1.msra.mxu0 0.0
    %339 = vmatprep.subr.mxu0 0.0
    %340 = vmatpush1.msra.mxu0 0.0
    %341 = vmatprep.subr.mxu0 0.0
    %342 = vmatpush1.msra.mxu0 0.0
    %343 = vmatprep.subr.mxu0 0.0
    %344 = vmatpush1.msra.mxu0 0.0
    %345 = vmatprep.subr.mxu0 0.0
    %346 = vmatpush1.msra.mxu0 0.0
    %347 = vmatprep.subr.mxu0 0.0
    %348 = vmatpush1.msra.mxu0 0.0
    %349 = vmatprep.subr.mxu0 0.0
    %350 = vmatpush1.msra.mxu0 0.0
    %351 = vmatprep.subr.mxu0 0.0
    %352 = vmatpush1.msra.mxu0 0.0
    %353 = vmatprep.subr.mxu0 0.0
    %354 = vmatpush1.msra.mxu0 0.0
    %355 = vmatprep.subr.mxu0 0.0
    %356 = vmatpush1.msra.mxu0 0.0
    %357 = vmatprep.subr.mxu0 0.0
    %358 = vmatpush1.msra.mxu0 0.0
    %359 = vmatprep.subr.mxu0 0.0
    %360 = vmatpush1.msra.mxu0 0.0
    %361 = vmatprep.subr.mxu0 0.0
    %362 = vmatpush1.msra.mxu0 0.0
    %363 = vmatprep.subr.mxu0 0.0
    %364 = vmatpush1.msra.mxu0 0.0
    %365 = vmatprep.subr.mxu0 0.0
    %366 = vmatpush1.msra.mxu0 0.0
    %367 = vmatprep.subr.mxu0 0.0
    %368 = vmatpush1.msra.mxu0 0.0
    %369 = vmatprep.subr.mxu0 0.0
    %370 = vmatpush1.msra.mxu0 0.0
    %371 = vmatprep.subr.mxu0 0.0
    %372 = vmatpush1.msra.mxu0 0.0
    %373 = vmatprep.subr.mxu0 0.0
    %374 = vmatpush1.msra.mxu0 0.0
    %375 = vmatprep.subr.mxu0 0.0
    %376 = vmatpush1.msra.mxu0 0.0
    %377 = vmatprep.subr.mxu0 0.0
    %378 = vmatpush1.msra.mxu0 0.0
    %379 = vmatprep.subr.mxu0 0.0
    %380 = vmatpush1.msra.mxu0 0.0
    %381 = vmatprep.subr.mxu0 0.0
    %382 = vmatpush1.msra.mxu0 0.0
    %383 = vmatprep.subr.mxu0 0.0
    %384 = vmatpush1.msra.mxu0 0.0
    %385 = vmatprep.mubr.f32.mxu0 0.0
    %v386 = vand.u32 %v90, 4294901760
    %v387 = vsub.f32 %v90, %v386
    %388 = vmatmul.mubr.f32.gmra.mrb[0].mxu0 %v387
    %v389 = vpop.f32.mrb[0].mxu0
    %v390 = vadd.f32 %v296, %v389
    %v391 = vpop.f32.mrb[0].mxu0
    %392 = vmatprep.mubr.f32.mxu0 0.0
    %v393 = vand.u32 %v93, 4294901760
    %v394 = vsub.f32 %v93, %v393
    %395 = vmatmul.mubr.f32.gmra.mrb[0].mxu0 %v394
    %v396 = vpop.f32.mrb[0].mxu0
    %v397 = vadd.f32 %v302, %v396
    %v398 = vpop.f32.mrb[0].mxu0
    %399 = vdwg.mxu0
    %400 = vmatprep.subr.mxu0 0.0
    %v401 = vand.u32 %v73, 4294901760
    %402 = vmatpush1.msra.mxu0 %v401
    %403 = vmatprep.subr.mxu0 0.0
    %v404 = vand.u32 %v74, 4294901760
    %405 = vmatpush1.msra.mxu0 %v404
    %406 = vmatprep.subr.mxu0 0.0
    %v407 = vand.u32 %v75, 4294901760
    %408 = vmatpush1.msra.mxu0 %v407
    %409 = vmatprep.subr.mxu0 0.0
    %v410 = vand.u32 %v76, 4294901760
    %411 = vmatpush1.msra.mxu0 %v410
    %412 = vmatprep.subr.mxu0 0.0
    %v413 = vand.u32 %v77, 4294901760
    %414 = vmatpush1.msra.mxu0 %v413
    %415 = vmatprep.subr.mxu0 0.0
    %v416 = vand.u32 %v78, 4294901760
    %417 = vmatpush1.msra.mxu0 %v416
    %418 = vmatprep.subr.mxu0 0.0
    %v419 = vand.u32 %v79, 4294901760
    %420 = vmatpush1.msra.mxu0 %v419
    %421 = vmatprep.subr.mxu0 0.0
    %v422 = vand.u32 %v80, 4294901760
    %423 = vmatpush1.msra.mxu0 %v422
    %424 = vmatprep.subr.mxu0 0.0
    %425 = vmatpush1.msra.mxu0 0.0
    %426 = vmatprep.subr.mxu0 0.0
    %427 = vmatpush1.msra.mxu0 0.0
    %428 = vmatprep.subr.mxu0 0.0
    %429 = vmatpush1.msra.mxu0 0.0
    %430 = vmatprep.subr.mxu0 0.0
    %431 = vmatpush1.msra.mxu0 0.0
    %432 = vmatprep.subr.mxu0 0.0
    %433 = vmatpush1.msra.mxu0 0.0
    %434 = vmatprep.subr.mxu0 0.0
    %435 = vmatpush1.msra.mxu0 0.0
    %436 = vmatprep.subr.mxu0 0.0
    %437 = vmatpush1.msra.mxu0 0.0
    %438 = vmatprep.subr.mxu0 0.0
    %439 = vmatpush1.msra.mxu0 0.0
    %440 = vmatprep.subr.mxu0 0.0
    %441 = vmatpush1.msra.mxu0 0.0
    %442 = vmatprep.subr.mxu0 0.0
    %443 = vmatpush1.msra.mxu0 0.0
    %444 = vmatprep.subr.mxu0 0.0
    %445 = vmatpush1.msra.mxu0 0.0
    %446 = vmatprep.subr.mxu0 0.0
    %447 = vmatpush1.msra.mxu0 0.0
    %448 = vmatprep.subr.mxu0 0.0
    %449 = vmatpush1.msra.mxu0 0.0
    %450 = vmatprep.subr.mxu0 0.0
    %451 = vmatpush1.msra.mxu0 0.0
    %452 = vmatprep.subr.mxu0 0.0
    %453 = vmatpush1.msra.mxu0 0.0
    %454 = vmatprep.subr.mxu0 0.0
    %455 = vmatpush1.msra.mxu0 0.0
    %456 = vmatprep.subr.mxu0 0.0
    %457 = vmatpush1.msra.mxu0 0.0
    %458 = vmatprep.subr.mxu0 0.0
    %459 = vmatpush1.msra.mxu0 0.0
    %460 = vmatprep.subr.mxu0 0.0
    %461 = vmatpush1.msra.mxu0 0.0
    %462 = vmatprep.subr.mxu0 0.0
    %463 = vmatpush1.msra.mxu0 0.0
    %464 = vmatprep.subr.mxu0 0.0
    %465 = vmatpush1.msra.mxu0 0.0
    %466 = vmatprep.subr.mxu0 0.0
    %467 = vmatpush1.msra.mxu0 0.0
    %468 = vmatprep.subr.mxu0 0.0
    %469 = vmatpush1.msra.mxu0 0.0
    %470 = vmatprep.subr.mxu0 0.0
    %471 = vmatpush1.msra.mxu0 0.0
    %472 = vmatprep.mubr.f32.mxu0 0.0
    %v473 = vand.u32 %v90, 4294901760
    %v474 = vsub.f32 %v90, %v473
    %v475 = vand.u32 %v474, 4294901760
    %476 = vmatmul.mubr.f32.gmra.mrb[0].mxu0 %v475
    %v477 = vpop.f32.mrb[0].mxu0
    %v478 = vadd.f32 %v390, %v477
    %v479 = vpop.f32.mrb[0].mxu0
    %480 = vmatprep.mubr.f32.mxu0 0.0
    %v481 = vand.u32 %v93, 4294901760
    %v482 = vsub.f32 %v93, %v481
    %v483 = vand.u32 %v482, 4294901760
    %484 = vmatmul.mubr.f32.gmra.mrb[0].mxu0 %v483
    %v485 = vpop.f32.mrb[0].mxu0
    %v486 = vadd.f32 %v397, %v485
    %v487 = vpop.f32.mrb[0].mxu0
    %488 = vdwg.mxu0
    %489 = vmatprep.subr.mxu0 0.0
    %v490 = vand.u32 %v73, 4294901760
    %v491 = vsub.f32 %v73, %v490
    %v492 = vand.u32 %v491, 4294901760
    %493 = vmatpush1.msra.mxu0 %v492
    %494 = vmatprep.subr.mxu0 0.0
    %v495 = vand.u32 %v74, 4294901760
    %v496 = vsub.f32 %v74, %v495
    %v497 = vand.u32 %v496, 4294901760
    %498 = vmatpush1.msra.mxu0 %v497
    %499 = vmatprep.subr.mxu0 0.0
    %v500 = vand.u32 %v75, 4294901760
    %v501 = vsub.f32 %v75, %v500
    %v502 = vand.u32 %v501, 4294901760
    %503 = vmatpush1.msra.mxu0 %v502
    %504 = vmatprep.subr.mxu0 0.0
    %v505 = vand.u32 %v76, 4294901760
    %v506 = vsub.f32 %v76, %v505
    %v507 = vand.u32 %v506, 4294901760
    %508 = vmatpush1.msra.mxu0 %v507
    %509 = vmatprep.subr.mxu0 0.0
    %v510 = vand.u32 %v77, 4294901760
    %v511 = vsub.f32 %v77, %v510
    %v512 = vand.u32 %v511, 4294901760
    %513 = vmatpush1.msra.mxu0 %v512
    %514 = vmatprep.subr.mxu0 0.0
    %v515 = vand.u32 %v78, 4294901760
    %v516 = vsub.f32 %v78, %v515
    %v517 = vand.u32 %v516, 4294901760
    %518 = vmatpush1.msra.mxu0 %v517
    %519 = vmatprep.subr.mxu0 0.0
    %v520 = vand.u32 %v79, 4294901760
    %v521 = vsub.f32 %v79, %v520
    %v522 = vand.u32 %v521, 4294901760
    %523 = vmatpush1.msra.mxu0 %v522
    %524 = vmatprep.subr.mxu0 0.0
    %v525 = vand.u32 %v80, 4294901760
    %v526 = vsub.f32 %v80, %v525
    %v527 = vand.u32 %v526, 4294901760
    %528 = vmatpush1.msra.mxu0 %v527
    %529 = vmatprep.subr.mxu0 0.0
    %530 = vmatpush1.msra.mxu0 0.0
    %531 = vmatprep.subr.mxu0 0.0
    %532 = vmatpush1.msra.mxu0 0.0
    %533 = vmatprep.subr.mxu0 0.0
    %534 = vmatpush1.msra.mxu0 0.0
    %535 = vmatprep.subr.mxu0 0.0
    %536 = vmatpush1.msra.mxu0 0.0
    %537 = vmatprep.subr.mxu0 0.0
    %538 = vmatpush1.msra.mxu0 0.0
    %539 = vmatprep.subr.mxu0 0.0
    %540 = vmatpush1.msra.mxu0 0.0
    %541 = vmatprep.subr.mxu0 0.0
    %542 = vmatpush1.msra.mxu0 0.0
    %543 = vmatprep.subr.mxu0 0.0
    %544 = vmatpush1.msra.mxu0 0.0
    %545 = vmatprep.subr.mxu0 0.0
    %546 = vmatpush1.msra.mxu0 0.0
    %547 = vmatprep.subr.mxu0 0.0
    %548 = vmatpush1.msra.mxu0 0.0
    %549 = vmatprep.subr.mxu0 0.0
    %550 = vmatpush1.msra.mxu0 0.0
    %551 = vmatprep.subr.mxu0 0.0
    %552 = vmatpush1.msra.mxu0 0.0
    %553 = vmatprep.subr.mxu0 0.0
    %554 = vmatpush1.msra.mxu0 0.0
    %555 = vmatprep.subr.mxu0 0.0
    %556 = vmatpush1.msra.mxu0 0.0
    %557 = vmatprep.subr.mxu0 0.0
    %558 = vmatpush1.msra.mxu0 0.0
    %559 = vmatprep.subr.mxu0 0.0
    %560 = vmatpush1.msra.mxu0 0.0
    %561 = vmatprep.subr.mxu0 0.0
    %562 = vmatpush1.msra.mxu0 0.0
    %563 = vmatprep.subr.mxu0 0.0
    %564 = vmatpush1.msra.mxu0 0.0
    %565 = vmatprep.subr.mxu0 0.0
    %566 = vmatpush1.msra.mxu0 0.0
    %567 = vmatprep.subr.mxu0 0.0
    %568 = vmatpush1.msra.mxu0 0.0
    %569 = vmatprep.subr.mxu0 0.0
    %570 = vmatpush1.msra.mxu0 0.0
    %571 = vmatprep.subr.mxu0 0.0
    %572 = vmatpush1.msra.mxu0 0.0
    %573 = vmatprep.subr.mxu0 0.0
    %574 = vmatpush1.msra.mxu0 0.0
    %575 = vmatprep.subr.mxu0 0.0
    %576 = vmatpush1.msra.mxu0 0.0
    %577 = vmatprep.mubr.f32.mxu0 0.0
    %v578 = vand.u32 %v90, 4294901760
    %579 = vmatmul.mubr.f32.gmra.mrb[0].mxu0 %v578
    %v580 = vpop.f32.mrb[0].mxu0
    %v581 = vadd.f32 %v478, %v580
    %v582 = vpop.f32.mrb[0].mxu0
    %583 = vmatprep.mubr.f32.mxu0 0.0
    %v584 = vand.u32 %v93, 4294901760
    %585 = vmatmul.mubr.f32.gmra.mrb[0].mxu0 %v584
    %v586 = vpop.f32.mrb[0].mxu0
    %v587 = vadd.f32 %v486, %v586
    %v588 = vpop.f32.mrb[0].mxu0
    %589 = vdwg.mxu0
    %590 = vmatprep.subr.mxu0 0.0
    %v591 = vand.u32 %v73, 4294901760
    %592 = vmatpush1.msra.mxu0 %v591
    %593 = vmatprep.subr.mxu0 0.0
    %v594 = vand.u32 %v74, 4294901760
    %595 = vmatpush1.msra.mxu0 %v594
    %596 = vmatprep.subr.mxu0 0.0
    %v597 = vand.u32 %v75, 4294901760
    %598 = vmatpush1.msra.mxu0 %v597
    %599 = vmatprep.subr.mxu0 0.0
    %v600 = vand.u32 %v76, 4294901760
    %601 = vmatpush1.msra.mxu0 %v600
    %602 = vmatprep.subr.mxu0 0.0
    %v603 = vand.u32 %v77, 4294901760
    %604 = vmatpush1.msra.mxu0 %v603
    %605 = vmatprep.subr.mxu0 0.0
    %v606 = vand.u32 %v78, 4294901760
    %607 = vmatpush1.msra.mxu0 %v606
    %608 = vmatprep.subr.mxu0 0.0
    %v609 = vand.u32 %v79, 4294901760
    %610 = vmatpush1.msra.mxu0 %v609
    %611 = vmatprep.subr.mxu0 0.0
    %v612 = vand.u32 %v80, 4294901760
    %613 = vmatpush1.msra.mxu0 %v612
    %614 = vmatprep.subr.mxu0 0.0
    %615 = vmatpush1.msra.mxu0 0.0
    %616 = vmatprep.subr.mxu0 0.0
    %617 = vmatpush1.msra.mxu0 0.0
    %618 = vmatprep.subr.mxu0 0.0
    %619 = vmatpush1.msra.mxu0 0.0
    %620 = vmatprep.subr.mxu0 0.0
    %621 = vmatpush1.msra.mxu0 0.0
    %622 = vmatprep.subr.mxu0 0.0
    %623 = vmatpush1.msra.mxu0 0.0
    %624 = vmatprep.subr.mxu0 0.0
    %625 = vmatpush1.msra.mxu0 0.0
    %626 = vmatprep.subr.mxu0 0.0
    %627 = vmatpush1.msra.mxu0 0.0
    %628 = vmatprep.subr.mxu0 0.0
    %629 = vmatpush1.msra.mxu0 0.0
    %630 = vmatprep.subr.mxu0 0.0
    %631 = vmatpush1.msra.mxu0 0.0
    %632 = vmatprep.subr.mxu0 0.0
    %633 = vmatpush1.msra.mxu0 0.0
    %634 = vmatprep.subr.mxu0 0.0
    %635 = vmatpush1.msra.mxu0 0.0
    %636 = vmatprep.subr.mxu0 0.0
    %637 = vmatpush1.msra.mxu0 0.0
    %638 = vmatprep.subr.mxu0 0.0
    %639 = vmatpush1.msra.mxu0 0.0
    %640 = vmatprep.subr.mxu0 0.0
    %641 = vmatpush1.msra.mxu0 0.0
    %642 = vmatprep.subr.mxu0 0.0
    %643 = vmatpush1.msra.mxu0 0.0
    %644 = vmatprep.subr.mxu0 0.0
    %645 = vmatpush1.msra.mxu0 0.0
    %646 = vmatprep.subr.mxu0 0.0
    %647 = vmatpush1.msra.mxu0 0.0
    %648 = vmatprep.subr.mxu0 0.0
    %649 = vmatpush1.msra.mxu0 0.0
    %650 = vmatprep.subr.mxu0 0.0
    %651 = vmatpush1.msra.mxu0 0.0
    %652 = vmatprep.subr.mxu0 0.0
    %653 = vmatpush1.msra.mxu0 0.0
    %654 = vmatprep.subr.mxu0 0.0
    %655 = vmatpush1.msra.mxu0 0.0
    %656 = vmatprep.subr.mxu0 0.0
    %657 = vmatpush1.msra.mxu0 0.0
    %658 = vmatprep.subr.mxu0 0.0
    %659 = vmatpush1.msra.mxu0 0.0
    %660 = vmatprep.subr.mxu0 0.0
    %661 = vmatpush1.msra.mxu0 0.0
    %662 = vmatprep.mubr.f32.mxu0 0.0
    %v663 = vand.u32 %v90, 4294901760
    %664 = vmatmul.mubr.f32.gmra.mrb[0].mxu0 %v663
    %v665 = vpop.f32.mrb[0].mxu0
    %v666 = vadd.f32 %v581, %v665
    %v667 = vpop.f32.mrb[0].mxu0
    %668 = vmatprep.mubr.f32.mxu0 0.0
    %v669 = vand.u32 %v93, 4294901760
    %670 = vmatmul.mubr.f32.gmra.mrb[0].mxu0 %v669
    %v671 = vpop.f32.mrb[0].mxu0
    %v672 = vadd.f32 %v587, %v671
    %v673 = vpop.f32.mrb[0].mxu0
    %674 = vdwg.mxu0
    %v675 = vld [vmem:[#allocation8] sm:$0xff]
    %v676 = vld [vmem:[#allocation8 + $0x8] sm:$0xff]
    %v677 = vadd.f32 %v666, %v675
    %v678 = vadd.f32 %v672, %v676
    %vm679 = vcmask 261120
    %680 = vst.msk [vmem:[#allocation10] sm:$0xff] %vm679, %v677
    %681 = vst.msk [vmem:[#allocation10 + $0x8] sm:$0xff] %vm679, %v678
    // Predicated region
    $region34: #{mechanism_transformer_forward.26} parent=1 // pred_check
      _
    $region35: #{mechanism_transformer_forward.26} parent=1 // pred_check_branch
      %683 = sbr.rel (0) target = $region37
    $region36: #{mechanism_transformer_forward.26} parent=1 // pred_region
      %s685 = ssub.s32 256, 256
      %686 = vsyncadd [#allocation4], %s685
      %s687 = sshll.u32 [#allocation10], 4
      %s688 = int_to_ptr.vmem [resolvable:$true] %s687
      %693 = dma.vmem_to_hbm [thread:$0]  %s688, 256, %s4, [#allocation4], 128, 128, 8
    $region37: #{mechanism_transformer_forward.26} parent=1 // pred_fallthru
      _
    // Predicated region
    $region38: #{mechanism_transformer_forward.26} parent=1 // pred_check
      _
    $region39: #{mechanism_transformer_forward.26} parent=1 // pred_check_branch
      %695 = sbr.rel (0) target = $region41
    $region40: #{mechanism_transformer_forward.26} parent=1 // pred_region
      %696 = dma.done [#allocation4], 256
    $region41: #{mechanism_transformer_forward.26} parent=1 // pred_fallthru
      _
    %697 = vsyncpa [#allocation3], 1
    %698 = vsyncpa [#allocation6], 1
    %699 = vsyncpa [#allocation9], 1
    %700 = vsyncpa [#allocation4], 1

// kernel: mechanism_transformer_forward.35
$region0: #{mechanism_transformer_forward.35}
  #allocation0 [shape = 'u32[]', space=smem, size = 0x4, offset = 0x4, fixed_abs, tag = 'smem constant byte address 0x4 - core index']
  #allocation1 [shape = 'u32[144,128]{1,0:T(1,128)}', space=vmem, size = 0x12000, scoped, tag = 'internal scratch']
  %s0 = inlined_call_operand.hbm [shape: f32[16,32], index: 0, kind: input, shape index: {}]
  %s1 = inlined_call_operand.hbm [shape: f32[1,32], index: 1, kind: input, shape index: {}]
  %s2 = inlined_call_operand.hbm [shape: f32[1,32], index: 2, kind: input, shape index: {}]
  %s3 = inlined_call_operand.hbm [shape: f32[16,32], index: 3, kind: output, shape index: {}]
  %s4 = sld [smem:[#allocation0]]
  $region34: #{mechanism_transformer_forward.35} parent=0
    _
  %s6 = ssub.s32 1, %s4
  %s7 = scalar_select 0, %s6, %s4
  $region1: #{mechanism_transformer_forward.35} parent=0
    #allocation2 [shape = 'u8[8192]{0}', space=vmem, size = 0x2000, scoped, tag = 'input window, operand 0, single buffered']
    #allocation3 [shape = 's32[1]{0}', space=sflag, size = 0x4, scoped, tag = 'scoped memory for mechanism_transformer_forward.35']
    #allocation4 [shape = 's32[1]{0}', space=sflag, size = 0x4, scoped, tag = 'scoped memory for mechanism_transformer_forward.35']
    #allocation5 [shape = 'u8[512]{0}', space=vmem, size = 0x400, scoped, tag = 'input window, operand 1, single buffered']
    #allocation6 [shape = 's32[1]{0}', space=sflag, size = 0x4, scoped, tag = 'scoped memory for mechanism_transformer_forward.35']
    #allocation7 [shape = 'u8[512]{0}', space=vmem, size = 0x400, scoped, tag = 'input window, operand 2, single buffered']
    #allocation8 [shape = 'u8[8192]{0}', space=vmem, size = 0x2000, scoped, tag = 'output window, operand 0, single buffered']
    %8 = vsyncpa [#allocation3], 0
    %9 = vsyncpa [#allocation6], 0
    %10 = vsyncpa [#allocation4], 0
    // Predicated region
    $region2: #{mechanism_transformer_forward.35} parent=1 // pred_check
      _
    $region3: #{mechanism_transformer_forward.35} parent=1 // pred_check_branch
      %12 = sbr.rel (0) target = $region5
    $region4: #{mechanism_transformer_forward.35} parent=1 // pred_region
      %s14 = ssub.s32 256, 256
      %15 = vsyncadd [#allocation3], %s14
      %s16 = sshll.u32 [#allocation2], 4
      %s17 = int_to_ptr.vmem [resolvable:$true] %s16
      %22 = dma.hbm_to_vmem [thread:$0]  %s0, 256, %s17, [#allocation3], 128, 128, 8
    $region5: #{mechanism_transformer_forward.35} parent=1 // pred_fallthru
      _
    // Predicated region
    $region6: #{mechanism_transformer_forward.35} parent=1 // pred_check
      _
    $region7: #{mechanism_transformer_forward.35} parent=1 // pred_check_branch
      %24 = sbr.rel (0) target = $region9
    $region8: #{mechanism_transformer_forward.35} parent=1 // pred_region
      %s26 = ssub.s32 16, 16
      %27 = vsyncadd [#allocation6], %s26
      %s29 = sshll.u32 [#allocation5], 4
      %s30 = int_to_ptr.vmem [resolvable:$true] %s29
      %32 = dma.hbm_to_vmem [thread:$0]  %s1, 16, %s30, [#allocation6]
    $region9: #{mechanism_transformer_forward.35} parent=1 // pred_fallthru
      _
    // Predicated region
    $region10: #{mechanism_transformer_forward.35} parent=1 // pred_check
      _
    $region11: #{mechanism_transformer_forward.35} parent=1 // pred_check_branch
      %34 = sbr.rel (0) target = $region13
    $region12: #{mechanism_transformer_forward.35} parent=1 // pred_region
      %s36 = ssub.s32 16, 16
      %37 = vsyncadd [#allocation6], %s36
      %s39 = sshll.u32 [#allocation7], 4
      %s40 = int_to_ptr.vmem [resolvable:$true] %s39
      %42 = dma.hbm_to_vmem [thread:$0]  %s2, 16, %s40, [#allocation6]
    $region13: #{mechanism_transformer_forward.35} parent=1 // pred_fallthru
      _
    // Predicated region
    $region14: #{mechanism_transformer_forward.35} parent=1 // pred_check
      _
    $region15: #{mechanism_transformer_forward.35} parent=1 // pred_check_branch
      %44 = sbr.rel (0) target = $region17
    $region16: #{mechanism_transformer_forward.35} parent=1 // pred_region
      %45 = dma.done [#allocation3], 256
    $region17: #{mechanism_transformer_forward.35} parent=1 // pred_fallthru
      _
    // Predicated region
    $region18: #{mechanism_transformer_forward.35} parent=1 // pred_check
      _
    $region19: #{mechanism_transformer_forward.35} parent=1 // pred_check_branch
      %47 = sbr.rel (0) target = $region21
    $region20: #{mechanism_transformer_forward.35} parent=1 // pred_region
      %48 = dma.done [#allocation6], 16
    $region21: #{mechanism_transformer_forward.35} parent=1 // pred_fallthru
      _
    // Predicated region
    $region22: #{mechanism_transformer_forward.35} parent=1 // pred_check
      _
    $region23: #{mechanism_transformer_forward.35} parent=1 // pred_check_branch
      %50 = sbr.rel (0) target = $region25
    $region24: #{mechanism_transformer_forward.35} parent=1 // pred_region
      %51 = dma.done [#allocation6], 16
    $region25: #{mechanism_transformer_forward.35} parent=1 // pred_fallthru
      _
    %v52 = vld [vmem:[#allocation2] sm:$0xff]
    %v53 = vld [vmem:[#allocation2 + $0x8] sm:$0xff]
    %vm54 = vcmask 261120
    %v55 = vsel %vm54, %v52, 0.0
    %56 = vadd.xlane.f32.xlu0 %v55
    %v57 = vpop.xlane.xlu0 %56
    %v58 = vsel %vm54, %v53, 0.0
    %59 = vadd.xlane.f32.xlu0 %v58
    %v60 = vpop.xlane.xlu0 %59
    %v61 = vrcp.pop 32.0
    %v62 = vmul.f32 %v57, %v61
    %v63 = vmul.f32 %v60, %v61
    %v64 = vsub.f32 %v52, %v62
    %v65 = vsub.f32 %v53, %v63
    %v66 = vmul.f32 %v64, %v64
    %v67 = vmul.f32 %v65, %v65
    %v68 = vsel %vm54, %v66, 0.0
    %69 = vadd.xlane.f32.xlu0 %v68
    %v70 = vpop.xlane.xlu0 %69
    %v71 = vsel %vm54, %v67, 0.0
    %72 = vadd.xlane.f32.xlu0 %v71
    %v73 = vpop.xlane.xlu0 %72
    %v74 = vmul.f32 %v70, %v61
    %v75 = vmul.f32 %v73, %v61
    %v76 = vadd.f32 %v74, 1e-05
    %v77 = vadd.f32 %v75, 1e-05
    %v78 = vrsqrt.pop %v76
    %v79 = vrsqrt.pop %v77
    %v80 = vmul.f32 %v64, %v78
    %v81 = vmul.f32 %v65, %v79
    %v82 = vld [vmem:[#allocation5] sm:$0x1]
    %v84 = vlaneseq
    %v85 = vshrl.u32 %v84, 7
    %v86 = vsub.s32 0, %v85
    %v87 = vrot.slane %v82, %v86
    %v89 = vmul.f32 %v80, %v87
    %v90 = vmul.f32 %v81, %v87
    %v91 = vld [vmem:[#allocation7] sm:$0x1]
    %v93 = vlaneseq
    %v94 = vshrl.u32 %v93, 7
    %v95 = vsub.s32 0, %v94
    %v96 = vrot.slane %v91, %v95
    %v98 = vadd.f32 %v89, %v96
    %v99 = vadd.f32 %v90, %v96
    %100 = vst.msk [vmem:[#allocation8] sm:$0xff] %vm54, %v98
    %101 = vst.msk [vmem:[#allocation8 + $0x8] sm:$0xff] %vm54, %v99
    // Predicated region
    $region26: #{mechanism_transformer_forward.35} parent=1 // pred_check
      _
    $region27: #{mechanism_transformer_forward.35} parent=1 // pred_check_branch
      %103 = sbr.rel (0) target = $region29
    $region28: #{mechanism_transformer_forward.35} parent=1 // pred_region
      %s105 = ssub.s32 256, 256
      %106 = vsyncadd [#allocation4], %s105
      %s107 = sshll.u32 [#allocation8], 4
      %s108 = int_to_ptr.vmem [resolvable:$true] %s107
      %113 = dma.vmem_to_hbm [thread:$0]  %s108, 256, %s3, [#allocation4], 128, 128, 8
    $region29: #{mechanism_transformer_forward.35} parent=1 // pred_fallthru
      _
    // Predicated region
    $region30: #{mechanism_transformer_forward.35} parent=1 // pred_check
      _
    $region31: #{mechanism_transformer_forward.35} parent=1 // pred_check_branch
      %115 = sbr.rel (0) target = $region33
    $region32: #{mechanism_transformer_forward.35} parent=1 // pred_region
      %116 = dma.done [#allocation4], 256
    $region33: #{mechanism_transformer_forward.35} parent=1 // pred_fallthru
      _
    %117 = vsyncpa [#allocation3], 1
    %118 = vsyncpa [#allocation6], 1
    %119 = vsyncpa [#allocation4], 1

</llo_original>
